<compile_context>
chip_gen: v5e
topology: v5e:2x2
jax: 0.10.0
libtpu: 0.0.40
codegen_flags: <defaults>
</compile_context>

<pallas_src>
import functools
import numpy as np
import jax
import jax.numpy as jnp
from jax.experimental import pallas as pl
from jax.experimental.pallas import tpu as pltpu


# ------------------------------ in-kernel util -------------------------------

def _act(x, kind):
    if kind == "leaky":
        return jnp.where(x >= 0, x, 0.2 * x)
    if kind == "relu":
        return jnp.maximum(x, 0.0)
    if kind == "tanh":
        return jnp.tanh(x)
    return x


# ------------------------------ Pallas kernels -------------------------------

def _conv_kernel(a_ref, b_ref, o_ref, *, act_in):
    """o = act_in(A) @ B  (im2col conv; preceding activation folded into A)."""
    a = _act(a_ref[...], act_in)
    o_ref[...] = jnp.dot(a, b_ref[...], preferred_element_type=jnp.float32)


def _conv_bias_tanh_kernel(a_ref, b_ref, bias_ref, o_ref, *, act_in):
    """Outermost ConvTranspose: o = tanh(act_in(A) @ B + bias)."""
    a = _act(a_ref[...], act_in)
    acc = jnp.dot(a, b_ref[...], preferred_element_type=jnp.float32)
    o_ref[...] = jnp.tanh(acc + bias_ref[...])


def _conv_bn_kernel(a_ref, b_ref, g_ref, beta_ref, o_ref, *, act_in, eps):
    """Conv + train-mode BatchNorm fused.

    Single grid step: the whole conv output tile is resident in VMEM, so the
    batch statistics are computed in-register with a centered two-pass (no
    E[x^2]-E[x]^2 cancellation) and applied before the single store."""
    a = _act(a_ref[...], act_in)
    acc = jnp.dot(a, b_ref[...], preferred_element_type=jnp.float32)
    mean = jnp.mean(acc, axis=0, keepdims=True)
    cen = acc - mean
    var = jnp.mean(cen * cen, axis=0, keepdims=True)
    inv = jax.lax.rsqrt(var + eps)
    o_ref[...] = cen * (inv * g_ref[...]) + beta_ref[...]


# ------------------------------ Pallas wrappers -------------------------------

def _pad_rows8(a):
    r = (-a.shape[0]) % 8
    if r:
        a = jnp.pad(a, ((0, r), (0, 0)))
    return a


def _choose_m_tiling(mp, k, *, max_tile_bytes=6 << 20, tm_max=1024):
    """Single full-extent M block if the A tile fits comfortably in VMEM,
    otherwise the largest multiple-of-8 tile (<= tm_max) that divides Mp."""
    if mp * k * 4 <= max_tile_bytes:
        return mp, 1
    for tm in (tm_max, 512, 256, 128, 64, 32, 16, 8):
        if mp % tm == 0:
            return tm, mp // tm
    return mp, 1


def fused_conv(a, wm, *, act_in="none"):
    """Plain conv matmul; K/N are full-extent blocks, M tiled only if large."""
    M, K = a.shape
    N = wm.shape[1]
    a8 = _pad_rows8(a)                      # only the tiny M=2 conv pads rows
    Mp = a8.shape[0]
    bm, grid_m = _choose_m_tiling(Mp, K)
    out = pl.pallas_call(
        functools.partial(_conv_kernel, act_in=act_in),
        out_shape=jax.ShapeDtypeStruct((Mp, N), jnp.float32),
        grid_spec=pltpu.PrefetchScalarGridSpec(
            num_scalar_prefetch=0,
            grid=(grid_m,),
            in_specs=[pl.BlockSpec((bm, K), lambda i: (i, 0)),
                      pl.BlockSpec((K, N), lambda i: (0, 0))],
            out_specs=pl.BlockSpec((bm, N), lambda i: (i, 0))),
        compiler_params=pltpu.CompilerParams(
            dimension_semantics=("parallel",)),
    )(a8, wm)
    return out[:M] if Mp != M else out


def fused_conv_bias_tanh(a, wm, bias, *, act_in="relu"):
    M, K = a.shape
    N = wm.shape[1]
    a8 = _pad_rows8(a)
    Mp = a8.shape[0]
    bm, grid_m = _choose_m_tiling(Mp, K)
    b2 = bias.reshape(1, N).astype(jnp.float32)
    out = pl.pallas_call(
        functools.partial(_conv_bias_tanh_kernel, act_in=act_in),
        out_shape=jax.ShapeDtypeStruct((Mp, N), jnp.float32),
        grid_spec=pltpu.PrefetchScalarGridSpec(
            num_scalar_prefetch=0,
            grid=(grid_m,),
            in_specs=[pl.BlockSpec((bm, K), lambda i: (i, 0)),
                      pl.BlockSpec((K, N), lambda i: (0, 0)),
                      pl.BlockSpec((1, N), lambda i: (0, 0))],
            out_specs=pl.BlockSpec((bm, N), lambda i: (i, 0))),
        compiler_params=pltpu.CompilerParams(
            dimension_semantics=("parallel",)),
    )(a8, wm, b2)
    return out[:M] if Mp != M else out


def fused_conv_bn(a, wm, gamma, beta, *, act_in, eps=1e-5):
    """Conv + BatchNorm in a single kernel invocation (full M in one block).

    TODO(synk): for much larger inputs this would need a two-pass grid version
    (stats accumulation pass + normalize pass); at these shapes the largest BN
    conv tile is ~4 MiB so a single resident block is both correct and fastest.
    """
    M, K = a.shape
    N = wm.shape[1]
    g2 = gamma.reshape(1, N).astype(jnp.float32)
    b2 = beta.reshape(1, N).astype(jnp.float32)
    return pl.pallas_call(
        functools.partial(_conv_bn_kernel, act_in=act_in, eps=eps),
        out_shape=jax.ShapeDtypeStruct((M, N), jnp.float32),
        grid_spec=pltpu.PrefetchScalarGridSpec(
            num_scalar_prefetch=0,
            grid=(1,),
            in_specs=[pl.BlockSpec((M, K), lambda i: (0, 0)),
                      pl.BlockSpec((K, N), lambda i: (0, 0)),
                      pl.BlockSpec((1, N), lambda i: (0, 0)),
                      pl.BlockSpec((1, N), lambda i: (0, 0))],
            out_specs=pl.BlockSpec((M, N), lambda i: (0, 0))),
        compiler_params=pltpu.CompilerParams(
            dimension_semantics=("arbitrary",)),
    )(a, wm, g2, b2)


# --------------------------- conv building blocks ----------------------------
# TODO(synk): im2col patch gather is still built by JAX/XLA (strided slices +
# concat) rather than by in-kernel strided DMA; at these sizes (<4 MiB total)
# it is cheap, and keeping it outside avoids fragile 4-D in-kernel relayouts.

def _im2col_down(x):
    """Conv2d(k=4, s=2, p=1) im2col.  x: NHWC."""
    N, H, W, CI = x.shape
    OH, OW = H // 2, W // 2
    xp = jnp.pad(x, ((0, 0), (1, 1), (1, 1), (0, 0)))
    cols = [xp[:, kh:kh + 2 * OH:2, kw:kw + 2 * OW:2, :]
            for kh in range(4) for kw in range(4)]
    a = jnp.concatenate(cols, axis=-1).reshape(N * OH * OW, 16 * CI)
    return a, (N, OH, OW)


def _im2col_up(x):
    """ConvTranspose2d(k=4, s=2, p=1) im2col: dilate by 2, pad by 2, k=4 s=1."""
    N, H, W, CI = x.shape
    OH, OW = 2 * H, 2 * W
    y = jnp.zeros((N, 2 * H - 1, 2 * W - 1, CI), x.dtype).at[:, ::2, ::2, :].set(x)
    yp = jnp.pad(y, ((0, 0), (2, 2), (2, 2), (0, 0)))
    cols = [yp[:, kh:kh + OH, kw:kw + OW, :] for kh in range(4) for kw in range(4)]
    a = jnp.concatenate(cols, axis=-1).reshape(N * OH * OW, 16 * CI)
    return a, (N, OH, OW)


def conv_down(x, w, *, act_in="none", bn=None):
    """x: NHWC, w: torch Conv2d weight (CO, CI, 4, 4)."""
    a, (N, OH, OW) = _im2col_down(x)
    CO, CI = w.shape[0], w.shape[1]
    wm = jnp.transpose(w, (2, 3, 1, 0)).reshape(16 * CI, CO)
    if bn is None:
        out = fused_conv(a, wm, act_in=act_in)
    else:
        out = fused_conv_bn(a, wm, bn[0], bn[1], act_in=act_in)
    return out.reshape(N, OH, OW, CO)


def conv_up(x, wt, *, act_in="relu", bn=None, bias=None):
    """x: NHWC, wt: torch ConvTranspose2d weight (CI, CO, 4, 4)."""
    a, (N, OH, OW) = _im2col_up(x)
    CI, CO = wt.shape[0], wt.shape[1]
    wm = jnp.transpose(wt[:, :, ::-1, ::-1], (2, 3, 0, 1)).reshape(16 * CI, CO)
    if bn is not None:
        out = fused_conv_bn(a, wm, bn[0], bn[1], act_in=act_in)
    elif bias is not None:
        out = fused_conv_bias_tanh(a, wm, bias, act_in=act_in)
    else:
        out = fused_conv(a, wm, act_in=act_in)
    return out.reshape(N, OH, OW, CO)


# -------------------------------- Unet forward --------------------------------

def unet_block_forward(p, x):
    kind = p["kind"]
    if kind == "outermost":
        d = conv_down(x, p["down_w"], act_in="none")             # [downconv]
        z = unet_block_forward(p["sub"], d)                      # [submodule]
        # [uprelu + upconv + bias + tanh] fused in one kernel
        return conv_up(z, p["up_w"], act_in="relu", bias=p["up_b"])
    if kind == "innermost":
        d = conv_down(x, p["down_w"], act_in="leaky")            # [downrelu+downconv]
        u = conv_up(d, p["up_w"], act_in="relu",
                    bn=(p["up_gamma"], p["up_beta"]))            # [uprelu+upconv+upnorm]
        return jnp.concatenate([x, u], axis=-1)
    # middle block
    d = conv_down(x, p["down_w"], act_in="leaky",
                  bn=(p["down_gamma"], p["down_beta"]))          # [downrelu+downconv+downnorm]
    z = unet_block_forward(p["sub"], d)                          # [submodule]
    u = conv_up(z, p["up_w"], act_in="relu",
                bn=(p["up_gamma"], p["up_beta"]))                # [uprelu+upconv+upnorm]
    if p["dropout"]:
        # TODO(synk): train-mode nn.Dropout(0.5) (random mask) not applied; the
        # n_down=5 configuration has zero dropout blocks so this path is unused.
        pass
    return jnp.concatenate([x, u], axis=-1)


def unet_forward(params, x_nchw):
    x = jnp.transpose(x_nchw.astype(jnp.float32), (0, 2, 3, 1))  # NCHW -> NHWC
    out = unet_block_forward(params, x)
    return jnp.transpose(out, (0, 3, 1, 2))                      # NHWC -> NCHW


# ------------------------------- parameter init --------------------------------

def init_unet_params(key, input_c=1, output_c=2, n_down=5, num_filters=8):
    counter = [0]

    def nkey():
        counter[0] += 1
        return jax.random.fold_in(key, counter[0])

    def conv_w(co, ci):      # torch Conv2d weight layout (out, in, kh, kw)
        return 0.02 * jax.random.normal(nkey(), (co, ci, 4, 4), jnp.float32)

    def convt_w(ci, co):     # torch ConvTranspose2d weight layout (in, out, kh, kw)
        return 0.02 * jax.random.normal(nkey(), (ci, co, 4, 4), jnp.float32)

    def make_block(nf, ni, sub=None, input_c_=None, dropout=False,
                   innermost=False, outermost=False):
        if input_c_ is None:
            input_c_ = nf
        p = {"kind": ("outermost" if outermost else
                      ("innermost" if innermost else "middle")),
             "dropout": dropout, "sub": sub,
             "down_w": conv_w(ni, input_c_)}
        if outermost:
            p["up_w"] = convt_w(ni * 2, nf)
            p["up_b"] = 0.02 * jax.random.normal(nkey(), (nf,), jnp.float32)
        elif innermost:
            p["up_w"] = convt_w(ni, nf)
            p["up_gamma"] = jnp.ones((nf,), jnp.float32)
            p["up_beta"] = jnp.zeros((nf,), jnp.float32)
        else:
            p["down_gamma"] = jnp.ones((ni,), jnp.float32)
            p["down_beta"] = jnp.zeros((ni,), jnp.float32)
            p["up_w"] = convt_w(ni * 2, nf)
            p["up_gamma"] = jnp.ones((nf,), jnp.float32)
            p["up_beta"] = jnp.zeros((nf,), jnp.float32)
        return p

    blk = make_block(num_filters * 8, num_filters * 8, innermost=True)
    for _ in range(n_down - 5):
        blk = make_block(num_filters * 8, num_filters * 8, sub=blk, dropout=True)
    out_filters = num_filters * 8
    for _ in range(3):
        blk = make_block(out_filters // 2, out_filters, sub=blk)
        out_filters //= 2
    return make_block(output_c, out_filters, input_c_=input_c, sub=blk,
                      outermost=True)


# ------------------------------ pure-JAX reference -----------------------------

def _ref_conv_down(x, w):
    w_hwio = jnp.transpose(w, (2, 3, 1, 0))
    return jax.lax.conv_general_dilated(
        x, w_hwio, window_strides=(2, 2), padding=((1, 1), (1, 1)),
        dimension_numbers=("NHWC", "HWIO", "NHWC"),
        precision=jax.lax.Precision.HIGHEST)


def _ref_conv_up(x, wt):
    wf = jnp.transpose(wt[:, :, ::-1, ::-1], (2, 3, 0, 1))
    return jax.lax.conv_general_dilated(
        x, wf, window_strides=(1, 1), padding=((2, 2), (2, 2)),
        lhs_dilation=(2, 2), dimension_numbers=("NHWC", "HWIO", "NHWC"),
        precision=jax.lax.Precision.HIGHEST)


def _ref_bn(x, g, b, eps=1e-5):
    m = jnp.mean(x, axis=(0, 1, 2))
    v = jnp.mean((x - m) ** 2, axis=(0, 1, 2))
    return (x - m) / jnp.sqrt(v + eps) * g + b


def _ref_leaky(x):
    return jnp.where(x >= 0, x, 0.2 * x)


def ref_block_forward(p, x):
    kind = p["kind"]
    if kind == "outermost":
        y = _ref_conv_down(x, p["down_w"])
        z = ref_block_forward(p["sub"], y)
        u = _ref_conv_up(jnp.maximum(z, 0.0), p["up_w"]) + p["up_b"]
        return jnp.tanh(u)
    if kind == "innermost":
        y = _ref_conv_down(_ref_leaky(x), p["down_w"])
        u = _ref_conv_up(jnp.maximum(y, 0.0), p["up_w"])
        u = _ref_bn(u, p["up_gamma"], p["up_beta"])
        return jnp.concatenate([x, u], axis=-1)
    y = _ref_conv_down(_ref_leaky(x), p["down_w"])
    y = _ref_bn(y, p["down_gamma"], p["down_beta"])
    z = ref_block_forward(p["sub"], y)
    u = _ref_conv_up(jnp.maximum(z, 0.0), p["up_w"])
    u = _ref_bn(u, p["up_gamma"], p["up_beta"])
    return jnp.concatenate([x, u], axis=-1)


def ref_unet_forward(params, x_nchw):
    x = jnp.transpose(x_nchw.astype(jnp.float32), (0, 2, 3, 1))
    return jnp.transpose(ref_block_forward(params, x), (0, 3, 1, 2))


# -------------------------------------- main ------------------------------------

if __name__ == "__main__":
    INPUT_C, OUTPUT_C, N_DOWN, NUM_FILTERS = 1, 2, 5, 8
    BATCH = 2
    SPATIAL = 1 << N_DOWN  # 32: forward implies spatial divisible by 2**n_down

    key = jax.random.PRNGKey(0)
    k_params, k_x = jax.random.split(key)
    params = init_unet_params(k_params, INPUT_C, OUTPUT_C, N_DOWN, NUM_FILTERS)
    x = jax.random.normal(k_x, (BATCH, INPUT_C, SPATIAL, SPATIAL), jnp.float32)

    unet_fn = jax.jit(functools.partial(unet_forward, params))
    out = jax.block_until_ready(unet_fn(x))

    assert out.shape == (BATCH, OUTPUT_C, SPATIAL, SPATIAL), out.shape
    assert bool(jnp.all(jnp.isfinite(out)))

    ref = jax.block_until_ready(ref_unet_forward(params, x))
    max_err = float(np.max(np.abs(np.asarray(out) - np.asarray(ref))))
    assert np.allclose(np.asarray(out), np.asarray(ref),
                       atol=1e-2, rtol=1e-2), max_err

    print("KERNEL_OK")
</pallas_src>

<mosaic_0001>
module attributes {stable_mosaic.version = 11 : i64} {
  func.func @_conv_kernel(%arg0: i32, %arg1: memref<512x16xf32, #tpu.memory_space<vmem>>, %arg2: memref<16x8xf32, #tpu.memory_space<vmem>>, %arg3: memref<512x8xf32, #tpu.memory_space<vmem>>) attributes {dimension_semantics = [#tpu.dimension_semantics<parallel>], iteration_bounds = array<i64: 1>, scalar_prefetch = 0 : i64, scratch_operands = 0 : i64, tpu.core_type = #tpu.core_type<tc>, window_params = [{transform_indices = @transform_0, window_bounds = array<i64: 512, 16>}, {pipeline_mode = #tpu.pipeline_mode<synchronous>, transform_indices = @transform_1, window_bounds = array<i64: 16, 8>}, {transform_indices = @transform_2, window_bounds = array<i64: 512, 8>}]} {
    %c0 = arith.constant 0 : index
    %c0_0 = arith.constant 0 : index
    %0 = vector.load %arg1[%c0, %c0_0] : memref<512x16xf32, #tpu.memory_space<vmem>>, vector<512x16xf32>
    %c0_1 = arith.constant 0 : index
    %c0_2 = arith.constant 0 : index
    %1 = vector.load %arg2[%c0_1, %c0_2] : memref<16x8xf32, #tpu.memory_space<vmem>>, vector<16x8xf32>
    %cst = arith.constant dense<0.000000e+00> : vector<512x8xf32>
    %2 = tpu.matmul %0, %1, %cst {dimension_numbers = #tpu.dot_dimension_numbers<[1], [0], [0], [1], [0, 0, 1, 1], [], []>} : vector<512x16xf32>, vector<16x8xf32>, vector<512x8xf32> -> vector<512x8xf32>
    %c0_3 = arith.constant 0 : index
    %c0_4 = arith.constant 0 : index
    %3 = vector.load %arg3[%c0_3, %c0_4] : memref<512x8xf32, #tpu.memory_space<vmem>>, vector<512x8xf32>
    tpu.vector_store %arg3[%c0_3, %c0_4], %2 {strides = array<i32>} : memref<512x8xf32, #tpu.memory_space<vmem>>, vector<512x8xf32>,
    return
  }
  func.func @transform_0(%arg0: i32) -> (i32, i32) {
    %c0_i32 = arith.constant 0 : i32
    %c0_i32_0 = arith.constant 0 : i32
    return %arg0, %c0_i32 : i32, i32
  }
  func.func @transform_1(%arg0: i32) -> (i32, i32) {
    %c0_i32 = arith.constant 0 : i32
    %c0_i32_0 = arith.constant 0 : i32
    %c0_i32_1 = arith.constant 0 : i32
    return %c0_i32, %c0_i32_0 : i32, i32
  }
  func.func @transform_2(%arg0: i32) -> (i32, i32) {
    %c0_i32 = arith.constant 0 : i32
    %c0_i32_0 = arith.constant 0 : i32
    return %arg0, %c0_i32 : i32, i32
  }
}

module attributes {stable_mosaic.version = 11 : i64} {
  func.func @_conv_bn_kernel(%arg0: i32, %arg1: memref<128x128xf32, #tpu.memory_space<vmem>>, %arg2: memref<128x16xf32, #tpu.memory_space<vmem>>, %arg3: memref<1x16xf32, #tpu.memory_space<vmem>>, %arg4: memref<1x16xf32, #tpu.memory_space<vmem>>, %arg5: memref<128x16xf32, #tpu.memory_space<vmem>>) attributes {dimension_semantics = [#tpu.dimension_semantics<arbitrary>], iteration_bounds = array<i64: 1>, scalar_prefetch = 0 : i64, scratch_operands = 0 : i64, tpu.core_type = #tpu.core_type<tc>, window_params = [{pipeline_mode = #tpu.pipeline_mode<synchronous>, transform_indices = @transform_0, window_bounds = array<i64: 128, 128>}, {pipeline_mode = #tpu.pipeline_mode<synchronous>, transform_indices = @transform_1, window_bounds = array<i64: 128, 16>}, {pipeline_mode = #tpu.pipeline_mode<synchronous>, transform_indices = @transform_2, window_bounds = array<i64: 1, 16>}, {pipeline_mode = #tpu.pipeline_mode<synchronous>, transform_indices = @transform_3, window_bounds = array<i64: 1, 16>}, {pipeline_mode = #tpu.pipeline_mode<synchronous>, transform_indices = @transform_4, window_bounds = array<i64: 128, 16>}]} {
    %c0 = arith.constant 0 : index
    %c0_0 = arith.constant 0 : index
    %0 = vector.load %arg1[%c0, %c0_0] : memref<128x128xf32, #tpu.memory_space<vmem>>, vector<128x128xf32>
    %cst = arith.constant 0.000000e+00 : f32
    %1 = vector.broadcast %cst : f32 to vector<128x128xf32>
    %2 = arith.cmpf oge, %0, %1 : vector<128x128xf32>
    %cst_1 = arith.constant 2.000000e-01 : f32
    %3 = vector.broadcast %cst_1 : f32 to vector<128x128xf32>
    %4 = arith.mulf %3, %0 : vector<128x128xf32>
    %5 = arith.select %2, %0, %4 : vector<128x128xi1>, vector<128x128xf32>
    %c0_2 = arith.constant 0 : index
    %c0_3 = arith.constant 0 : index
    %6 = vector.load %arg2[%c0_2, %c0_3] : memref<128x16xf32, #tpu.memory_space<vmem>>, vector<128x16xf32>
    %cst_4 = arith.constant dense<0.000000e+00> : vector<128x16xf32>
    %7 = tpu.matmul %5, %6, %cst_4 {dimension_numbers = #tpu.dot_dimension_numbers<[1], [0], [0], [1], [0, 0, 1, 1], [], []>} : vector<128x128xf32>, vector<128x16xf32>, vector<128x16xf32> -> vector<128x16xf32>
    %cst_5 = arith.constant dense<0.000000e+00> : vector<16xf32>
    %8 = vector.multi_reduction <add>, %7, %cst_5 [0] : vector<128x16xf32> to vector<16xf32>
    %9 = vector.shape_cast %8 : vector<16xf32> to vector<1x16xf32>
    %cst_6 = arith.constant 1.280000e+02 : f32
    %10 = vector.broadcast %cst_6 : f32 to vector<1x16xf32>
    %11 = arith.divf %9, %10 : vector<1x16xf32>
    %12 = vector.broadcast %11 : vector<1x16xf32> to vector<128x16xf32>
    %13 = arith.subf %7, %12 : vector<128x16xf32>
    %14 = arith.mulf %13, %13 : vector<128x16xf32>
    %cst_7 = arith.constant dense<0.000000e+00> : vector<16xf32>
    %15 = vector.multi_reduction <add>, %14, %cst_7 [0] : vector<128x16xf32> to vector<16xf32>
    %16 = vector.shape_cast %15 : vector<16xf32> to vector<1x16xf32>
    %cst_8 = arith.constant 1.280000e+02 : f32
    %17 = vector.broadcast %cst_8 : f32 to vector<1x16xf32>
    %18 = arith.divf %16, %17 : vector<1x16xf32>
    %cst_9 = arith.constant 9.99999974E-6 : f32
    %19 = vector.broadcast %cst_9 : f32 to vector<1x16xf32>
    %20 = arith.addf %18, %19 : vector<1x16xf32>
    %21 = math.rsqrt %20 : vector<1x16xf32>
    %c0_10 = arith.constant 0 : index
    %c0_11 = arith.constant 0 : index
    %22 = vector.load %arg3[%c0_10, %c0_11] : memref<1x16xf32, #tpu.memory_space<vmem>>, vector<1x16xf32>
    %23 = arith.mulf %21, %22 : vector<1x16xf32>
    %24 = vector.broadcast %23 : vector<1x16xf32> to vector<128x16xf32>
    %25 = arith.mulf %13, %24 : vector<128x16xf32>
    %c0_12 = arith.constant 0 : index
    %c0_13 = arith.constant 0 : index
    %26 = vector.load %arg4[%c0_12, %c0_13] : memref<1x16xf32, #tpu.memory_space<vmem>>, vector<1x16xf32>
    %27 = vector.broadcast %26 : vector<1x16xf32> to vector<128x16xf32>
    %28 = arith.addf %25, %27 : vector<128x16xf32>
    %c0_14 = arith.constant 0 : index
    %c0_15 = arith.constant 0 : index
    %29 = vector.load %arg5[%c0_14, %c0_15] : memref<128x16xf32, #tpu.memory_space<vmem>>, vector<128x16xf32>
    tpu.vector_store %arg5[%c0_14, %c0_15], %28 {strides = array<i32>} : memref<128x16xf32, #tpu.memory_space<vmem>>, vector<128x16xf32>,
    return
  }
  func.func @transform_0(%arg0: i32) -> (i32, i32) {
    %c0_i32 = arith.constant 0 : i32
    %c0_i32_0 = arith.constant 0 : i32
    %c0_i32_1 = arith.constant 0 : i32
    return %c0_i32, %c0_i32_0 : i32, i32
  }
  func.func @transform_1(%arg0: i32) -> (i32, i32) {
    %c0_i32 = arith.constant 0 : i32
    %c0_i32_0 = arith.constant 0 : i32
    %c0_i32_1 = arith.constant 0 : i32
    return %c0_i32, %c0_i32_0 : i32, i32
  }
  func.func @transform_2(%arg0: i32) -> (i32, i32) {
    %c0_i32 = arith.constant 0 : i32
    %c0_i32_0 = arith.constant 0 : i32
    %c0_i32_1 = arith.constant 0 : i32
    return %c0_i32, %c0_i32_0 : i32, i32
  }
  func.func @transform_3(%arg0: i32) -> (i32, i32) {
    %c0_i32 = arith.constant 0 : i32
    %c0_i32_0 = arith.constant 0 : i32
    %c0_i32_1 = arith.constant 0 : i32
    return %c0_i32, %c0_i32_0 : i32, i32
  }
  func.func @transform_4(%arg0: i32) -> (i32, i32) {
    %c0_i32 = arith.constant 0 : i32
    %c0_i32_0 = arith.constant 0 : i32
    %c0_i32_1 = arith.constant 0 : i32
    return %c0_i32, %c0_i32_0 : i32, i32
  }
}

module attributes {stable_mosaic.version = 11 : i64} {
  func.func @_conv_bn_kernel(%arg0: i32, %arg1: memref<32x256xf32, #tpu.memory_space<vmem>>, %arg2: memref<256x32xf32, #tpu.memory_space<vmem>>, %arg3: memref<1x32xf32, #tpu.memory_space<vmem>>, %arg4: memref<1x32xf32, #tpu.memory_space<vmem>>, %arg5: memref<32x32xf32, #tpu.memory_space<vmem>>) attributes {dimension_semantics = [#tpu.dimension_semantics<arbitrary>], iteration_bounds = array<i64: 1>, scalar_prefetch = 0 : i64, scratch_operands = 0 : i64, tpu.core_type = #tpu.core_type<tc>, window_params = [{pipeline_mode = #tpu.pipeline_mode<synchronous>, transform_indices = @transform_0, window_bounds = array<i64: 32, 256>}, {pipeline_mode = #tpu.pipeline_mode<synchronous>, transform_indices = @transform_1, window_bounds = array<i64: 256, 32>}, {pipeline_mode = #tpu.pipeline_mode<synchronous>, transform_indices = @transform_2, window_bounds = array<i64: 1, 32>}, {pipeline_mode = #tpu.pipeline_mode<synchronous>, transform_indices = @transform_3, window_bounds = array<i64: 1, 32>}, {pipeline_mode = #tpu.pipeline_mode<synchronous>, transform_indices = @transform_4, window_bounds = array<i64: 32, 32>}]} {
    %c0 = arith.constant 0 : index
    %c0_0 = arith.constant 0 : index
    %0 = vector.load %arg1[%c0, %c0_0] : memref<32x256xf32, #tpu.memory_space<vmem>>, vector<32x256xf32>
    %cst = arith.constant 0.000000e+00 : f32
    %1 = vector.broadcast %cst : f32 to vector<32x256xf32>
    %2 = arith.cmpf oge, %0, %1 : vector<32x256xf32>
    %cst_1 = arith.constant 2.000000e-01 : f32
    %3 = vector.broadcast %cst_1 : f32 to vector<32x256xf32>
    %4 = arith.mulf %3, %0 : vector<32x256xf32>
    %5 = arith.select %2, %0, %4 : vector<32x256xi1>, vector<32x256xf32>
    %c0_2 = arith.constant 0 : index
    %c0_3 = arith.constant 0 : index
    %6 = vector.load %arg2[%c0_2, %c0_3] : memref<256x32xf32, #tpu.memory_space<vmem>>, vector<256x32xf32>
    %cst_4 = arith.constant dense<0.000000e+00> : vector<32x32xf32>
    %7 = tpu.matmul %5, %6, %cst_4 {dimension_numbers = #tpu.dot_dimension_numbers<[1], [0], [0], [1], [0, 0, 1, 1], [], []>} : vector<32x256xf32>, vector<256x32xf32>, vector<32x32xf32> -> vector<32x32xf32>
    %cst_5 = arith.constant dense<0.000000e+00> : vector<32xf32>
    %8 = vector.multi_reduction <add>, %7, %cst_5 [0] : vector<32x32xf32> to vector<32xf32>
    %9 = vector.shape_cast %8 : vector<32xf32> to vector<1x32xf32>
    %cst_6 = arith.constant 3.200000e+01 : f32
    %10 = vector.broadcast %cst_6 : f32 to vector<1x32xf32>
    %11 = arith.divf %9, %10 : vector<1x32xf32>
    %12 = vector.broadcast %11 : vector<1x32xf32> to vector<32x32xf32>
    %13 = arith.subf %7, %12 : vector<32x32xf32>
    %14 = arith.mulf %13, %13 : vector<32x32xf32>
    %cst_7 = arith.constant dense<0.000000e+00> : vector<32xf32>
    %15 = vector.multi_reduction <add>, %14, %cst_7 [0] : vector<32x32xf32> to vector<32xf32>
    %16 = vector.shape_cast %15 : vector<32xf32> to vector<1x32xf32>
    %cst_8 = arith.constant 3.200000e+01 : f32
    %17 = vector.broadcast %cst_8 : f32 to vector<1x32xf32>
    %18 = arith.divf %16, %17 : vector<1x32xf32>
    %cst_9 = arith.constant 9.99999974E-6 : f32
    %19 = vector.broadcast %cst_9 : f32 to vector<1x32xf32>
    %20 = arith.addf %18, %19 : vector<1x32xf32>
    %21 = math.rsqrt %20 : vector<1x32xf32>
    %c0_10 = arith.constant 0 : index
    %c0_11 = arith.constant 0 : index
    %22 = vector.load %arg3[%c0_10, %c0_11] : memref<1x32xf32, #tpu.memory_space<vmem>>, vector<1x32xf32>
    %23 = arith.mulf %21, %22 : vector<1x32xf32>
    %24 = vector.broadcast %23 : vector<1x32xf32> to vector<32x32xf32>
    %25 = arith.mulf %13, %24 : vector<32x32xf32>
    %c0_12 = arith.constant 0 : index
    %c0_13 = arith.constant 0 : index
    %26 = vector.load %arg4[%c0_12, %c0_13] : memref<1x32xf32, #tpu.memory_space<vmem>>, vector<1x32xf32>
    %27 = vector.broadcast %26 : vector<1x32xf32> to vector<32x32xf32>
    %28 = arith.addf %25, %27 : vector<32x32xf32>
    %c0_14 = arith.constant 0 : index
    %c0_15 = arith.constant 0 : index
    %29 = vector.load %arg5[%c0_14, %c0_15] : memref<32x32xf32, #tpu.memory_space<vmem>>, vector<32x32xf32>
    tpu.vector_store %arg5[%c0_14, %c0_15], %28 {strides = array<i32>} : memref<32x32xf32, #tpu.memory_space<vmem>>, vector<32x32xf32>,
    return
  }
  func.func @transform_0(%arg0: i32) -> (i32, i32) {
    %c0_i32 = arith.constant 0 : i32
    %c0_i32_0 = arith.constant 0 : i32
    %c0_i32_1 = arith.constant 0 : i32
    return %c0_i32, %c0_i32_0 : i32, i32
  }
  func.func @transform_1(%arg0: i32) -> (i32, i32) {
    %c0_i32 = arith.constant 0 : i32
    %c0_i32_0 = arith.constant 0 : i32
    %c0_i32_1 = arith.constant 0 : i32
    return %c0_i32, %c0_i32_0 : i32, i32
  }
  func.func @transform_2(%arg0: i32) -> (i32, i32) {
    %c0_i32 = arith.constant 0 : i32
    %c0_i32_0 = arith.constant 0 : i32
    %c0_i32_1 = arith.constant 0 : i32
    return %c0_i32, %c0_i32_0 : i32, i32
  }
  func.func @transform_3(%arg0: i32) -> (i32, i32) {
    %c0_i32 = arith.constant 0 : i32
    %c0_i32_0 = arith.constant 0 : i32
    %c0_i32_1 = arith.constant 0 : i32
    return %c0_i32, %c0_i32_0 : i32, i32
  }
  func.func @transform_4(%arg0: i32) -> (i32, i32) {
    %c0_i32 = arith.constant 0 : i32
    %c0_i32_0 = arith.constant 0 : i32
    %c0_i32_1 = arith.constant 0 : i32
    return %c0_i32, %c0_i32_0 : i32, i32
  }
}

module attributes {stable_mosaic.version = 11 : i64} {
  func.func @_conv_bn_kernel(%arg0: i32, %arg1: memref<8x512xf32, #tpu.memory_space<vmem>>, %arg2: memref<512x64xf32, #tpu.memory_space<vmem>>, %arg3: memref<1x64xf32, #tpu.memory_space<vmem>>, %arg4: memref<1x64xf32, #tpu.memory_space<vmem>>, %arg5: memref<8x64xf32, #tpu.memory_space<vmem>>) attributes {dimension_semantics = [#tpu.dimension_semantics<arbitrary>], iteration_bounds = array<i64: 1>, scalar_prefetch = 0 : i64, scratch_operands = 0 : i64, tpu.core_type = #tpu.core_type<tc>, window_params = [{pipeline_mode = #tpu.pipeline_mode<synchronous>, transform_indices = @transform_0, window_bounds = array<i64: 8, 512>}, {pipeline_mode = #tpu.pipeline_mode<synchronous>, transform_indices = @transform_1, window_bounds = array<i64: 512, 64>}, {pipeline_mode = #tpu.pipeline_mode<synchronous>, transform_indices = @transform_2, window_bounds = array<i64: 1, 64>}, {pipeline_mode = #tpu.pipeline_mode<synchronous>, transform_indices = @transform_3, window_bounds = array<i64: 1, 64>}, {pipeline_mode = #tpu.pipeline_mode<synchronous>, transform_indices = @transform_4, window_bounds = array<i64: 8, 64>}]} {
    %c0 = arith.constant 0 : index
    %c0_0 = arith.constant 0 : index
    %0 = vector.load %arg1[%c0, %c0_0] : memref<8x512xf32, #tpu.memory_space<vmem>>, vector<8x512xf32>
    %cst = arith.constant 0.000000e+00 : f32
    %1 = vector.broadcast %cst : f32 to vector<8x512xf32>
    %2 = arith.cmpf oge, %0, %1 : vector<8x512xf32>
    %cst_1 = arith.constant 2.000000e-01 : f32
    %3 = vector.broadcast %cst_1 : f32 to vector<8x512xf32>
    %4 = arith.mulf %3, %0 : vector<8x512xf32>
    %5 = arith.select %2, %0, %4 : vector<8x512xi1>, vector<8x512xf32>
    %c0_2 = arith.constant 0 : index
    %c0_3 = arith.constant 0 : index
    %6 = vector.load %arg2[%c0_2, %c0_3] : memref<512x64xf32, #tpu.memory_space<vmem>>, vector<512x64xf32>
    %cst_4 = arith.constant dense<0.000000e+00> : vector<8x64xf32>
    %7 = tpu.matmul %5, %6, %cst_4 {dimension_numbers = #tpu.dot_dimension_numbers<[1], [0], [0], [1], [0, 0, 1, 1], [], []>} : vector<8x512xf32>, vector<512x64xf32>, vector<8x64xf32> -> vector<8x64xf32>
    %cst_5 = arith.constant dense<0.000000e+00> : vector<64xf32>
    %8 = vector.multi_reduction <add>, %7, %cst_5 [0] : vector<8x64xf32> to vector<64xf32>
    %9 = vector.shape_cast %8 : vector<64xf32> to vector<1x64xf32>
    %cst_6 = arith.constant 8.000000e+00 : f32
    %10 = vector.broadcast %cst_6 : f32 to vector<1x64xf32>
    %11 = arith.divf %9, %10 : vector<1x64xf32>
    %12 = vector.broadcast %11 : vector<1x64xf32> to vector<8x64xf32>
    %13 = arith.subf %7, %12 : vector<8x64xf32>
    %14 = arith.mulf %13, %13 : vector<8x64xf32>
    %cst_7 = arith.constant dense<0.000000e+00> : vector<64xf32>
    %15 = vector.multi_reduction <add>, %14, %cst_7 [0] : vector<8x64xf32> to vector<64xf32>
    %16 = vector.shape_cast %15 : vector<64xf32> to vector<1x64xf32>
    %cst_8 = arith.constant 8.000000e+00 : f32
    %17 = vector.broadcast %cst_8 : f32 to vector<1x64xf32>
    %18 = arith.divf %16, %17 : vector<1x64xf32>
    %cst_9 = arith.constant 9.99999974E-6 : f32
    %19 = vector.broadcast %cst_9 : f32 to vector<1x64xf32>
    %20 = arith.addf %18, %19 : vector<1x64xf32>
    %21 = math.rsqrt %20 : vector<1x64xf32>
    %c0_10 = arith.constant 0 : index
    %c0_11 = arith.constant 0 : index
    %22 = vector.load %arg3[%c0_10, %c0_11] : memref<1x64xf32, #tpu.memory_space<vmem>>, vector<1x64xf32>
    %23 = arith.mulf %21, %22 : vector<1x64xf32>
    %24 = vector.broadcast %23 : vector<1x64xf32> to vector<8x64xf32>
    %25 = arith.mulf %13, %24 : vector<8x64xf32>
    %c0_12 = arith.constant 0 : index
    %c0_13 = arith.constant 0 : index
    %26 = vector.load %arg4[%c0_12, %c0_13] : memref<1x64xf32, #tpu.memory_space<vmem>>, vector<1x64xf32>
    %27 = vector.broadcast %26 : vector<1x64xf32> to vector<8x64xf32>
    %28 = arith.addf %25, %27 : vector<8x64xf32>
    %c0_14 = arith.constant 0 : index
    %c0_15 = arith.constant 0 : index
    %29 = vector.load %arg5[%c0_14, %c0_15] : memref<8x64xf32, #tpu.memory_space<vmem>>, vector<8x64xf32>
    tpu.vector_store %arg5[%c0_14, %c0_15], %28 {strides = array<i32>} : memref<8x64xf32, #tpu.memory_space<vmem>>, vector<8x64xf32>,
    return
  }
  func.func @transform_0(%arg0: i32) -> (i32, i32) {
    %c0_i32 = arith.constant 0 : i32
    %c0_i32_0 = arith.constant 0 : i32
    %c0_i32_1 = arith.constant 0 : i32
    return %c0_i32, %c0_i32_0 : i32, i32
  }
  func.func @transform_1(%arg0: i32) -> (i32, i32) {
    %c0_i32 = arith.constant 0 : i32
    %c0_i32_0 = arith.constant 0 : i32
    %c0_i32_1 = arith.constant 0 : i32
    return %c0_i32, %c0_i32_0 : i32, i32
  }
  func.func @transform_2(%arg0: i32) -> (i32, i32) {
    %c0_i32 = arith.constant 0 : i32
    %c0_i32_0 = arith.constant 0 : i32
    %c0_i32_1 = arith.constant 0 : i32
    return %c0_i32, %c0_i32_0 : i32, i32
  }
  func.func @transform_3(%arg0: i32) -> (i32, i32) {
    %c0_i32 = arith.constant 0 : i32
    %c0_i32_0 = arith.constant 0 : i32
    %c0_i32_1 = arith.constant 0 : i32
    return %c0_i32, %c0_i32_0 : i32, i32
  }
  func.func @transform_4(%arg0: i32) -> (i32, i32) {
    %c0_i32 = arith.constant 0 : i32
    %c0_i32_0 = arith.constant 0 : i32
    %c0_i32_1 = arith.constant 0 : i32
    return %c0_i32, %c0_i32_0 : i32, i32
  }
}

module attributes {stable_mosaic.version = 11 : i64} {
  func.func @_conv_kernel(%arg0: i32, %arg1: memref<8x1024xf32, #tpu.memory_space<vmem>>, %arg2: memref<1024x64xf32, #tpu.memory_space<vmem>>, %arg3: memref<8x64xf32, #tpu.memory_space<vmem>>) attributes {dimension_semantics = [#tpu.dimension_semantics<parallel>], iteration_bounds = array<i64: 1>, scalar_prefetch = 0 : i64, scratch_operands = 0 : i64, tpu.core_type = #tpu.core_type<tc>, window_params = [{transform_indices = @transform_0, window_bounds = array<i64: 8, 1024>}, {pipeline_mode = #tpu.pipeline_mode<synchronous>, transform_indices = @transform_1, window_bounds = array<i64: 1024, 64>}, {transform_indices = @transform_2, window_bounds = array<i64: 8, 64>}]} {
    %c0 = arith.constant 0 : index
    %c0_0 = arith.constant 0 : index
    %0 = vector.load %arg1[%c0, %c0_0] : memref<8x1024xf32, #tpu.memory_space<vmem>>, vector<8x1024xf32>
    %cst = arith.constant 0.000000e+00 : f32
    %1 = vector.broadcast %cst : f32 to vector<8x1024xf32>
    %2 = arith.cmpf oge, %0, %1 : vector<8x1024xf32>
    %cst_1 = arith.constant 2.000000e-01 : f32
    %3 = vector.broadcast %cst_1 : f32 to vector<8x1024xf32>
    %4 = arith.mulf %3, %0 : vector<8x1024xf32>
    %5 = arith.select %2, %0, %4 : vector<8x1024xi1>, vector<8x1024xf32>
    %c0_2 = arith.constant 0 : index
    %c0_3 = arith.constant 0 : index
    %6 = vector.load %arg2[%c0_2, %c0_3] : memref<1024x64xf32, #tpu.memory_space<vmem>>, vector<1024x64xf32>
    %cst_4 = arith.constant dense<0.000000e+00> : vector<8x64xf32>
    %7 = tpu.matmul %5, %6, %cst_4 {dimension_numbers = #tpu.dot_dimension_numbers<[1], [0], [0], [1], [0, 0, 1, 1], [], []>} : vector<8x1024xf32>, vector<1024x64xf32>, vector<8x64xf32> -> vector<8x64xf32>
    %c0_5 = arith.constant 0 : index
    %c0_6 = arith.constant 0 : index
    %8 = vector.load %arg3[%c0_5, %c0_6] : memref<8x64xf32, #tpu.memory_space<vmem>>, vector<8x64xf32>
    tpu.vector_store %arg3[%c0_5, %c0_6], %7 {strides = array<i32>} : memref<8x64xf32, #tpu.memory_space<vmem>>, vector<8x64xf32>,
    return
  }
  func.func @transform_0(%arg0: i32) -> (i32, i32) {
    %c0_i32 = arith.constant 0 : i32
    %c0_i32_0 = arith.constant 0 : i32
    return %arg0, %c0_i32 : i32, i32
  }
  func.func @transform_1(%arg0: i32) -> (i32, i32) {
    %c0_i32 = arith.constant 0 : i32
    %c0_i32_0 = arith.constant 0 : i32
    %c0_i32_1 = arith.constant 0 : i32
    return %c0_i32, %c0_i32_0 : i32, i32
  }
  func.func @transform_2(%arg0: i32) -> (i32, i32) {
    %c0_i32 = arith.constant 0 : i32
    %c0_i32_0 = arith.constant 0 : i32
    return %arg0, %c0_i32 : i32, i32
  }
}

module attributes {stable_mosaic.version = 11 : i64} {
  func.func @_conv_bn_kernel(%arg0: i32, %arg1: memref<8x1024xf32, #tpu.memory_space<vmem>>, %arg2: memref<1024x64xf32, #tpu.memory_space<vmem>>, %arg3: memref<1x64xf32, #tpu.memory_space<vmem>>, %arg4: memref<1x64xf32, #tpu.memory_space<vmem>>, %arg5: memref<8x64xf32, #tpu.memory_space<vmem>>) attributes {dimension_semantics = [#tpu.dimension_semantics<arbitrary>], iteration_bounds = array<i64: 1>, scalar_prefetch = 0 : i64, scratch_operands = 0 : i64, tpu.core_type = #tpu.core_type<tc>, window_params = [{pipeline_mode = #tpu.pipeline_mode<synchronous>, transform_indices = @transform_0, window_bounds = array<i64: 8, 1024>}, {pipeline_mode = #tpu.pipeline_mode<synchronous>, transform_indices = @transform_1, window_bounds = array<i64: 1024, 64>}, {pipeline_mode = #tpu.pipeline_mode<synchronous>, transform_indices = @transform_2, window_bounds = array<i64: 1, 64>}, {pipeline_mode = #tpu.pipeline_mode<synchronous>, transform_indices = @transform_3, window_bounds = array<i64: 1, 64>}, {pipeline_mode = #tpu.pipeline_mode<synchronous>, transform_indices = @transform_4, window_bounds = array<i64: 8, 64>}]} {
    %c0 = arith.constant 0 : index
    %c0_0 = arith.constant 0 : index
    %0 = vector.load %arg1[%c0, %c0_0] : memref<8x1024xf32, #tpu.memory_space<vmem>>, vector<8x1024xf32>
    %cst = arith.constant 0.000000e+00 : f32
    %1 = vector.broadcast %cst : f32 to vector<8x1024xf32>
    %2 = arith.maximumf %0, %1 : vector<8x1024xf32>
    %c0_1 = arith.constant 0 : index
    %c0_2 = arith.constant 0 : index
    %3 = vector.load %arg2[%c0_1, %c0_2] : memref<1024x64xf32, #tpu.memory_space<vmem>>, vector<1024x64xf32>
    %cst_3 = arith.constant dense<0.000000e+00> : vector<8x64xf32>
    %4 = tpu.matmul %2, %3, %cst_3 {dimension_numbers = #tpu.dot_dimension_numbers<[1], [0], [0], [1], [0, 0, 1, 1], [], []>} : vector<8x1024xf32>, vector<1024x64xf32>, vector<8x64xf32> -> vector<8x64xf32>
    %cst_4 = arith.constant dense<0.000000e+00> : vector<64xf32>
    %5 = vector.multi_reduction <add>, %4, %cst_4 [0] : vector<8x64xf32> to vector<64xf32>
    %6 = vector.shape_cast %5 : vector<64xf32> to vector<1x64xf32>
    %cst_5 = arith.constant 8.000000e+00 : f32
    %7 = vector.broadcast %cst_5 : f32 to vector<1x64xf32>
    %8 = arith.divf %6, %7 : vector<1x64xf32>
    %9 = vector.broadcast %8 : vector<1x64xf32> to vector<8x64xf32>
    %10 = arith.subf %4, %9 : vector<8x64xf32>
    %11 = arith.mulf %10, %10 : vector<8x64xf32>
    %cst_6 = arith.constant dense<0.000000e+00> : vector<64xf32>
    %12 = vector.multi_reduction <add>, %11, %cst_6 [0] : vector<8x64xf32> to vector<64xf32>
    %13 = vector.shape_cast %12 : vector<64xf32> to vector<1x64xf32>
    %cst_7 = arith.constant 8.000000e+00 : f32
    %14 = vector.broadcast %cst_7 : f32 to vector<1x64xf32>
    %15 = arith.divf %13, %14 : vector<1x64xf32>
    %cst_8 = arith.constant 9.99999974E-6 : f32
    %16 = vector.broadcast %cst_8 : f32 to vector<1x64xf32>
    %17 = arith.addf %15, %16 : vector<1x64xf32>
    %18 = math.rsqrt %17 : vector<1x64xf32>
    %c0_9 = arith.constant 0 : index
    %c0_10 = arith.constant 0 : index
    %19 = vector.load %arg3[%c0_9, %c0_10] : memref<1x64xf32, #tpu.memory_space<vmem>>, vector<1x64xf32>
    %20 = arith.mulf %18, %19 : vector<1x64xf32>
    %21 = vector.broadcast %20 : vector<1x64xf32> to vector<8x64xf32>
    %22 = arith.mulf %10, %21 : vector<8x64xf32>
    %c0_11 = arith.constant 0 : index
    %c0_12 = arith.constant 0 : index
    %23 = vector.load %arg4[%c0_11, %c0_12] : memref<1x64xf32, #tpu.memory_space<vmem>>, vector<1x64xf32>
    %24 = vector.broadcast %23 : vector<1x64xf32> to vector<8x64xf32>
    %25 = arith.addf %22, %24 : vector<8x64xf32>
    %c0_13 = arith.constant 0 : index
    %c0_14 = arith.constant 0 : index
    %26 = vector.load %arg5[%c0_13, %c0_14] : memref<8x64xf32, #tpu.memory_space<vmem>>, vector<8x64xf32>
    tpu.vector_store %arg5[%c0_13, %c0_14], %25 {strides = array<i32>} : memref<8x64xf32, #tpu.memory_space<vmem>>, vector<8x64xf32>,
    return
  }
  func.func @transform_0(%arg0: i32) -> (i32, i32) {
    %c0_i32 = arith.constant 0 : i32
    %c0_i32_0 = arith.constant 0 : i32
    %c0_i32_1 = arith.constant 0 : i32
    return %c0_i32, %c0_i32_0 : i32, i32
  }
  func.func @transform_1(%arg0: i32) -> (i32, i32) {
    %c0_i32 = arith.constant 0 : i32
    %c0_i32_0 = arith.constant 0 : i32
    %c0_i32_1 = arith.constant 0 : i32
    return %c0_i32, %c0_i32_0 : i32, i32
  }
  func.func @transform_2(%arg0: i32) -> (i32, i32) {
    %c0_i32 = arith.constant 0 : i32
    %c0_i32_0 = arith.constant 0 : i32
    %c0_i32_1 = arith.constant 0 : i32
    return %c0_i32, %c0_i32_0 : i32, i32
  }
  func.func @transform_3(%arg0: i32) -> (i32, i32) {
    %c0_i32 = arith.constant 0 : i32
    %c0_i32_0 = arith.constant 0 : i32
    %c0_i32_1 = arith.constant 0 : i32
    return %c0_i32, %c0_i32_0 : i32, i32
  }
  func.func @transform_4(%arg0: i32) -> (i32, i32) {
    %c0_i32 = arith.constant 0 : i32
    %c0_i32_0 = arith.constant 0 : i32
    %c0_i32_1 = arith.constant 0 : i32
    return %c0_i32, %c0_i32_0 : i32, i32
  }
}

module attributes {stable_mosaic.version = 11 : i64} {
  func.func @_conv_bn_kernel(%arg0: i32, %arg1: memref<32x2048xf32, #tpu.memory_space<vmem>>, %arg2: memref<2048x32xf32, #tpu.memory_space<vmem>>, %arg3: memref<1x32xf32, #tpu.memory_space<vmem>>, %arg4: memref<1x32xf32, #tpu.memory_space<vmem>>, %arg5: memref<32x32xf32, #tpu.memory_space<vmem>>) attributes {dimension_semantics = [#tpu.dimension_semantics<arbitrary>], iteration_bounds = array<i64: 1>, scalar_prefetch = 0 : i64, scratch_operands = 0 : i64, tpu.core_type = #tpu.core_type<tc>, window_params = [{pipeline_mode = #tpu.pipeline_mode<synchronous>, transform_indices = @transform_0, window_bounds = array<i64: 32, 2048>}, {pipeline_mode = #tpu.pipeline_mode<synchronous>, transform_indices = @transform_1, window_bounds = array<i64: 2048, 32>}, {pipeline_mode = #tpu.pipeline_mode<synchronous>, transform_indices = @transform_2, window_bounds = array<i64: 1, 32>}, {pipeline_mode = #tpu.pipeline_mode<synchronous>, transform_indices = @transform_3, window_bounds = array<i64: 1, 32>}, {pipeline_mode = #tpu.pipeline_mode<synchronous>, transform_indices = @transform_4, window_bounds = array<i64: 32, 32>}]} {
    %c0 = arith.constant 0 : index
    %c0_0 = arith.constant 0 : index
    %0 = vector.load %arg1[%c0, %c0_0] : memref<32x2048xf32, #tpu.memory_space<vmem>>, vector<32x2048xf32>
    %cst = arith.constant 0.000000e+00 : f32
    %1 = vector.broadcast %cst : f32 to vector<32x2048xf32>
    %2 = arith.maximumf %0, %1 : vector<32x2048xf32>
    %c0_1 = arith.constant 0 : index
    %c0_2 = arith.constant 0 : index
    %3 = vector.load %arg2[%c0_1, %c0_2] : memref<2048x32xf32, #tpu.memory_space<vmem>>, vector<2048x32xf32>
    %cst_3 = arith.constant dense<0.000000e+00> : vector<32x32xf32>
    %4 = tpu.matmul %2, %3, %cst_3 {dimension_numbers = #tpu.dot_dimension_numbers<[1], [0], [0], [1], [0, 0, 1, 1], [], []>} : vector<32x2048xf32>, vector<2048x32xf32>, vector<32x32xf32> -> vector<32x32xf32>
    %cst_4 = arith.constant dense<0.000000e+00> : vector<32xf32>
    %5 = vector.multi_reduction <add>, %4, %cst_4 [0] : vector<32x32xf32> to vector<32xf32>
    %6 = vector.shape_cast %5 : vector<32xf32> to vector<1x32xf32>
    %cst_5 = arith.constant 3.200000e+01 : f32
    %7 = vector.broadcast %cst_5 : f32 to vector<1x32xf32>
    %8 = arith.divf %6, %7 : vector<1x32xf32>
    %9 = vector.broadcast %8 : vector<1x32xf32> to vector<32x32xf32>
    %10 = arith.subf %4, %9 : vector<32x32xf32>
    %11 = arith.mulf %10, %10 : vector<32x32xf32>
    %cst_6 = arith.constant dense<0.000000e+00> : vector<32xf32>
    %12 = vector.multi_reduction <add>, %11, %cst_6 [0] : vector<32x32xf32> to vector<32xf32>
    %13 = vector.shape_cast %12 : vector<32xf32> to vector<1x32xf32>
    %cst_7 = arith.constant 3.200000e+01 : f32
    %14 = vector.broadcast %cst_7 : f32 to vector<1x32xf32>
    %15 = arith.divf %13, %14 : vector<1x32xf32>
    %cst_8 = arith.constant 9.99999974E-6 : f32
    %16 = vector.broadcast %cst_8 : f32 to vector<1x32xf32>
    %17 = arith.addf %15, %16 : vector<1x32xf32>
    %18 = math.rsqrt %17 : vector<1x32xf32>
    %c0_9 = arith.constant 0 : index
    %c0_10 = arith.constant 0 : index
    %19 = vector.load %arg3[%c0_9, %c0_10] : memref<1x32xf32, #tpu.memory_space<vmem>>, vector<1x32xf32>
    %20 = arith.mulf %18, %19 : vector<1x32xf32>
    %21 = vector.broadcast %20 : vector<1x32xf32> to vector<32x32xf32>
    %22 = arith.mulf %10, %21 : vector<32x32xf32>
    %c0_11 = arith.constant 0 : index
    %c0_12 = arith.constant 0 : index
    %23 = vector.load %arg4[%c0_11, %c0_12] : memref<1x32xf32, #tpu.memory_space<vmem>>, vector<1x32xf32>
    %24 = vector.broadcast %23 : vector<1x32xf32> to vector<32x32xf32>
    %25 = arith.addf %22, %24 : vector<32x32xf32>
    %c0_13 = arith.constant 0 : index
    %c0_14 = arith.constant 0 : index
    %26 = vector.load %arg5[%c0_13, %c0_14] : memref<32x32xf32, #tpu.memory_space<vmem>>, vector<32x32xf32>
    tpu.vector_store %arg5[%c0_13, %c0_14], %25 {strides = array<i32>} : memref<32x32xf32, #tpu.memory_space<vmem>>, vector<32x32xf32>,
    return
  }
  func.func @transform_0(%arg0: i32) -> (i32, i32) {
    %c0_i32 = arith.constant 0 : i32
    %c0_i32_0 = arith.constant 0 : i32
    %c0_i32_1 = arith.constant 0 : i32
    return %c0_i32, %c0_i32_0 : i32, i32
  }
  func.func @transform_1(%arg0: i32) -> (i32, i32) {
    %c0_i32 = arith.constant 0 : i32
    %c0_i32_0 = arith.constant 0 : i32
    %c0_i32_1 = arith.constant 0 : i32
    return %c0_i32, %c0_i32_0 : i32, i32
  }
  func.func @transform_2(%arg0: i32) -> (i32, i32) {
    %c0_i32 = arith.constant 0 : i32
    %c0_i32_0 = arith.constant 0 : i32
    %c0_i32_1 = arith.constant 0 : i32
    return %c0_i32, %c0_i32_0 : i32, i32
  }
  func.func @transform_3(%arg0: i32) -> (i32, i32) {
    %c0_i32 = arith.constant 0 : i32
    %c0_i32_0 = arith.constant 0 : i32
    %c0_i32_1 = arith.constant 0 : i32
    return %c0_i32, %c0_i32_0 : i32, i32
  }
  func.func @transform_4(%arg0: i32) -> (i32, i32) {
    %c0_i32 = arith.constant 0 : i32
    %c0_i32_0 = arith.constant 0 : i32
    %c0_i32_1 = arith.constant 0 : i32
    return %c0_i32, %c0_i32_0 : i32, i32
  }
}

module attributes {stable_mosaic.version = 11 : i64} {
  func.func @_conv_bn_kernel(%arg0: i32, %arg1: memref<128x1024xf32, #tpu.memory_space<vmem>>, %arg2: memref<1024x16xf32, #tpu.memory_space<vmem>>, %arg3: memref<1x16xf32, #tpu.memory_space<vmem>>, %arg4: memref<1x16xf32, #tpu.memory_space<vmem>>, %arg5: memref<128x16xf32, #tpu.memory_space<vmem>>) attributes {dimension_semantics = [#tpu.dimension_semantics<arbitrary>], iteration_bounds = array<i64: 1>, scalar_prefetch = 0 : i64, scratch_operands = 0 : i64, tpu.core_type = #tpu.core_type<tc>, window_params = [{pipeline_mode = #tpu.pipeline_mode<synchronous>, transform_indices = @transform_0, window_bounds = array<i64: 128, 1024>}, {pipeline_mode = #tpu.pipeline_mode<synchronous>, transform_indices = @transform_1, window_bounds = array<i64: 1024, 16>}, {pipeline_mode = #tpu.pipeline_mode<synchronous>, transform_indices = @transform_2, window_bounds = array<i64: 1, 16>}, {pipeline_mode = #tpu.pipeline_mode<synchronous>, transform_indices = @transform_3, window_bounds = array<i64: 1, 16>}, {pipeline_mode = #tpu.pipeline_mode<synchronous>, transform_indices = @transform_4, window_bounds = array<i64: 128, 16>}]} {
    %c0 = arith.constant 0 : index
    %c0_0 = arith.constant 0 : index
    %0 = vector.load %arg1[%c0, %c0_0] : memref<128x1024xf32, #tpu.memory_space<vmem>>, vector<128x1024xf32>
    %cst = arith.constant 0.000000e+00 : f32
    %1 = vector.broadcast %cst : f32 to vector<128x1024xf32>
    %2 = arith.maximumf %0, %1 : vector<128x1024xf32>
    %c0_1 = arith.constant 0 : index
    %c0_2 = arith.constant 0 : index
    %3 = vector.load %arg2[%c0_1, %c0_2] : memref<1024x16xf32, #tpu.memory_space<vmem>>, vector<1024x16xf32>
    %cst_3 = arith.constant dense<0.000000e+00> : vector<128x16xf32>
    %4 = tpu.matmul %2, %3, %cst_3 {dimension_numbers = #tpu.dot_dimension_numbers<[1], [0], [0], [1], [0, 0, 1, 1], [], []>} : vector<128x1024xf32>, vector<1024x16xf32>, vector<128x16xf32> -> vector<128x16xf32>
    %cst_4 = arith.constant dense<0.000000e+00> : vector<16xf32>
    %5 = vector.multi_reduction <add>, %4, %cst_4 [0] : vector<128x16xf32> to vector<16xf32>
    %6 = vector.shape_cast %5 : vector<16xf32> to vector<1x16xf32>
    %cst_5 = arith.constant 1.280000e+02 : f32
    %7 = vector.broadcast %cst_5 : f32 to vector<1x16xf32>
    %8 = arith.divf %6, %7 : vector<1x16xf32>
    %9 = vector.broadcast %8 : vector<1x16xf32> to vector<128x16xf32>
    %10 = arith.subf %4, %9 : vector<128x16xf32>
    %11 = arith.mulf %10, %10 : vector<128x16xf32>
    %cst_6 = arith.constant dense<0.000000e+00> : vector<16xf32>
    %12 = vector.multi_reduction <add>, %11, %cst_6 [0] : vector<128x16xf32> to vector<16xf32>
    %13 = vector.shape_cast %12 : vector<16xf32> to vector<1x16xf32>
    %cst_7 = arith.constant 1.280000e+02 : f32
    %14 = vector.broadcast %cst_7 : f32 to vector<1x16xf32>
    %15 = arith.divf %13, %14 : vector<1x16xf32>
    %cst_8 = arith.constant 9.99999974E-6 : f32
    %16 = vector.broadcast %cst_8 : f32 to vector<1x16xf32>
    %17 = arith.addf %15, %16 : vector<1x16xf32>
    %18 = math.rsqrt %17 : vector<1x16xf32>
    %c0_9 = arith.constant 0 : index
    %c0_10 = arith.constant 0 : index
    %19 = vector.load %arg3[%c0_9, %c0_10] : memref<1x16xf32, #tpu.memory_space<vmem>>, vector<1x16xf32>
    %20 = arith.mulf %18, %19 : vector<1x16xf32>
    %21 = vector.broadcast %20 : vector<1x16xf32> to vector<128x16xf32>
    %22 = arith.mulf %10, %21 : vector<128x16xf32>
    %c0_11 = arith.constant 0 : index
    %c0_12 = arith.constant 0 : index
    %23 = vector.load %arg4[%c0_11, %c0_12] : memref<1x16xf32, #tpu.memory_space<vmem>>, vector<1x16xf32>
    %24 = vector.broadcast %23 : vector<1x16xf32> to vector<128x16xf32>
    %25 = arith.addf %22, %24 : vector<128x16xf32>
    %c0_13 = arith.constant 0 : index
    %c0_14 = arith.constant 0 : index
    %26 = vector.load %arg5[%c0_13, %c0_14] : memref<128x16xf32, #tpu.memory_space<vmem>>, vector<128x16xf32>
    tpu.vector_store %arg5[%c0_13, %c0_14], %25 {strides = array<i32>} : memref<128x16xf32, #tpu.memory_space<vmem>>, vector<128x16xf32>,
    return
  }
  func.func @transform_0(%arg0: i32) -> (i32, i32) {
    %c0_i32 = arith.constant 0 : i32
    %c0_i32_0 = arith.constant 0 : i32
    %c0_i32_1 = arith.constant 0 : i32
    return %c0_i32, %c0_i32_0 : i32, i32
  }
  func.func @transform_1(%arg0: i32) -> (i32, i32) {
    %c0_i32 = arith.constant 0 : i32
    %c0_i32_0 = arith.constant 0 : i32
    %c0_i32_1 = arith.constant 0 : i32
    return %c0_i32, %c0_i32_0 : i32, i32
  }
  func.func @transform_2(%arg0: i32) -> (i32, i32) {
    %c0_i32 = arith.constant 0 : i32
    %c0_i32_0 = arith.constant 0 : i32
    %c0_i32_1 = arith.constant 0 : i32
    return %c0_i32, %c0_i32_0 : i32, i32
  }
  func.func @transform_3(%arg0: i32) -> (i32, i32) {
    %c0_i32 = arith.constant 0 : i32
    %c0_i32_0 = arith.constant 0 : i32
    %c0_i32_1 = arith.constant 0 : i32
    return %c0_i32, %c0_i32_0 : i32, i32
  }
  func.func @transform_4(%arg0: i32) -> (i32, i32) {
    %c0_i32 = arith.constant 0 : i32
    %c0_i32_0 = arith.constant 0 : i32
    %c0_i32_1 = arith.constant 0 : i32
    return %c0_i32, %c0_i32_0 : i32, i32
  }
}

module attributes {stable_mosaic.version = 11 : i64} {
  func.func @_conv_bn_kernel(%arg0: i32, %arg1: memref<512x512xf32, #tpu.memory_space<vmem>>, %arg2: memref<512x8xf32, #tpu.memory_space<vmem>>, %arg3: memref<1x8xf32, #tpu.memory_space<vmem>>, %arg4: memref<1x8xf32, #tpu.memory_space<vmem>>, %arg5: memref<512x8xf32, #tpu.memory_space<vmem>>) attributes {dimension_semantics = [#tpu.dimension_semantics<arbitrary>], iteration_bounds = array<i64: 1>, scalar_prefetch = 0 : i64, scratch_operands = 0 : i64, tpu.core_type = #tpu.core_type<tc>, window_params = [{pipeline_mode = #tpu.pipeline_mode<synchronous>, transform_indices = @transform_0, window_bounds = array<i64: 512, 512>}, {pipeline_mode = #tpu.pipeline_mode<synchronous>, transform_indices = @transform_1, window_bounds = array<i64: 512, 8>}, {pipeline_mode = #tpu.pipeline_mode<synchronous>, transform_indices = @transform_2, window_bounds = array<i64: 1, 8>}, {pipeline_mode = #tpu.pipeline_mode<synchronous>, transform_indices = @transform_3, window_bounds = array<i64: 1, 8>}, {pipeline_mode = #tpu.pipeline_mode<synchronous>, transform_indices = @transform_4, window_bounds = array<i64: 512, 8>}]} {
    %c0 = arith.constant 0 : index
    %c0_0 = arith.constant 0 : index
    %0 = vector.load %arg1[%c0, %c0_0] : memref<512x512xf32, #tpu.memory_space<vmem>>, vector<512x512xf32>
    %cst = arith.constant 0.000000e+00 : f32
    %1 = vector.broadcast %cst : f32 to vector<512x512xf32>
    %2 = arith.maximumf %0, %1 : vector<512x512xf32>
    %c0_1 = arith.constant 0 : index
    %c0_2 = arith.constant 0 : index
    %3 = vector.load %arg2[%c0_1, %c0_2] : memref<512x8xf32, #tpu.memory_space<vmem>>, vector<512x8xf32>
    %cst_3 = arith.constant dense<0.000000e+00> : vector<512x8xf32>
    %4 = tpu.matmul %2, %3, %cst_3 {dimension_numbers = #tpu.dot_dimension_numbers<[1], [0], [0], [1], [0, 0, 1, 1], [], []>} : vector<512x512xf32>, vector<512x8xf32>, vector<512x8xf32> -> vector<512x8xf32>
    %cst_4 = arith.constant dense<0.000000e+00> : vector<8xf32>
    %5 = vector.multi_reduction <add>, %4, %cst_4 [0] : vector<512x8xf32> to vector<8xf32>
    %6 = vector.shape_cast %5 : vector<8xf32> to vector<1x8xf32>
    %cst_5 = arith.constant 5.120000e+02 : f32
    %7 = vector.broadcast %cst_5 : f32 to vector<1x8xf32>
    %8 = arith.divf %6, %7 : vector<1x8xf32>
    %9 = vector.broadcast %8 : vector<1x8xf32> to vector<512x8xf32>
    %10 = arith.subf %4, %9 : vector<512x8xf32>
    %11 = arith.mulf %10, %10 : vector<512x8xf32>
    %cst_6 = arith.constant dense<0.000000e+00> : vector<8xf32>
    %12 = vector.multi_reduction <add>, %11, %cst_6 [0] : vector<512x8xf32> to vector<8xf32>
    %13 = vector.shape_cast %12 : vector<8xf32> to vector<1x8xf32>
    %cst_7 = arith.constant 5.120000e+02 : f32
    %14 = vector.broadcast %cst_7 : f32 to vector<1x8xf32>
    %15 = arith.divf %13, %14 : vector<1x8xf32>
    %cst_8 = arith.constant 9.99999974E-6 : f32
    %16 = vector.broadcast %cst_8 : f32 to vector<1x8xf32>
    %17 = arith.addf %15, %16 : vector<1x8xf32>
    %18 = math.rsqrt %17 : vector<1x8xf32>
    %c0_9 = arith.constant 0 : index
    %c0_10 = arith.constant 0 : index
    %19 = vector.load %arg3[%c0_9, %c0_10] : memref<1x8xf32, #tpu.memory_space<vmem>>, vector<1x8xf32>
    %20 = arith.mulf %18, %19 : vector<1x8xf32>
    %21 = vector.broadcast %20 : vector<1x8xf32> to vector<512x8xf32>
    %22 = arith.mulf %10, %21 : vector<512x8xf32>
    %c0_11 = arith.constant 0 : index
    %c0_12 = arith.constant 0 : index
    %23 = vector.load %arg4[%c0_11, %c0_12] : memref<1x8xf32, #tpu.memory_space<vmem>>, vector<1x8xf32>
    %24 = vector.broadcast %23 : vector<1x8xf32> to vector<512x8xf32>
    %25 = arith.addf %22, %24 : vector<512x8xf32>
    %c0_13 = arith.constant 0 : index
    %c0_14 = arith.constant 0 : index
    %26 = vector.load %arg5[%c0_13, %c0_14] : memref<512x8xf32, #tpu.memory_space<vmem>>, vector<512x8xf32>
    tpu.vector_store %arg5[%c0_13, %c0_14], %25 {strides = array<i32>} : memref<512x8xf32, #tpu.memory_space<vmem>>, vector<512x8xf32>,
    return
  }
  func.func @transform_0(%arg0: i32) -> (i32, i32) {
    %c0_i32 = arith.constant 0 : i32
    %c0_i32_0 = arith.constant 0 : i32
    %c0_i32_1 = arith.constant 0 : i32
    return %c0_i32, %c0_i32_0 : i32, i32
  }
  func.func @transform_1(%arg0: i32) -> (i32, i32) {
    %c0_i32 = arith.constant 0 : i32
    %c0_i32_0 = arith.constant 0 : i32
    %c0_i32_1 = arith.constant 0 : i32
    return %c0_i32, %c0_i32_0 : i32, i32
  }
  func.func @transform_2(%arg0: i32) -> (i32, i32) {
    %c0_i32 = arith.constant 0 : i32
    %c0_i32_0 = arith.constant 0 : i32
    %c0_i32_1 = arith.constant 0 : i32
    return %c0_i32, %c0_i32_0 : i32, i32
  }
  func.func @transform_3(%arg0: i32) -> (i32, i32) {
    %c0_i32 = arith.constant 0 : i32
    %c0_i32_0 = arith.constant 0 : i32
    %c0_i32_1 = arith.constant 0 : i32
    return %c0_i32, %c0_i32_0 : i32, i32
  }
  func.func @transform_4(%arg0: i32) -> (i32, i32) {
    %c0_i32 = arith.constant 0 : i32
    %c0_i32_0 = arith.constant 0 : i32
    %c0_i32_1 = arith.constant 0 : i32
    return %c0_i32, %c0_i32_0 : i32, i32
  }
}

module attributes {stable_mosaic.version = 11 : i64} {
  func.func @_conv_bias_tanh_kernel(%arg0: i32, %arg1: memref<2048x256xf32, #tpu.memory_space<vmem>>, %arg2: memref<256x2xf32, #tpu.memory_space<vmem>>, %arg3: memref<1x2xf32, #tpu.memory_space<vmem>>, %arg4: memref<2048x2xf32, #tpu.memory_space<vmem>>) attributes {dimension_semantics = [#tpu.dimension_semantics<parallel>], iteration_bounds = array<i64: 1>, scalar_prefetch = 0 : i64, scratch_operands = 0 : i64, tpu.core_type = #tpu.core_type<tc>, window_params = [{transform_indices = @transform_0, window_bounds = array<i64: 2048, 256>}, {pipeline_mode = #tpu.pipeline_mode<synchronous>, transform_indices = @transform_1, window_bounds = array<i64: 256, 2>}, {pipeline_mode = #tpu.pipeline_mode<synchronous>, transform_indices = @transform_2, window_bounds = array<i64: 1, 2>}, {transform_indices = @transform_3, window_bounds = array<i64: 2048, 2>}]} {
    %c0 = arith.constant 0 : index
    %c0_0 = arith.constant 0 : index
    %0 = vector.load %arg1[%c0, %c0_0] : memref<2048x256xf32, #tpu.memory_space<vmem>>, vector<2048x256xf32>
    %cst = arith.constant 0.000000e+00 : f32
    %1 = vector.broadcast %cst : f32 to vector<2048x256xf32>
    %2 = arith.maximumf %0, %1 : vector<2048x256xf32>
    %c0_1 = arith.constant 0 : index
    %c0_2 = arith.constant 0 : index
    %3 = vector.load %arg2[%c0_1, %c0_2] : memref<256x2xf32, #tpu.memory_space<vmem>>, vector<256x2xf32>
    %cst_3 = arith.constant dense<0.000000e+00> : vector<2048x2xf32>
    %4 = tpu.matmul %2, %3, %cst_3 {dimension_numbers = #tpu.dot_dimension_numbers<[1], [0], [0], [1], [0, 0, 1, 1], [], []>} : vector<2048x256xf32>, vector<256x2xf32>, vector<2048x2xf32> -> vector<2048x2xf32>
    %c0_4 = arith.constant 0 : index
    %c0_5 = arith.constant 0 : index
    %5 = vector.load %arg3[%c0_4, %c0_5] : memref<1x2xf32, #tpu.memory_space<vmem>>, vector<1x2xf32>
    %6 = vector.broadcast %5 : vector<1x2xf32> to vector<2048x2xf32>
    %7 = arith.addf %4, %6 : vector<2048x2xf32>
    %8 = math.tanh %7 : vector<2048x2xf32>
    %c0_6 = arith.constant 0 : index
    %c0_7 = arith.constant 0 : index
    %9 = vector.load %arg4[%c0_6, %c0_7] : memref<2048x2xf32, #tpu.memory_space<vmem>>, vector<2048x2xf32>
    tpu.vector_store %arg4[%c0_6, %c0_7], %8 {strides = array<i32>} : memref<2048x2xf32, #tpu.memory_space<vmem>>, vector<2048x2xf32>,
    return
  }
  func.func @transform_0(%arg0: i32) -> (i32, i32) {
    %c0_i32 = arith.constant 0 : i32
    %c0_i32_0 = arith.constant 0 : i32
    return %arg0, %c0_i32 : i32, i32
  }
  func.func @transform_1(%arg0: i32) -> (i32, i32) {
    %c0_i32 = arith.constant 0 : i32
    %c0_i32_0 = arith.constant 0 : i32
    %c0_i32_1 = arith.constant 0 : i32
    return %c0_i32, %c0_i32_0 : i32, i32
  }
  func.func @transform_2(%arg0: i32) -> (i32, i32) {
    %c0_i32 = arith.constant 0 : i32
    %c0_i32_0 = arith.constant 0 : i32
    %c0_i32_1 = arith.constant 0 : i32
    return %c0_i32, %c0_i32_0 : i32, i32
  }
  func.func @transform_3(%arg0: i32) -> (i32, i32) {
    %c0_i32 = arith.constant 0 : i32
    %c0_i32_0 = arith.constant 0 : i32
    return %arg0, %c0_i32 : i32, i32
  }
}

</mosaic_0001>

<llo_original>
// kernel: unet_forward.10
$region0: #{unet_forward.10}
  #allocation0 [shape = 'u32[]', space=smem, size = 0x4, offset = 0x4, fixed_abs, tag = 'smem constant byte address 0x4 - core index']
  #allocation1 [shape = 'u32[72,128]{1,0:T(1,128)}', space=vmem, size = 0x9000, scoped, tag = 'internal scratch']
  %s0 = inlined_call_operand.vmem [shape: f32[512,16], index: 0, kind: input, shape index: {}]
  %s1 = inlined_call_operand.vmem [shape: f32[16,8], index: 1, kind: input, shape index: {}]
  %s2 = inlined_call_operand.vmem [shape: f32[512,8], index: 2, kind: output, shape index: {}]
  %s3 = sld [smem:[#allocation0]]
  $region18: #{unet_forward.10} parent=0
    _
  %s5 = ssub.s32 1, %s3
  %s6 = scalar_select 0, %s5, %s3
  // Predicated region
  $region2: #{unet_forward.10} parent=0 // pred_check
    _
  $region3: #{unet_forward.10} parent=0 // pred_check_branch
    %8 = sbr.rel (0) target = $region5
  $region4: #{unet_forward.10} parent=0 // pred_region
    _
  $region5: #{unet_forward.10} parent=0 // pred_fallthru
    _
  // Predicated region
  $region6: #{unet_forward.10} parent=0 // pred_check
    _
  $region7: #{unet_forward.10} parent=0 // pred_check_branch
    %10 = sbr.rel (0) target = $region9
  $region8: #{unet_forward.10} parent=0 // pred_region
    _
  $region9: #{unet_forward.10} parent=0 // pred_fallthru
    _
  %v11 = vld [vmem:[%s0] sm:$0xff]
  %v12 = vld [vmem:[%s0 + $0x8] sm:$0xff]
  %v13 = vld [vmem:[%s0 + $0x10] sm:$0xff]
  %v14 = vld [vmem:[%s0 + $0x18] sm:$0xff]
  %v15 = vld [vmem:[%s0 + $0x20] sm:$0xff]
  %v16 = vld [vmem:[%s0 + $0x28] sm:$0xff]
  %v17 = vld [vmem:[%s0 + $0x30] sm:$0xff]
  %v18 = vld [vmem:[%s0 + $0x38] sm:$0xff]
  %v19 = vld [vmem:[%s0 + $0x40] sm:$0xff]
  %v20 = vld [vmem:[%s0 + $0x48] sm:$0xff]
  %v21 = vld [vmem:[%s0 + $0x50] sm:$0xff]
  %v22 = vld [vmem:[%s0 + $0x58] sm:$0xff]
  %v23 = vld [vmem:[%s0 + $0x60] sm:$0xff]
  %v24 = vld [vmem:[%s0 + $0x68] sm:$0xff]
  %v25 = vld [vmem:[%s0 + $0x70] sm:$0xff]
  %v26 = vld [vmem:[%s0 + $0x78] sm:$0xff]
  %v27 = vld [vmem:[%s0 + $0x80] sm:$0xff]
  %v28 = vld [vmem:[%s0 + $0x88] sm:$0xff]
  %v29 = vld [vmem:[%s0 + $0x90] sm:$0xff]
  %v30 = vld [vmem:[%s0 + $0x98] sm:$0xff]
  %v31 = vld [vmem:[%s0 + $0xa0] sm:$0xff]
  %v32 = vld [vmem:[%s0 + $0xa8] sm:$0xff]
  %v33 = vld [vmem:[%s0 + $0xb0] sm:$0xff]
  %v34 = vld [vmem:[%s0 + $0xb8] sm:$0xff]
  %v35 = vld [vmem:[%s0 + $0xc0] sm:$0xff]
  %v36 = vld [vmem:[%s0 + $0xc8] sm:$0xff]
  %v37 = vld [vmem:[%s0 + $0xd0] sm:$0xff]
  %v38 = vld [vmem:[%s0 + $0xd8] sm:$0xff]
  %v39 = vld [vmem:[%s0 + $0xe0] sm:$0xff]
  %v40 = vld [vmem:[%s0 + $0xe8] sm:$0xff]
  %v41 = vld [vmem:[%s0 + $0xf0] sm:$0xff]
  %v42 = vld [vmem:[%s0 + $0xf8] sm:$0xff]
  %v43 = vld [vmem:[%s0 + $0x100] sm:$0xff]
  %v44 = vld [vmem:[%s0 + $0x108] sm:$0xff]
  %v45 = vld [vmem:[%s0 + $0x110] sm:$0xff]
  %v46 = vld [vmem:[%s0 + $0x118] sm:$0xff]
  %v47 = vld [vmem:[%s0 + $0x120] sm:$0xff]
  %v48 = vld [vmem:[%s0 + $0x128] sm:$0xff]
  %v49 = vld [vmem:[%s0 + $0x130] sm:$0xff]
  %v50 = vld [vmem:[%s0 + $0x138] sm:$0xff]
  %v51 = vld [vmem:[%s0 + $0x140] sm:$0xff]
  %v52 = vld [vmem:[%s0 + $0x148] sm:$0xff]
  %v53 = vld [vmem:[%s0 + $0x150] sm:$0xff]
  %v54 = vld [vmem:[%s0 + $0x158] sm:$0xff]
  %v55 = vld [vmem:[%s0 + $0x160] sm:$0xff]
  %v56 = vld [vmem:[%s0 + $0x168] sm:$0xff]
  %v57 = vld [vmem:[%s0 + $0x170] sm:$0xff]
  %v58 = vld [vmem:[%s0 + $0x178] sm:$0xff]
  %v59 = vld [vmem:[%s0 + $0x180] sm:$0xff]
  %v60 = vld [vmem:[%s0 + $0x188] sm:$0xff]
  %v61 = vld [vmem:[%s0 + $0x190] sm:$0xff]
  %v62 = vld [vmem:[%s0 + $0x198] sm:$0xff]
  %v63 = vld [vmem:[%s0 + $0x1a0] sm:$0xff]
  %v64 = vld [vmem:[%s0 + $0x1a8] sm:$0xff]
  %v65 = vld [vmem:[%s0 + $0x1b0] sm:$0xff]
  %v66 = vld [vmem:[%s0 + $0x1b8] sm:$0xff]
  %v67 = vld [vmem:[%s0 + $0x1c0] sm:$0xff]
  %v68 = vld [vmem:[%s0 + $0x1c8] sm:$0xff]
  %v69 = vld [vmem:[%s0 + $0x1d0] sm:$0xff]
  %v70 = vld [vmem:[%s0 + $0x1d8] sm:$0xff]
  %v71 = vld [vmem:[%s0 + $0x1e0] sm:$0xff]
  %v72 = vld [vmem:[%s0 + $0x1e8] sm:$0xff]
  %v73 = vld [vmem:[%s0 + $0x1f0] sm:$0xff]
  %v74 = vld [vmem:[%s0 + $0x1f8] sm:$0xff]
  %v75 = vld [vmem:[%s1] sm:$0xff]
  %v76 = vld [vmem:[%s1 + $0x8] sm:$0xff]
  %vm77 = vcmask 130048
  %v79 = vsel %vm77, %v11, 0
  %v82 = vsel %vm77, %v12, 0
  %v85 = vsel %vm77, %v13, 0
  %v88 = vsel %vm77, %v14, 0
  %v91 = vsel %vm77, %v15, 0
  %v94 = vsel %vm77, %v16, 0
  %v97 = vsel %vm77, %v17, 0
  %v100 = vsel %vm77, %v18, 0
  %v103 = vsel %vm77, %v19, 0
  %v106 = vsel %vm77, %v20, 0
  %v109 = vsel %vm77, %v21, 0
  %v112 = vsel %vm77, %v22, 0
  %v115 = vsel %vm77, %v23, 0
  %v118 = vsel %vm77, %v24, 0
  %v121 = vsel %vm77, %v25, 0
  %v124 = vsel %vm77, %v26, 0
  %v127 = vsel %vm77, %v27, 0
  %v130 = vsel %vm77, %v28, 0
  %v133 = vsel %vm77, %v29, 0
  %v136 = vsel %vm77, %v30, 0
  %v139 = vsel %vm77, %v31, 0
  %v142 = vsel %vm77, %v32, 0
  %v145 = vsel %vm77, %v33, 0
  %v148 = vsel %vm77, %v34, 0
  %v151 = vsel %vm77, %v35, 0
  %v154 = vsel %vm77, %v36, 0
  %v157 = vsel %vm77, %v37, 0
  %v160 = vsel %vm77, %v38, 0
  %v163 = vsel %vm77, %v39, 0
  %v166 = vsel %vm77, %v40, 0
  %v169 = vsel %vm77, %v41, 0
  %v172 = vsel %vm77, %v42, 0
  %v175 = vsel %vm77, %v43, 0
  %v178 = vsel %vm77, %v44, 0
  %v181 = vsel %vm77, %v45, 0
  %v184 = vsel %vm77, %v46, 0
  %v187 = vsel %vm77, %v47, 0
  %v190 = vsel %vm77, %v48, 0
  %v193 = vsel %vm77, %v49, 0
  %v196 = vsel %vm77, %v50, 0
  %v199 = vsel %vm77, %v51, 0
  %v202 = vsel %vm77, %v52, 0
  %v205 = vsel %vm77, %v53, 0
  %v208 = vsel %vm77, %v54, 0
  %v211 = vsel %vm77, %v55, 0
  %v214 = vsel %vm77, %v56, 0
  %v217 = vsel %vm77, %v57, 0
  %v220 = vsel %vm77, %v58, 0
  %v223 = vsel %vm77, %v59, 0
  %v226 = vsel %vm77, %v60, 0
  %v229 = vsel %vm77, %v61, 0
  %v232 = vsel %vm77, %v62, 0
  %v235 = vsel %vm77, %v63, 0
  %v238 = vsel %vm77, %v64, 0
  %v241 = vsel %vm77, %v65, 0
  %v244 = vsel %vm77, %v66, 0
  %v247 = vsel %vm77, %v67, 0
  %v250 = vsel %vm77, %v68, 0
  %v253 = vsel %vm77, %v69, 0
  %v256 = vsel %vm77, %v70, 0
  %v259 = vsel %vm77, %v71, 0
  %v262 = vsel %vm77, %v72, 0
  %v265 = vsel %vm77, %v73, 0
  %v268 = vsel %vm77, %v74, 0
  %270 = vmatpush.msra.mxu0 0.0
  %271 = vmatpush.msra.mxu0 0.0
  %272 = vmatpush.msra.mxu0 0.0
  %273 = vmatpush.msra.mxu0 0.0
  %274 = vmatpush.msra.mxu0 0.0
  %275 = vmatpush.msra.mxu0 0.0
  %276 = vmatpush.msra.mxu0 0.0
  %277 = vmatpush.msra.mxu0 0.0
  %278 = vmatpush.msra.mxu0 0.0
  %279 = vmatpush.msra.mxu0 0.0
  %280 = vmatpush.msra.mxu0 0.0
  %281 = vmatpush.msra.mxu0 0.0
  %282 = vmatpush.msra.mxu0 0.0
  %283 = vmatpush.msra.mxu0 0.0
  %284 = vmatpush.msra.mxu0 %v76
  %285 = vmatpush.msra.mxu0 %v75
  %286 = vmatmul.f32.gmra.mxu0 %v79
  %v287 = vpop.f32.mrf.mxu0
  %v288 = vadd.f32 0.0, %v287
  %289 = vmatmul.f32.gmra.mxu0 %v82
  %v290 = vpop.f32.mrf.mxu0
  %v291 = vadd.f32 0.0, %v290
  %292 = vmatmul.f32.gmra.mxu0 %v85
  %v293 = vpop.f32.mrf.mxu0
  %v294 = vadd.f32 0.0, %v293
  %295 = vmatmul.f32.gmra.mxu0 %v88
  %v296 = vpop.f32.mrf.mxu0
  %v297 = vadd.f32 0.0, %v296
  %298 = vmatmul.f32.gmra.mxu0 %v91
  %v299 = vpop.f32.mrf.mxu0
  %v300 = vadd.f32 0.0, %v299
  %301 = vmatmul.f32.gmra.mxu0 %v94
  %v302 = vpop.f32.mrf.mxu0
  %v303 = vadd.f32 0.0, %v302
  %304 = vmatmul.f32.gmra.mxu0 %v97
  %v305 = vpop.f32.mrf.mxu0
  %v306 = vadd.f32 0.0, %v305
  %307 = vmatmul.f32.gmra.mxu0 %v100
  %v308 = vpop.f32.mrf.mxu0
  %v309 = vadd.f32 0.0, %v308
  %310 = vmatmul.f32.gmra.mxu0 %v103
  %v311 = vpop.f32.mrf.mxu0
  %v312 = vadd.f32 0.0, %v311
  %313 = vmatmul.f32.gmra.mxu0 %v106
  %v314 = vpop.f32.mrf.mxu0
  %v315 = vadd.f32 0.0, %v314
  %316 = vmatmul.f32.gmra.mxu0 %v109
  %v317 = vpop.f32.mrf.mxu0
  %v318 = vadd.f32 0.0, %v317
  %319 = vmatmul.f32.gmra.mxu0 %v112
  %v320 = vpop.f32.mrf.mxu0
  %v321 = vadd.f32 0.0, %v320
  %322 = vmatmul.f32.gmra.mxu0 %v115
  %v323 = vpop.f32.mrf.mxu0
  %v324 = vadd.f32 0.0, %v323
  %325 = vmatmul.f32.gmra.mxu0 %v118
  %v326 = vpop.f32.mrf.mxu0
  %v327 = vadd.f32 0.0, %v326
  %328 = vmatmul.f32.gmra.mxu0 %v121
  %v329 = vpop.f32.mrf.mxu0
  %v330 = vadd.f32 0.0, %v329
  %331 = vmatmul.f32.gmra.mxu0 %v124
  %v332 = vpop.f32.mrf.mxu0
  %v333 = vadd.f32 0.0, %v332
  %334 = vmatmul.f32.gmra.mxu0 %v127
  %v335 = vpop.f32.mrf.mxu0
  %v336 = vadd.f32 0.0, %v335
  %337 = vmatmul.f32.gmra.mxu0 %v130
  %v338 = vpop.f32.mrf.mxu0
  %v339 = vadd.f32 0.0, %v338
  %340 = vmatmul.f32.gmra.mxu0 %v133
  %v341 = vpop.f32.mrf.mxu0
  %v342 = vadd.f32 0.0, %v341
  %343 = vmatmul.f32.gmra.mxu0 %v136
  %v344 = vpop.f32.mrf.mxu0
  %v345 = vadd.f32 0.0, %v344
  %346 = vmatmul.f32.gmra.mxu0 %v139
  %v347 = vpop.f32.mrf.mxu0
  %v348 = vadd.f32 0.0, %v347
  %349 = vmatmul.f32.gmra.mxu0 %v142
  %v350 = vpop.f32.mrf.mxu0
  %v351 = vadd.f32 0.0, %v350
  %352 = vmatmul.f32.gmra.mxu0 %v145
  %v353 = vpop.f32.mrf.mxu0
  %v354 = vadd.f32 0.0, %v353
  %355 = vmatmul.f32.gmra.mxu0 %v148
  %v356 = vpop.f32.mrf.mxu0
  %v357 = vadd.f32 0.0, %v356
  %358 = vmatmul.f32.gmra.mxu0 %v151
  %v359 = vpop.f32.mrf.mxu0
  %v360 = vadd.f32 0.0, %v359
  %361 = vmatmul.f32.gmra.mxu0 %v154
  %v362 = vpop.f32.mrf.mxu0
  %v363 = vadd.f32 0.0, %v362
  %364 = vmatmul.f32.gmra.mxu0 %v157
  %v365 = vpop.f32.mrf.mxu0
  %v366 = vadd.f32 0.0, %v365
  %367 = vmatmul.f32.gmra.mxu0 %v160
  %v368 = vpop.f32.mrf.mxu0
  %v369 = vadd.f32 0.0, %v368
  %370 = vmatmul.f32.gmra.mxu0 %v163
  %v371 = vpop.f32.mrf.mxu0
  %v372 = vadd.f32 0.0, %v371
  %373 = vmatmul.f32.gmra.mxu0 %v166
  %v374 = vpop.f32.mrf.mxu0
  %v375 = vadd.f32 0.0, %v374
  %376 = vmatmul.f32.gmra.mxu0 %v169
  %v377 = vpop.f32.mrf.mxu0
  %v378 = vadd.f32 0.0, %v377
  %379 = vmatmul.f32.gmra.mxu0 %v172
  %v380 = vpop.f32.mrf.mxu0
  %v381 = vadd.f32 0.0, %v380
  %382 = vmatmul.f32.gmra.mxu0 %v175
  %v383 = vpop.f32.mrf.mxu0
  %v384 = vadd.f32 0.0, %v383
  %385 = vmatmul.f32.gmra.mxu0 %v178
  %v386 = vpop.f32.mrf.mxu0
  %v387 = vadd.f32 0.0, %v386
  %388 = vmatmul.f32.gmra.mxu0 %v181
  %v389 = vpop.f32.mrf.mxu0
  %v390 = vadd.f32 0.0, %v389
  %391 = vmatmul.f32.gmra.mxu0 %v184
  %v392 = vpop.f32.mrf.mxu0
  %v393 = vadd.f32 0.0, %v392
  %394 = vmatmul.f32.gmra.mxu0 %v187
  %v395 = vpop.f32.mrf.mxu0
  %v396 = vadd.f32 0.0, %v395
  %397 = vmatmul.f32.gmra.mxu0 %v190
  %v398 = vpop.f32.mrf.mxu0
  %v399 = vadd.f32 0.0, %v398
  %400 = vmatmul.f32.gmra.mxu0 %v193
  %v401 = vpop.f32.mrf.mxu0
  %v402 = vadd.f32 0.0, %v401
  %403 = vmatmul.f32.gmra.mxu0 %v196
  %v404 = vpop.f32.mrf.mxu0
  %v405 = vadd.f32 0.0, %v404
  %406 = vmatmul.f32.gmra.mxu0 %v199
  %v407 = vpop.f32.mrf.mxu0
  %v408 = vadd.f32 0.0, %v407
  %409 = vmatmul.f32.gmra.mxu0 %v202
  %v410 = vpop.f32.mrf.mxu0
  %v411 = vadd.f32 0.0, %v410
  %412 = vmatmul.f32.gmra.mxu0 %v205
  %v413 = vpop.f32.mrf.mxu0
  %v414 = vadd.f32 0.0, %v413
  %415 = vmatmul.f32.gmra.mxu0 %v208
  %v416 = vpop.f32.mrf.mxu0
  %v417 = vadd.f32 0.0, %v416
  %418 = vmatmul.f32.gmra.mxu0 %v211
  %v419 = vpop.f32.mrf.mxu0
  %v420 = vadd.f32 0.0, %v419
  %421 = vmatmul.f32.gmra.mxu0 %v214
  %v422 = vpop.f32.mrf.mxu0
  %v423 = vadd.f32 0.0, %v422
  %424 = vmatmul.f32.gmra.mxu0 %v217
  %v425 = vpop.f32.mrf.mxu0
  %v426 = vadd.f32 0.0, %v425
  %427 = vmatmul.f32.gmra.mxu0 %v220
  %v428 = vpop.f32.mrf.mxu0
  %v429 = vadd.f32 0.0, %v428
  %430 = vmatmul.f32.gmra.mxu0 %v223
  %v431 = vpop.f32.mrf.mxu0
  %v432 = vadd.f32 0.0, %v431
  %433 = vmatmul.f32.gmra.mxu0 %v226
  %v434 = vpop.f32.mrf.mxu0
  %v435 = vadd.f32 0.0, %v434
  %436 = vmatmul.f32.gmra.mxu0 %v229
  %v437 = vpop.f32.mrf.mxu0
  %v438 = vadd.f32 0.0, %v437
  %439 = vmatmul.f32.gmra.mxu0 %v232
  %v440 = vpop.f32.mrf.mxu0
  %v441 = vadd.f32 0.0, %v440
  %442 = vmatmul.f32.gmra.mxu0 %v235
  %v443 = vpop.f32.mrf.mxu0
  %v444 = vadd.f32 0.0, %v443
  %445 = vmatmul.f32.gmra.mxu0 %v238
  %v446 = vpop.f32.mrf.mxu0
  %v447 = vadd.f32 0.0, %v446
  %448 = vmatmul.f32.gmra.mxu0 %v241
  %v449 = vpop.f32.mrf.mxu0
  %v450 = vadd.f32 0.0, %v449
  %451 = vmatmul.f32.gmra.mxu0 %v244
  %v452 = vpop.f32.mrf.mxu0
  %v453 = vadd.f32 0.0, %v452
  %454 = vmatmul.f32.gmra.mxu0 %v247
  %v455 = vpop.f32.mrf.mxu0
  %v456 = vadd.f32 0.0, %v455
  %457 = vmatmul.f32.gmra.mxu0 %v250
  %v458 = vpop.f32.mrf.mxu0
  %v459 = vadd.f32 0.0, %v458
  %460 = vmatmul.f32.gmra.mxu0 %v253
  %v461 = vpop.f32.mrf.mxu0
  %v462 = vadd.f32 0.0, %v461
  %463 = vmatmul.f32.gmra.mxu0 %v256
  %v464 = vpop.f32.mrf.mxu0
  %v465 = vadd.f32 0.0, %v464
  %466 = vmatmul.f32.gmra.mxu0 %v259
  %v467 = vpop.f32.mrf.mxu0
  %v468 = vadd.f32 0.0, %v467
  %469 = vmatmul.f32.gmra.mxu0 %v262
  %v470 = vpop.f32.mrf.mxu0
  %v471 = vadd.f32 0.0, %v470
  %472 = vmatmul.f32.gmra.mxu0 %v265
  %v473 = vpop.f32.mrf.mxu0
  %v474 = vadd.f32 0.0, %v473
  %475 = vmatmul.f32.gmra.mxu0 %v268
  %v476 = vpop.f32.mrf.mxu0
  %v477 = vadd.f32 0.0, %v476
  %478 = vdwg.mxu0
  %vm479 = vcmask 64512
  %480 = vst.msk [vmem:[%s2] sm:$0xff] %vm479, %v288
  %481 = vst.msk [vmem:[%s2 + $0x8] sm:$0xff] %vm479, %v291
  %482 = vst.msk [vmem:[%s2 + $0x10] sm:$0xff] %vm479, %v294
  %483 = vst.msk [vmem:[%s2 + $0x18] sm:$0xff] %vm479, %v297
  %484 = vst.msk [vmem:[%s2 + $0x20] sm:$0xff] %vm479, %v300
  %485 = vst.msk [vmem:[%s2 + $0x28] sm:$0xff] %vm479, %v303
  %486 = vst.msk [vmem:[%s2 + $0x30] sm:$0xff] %vm479, %v306
  %487 = vst.msk [vmem:[%s2 + $0x38] sm:$0xff] %vm479, %v309
  %488 = vst.msk [vmem:[%s2 + $0x40] sm:$0xff] %vm479, %v312
  %489 = vst.msk [vmem:[%s2 + $0x48] sm:$0xff] %vm479, %v315
  %490 = vst.msk [vmem:[%s2 + $0x50] sm:$0xff] %vm479, %v318
  %491 = vst.msk [vmem:[%s2 + $0x58] sm:$0xff] %vm479, %v321
  %492 = vst.msk [vmem:[%s2 + $0x60] sm:$0xff] %vm479, %v324
  %493 = vst.msk [vmem:[%s2 + $0x68] sm:$0xff] %vm479, %v327
  %494 = vst.msk [vmem:[%s2 + $0x70] sm:$0xff] %vm479, %v330
  %495 = vst.msk [vmem:[%s2 + $0x78] sm:$0xff] %vm479, %v333
  %496 = vst.msk [vmem:[%s2 + $0x80] sm:$0xff] %vm479, %v336
  %497 = vst.msk [vmem:[%s2 + $0x88] sm:$0xff] %vm479, %v339
  %498 = vst.msk [vmem:[%s2 + $0x90] sm:$0xff] %vm479, %v342
  %499 = vst.msk [vmem:[%s2 + $0x98] sm:$0xff] %vm479, %v345
  %500 = vst.msk [vmem:[%s2 + $0xa0] sm:$0xff] %vm479, %v348
  %501 = vst.msk [vmem:[%s2 + $0xa8] sm:$0xff] %vm479, %v351
  %502 = vst.msk [vmem:[%s2 + $0xb0] sm:$0xff] %vm479, %v354
  %503 = vst.msk [vmem:[%s2 + $0xb8] sm:$0xff] %vm479, %v357
  %504 = vst.msk [vmem:[%s2 + $0xc0] sm:$0xff] %vm479, %v360
  %505 = vst.msk [vmem:[%s2 + $0xc8] sm:$0xff] %vm479, %v363
  %506 = vst.msk [vmem:[%s2 + $0xd0] sm:$0xff] %vm479, %v366
  %507 = vst.msk [vmem:[%s2 + $0xd8] sm:$0xff] %vm479, %v369
  %508 = vst.msk [vmem:[%s2 + $0xe0] sm:$0xff] %vm479, %v372
  %509 = vst.msk [vmem:[%s2 + $0xe8] sm:$0xff] %vm479, %v375
  %510 = vst.msk [vmem:[%s2 + $0xf0] sm:$0xff] %vm479, %v378
  %511 = vst.msk [vmem:[%s2 + $0xf8] sm:$0xff] %vm479, %v381
  %512 = vst.msk [vmem:[%s2 + $0x100] sm:$0xff] %vm479, %v384
  %513 = vst.msk [vmem:[%s2 + $0x108] sm:$0xff] %vm479, %v387
  %514 = vst.msk [vmem:[%s2 + $0x110] sm:$0xff] %vm479, %v390
  %515 = vst.msk [vmem:[%s2 + $0x118] sm:$0xff] %vm479, %v393
  %516 = vst.msk [vmem:[%s2 + $0x120] sm:$0xff] %vm479, %v396
  %517 = vst.msk [vmem:[%s2 + $0x128] sm:$0xff] %vm479, %v399
  %518 = vst.msk [vmem:[%s2 + $0x130] sm:$0xff] %vm479, %v402
  %519 = vst.msk [vmem:[%s2 + $0x138] sm:$0xff] %vm479, %v405
  %520 = vst.msk [vmem:[%s2 + $0x140] sm:$0xff] %vm479, %v408
  %521 = vst.msk [vmem:[%s2 + $0x148] sm:$0xff] %vm479, %v411
  %522 = vst.msk [vmem:[%s2 + $0x150] sm:$0xff] %vm479, %v414
  %523 = vst.msk [vmem:[%s2 + $0x158] sm:$0xff] %vm479, %v417
  %524 = vst.msk [vmem:[%s2 + $0x160] sm:$0xff] %vm479, %v420
  %525 = vst.msk [vmem:[%s2 + $0x168] sm:$0xff] %vm479, %v423
  %526 = vst.msk [vmem:[%s2 + $0x170] sm:$0xff] %vm479, %v426
  %527 = vst.msk [vmem:[%s2 + $0x178] sm:$0xff] %vm479, %v429
  %528 = vst.msk [vmem:[%s2 + $0x180] sm:$0xff] %vm479, %v432
  %529 = vst.msk [vmem:[%s2 + $0x188] sm:$0xff] %vm479, %v435
  %530 = vst.msk [vmem:[%s2 + $0x190] sm:$0xff] %vm479, %v438
  %531 = vst.msk [vmem:[%s2 + $0x198] sm:$0xff] %vm479, %v441
  %532 = vst.msk [vmem:[%s2 + $0x1a0] sm:$0xff] %vm479, %v444
  %533 = vst.msk [vmem:[%s2 + $0x1a8] sm:$0xff] %vm479, %v447
  %534 = vst.msk [vmem:[%s2 + $0x1b0] sm:$0xff] %vm479, %v450
  %535 = vst.msk [vmem:[%s2 + $0x1b8] sm:$0xff] %vm479, %v453
  %536 = vst.msk [vmem:[%s2 + $0x1c0] sm:$0xff] %vm479, %v456
  %537 = vst.msk [vmem:[%s2 + $0x1c8] sm:$0xff] %vm479, %v459
  %538 = vst.msk [vmem:[%s2 + $0x1d0] sm:$0xff] %vm479, %v462
  %539 = vst.msk [vmem:[%s2 + $0x1d8] sm:$0xff] %vm479, %v465
  %540 = vst.msk [vmem:[%s2 + $0x1e0] sm:$0xff] %vm479, %v468
  %541 = vst.msk [vmem:[%s2 + $0x1e8] sm:$0xff] %vm479, %v471
  %542 = vst.msk [vmem:[%s2 + $0x1f0] sm:$0xff] %vm479, %v474
  %543 = vst.msk [vmem:[%s2 + $0x1f8] sm:$0xff] %vm479, %v477
  // Predicated region
  $region10: #{unet_forward.10} parent=0 // pred_check
    _
  $region11: #{unet_forward.10} parent=0 // pred_check_branch
    %545 = sbr.rel (0) target = $region13
  $region12: #{unet_forward.10} parent=0 // pred_region
    _
  $region13: #{unet_forward.10} parent=0 // pred_fallthru
    _
  // Predicated region
  $region14: #{unet_forward.10} parent=0 // pred_check
    _
  $region15: #{unet_forward.10} parent=0 // pred_check_branch
    %547 = sbr.rel (0) target = $region17
  $region16: #{unet_forward.10} parent=0 // pred_region
    _
  $region17: #{unet_forward.10} parent=0 // pred_fallthru
    _

// kernel: unet_forward.11
$region0: #{unet_forward.11}
  #allocation0 [shape = 'u32[]', space=smem, size = 0x4, offset = 0x4, fixed_abs, tag = 'smem constant byte address 0x4 - core index']
  #allocation1 [shape = 'u32[72,128]{1,0:T(1,128)}', space=vmem, size = 0x9000, scoped, tag = 'internal scratch']
  %s0 = inlined_call_operand.vmem [shape: f32[128,128], index: 0, kind: input, shape index: {}]
  %s1 = inlined_call_operand.vmem [shape: f32[128,16], index: 1, kind: input, shape index: {}]
  %s2 = inlined_call_operand.vmem [shape: f32[1,16], index: 2, kind: input, shape index: {}]
  %s3 = inlined_call_operand.vmem [shape: f32[1,16], index: 3, kind: input, shape index: {}]
  %s4 = inlined_call_operand.vmem [shape: f32[128,16], index: 4, kind: output, shape index: {}]
  %s5 = sld [smem:[#allocation0]]
  $region26: #{unet_forward.11} parent=0
    _
  %s7 = ssub.s32 1, %s5
  %s8 = scalar_select 0, %s7, %s5
  // Predicated region
  $region2: #{unet_forward.11} parent=0 // pred_check
    _
  $region3: #{unet_forward.11} parent=0 // pred_check_branch
    %10 = sbr.rel (0) target = $region5
  $region4: #{unet_forward.11} parent=0 // pred_region
    _
  $region5: #{unet_forward.11} parent=0 // pred_fallthru
    _
  // Predicated region
  $region6: #{unet_forward.11} parent=0 // pred_check
    _
  $region7: #{unet_forward.11} parent=0 // pred_check_branch
    %12 = sbr.rel (0) target = $region9
  $region8: #{unet_forward.11} parent=0 // pred_region
    _
  $region9: #{unet_forward.11} parent=0 // pred_fallthru
    _
  // Predicated region
  $region10: #{unet_forward.11} parent=0 // pred_check
    _
  $region11: #{unet_forward.11} parent=0 // pred_check_branch
    %14 = sbr.rel (0) target = $region13
  $region12: #{unet_forward.11} parent=0 // pred_region
    _
  $region13: #{unet_forward.11} parent=0 // pred_fallthru
    _
  // Predicated region
  $region14: #{unet_forward.11} parent=0 // pred_check
    _
  $region15: #{unet_forward.11} parent=0 // pred_check_branch
    %16 = sbr.rel (0) target = $region17
  $region16: #{unet_forward.11} parent=0 // pred_region
    _
  $region17: #{unet_forward.11} parent=0 // pred_fallthru
    _
  %v17 = vld [vmem:[%s0] sm:$0xff]
  %v18 = vld [vmem:[%s0 + $0x8] sm:$0xff]
  %v19 = vld [vmem:[%s0 + $0x10] sm:$0xff]
  %v20 = vld [vmem:[%s0 + $0x18] sm:$0xff]
  %v21 = vld [vmem:[%s0 + $0x20] sm:$0xff]
  %v22 = vld [vmem:[%s0 + $0x28] sm:$0xff]
  %v23 = vld [vmem:[%s0 + $0x30] sm:$0xff]
  %v24 = vld [vmem:[%s0 + $0x38] sm:$0xff]
  %v25 = vld [vmem:[%s0 + $0x40] sm:$0xff]
  %v26 = vld [vmem:[%s0 + $0x48] sm:$0xff]
  %v27 = vld [vmem:[%s0 + $0x50] sm:$0xff]
  %v28 = vld [vmem:[%s0 + $0x58] sm:$0xff]
  %v29 = vld [vmem:[%s0 + $0x60] sm:$0xff]
  %v30 = vld [vmem:[%s0 + $0x68] sm:$0xff]
  %v31 = vld [vmem:[%s0 + $0x70] sm:$0xff]
  %v32 = vld [vmem:[%s0 + $0x78] sm:$0xff]
  %vm33 = vcmp.ge.f32.partialorder %v17, 0.0
  %vm34 = vcmp.ge.f32.partialorder %v18, 0.0
  %vm35 = vcmp.ge.f32.partialorder %v19, 0.0
  %vm36 = vcmp.ge.f32.partialorder %v20, 0.0
  %vm37 = vcmp.ge.f32.partialorder %v21, 0.0
  %vm38 = vcmp.ge.f32.partialorder %v22, 0.0
  %vm39 = vcmp.ge.f32.partialorder %v23, 0.0
  %vm40 = vcmp.ge.f32.partialorder %v24, 0.0
  %vm41 = vcmp.ge.f32.partialorder %v25, 0.0
  %vm42 = vcmp.ge.f32.partialorder %v26, 0.0
  %vm43 = vcmp.ge.f32.partialorder %v27, 0.0
  %vm44 = vcmp.ge.f32.partialorder %v28, 0.0
  %vm45 = vcmp.ge.f32.partialorder %v29, 0.0
  %vm46 = vcmp.ge.f32.partialorder %v30, 0.0
  %vm47 = vcmp.ge.f32.partialorder %v31, 0.0
  %vm48 = vcmp.ge.f32.partialorder %v32, 0.0
  %v49 = vmul.f32 %v17, 0.2
  %v50 = vmul.f32 %v18, 0.2
  %v51 = vmul.f32 %v19, 0.2
  %v52 = vmul.f32 %v20, 0.2
  %v53 = vmul.f32 %v21, 0.2
  %v54 = vmul.f32 %v22, 0.2
  %v55 = vmul.f32 %v23, 0.2
  %v56 = vmul.f32 %v24, 0.2
  %v57 = vmul.f32 %v25, 0.2
  %v58 = vmul.f32 %v26, 0.2
  %v59 = vmul.f32 %v27, 0.2
  %v60 = vmul.f32 %v28, 0.2
  %v61 = vmul.f32 %v29, 0.2
  %v62 = vmul.f32 %v30, 0.2
  %v63 = vmul.f32 %v31, 0.2
  %v64 = vmul.f32 %v32, 0.2
  %v65 = vsel %vm33, %v17, %v49
  %v66 = vsel %vm34, %v18, %v50
  %v67 = vsel %vm35, %v19, %v51
  %v68 = vsel %vm36, %v20, %v52
  %v69 = vsel %vm37, %v21, %v53
  %v70 = vsel %vm38, %v22, %v54
  %v71 = vsel %vm39, %v23, %v55
  %v72 = vsel %vm40, %v24, %v56
  %v73 = vsel %vm41, %v25, %v57
  %v74 = vsel %vm42, %v26, %v58
  %v75 = vsel %vm43, %v27, %v59
  %v76 = vsel %vm44, %v28, %v60
  %v77 = vsel %vm45, %v29, %v61
  %v78 = vsel %vm46, %v30, %v62
  %v79 = vsel %vm47, %v31, %v63
  %v80 = vsel %vm48, %v32, %v64
  %v81 = vld [vmem:[%s1] sm:$0xff]
  %v82 = vld [vmem:[%s1 + $0x8] sm:$0xff]
  %v83 = vld [vmem:[%s1 + $0x10] sm:$0xff]
  %v84 = vld [vmem:[%s1 + $0x18] sm:$0xff]
  %v85 = vld [vmem:[%s1 + $0x20] sm:$0xff]
  %v86 = vld [vmem:[%s1 + $0x28] sm:$0xff]
  %v87 = vld [vmem:[%s1 + $0x30] sm:$0xff]
  %v88 = vld [vmem:[%s1 + $0x38] sm:$0xff]
  %v89 = vld [vmem:[%s1 + $0x40] sm:$0xff]
  %v90 = vld [vmem:[%s1 + $0x48] sm:$0xff]
  %v91 = vld [vmem:[%s1 + $0x50] sm:$0xff]
  %v92 = vld [vmem:[%s1 + $0x58] sm:$0xff]
  %v93 = vld [vmem:[%s1 + $0x60] sm:$0xff]
  %v94 = vld [vmem:[%s1 + $0x68] sm:$0xff]
  %v95 = vld [vmem:[%s1 + $0x70] sm:$0xff]
  %v96 = vld [vmem:[%s1 + $0x78] sm:$0xff]
  %97 = vmatpush.msra.mxu0 %v96
  %98 = vmatpush.msra.mxu0 %v95
  %99 = vmatpush.msra.mxu0 %v94
  %100 = vmatpush.msra.mxu0 %v93
  %101 = vmatpush.msra.mxu0 %v92
  %102 = vmatpush.msra.mxu0 %v91
  %103 = vmatpush.msra.mxu0 %v90
  %104 = vmatpush.msra.mxu0 %v89
  %105 = vmatpush.msra.mxu0 %v88
  %106 = vmatpush.msra.mxu0 %v87
  %107 = vmatpush.msra.mxu0 %v86
  %108 = vmatpush.msra.mxu0 %v85
  %109 = vmatpush.msra.mxu0 %v84
  %110 = vmatpush.msra.mxu0 %v83
  %111 = vmatpush.msra.mxu0 %v82
  %112 = vmatpush.msra.mxu0 %v81
  %113 = vmatmul.f32.gmra.mxu0 %v65
  %v114 = vpop.f32.mrf.mxu0
  %v115 = vadd.f32 0.0, %v114
  %116 = vmatmul.f32.gmra.mxu0 %v66
  %v117 = vpop.f32.mrf.mxu0
  %v118 = vadd.f32 0.0, %v117
  %119 = vmatmul.f32.gmra.mxu0 %v67
  %v120 = vpop.f32.mrf.mxu0
  %v121 = vadd.f32 0.0, %v120
  %122 = vmatmul.f32.gmra.mxu0 %v68
  %v123 = vpop.f32.mrf.mxu0
  %v124 = vadd.f32 0.0, %v123
  %125 = vmatmul.f32.gmra.mxu0 %v69
  %v126 = vpop.f32.mrf.mxu0
  %v127 = vadd.f32 0.0, %v126
  %128 = vmatmul.f32.gmra.mxu0 %v70
  %v129 = vpop.f32.mrf.mxu0
  %v130 = vadd.f32 0.0, %v129
  %131 = vmatmul.f32.gmra.mxu0 %v71
  %v132 = vpop.f32.mrf.mxu0
  %v133 = vadd.f32 0.0, %v132
  %134 = vmatmul.f32.gmra.mxu0 %v72
  %v135 = vpop.f32.mrf.mxu0
  %v136 = vadd.f32 0.0, %v135
  %137 = vmatmul.f32.gmra.mxu0 %v73
  %v138 = vpop.f32.mrf.mxu0
  %v139 = vadd.f32 0.0, %v138
  %140 = vmatmul.f32.gmra.mxu0 %v74
  %v141 = vpop.f32.mrf.mxu0
  %v142 = vadd.f32 0.0, %v141
  %143 = vmatmul.f32.gmra.mxu0 %v75
  %v144 = vpop.f32.mrf.mxu0
  %v145 = vadd.f32 0.0, %v144
  %146 = vmatmul.f32.gmra.mxu0 %v76
  %v147 = vpop.f32.mrf.mxu0
  %v148 = vadd.f32 0.0, %v147
  %149 = vmatmul.f32.gmra.mxu0 %v77
  %v150 = vpop.f32.mrf.mxu0
  %v151 = vadd.f32 0.0, %v150
  %152 = vmatmul.f32.gmra.mxu0 %v78
  %v153 = vpop.f32.mrf.mxu0
  %v154 = vadd.f32 0.0, %v153
  %155 = vmatmul.f32.gmra.mxu0 %v79
  %v156 = vpop.f32.mrf.mxu0
  %v157 = vadd.f32 0.0, %v156
  %158 = vmatmul.f32.gmra.mxu0 %v80
  %v159 = vpop.f32.mrf.mxu0
  %v160 = vadd.f32 0.0, %v159
  %161 = vdwg.mxu0
  %vm162 = vcmask 130048
  %v163 = vsel %vm162, %v115, 0.0
  %v164 = vsel %vm162, %v118, 0.0
  %v165 = vadd.f32 %v163, %v164
  %v166 = vsel %vm162, %v121, 0.0
  %v167 = vadd.f32 %v165, %v166
  %v168 = vsel %vm162, %v124, 0.0
  %v169 = vadd.f32 %v167, %v168
  %v170 = vsel %vm162, %v127, 0.0
  %v171 = vadd.f32 %v169, %v170
  %v172 = vsel %vm162, %v130, 0.0
  %v173 = vadd.f32 %v171, %v172
  %v174 = vsel %vm162, %v133, 0.0
  %v175 = vadd.f32 %v173, %v174
  %v176 = vsel %vm162, %v136, 0.0
  %v177 = vadd.f32 %v175, %v176
  %v178 = vsel %vm162, %v139, 0.0
  %v179 = vadd.f32 %v177, %v178
  %v180 = vsel %vm162, %v142, 0.0
  %v181 = vadd.f32 %v179, %v180
  %v182 = vsel %vm162, %v145, 0.0
  %v183 = vadd.f32 %v181, %v182
  %v184 = vsel %vm162, %v148, 0.0
  %v185 = vadd.f32 %v183, %v184
  %v186 = vsel %vm162, %v151, 0.0
  %v187 = vadd.f32 %v185, %v186
  %v188 = vsel %vm162, %v154, 0.0
  %v189 = vadd.f32 %v187, %v188
  %v190 = vsel %vm162, %v157, 0.0
  %v191 = vadd.f32 %v189, %v190
  %v192 = vsel %vm162, %v160, 0.0
  %v193 = vadd.f32 %v191, %v192
  %v194 = vrot.slane %v193, 4
  %v195 = vadd.f32 %v193, %v194
  %v196 = vrot.slane %v195, 2
  %v197 = vadd.f32 %v195, %v196
  %v198 = vrot.slane %v197, 1
  %v199 = vadd.f32 %v197, %v198
  %v200 = vrcp.pop 128.0
  %v201 = vmul.f32 128.0, %v200
  %v202 = vsub.f32 1.0, %v201
  %v203 = vmul.f32 %v200, %v202
  %v204 = vadd.f32 %v200, %v203
  %vm205 = vweird.f32 %v200
  %v206 = vsel %vm205, %v200, %v204
  %v207 = vmul.f32 %v199, %v206
  %v208 = vsub.f32 %v115, %v207
  %v209 = vsub.f32 %v118, %v207
  %v210 = vsub.f32 %v121, %v207
  %v211 = vsub.f32 %v124, %v207
  %v212 = vsub.f32 %v127, %v207
  %v213 = vsub.f32 %v130, %v207
  %v214 = vsub.f32 %v133, %v207
  %v215 = vsub.f32 %v136, %v207
  %v216 = vsub.f32 %v139, %v207
  %v217 = vsub.f32 %v142, %v207
  %v218 = vsub.f32 %v145, %v207
  %v219 = vsub.f32 %v148, %v207
  %v220 = vsub.f32 %v151, %v207
  %v221 = vsub.f32 %v154, %v207
  %v222 = vsub.f32 %v157, %v207
  %v223 = vsub.f32 %v160, %v207
  %v224 = vmul.f32 %v208, %v208
  %v225 = vmul.f32 %v209, %v209
  %v226 = vmul.f32 %v210, %v210
  %v227 = vmul.f32 %v211, %v211
  %v228 = vmul.f32 %v212, %v212
  %v229 = vmul.f32 %v213, %v213
  %v230 = vmul.f32 %v214, %v214
  %v231 = vmul.f32 %v215, %v215
  %v232 = vmul.f32 %v216, %v216
  %v233 = vmul.f32 %v217, %v217
  %v234 = vmul.f32 %v218, %v218
  %v235 = vmul.f32 %v219, %v219
  %v236 = vmul.f32 %v220, %v220
  %v237 = vmul.f32 %v221, %v221
  %v238 = vmul.f32 %v222, %v222
  %v239 = vmul.f32 %v223, %v223
  %v240 = vsel %vm162, %v224, 0.0
  %v241 = vsel %vm162, %v225, 0.0
  %v242 = vadd.f32 %v240, %v241
  %v243 = vsel %vm162, %v226, 0.0
  %v244 = vadd.f32 %v242, %v243
  %v245 = vsel %vm162, %v227, 0.0
  %v246 = vadd.f32 %v244, %v245
  %v247 = vsel %vm162, %v228, 0.0
  %v248 = vadd.f32 %v246, %v247
  %v249 = vsel %vm162, %v229, 0.0
  %v250 = vadd.f32 %v248, %v249
  %v251 = vsel %vm162, %v230, 0.0
  %v252 = vadd.f32 %v250, %v251
  %v253 = vsel %vm162, %v231, 0.0
  %v254 = vadd.f32 %v252, %v253
  %v255 = vsel %vm162, %v232, 0.0
  %v256 = vadd.f32 %v254, %v255
  %v257 = vsel %vm162, %v233, 0.0
  %v258 = vadd.f32 %v256, %v257
  %v259 = vsel %vm162, %v234, 0.0
  %v260 = vadd.f32 %v258, %v259
  %v261 = vsel %vm162, %v235, 0.0
  %v262 = vadd.f32 %v260, %v261
  %v263 = vsel %vm162, %v236, 0.0
  %v264 = vadd.f32 %v262, %v263
  %v265 = vsel %vm162, %v237, 0.0
  %v266 = vadd.f32 %v264, %v265
  %v267 = vsel %vm162, %v238, 0.0
  %v268 = vadd.f32 %v266, %v267
  %v269 = vsel %vm162, %v239, 0.0
  %v270 = vadd.f32 %v268, %v269
  %v271 = vrot.slane %v270, 4
  %v272 = vadd.f32 %v270, %v271
  %v273 = vrot.slane %v272, 2
  %v274 = vadd.f32 %v272, %v273
  %v275 = vrot.slane %v274, 1
  %v276 = vadd.f32 %v274, %v275
  %v277 = vmul.f32 %v276, %v206
  %v278 = vadd.f32 %v277, 1e-05
  %v279 = vrsqrt.pop %v278
  %v280 = vmul.f32 %v279, %v278
  %v281 = vmul.f32 %v280, %v279
  %v282 = vmul.f32 0.5, %v281
  %v283 = vsub.f32 1.5, %v282
  %v284 = vmul.f32 %v279, %v283
  %vm285 = vweird.f32 %v278
  %vm286 = vweird.f32 %v279
  %vm287 = vmor %vm285, %vm286
  %v288 = vsel %vm287, %v279, %v284
  %v289 = vld [vmem:[%s2] sm:$0x1]
  %v290 = vmul.f32 %v288, %v289
  %v291 = vperm.slane %v290, 0
  %v292 = vmul.f32 %v208, %v291
  %v293 = vmul.f32 %v209, %v291
  %v294 = vmul.f32 %v210, %v291
  %v295 = vmul.f32 %v211, %v291
  %v296 = vmul.f32 %v212, %v291
  %v297 = vmul.f32 %v213, %v291
  %v298 = vmul.f32 %v214, %v291
  %v299 = vmul.f32 %v215, %v291
  %v300 = vmul.f32 %v216, %v291
  %v301 = vmul.f32 %v217, %v291
  %v302 = vmul.f32 %v218, %v291
  %v303 = vmul.f32 %v219, %v291
  %v304 = vmul.f32 %v220, %v291
  %v305 = vmul.f32 %v221, %v291
  %v306 = vmul.f32 %v222, %v291
  %v307 = vmul.f32 %v223, %v291
  %v308 = vld [vmem:[%s3] sm:$0x1]
  %v310 = vperm.slane %v308, 0
  %v312 = vadd.f32 %v292, %v310
  %v313 = vadd.f32 %v293, %v310
  %v314 = vadd.f32 %v294, %v310
  %v315 = vadd.f32 %v295, %v310
  %v316 = vadd.f32 %v296, %v310
  %v317 = vadd.f32 %v297, %v310
  %v318 = vadd.f32 %v298, %v310
  %v319 = vadd.f32 %v299, %v310
  %v320 = vadd.f32 %v300, %v310
  %v321 = vadd.f32 %v301, %v310
  %v322 = vadd.f32 %v302, %v310
  %v323 = vadd.f32 %v303, %v310
  %v324 = vadd.f32 %v304, %v310
  %v325 = vadd.f32 %v305, %v310
  %v326 = vadd.f32 %v306, %v310
  %v327 = vadd.f32 %v307, %v310
  %328 = vst.msk [vmem:[%s4] sm:$0xff] %vm162, %v312
  %329 = vst.msk [vmem:[%s4 + $0x8] sm:$0xff] %vm162, %v313
  %330 = vst.msk [vmem:[%s4 + $0x10] sm:$0xff] %vm162, %v314
  %331 = vst.msk [vmem:[%s4 + $0x18] sm:$0xff] %vm162, %v315
  %332 = vst.msk [vmem:[%s4 + $0x20] sm:$0xff] %vm162, %v316
  %333 = vst.msk [vmem:[%s4 + $0x28] sm:$0xff] %vm162, %v317
  %334 = vst.msk [vmem:[%s4 + $0x30] sm:$0xff] %vm162, %v318
  %335 = vst.msk [vmem:[%s4 + $0x38] sm:$0xff] %vm162, %v319
  %336 = vst.msk [vmem:[%s4 + $0x40] sm:$0xff] %vm162, %v320
  %337 = vst.msk [vmem:[%s4 + $0x48] sm:$0xff] %vm162, %v321
  %338 = vst.msk [vmem:[%s4 + $0x50] sm:$0xff] %vm162, %v322
  %339 = vst.msk [vmem:[%s4 + $0x58] sm:$0xff] %vm162, %v323
  %340 = vst.msk [vmem:[%s4 + $0x60] sm:$0xff] %vm162, %v324
  %341 = vst.msk [vmem:[%s4 + $0x68] sm:$0xff] %vm162, %v325
  %342 = vst.msk [vmem:[%s4 + $0x70] sm:$0xff] %vm162, %v326
  %343 = vst.msk [vmem:[%s4 + $0x78] sm:$0xff] %vm162, %v327
  // Predicated region
  $region18: #{unet_forward.11} parent=0 // pred_check
    _
  $region19: #{unet_forward.11} parent=0 // pred_check_branch
    %345 = sbr.rel (0) target = $region21
  $region20: #{unet_forward.11} parent=0 // pred_region
    _
  $region21: #{unet_forward.11} parent=0 // pred_fallthru
    _
  // Predicated region
  $region22: #{unet_forward.11} parent=0 // pred_check
    _
  $region23: #{unet_forward.11} parent=0 // pred_check_branch
    %347 = sbr.rel (0) target = $region25
  $region24: #{unet_forward.11} parent=0 // pred_region
    _
  $region25: #{unet_forward.11} parent=0 // pred_fallthru
    _

// kernel: unet_forward.12
$region0: #{unet_forward.12}
  #allocation0 [shape = 'u32[]', space=smem, size = 0x4, offset = 0x4, fixed_abs, tag = 'smem constant byte address 0x4 - core index']
  #allocation1 [shape = 'u32[72,128]{1,0:T(1,128)}', space=vmem, size = 0x9000, scoped, tag = 'internal scratch']
  %s0 = inlined_call_operand.vmem [shape: f32[32,256], index: 0, kind: input, shape index: {}]
  %s1 = inlined_call_operand.vmem [shape: f32[256,32], index: 1, kind: input, shape index: {}]
  %s2 = inlined_call_operand.vmem [shape: f32[1,32], index: 2, kind: input, shape index: {}]
  %s3 = inlined_call_operand.vmem [shape: f32[1,32], index: 3, kind: input, shape index: {}]
  %s4 = inlined_call_operand.vmem [shape: f32[32,32], index: 4, kind: output, shape index: {}]
  %s5 = sld [smem:[#allocation0]]
  $region26: #{unet_forward.12} parent=0
    _
  %s7 = ssub.s32 1, %s5
  %s8 = scalar_select 0, %s7, %s5
  // Predicated region
  $region2: #{unet_forward.12} parent=0 // pred_check
    _
  $region3: #{unet_forward.12} parent=0 // pred_check_branch
    %10 = sbr.rel (0) target = $region5
  $region4: #{unet_forward.12} parent=0 // pred_region
    _
  $region5: #{unet_forward.12} parent=0 // pred_fallthru
    _
  // Predicated region
  $region6: #{unet_forward.12} parent=0 // pred_check
    _
  $region7: #{unet_forward.12} parent=0 // pred_check_branch
    %12 = sbr.rel (0) target = $region9
  $region8: #{unet_forward.12} parent=0 // pred_region
    _
  $region9: #{unet_forward.12} parent=0 // pred_fallthru
    _
  // Predicated region
  $region10: #{unet_forward.12} parent=0 // pred_check
    _
  $region11: #{unet_forward.12} parent=0 // pred_check_branch
    %14 = sbr.rel (0) target = $region13
  $region12: #{unet_forward.12} parent=0 // pred_region
    _
  $region13: #{unet_forward.12} parent=0 // pred_fallthru
    _
  // Predicated region
  $region14: #{unet_forward.12} parent=0 // pred_check
    _
  $region15: #{unet_forward.12} parent=0 // pred_check_branch
    %16 = sbr.rel (0) target = $region17
  $region16: #{unet_forward.12} parent=0 // pred_region
    _
  $region17: #{unet_forward.12} parent=0 // pred_fallthru
    _
  %v17 = vld [vmem:[%s0] sm:$0xff]
  %v18 = vld [vmem:[%s0 + $0x8] sm:$0xff]
  %v19 = vld [vmem:[%s0 + $0x10] sm:$0xff]
  %v20 = vld [vmem:[%s0 + $0x18] sm:$0xff]
  %v21 = vld [vmem:[%s0 + $0x20] sm:$0xff]
  %v22 = vld [vmem:[%s0 + $0x28] sm:$0xff]
  %v23 = vld [vmem:[%s0 + $0x30] sm:$0xff]
  %v24 = vld [vmem:[%s0 + $0x38] sm:$0xff]
  %vm25 = vcmp.ge.f32.partialorder %v17, 0.0
  %vm26 = vcmp.ge.f32.partialorder %v18, 0.0
  %vm27 = vcmp.ge.f32.partialorder %v19, 0.0
  %vm28 = vcmp.ge.f32.partialorder %v20, 0.0
  %vm29 = vcmp.ge.f32.partialorder %v21, 0.0
  %vm30 = vcmp.ge.f32.partialorder %v22, 0.0
  %vm31 = vcmp.ge.f32.partialorder %v23, 0.0
  %vm32 = vcmp.ge.f32.partialorder %v24, 0.0
  %v33 = vmul.f32 %v17, 0.2
  %v34 = vmul.f32 %v18, 0.2
  %v35 = vmul.f32 %v19, 0.2
  %v36 = vmul.f32 %v20, 0.2
  %v37 = vmul.f32 %v21, 0.2
  %v38 = vmul.f32 %v22, 0.2
  %v39 = vmul.f32 %v23, 0.2
  %v40 = vmul.f32 %v24, 0.2
  %v41 = vsel %vm25, %v17, %v33
  %v42 = vsel %vm26, %v18, %v34
  %v43 = vsel %vm27, %v19, %v35
  %v44 = vsel %vm28, %v20, %v36
  %v45 = vsel %vm29, %v21, %v37
  %v46 = vsel %vm30, %v22, %v38
  %v47 = vsel %vm31, %v23, %v39
  %v48 = vsel %vm32, %v24, %v40
  %v49 = vld [vmem:[%s1] sm:$0xff]
  %v50 = vld [vmem:[%s1 + $0x8] sm:$0xff]
  %v51 = vld [vmem:[%s1 + $0x10] sm:$0xff]
  %v52 = vld [vmem:[%s1 + $0x18] sm:$0xff]
  %v53 = vld [vmem:[%s1 + $0x20] sm:$0xff]
  %v54 = vld [vmem:[%s1 + $0x28] sm:$0xff]
  %v55 = vld [vmem:[%s1 + $0x30] sm:$0xff]
  %v56 = vld [vmem:[%s1 + $0x38] sm:$0xff]
  %v57 = vld [vmem:[%s1 + $0x40] sm:$0xff]
  %v58 = vld [vmem:[%s1 + $0x48] sm:$0xff]
  %v59 = vld [vmem:[%s1 + $0x50] sm:$0xff]
  %v60 = vld [vmem:[%s1 + $0x58] sm:$0xff]
  %v61 = vld [vmem:[%s1 + $0x60] sm:$0xff]
  %v62 = vld [vmem:[%s1 + $0x68] sm:$0xff]
  %v63 = vld [vmem:[%s1 + $0x70] sm:$0xff]
  %v64 = vld [vmem:[%s1 + $0x78] sm:$0xff]
  %v65 = vld [vmem:[%s1 + $0x80] sm:$0xff]
  %v66 = vld [vmem:[%s1 + $0x88] sm:$0xff]
  %v67 = vld [vmem:[%s1 + $0x90] sm:$0xff]
  %v68 = vld [vmem:[%s1 + $0x98] sm:$0xff]
  %v69 = vld [vmem:[%s1 + $0xa0] sm:$0xff]
  %v70 = vld [vmem:[%s1 + $0xa8] sm:$0xff]
  %v71 = vld [vmem:[%s1 + $0xb0] sm:$0xff]
  %v72 = vld [vmem:[%s1 + $0xb8] sm:$0xff]
  %v73 = vld [vmem:[%s1 + $0xc0] sm:$0xff]
  %v74 = vld [vmem:[%s1 + $0xc8] sm:$0xff]
  %v75 = vld [vmem:[%s1 + $0xd0] sm:$0xff]
  %v76 = vld [vmem:[%s1 + $0xd8] sm:$0xff]
  %v77 = vld [vmem:[%s1 + $0xe0] sm:$0xff]
  %v78 = vld [vmem:[%s1 + $0xe8] sm:$0xff]
  %v79 = vld [vmem:[%s1 + $0xf0] sm:$0xff]
  %v80 = vld [vmem:[%s1 + $0xf8] sm:$0xff]
  %81 = vmatpush.msra.mxu0 %v64
  %82 = vmatpush.msra.mxu0 %v63
  %83 = vmatpush.msra.mxu0 %v62
  %84 = vmatpush.msra.mxu0 %v61
  %85 = vmatpush.msra.mxu0 %v60
  %86 = vmatpush.msra.mxu0 %v59
  %87 = vmatpush.msra.mxu0 %v58
  %88 = vmatpush.msra.mxu0 %v57
  %89 = vmatpush.msra.mxu0 %v56
  %90 = vmatpush.msra.mxu0 %v55
  %91 = vmatpush.msra.mxu0 %v54
  %92 = vmatpush.msra.mxu0 %v53
  %93 = vmatpush.msra.mxu0 %v52
  %94 = vmatpush.msra.mxu0 %v51
  %95 = vmatpush.msra.mxu0 %v50
  %96 = vmatpush.msra.mxu0 %v49
  %97 = vmatmul.f32.gmra.mxu0 %v41
  %v98 = vpop.f32.mrf.mxu0
  %v99 = vadd.f32 0.0, %v98
  %100 = vmatmul.f32.gmra.mxu0 %v43
  %v101 = vpop.f32.mrf.mxu0
  %v102 = vadd.f32 0.0, %v101
  %103 = vmatmul.f32.gmra.mxu0 %v45
  %v104 = vpop.f32.mrf.mxu0
  %v105 = vadd.f32 0.0, %v104
  %106 = vmatmul.f32.gmra.mxu0 %v47
  %v107 = vpop.f32.mrf.mxu0
  %v108 = vadd.f32 0.0, %v107
  %109 = vdwg.mxu0
  %110 = vmatpush.msra.mxu0 %v80
  %111 = vmatpush.msra.mxu0 %v79
  %112 = vmatpush.msra.mxu0 %v78
  %113 = vmatpush.msra.mxu0 %v77
  %114 = vmatpush.msra.mxu0 %v76
  %115 = vmatpush.msra.mxu0 %v75
  %116 = vmatpush.msra.mxu0 %v74
  %117 = vmatpush.msra.mxu0 %v73
  %118 = vmatpush.msra.mxu0 %v72
  %119 = vmatpush.msra.mxu0 %v71
  %120 = vmatpush.msra.mxu0 %v70
  %121 = vmatpush.msra.mxu0 %v69
  %122 = vmatpush.msra.mxu0 %v68
  %123 = vmatpush.msra.mxu0 %v67
  %124 = vmatpush.msra.mxu0 %v66
  %125 = vmatpush.msra.mxu0 %v65
  %126 = vmatmul.f32.gmra.mxu0 %v42
  %v127 = vpop.f32.mrf.mxu0
  %v128 = vadd.f32 %v99, %v127
  %129 = vmatmul.f32.gmra.mxu0 %v44
  %v130 = vpop.f32.mrf.mxu0
  %v131 = vadd.f32 %v102, %v130
  %132 = vmatmul.f32.gmra.mxu0 %v46
  %v133 = vpop.f32.mrf.mxu0
  %v134 = vadd.f32 %v105, %v133
  %135 = vmatmul.f32.gmra.mxu0 %v48
  %v136 = vpop.f32.mrf.mxu0
  %v137 = vadd.f32 %v108, %v136
  %138 = vdwg.mxu0
  %vm139 = vcmask 261120
  %v140 = vsel %vm139, %v128, 0.0
  %v141 = vsel %vm139, %v131, 0.0
  %v142 = vadd.f32 %v140, %v141
  %v143 = vsel %vm139, %v134, 0.0
  %v144 = vadd.f32 %v142, %v143
  %v145 = vsel %vm139, %v137, 0.0
  %v146 = vadd.f32 %v144, %v145
  %v147 = vrot.slane %v146, 4
  %v148 = vadd.f32 %v146, %v147
  %v149 = vrot.slane %v148, 2
  %v150 = vadd.f32 %v148, %v149
  %v151 = vrot.slane %v150, 1
  %v152 = vadd.f32 %v150, %v151
  %v153 = vrcp.pop 32.0
  %v154 = vmul.f32 32.0, %v153
  %v155 = vsub.f32 1.0, %v154
  %v156 = vmul.f32 %v153, %v155
  %v157 = vadd.f32 %v153, %v156
  %vm158 = vweird.f32 %v153
  %v159 = vsel %vm158, %v153, %v157
  %v160 = vmul.f32 %v152, %v159
  %v161 = vsub.f32 %v128, %v160
  %v162 = vsub.f32 %v131, %v160
  %v163 = vsub.f32 %v134, %v160
  %v164 = vsub.f32 %v137, %v160
  %v165 = vmul.f32 %v161, %v161
  %v166 = vmul.f32 %v162, %v162
  %v167 = vmul.f32 %v163, %v163
  %v168 = vmul.f32 %v164, %v164
  %v169 = vsel %vm139, %v165, 0.0
  %v170 = vsel %vm139, %v166, 0.0
  %v171 = vadd.f32 %v169, %v170
  %v172 = vsel %vm139, %v167, 0.0
  %v173 = vadd.f32 %v171, %v172
  %v174 = vsel %vm139, %v168, 0.0
  %v175 = vadd.f32 %v173, %v174
  %v176 = vrot.slane %v175, 4
  %v177 = vadd.f32 %v175, %v176
  %v178 = vrot.slane %v177, 2
  %v179 = vadd.f32 %v177, %v178
  %v180 = vrot.slane %v179, 1
  %v181 = vadd.f32 %v179, %v180
  %v182 = vmul.f32 %v181, %v159
  %v183 = vadd.f32 %v182, 1e-05
  %v184 = vrsqrt.pop %v183
  %v185 = vmul.f32 %v184, %v183
  %v186 = vmul.f32 %v185, %v184
  %v187 = vmul.f32 0.5, %v186
  %v188 = vsub.f32 1.5, %v187
  %v189 = vmul.f32 %v184, %v188
  %vm190 = vweird.f32 %v183
  %vm191 = vweird.f32 %v184
  %vm192 = vmor %vm190, %vm191
  %v193 = vsel %vm192, %v184, %v189
  %v194 = vld [vmem:[%s2] sm:$0x1]
  %v195 = vmul.f32 %v193, %v194
  %v196 = vperm.slane %v195, 0
  %v197 = vmul.f32 %v161, %v196
  %v198 = vmul.f32 %v162, %v196
  %v199 = vmul.f32 %v163, %v196
  %v200 = vmul.f32 %v164, %v196
  %v201 = vld [vmem:[%s3] sm:$0x1]
  %v203 = vperm.slane %v201, 0
  %v205 = vadd.f32 %v197, %v203
  %v206 = vadd.f32 %v198, %v203
  %v207 = vadd.f32 %v199, %v203
  %v208 = vadd.f32 %v200, %v203
  %209 = vst.msk [vmem:[%s4] sm:$0xff] %vm139, %v205
  %210 = vst.msk [vmem:[%s4 + $0x8] sm:$0xff] %vm139, %v206
  %211 = vst.msk [vmem:[%s4 + $0x10] sm:$0xff] %vm139, %v207
  %212 = vst.msk [vmem:[%s4 + $0x18] sm:$0xff] %vm139, %v208
  // Predicated region
  $region18: #{unet_forward.12} parent=0 // pred_check
    _
  $region19: #{unet_forward.12} parent=0 // pred_check_branch
    %214 = sbr.rel (0) target = $region21
  $region20: #{unet_forward.12} parent=0 // pred_region
    _
  $region21: #{unet_forward.12} parent=0 // pred_fallthru
    _
  // Predicated region
  $region22: #{unet_forward.12} parent=0 // pred_check
    _
  $region23: #{unet_forward.12} parent=0 // pred_check_branch
    %216 = sbr.rel (0) target = $region25
  $region24: #{unet_forward.12} parent=0 // pred_region
    _
  $region25: #{unet_forward.12} parent=0 // pred_fallthru
    _

// kernel: unet_forward.13
$region0: #{unet_forward.13}
  #allocation0 [shape = 'u32[]', space=smem, size = 0x4, offset = 0x4, fixed_abs, tag = 'smem constant byte address 0x4 - core index']
  #allocation1 [shape = 'u32[72,128]{1,0:T(1,128)}', space=vmem, size = 0x9000, scoped, tag = 'internal scratch']
  %s0 = inlined_call_operand.vmem [shape: f32[8,512], index: 0, kind: input, shape index: {}]
  %s1 = inlined_call_operand.vmem [shape: f32[512,64], index: 1, kind: input, shape index: {}]
  %s2 = inlined_call_operand.vmem [shape: f32[1,64], index: 2, kind: input, shape index: {}]
  %s3 = inlined_call_operand.vmem [shape: f32[1,64], index: 3, kind: input, shape index: {}]
  %s4 = inlined_call_operand.vmem [shape: f32[8,64], index: 4, kind: output, shape index: {}]
  %s5 = sld [smem:[#allocation0]]
  $region26: #{unet_forward.13} parent=0
    _
  %s7 = ssub.s32 1, %s5
  %s8 = scalar_select 0, %s7, %s5
  // Predicated region
  $region2: #{unet_forward.13} parent=0 // pred_check
    _
  $region3: #{unet_forward.13} parent=0 // pred_check_branch
    %10 = sbr.rel (0) target = $region5
  $region4: #{unet_forward.13} parent=0 // pred_region
    _
  $region5: #{unet_forward.13} parent=0 // pred_fallthru
    _
  // Predicated region
  $region6: #{unet_forward.13} parent=0 // pred_check
    _
  $region7: #{unet_forward.13} parent=0 // pred_check_branch
    %12 = sbr.rel (0) target = $region9
  $region8: #{unet_forward.13} parent=0 // pred_region
    _
  $region9: #{unet_forward.13} parent=0 // pred_fallthru
    _
  // Predicated region
  $region10: #{unet_forward.13} parent=0 // pred_check
    _
  $region11: #{unet_forward.13} parent=0 // pred_check_branch
    %14 = sbr.rel (0) target = $region13
  $region12: #{unet_forward.13} parent=0 // pred_region
    _
  $region13: #{unet_forward.13} parent=0 // pred_fallthru
    _
  // Predicated region
  $region14: #{unet_forward.13} parent=0 // pred_check
    _
  $region15: #{unet_forward.13} parent=0 // pred_check_branch
    %16 = sbr.rel (0) target = $region17
  $region16: #{unet_forward.13} parent=0 // pred_region
    _
  $region17: #{unet_forward.13} parent=0 // pred_fallthru
    _
  %v17 = vld [vmem:[%s0] sm:$0xff]
  %v18 = vld [vmem:[%s0 + $0x8] sm:$0xff]
  %v19 = vld [vmem:[%s0 + $0x10] sm:$0xff]
  %v20 = vld [vmem:[%s0 + $0x18] sm:$0xff]
  %vm21 = vcmp.ge.f32.partialorder %v17, 0.0
  %vm22 = vcmp.ge.f32.partialorder %v18, 0.0
  %vm23 = vcmp.ge.f32.partialorder %v19, 0.0
  %vm24 = vcmp.ge.f32.partialorder %v20, 0.0
  %v25 = vmul.f32 %v17, 0.2
  %v26 = vmul.f32 %v18, 0.2
  %v27 = vmul.f32 %v19, 0.2
  %v28 = vmul.f32 %v20, 0.2
  %v29 = vsel %vm21, %v17, %v25
  %v30 = vsel %vm22, %v18, %v26
  %v31 = vsel %vm23, %v19, %v27
  %v32 = vsel %vm24, %v20, %v28
  %v33 = vld [vmem:[%s1] sm:$0xff]
  %v34 = vld [vmem:[%s1 + $0x8] sm:$0xff]
  %v35 = vld [vmem:[%s1 + $0x10] sm:$0xff]
  %v36 = vld [vmem:[%s1 + $0x18] sm:$0xff]
  %v37 = vld [vmem:[%s1 + $0x20] sm:$0xff]
  %v38 = vld [vmem:[%s1 + $0x28] sm:$0xff]
  %v39 = vld [vmem:[%s1 + $0x30] sm:$0xff]
  %v40 = vld [vmem:[%s1 + $0x38] sm:$0xff]
  %v41 = vld [vmem:[%s1 + $0x40] sm:$0xff]
  %v42 = vld [vmem:[%s1 + $0x48] sm:$0xff]
  %v43 = vld [vmem:[%s1 + $0x50] sm:$0xff]
  %v44 = vld [vmem:[%s1 + $0x58] sm:$0xff]
  %v45 = vld [vmem:[%s1 + $0x60] sm:$0xff]
  %v46 = vld [vmem:[%s1 + $0x68] sm:$0xff]
  %v47 = vld [vmem:[%s1 + $0x70] sm:$0xff]
  %v48 = vld [vmem:[%s1 + $0x78] sm:$0xff]
  %v49 = vld [vmem:[%s1 + $0x80] sm:$0xff]
  %v50 = vld [vmem:[%s1 + $0x88] sm:$0xff]
  %v51 = vld [vmem:[%s1 + $0x90] sm:$0xff]
  %v52 = vld [vmem:[%s1 + $0x98] sm:$0xff]
  %v53 = vld [vmem:[%s1 + $0xa0] sm:$0xff]
  %v54 = vld [vmem:[%s1 + $0xa8] sm:$0xff]
  %v55 = vld [vmem:[%s1 + $0xb0] sm:$0xff]
  %v56 = vld [vmem:[%s1 + $0xb8] sm:$0xff]
  %v57 = vld [vmem:[%s1 + $0xc0] sm:$0xff]
  %v58 = vld [vmem:[%s1 + $0xc8] sm:$0xff]
  %v59 = vld [vmem:[%s1 + $0xd0] sm:$0xff]
  %v60 = vld [vmem:[%s1 + $0xd8] sm:$0xff]
  %v61 = vld [vmem:[%s1 + $0xe0] sm:$0xff]
  %v62 = vld [vmem:[%s1 + $0xe8] sm:$0xff]
  %v63 = vld [vmem:[%s1 + $0xf0] sm:$0xff]
  %v64 = vld [vmem:[%s1 + $0xf8] sm:$0xff]
  %v65 = vld [vmem:[%s1 + $0x100] sm:$0xff]
  %v66 = vld [vmem:[%s1 + $0x108] sm:$0xff]
  %v67 = vld [vmem:[%s1 + $0x110] sm:$0xff]
  %v68 = vld [vmem:[%s1 + $0x118] sm:$0xff]
  %v69 = vld [vmem:[%s1 + $0x120] sm:$0xff]
  %v70 = vld [vmem:[%s1 + $0x128] sm:$0xff]
  %v71 = vld [vmem:[%s1 + $0x130] sm:$0xff]
  %v72 = vld [vmem:[%s1 + $0x138] sm:$0xff]
  %v73 = vld [vmem:[%s1 + $0x140] sm:$0xff]
  %v74 = vld [vmem:[%s1 + $0x148] sm:$0xff]
  %v75 = vld [vmem:[%s1 + $0x150] sm:$0xff]
  %v76 = vld [vmem:[%s1 + $0x158] sm:$0xff]
  %v77 = vld [vmem:[%s1 + $0x160] sm:$0xff]
  %v78 = vld [vmem:[%s1 + $0x168] sm:$0xff]
  %v79 = vld [vmem:[%s1 + $0x170] sm:$0xff]
  %v80 = vld [vmem:[%s1 + $0x178] sm:$0xff]
  %v81 = vld [vmem:[%s1 + $0x180] sm:$0xff]
  %v82 = vld [vmem:[%s1 + $0x188] sm:$0xff]
  %v83 = vld [vmem:[%s1 + $0x190] sm:$0xff]
  %v84 = vld [vmem:[%s1 + $0x198] sm:$0xff]
  %v85 = vld [vmem:[%s1 + $0x1a0] sm:$0xff]
  %v86 = vld [vmem:[%s1 + $0x1a8] sm:$0xff]
  %v87 = vld [vmem:[%s1 + $0x1b0] sm:$0xff]
  %v88 = vld [vmem:[%s1 + $0x1b8] sm:$0xff]
  %v89 = vld [vmem:[%s1 + $0x1c0] sm:$0xff]
  %v90 = vld [vmem:[%s1 + $0x1c8] sm:$0xff]
  %v91 = vld [vmem:[%s1 + $0x1d0] sm:$0xff]
  %v92 = vld [vmem:[%s1 + $0x1d8] sm:$0xff]
  %v93 = vld [vmem:[%s1 + $0x1e0] sm:$0xff]
  %v94 = vld [vmem:[%s1 + $0x1e8] sm:$0xff]
  %v95 = vld [vmem:[%s1 + $0x1f0] sm:$0xff]
  %v96 = vld [vmem:[%s1 + $0x1f8] sm:$0xff]
  %97 = vmatpush.msra.mxu0 %v48
  %98 = vmatpush.msra.mxu0 %v47
  %99 = vmatpush.msra.mxu0 %v46
  %100 = vmatpush.msra.mxu0 %v45
  %101 = vmatpush.msra.mxu0 %v44
  %102 = vmatpush.msra.mxu0 %v43
  %103 = vmatpush.msra.mxu0 %v42
  %104 = vmatpush.msra.mxu0 %v41
  %105 = vmatpush.msra.mxu0 %v40
  %106 = vmatpush.msra.mxu0 %v39
  %107 = vmatpush.msra.mxu0 %v38
  %108 = vmatpush.msra.mxu0 %v37
  %109 = vmatpush.msra.mxu0 %v36
  %110 = vmatpush.msra.mxu0 %v35
  %111 = vmatpush.msra.mxu0 %v34
  %112 = vmatpush.msra.mxu0 %v33
  %113 = vmatmul.f32.gmra.mxu0 %v29
  %v114 = vpop.f32.mrf.mxu0
  %v115 = vadd.f32 0.0, %v114
  %116 = vdwg.mxu0
  %117 = vmatpush.msra.mxu0 %v64
  %118 = vmatpush.msra.mxu0 %v63
  %119 = vmatpush.msra.mxu0 %v62
  %120 = vmatpush.msra.mxu0 %v61
  %121 = vmatpush.msra.mxu0 %v60
  %122 = vmatpush.msra.mxu0 %v59
  %123 = vmatpush.msra.mxu0 %v58
  %124 = vmatpush.msra.mxu0 %v57
  %125 = vmatpush.msra.mxu0 %v56
  %126 = vmatpush.msra.mxu0 %v55
  %127 = vmatpush.msra.mxu0 %v54
  %128 = vmatpush.msra.mxu0 %v53
  %129 = vmatpush.msra.mxu0 %v52
  %130 = vmatpush.msra.mxu0 %v51
  %131 = vmatpush.msra.mxu0 %v50
  %132 = vmatpush.msra.mxu0 %v49
  %133 = vmatmul.f32.gmra.mxu0 %v30
  %v134 = vpop.f32.mrf.mxu0
  %v135 = vadd.f32 %v115, %v134
  %136 = vdwg.mxu0
  %137 = vmatpush.msra.mxu0 %v80
  %138 = vmatpush.msra.mxu0 %v79
  %139 = vmatpush.msra.mxu0 %v78
  %140 = vmatpush.msra.mxu0 %v77
  %141 = vmatpush.msra.mxu0 %v76
  %142 = vmatpush.msra.mxu0 %v75
  %143 = vmatpush.msra.mxu0 %v74
  %144 = vmatpush.msra.mxu0 %v73
  %145 = vmatpush.msra.mxu0 %v72
  %146 = vmatpush.msra.mxu0 %v71
  %147 = vmatpush.msra.mxu0 %v70
  %148 = vmatpush.msra.mxu0 %v69
  %149 = vmatpush.msra.mxu0 %v68
  %150 = vmatpush.msra.mxu0 %v67
  %151 = vmatpush.msra.mxu0 %v66
  %152 = vmatpush.msra.mxu0 %v65
  %153 = vmatmul.f32.gmra.mxu0 %v31
  %v154 = vpop.f32.mrf.mxu0
  %v155 = vadd.f32 %v135, %v154
  %156 = vdwg.mxu0
  %157 = vmatpush.msra.mxu0 %v96
  %158 = vmatpush.msra.mxu0 %v95
  %159 = vmatpush.msra.mxu0 %v94
  %160 = vmatpush.msra.mxu0 %v93
  %161 = vmatpush.msra.mxu0 %v92
  %162 = vmatpush.msra.mxu0 %v91
  %163 = vmatpush.msra.mxu0 %v90
  %164 = vmatpush.msra.mxu0 %v89
  %165 = vmatpush.msra.mxu0 %v88
  %166 = vmatpush.msra.mxu0 %v87
  %167 = vmatpush.msra.mxu0 %v86
  %168 = vmatpush.msra.mxu0 %v85
  %169 = vmatpush.msra.mxu0 %v84
  %170 = vmatpush.msra.mxu0 %v83
  %171 = vmatpush.msra.mxu0 %v82
  %172 = vmatpush.msra.mxu0 %v81
  %173 = vmatmul.f32.gmra.mxu0 %v32
  %v174 = vpop.f32.mrf.mxu0
  %v175 = vadd.f32 %v155, %v174
  %176 = vdwg.mxu0
  %vm177 = vcmask 523264
  %v178 = vsel %vm177, %v175, 0.0
  %v179 = vrot.slane %v178, 4
  %v180 = vadd.f32 %v178, %v179
  %v181 = vrot.slane %v180, 2
  %v182 = vadd.f32 %v180, %v181
  %v183 = vrot.slane %v182, 1
  %v184 = vadd.f32 %v182, %v183
  %v185 = vrcp.pop 8.0
  %v186 = vmul.f32 8.0, %v185
  %v187 = vsub.f32 1.0, %v186
  %v188 = vmul.f32 %v185, %v187
  %v189 = vadd.f32 %v185, %v188
  %vm190 = vweird.f32 %v185
  %v191 = vsel %vm190, %v185, %v189
  %v192 = vmul.f32 %v184, %v191
  %v193 = vsub.f32 %v175, %v192
  %v194 = vmul.f32 %v193, %v193
  %v195 = vsel %vm177, %v194, 0.0
  %v196 = vrot.slane %v195, 4
  %v197 = vadd.f32 %v195, %v196
  %v198 = vrot.slane %v197, 2
  %v199 = vadd.f32 %v197, %v198
  %v200 = vrot.slane %v199, 1
  %v201 = vadd.f32 %v199, %v200
  %v202 = vmul.f32 %v201, %v191
  %v203 = vadd.f32 %v202, 1e-05
  %v204 = vrsqrt.pop %v203
  %v205 = vmul.f32 %v204, %v203
  %v206 = vmul.f32 %v205, %v204
  %v207 = vmul.f32 0.5, %v206
  %v208 = vsub.f32 1.5, %v207
  %v209 = vmul.f32 %v204, %v208
  %vm210 = vweird.f32 %v203
  %vm211 = vweird.f32 %v204
  %vm212 = vmor %vm210, %vm211
  %v213 = vsel %vm212, %v204, %v209
  %v214 = vld [vmem:[%s2] sm:$0x1]
  %v215 = vmul.f32 %v213, %v214
  %v216 = vperm.slane %v215, 0
  %v217 = vmul.f32 %v193, %v216
  %v218 = vld [vmem:[%s3] sm:$0x1]
  %v220 = vperm.slane %v218, 0
  %v222 = vadd.f32 %v217, %v220
  %223 = vst.msk [vmem:[%s4] sm:$0xff] %vm177, %v222
  // Predicated region
  $region18: #{unet_forward.13} parent=0 // pred_check
    _
  $region19: #{unet_forward.13} parent=0 // pred_check_branch
    %225 = sbr.rel (0) target = $region21
  $region20: #{unet_forward.13} parent=0 // pred_region
    _
  $region21: #{unet_forward.13} parent=0 // pred_fallthru
    _
  // Predicated region
  $region22: #{unet_forward.13} parent=0 // pred_check
    _
  $region23: #{unet_forward.13} parent=0 // pred_check_branch
    %227 = sbr.rel (0) target = $region25
  $region24: #{unet_forward.13} parent=0 // pred_region
    _
  $region25: #{unet_forward.13} parent=0 // pred_fallthru
    _

// kernel: unet_forward.14
$region0: #{unet_forward.14}
  #allocation0 [shape = 'u32[]', space=smem, size = 0x4, offset = 0x4, fixed_abs, tag = 'smem constant byte address 0x4 - core index']
  #allocation1 [shape = 'u32[72,128]{1,0:T(1,128)}', space=vmem, size = 0x9000, scoped, tag = 'internal scratch']
  %s0 = inlined_call_operand.vmem [shape: f32[8,1024], index: 0, kind: input, shape index: {}]
  %s1 = inlined_call_operand.vmem [shape: f32[1024,64], index: 1, kind: input, shape index: {}]
  %s2 = inlined_call_operand.vmem [shape: f32[8,64], index: 2, kind: output, shape index: {}]
  %s3 = sld [smem:[#allocation0]]
  $region18: #{unet_forward.14} parent=0
    _
  %s5 = ssub.s32 1, %s3
  %s6 = scalar_select 0, %s5, %s3
  // Predicated region
  $region2: #{unet_forward.14} parent=0 // pred_check
    _
  $region3: #{unet_forward.14} parent=0 // pred_check_branch
    %8 = sbr.rel (0) target = $region5
  $region4: #{unet_forward.14} parent=0 // pred_region
    _
  $region5: #{unet_forward.14} parent=0 // pred_fallthru
    _
  // Predicated region
  $region6: #{unet_forward.14} parent=0 // pred_check
    _
  $region7: #{unet_forward.14} parent=0 // pred_check_branch
    %10 = sbr.rel (0) target = $region9
  $region8: #{unet_forward.14} parent=0 // pred_region
    _
  $region9: #{unet_forward.14} parent=0 // pred_fallthru
    _
  %v11 = vld [vmem:[%s0] sm:$0xff]
  %v12 = vld [vmem:[%s0 + $0x8] sm:$0xff]
  %v13 = vld [vmem:[%s0 + $0x10] sm:$0xff]
  %v14 = vld [vmem:[%s0 + $0x18] sm:$0xff]
  %v15 = vld [vmem:[%s0 + $0x20] sm:$0xff]
  %v16 = vld [vmem:[%s0 + $0x28] sm:$0xff]
  %v17 = vld [vmem:[%s0 + $0x30] sm:$0xff]
  %v18 = vld [vmem:[%s0 + $0x38] sm:$0xff]
  %vm19 = vcmp.ge.f32.partialorder %v11, 0.0
  %vm20 = vcmp.ge.f32.partialorder %v12, 0.0
  %vm21 = vcmp.ge.f32.partialorder %v13, 0.0
  %vm22 = vcmp.ge.f32.partialorder %v14, 0.0
  %vm23 = vcmp.ge.f32.partialorder %v15, 0.0
  %vm24 = vcmp.ge.f32.partialorder %v16, 0.0
  %vm25 = vcmp.ge.f32.partialorder %v17, 0.0
  %vm26 = vcmp.ge.f32.partialorder %v18, 0.0
  %v27 = vmul.f32 %v11, 0.2
  %v28 = vmul.f32 %v12, 0.2
  %v29 = vmul.f32 %v13, 0.2
  %v30 = vmul.f32 %v14, 0.2
  %v31 = vmul.f32 %v15, 0.2
  %v32 = vmul.f32 %v16, 0.2
  %v33 = vmul.f32 %v17, 0.2
  %v34 = vmul.f32 %v18, 0.2
  %v35 = vsel %vm19, %v11, %v27
  %v36 = vsel %vm20, %v12, %v28
  %v37 = vsel %vm21, %v13, %v29
  %v38 = vsel %vm22, %v14, %v30
  %v39 = vsel %vm23, %v15, %v31
  %v40 = vsel %vm24, %v16, %v32
  %v41 = vsel %vm25, %v17, %v33
  %v42 = vsel %vm26, %v18, %v34
  %v43 = vld [vmem:[%s1] sm:$0xff]
  %v44 = vld [vmem:[%s1 + $0x8] sm:$0xff]
  %v45 = vld [vmem:[%s1 + $0x10] sm:$0xff]
  %v46 = vld [vmem:[%s1 + $0x18] sm:$0xff]
  %v47 = vld [vmem:[%s1 + $0x20] sm:$0xff]
  %v48 = vld [vmem:[%s1 + $0x28] sm:$0xff]
  %v49 = vld [vmem:[%s1 + $0x30] sm:$0xff]
  %v50 = vld [vmem:[%s1 + $0x38] sm:$0xff]
  %v51 = vld [vmem:[%s1 + $0x40] sm:$0xff]
  %v52 = vld [vmem:[%s1 + $0x48] sm:$0xff]
  %v53 = vld [vmem:[%s1 + $0x50] sm:$0xff]
  %v54 = vld [vmem:[%s1 + $0x58] sm:$0xff]
  %v55 = vld [vmem:[%s1 + $0x60] sm:$0xff]
  %v56 = vld [vmem:[%s1 + $0x68] sm:$0xff]
  %v57 = vld [vmem:[%s1 + $0x70] sm:$0xff]
  %v58 = vld [vmem:[%s1 + $0x78] sm:$0xff]
  %v59 = vld [vmem:[%s1 + $0x80] sm:$0xff]
  %v60 = vld [vmem:[%s1 + $0x88] sm:$0xff]
  %v61 = vld [vmem:[%s1 + $0x90] sm:$0xff]
  %v62 = vld [vmem:[%s1 + $0x98] sm:$0xff]
  %v63 = vld [vmem:[%s1 + $0xa0] sm:$0xff]
  %v64 = vld [vmem:[%s1 + $0xa8] sm:$0xff]
  %v65 = vld [vmem:[%s1 + $0xb0] sm:$0xff]
  %v66 = vld [vmem:[%s1 + $0xb8] sm:$0xff]
  %v67 = vld [vmem:[%s1 + $0xc0] sm:$0xff]
  %v68 = vld [vmem:[%s1 + $0xc8] sm:$0xff]
  %v69 = vld [vmem:[%s1 + $0xd0] sm:$0xff]
  %v70 = vld [vmem:[%s1 + $0xd8] sm:$0xff]
  %v71 = vld [vmem:[%s1 + $0xe0] sm:$0xff]
  %v72 = vld [vmem:[%s1 + $0xe8] sm:$0xff]
  %v73 = vld [vmem:[%s1 + $0xf0] sm:$0xff]
  %v74 = vld [vmem:[%s1 + $0xf8] sm:$0xff]
  %v75 = vld [vmem:[%s1 + $0x100] sm:$0xff]
  %v76 = vld [vmem:[%s1 + $0x108] sm:$0xff]
  %v77 = vld [vmem:[%s1 + $0x110] sm:$0xff]
  %v78 = vld [vmem:[%s1 + $0x118] sm:$0xff]
  %v79 = vld [vmem:[%s1 + $0x120] sm:$0xff]
  %v80 = vld [vmem:[%s1 + $0x128] sm:$0xff]
  %v81 = vld [vmem:[%s1 + $0x130] sm:$0xff]
  %v82 = vld [vmem:[%s1 + $0x138] sm:$0xff]
  %v83 = vld [vmem:[%s1 + $0x140] sm:$0xff]
  %v84 = vld [vmem:[%s1 + $0x148] sm:$0xff]
  %v85 = vld [vmem:[%s1 + $0x150] sm:$0xff]
  %v86 = vld [vmem:[%s1 + $0x158] sm:$0xff]
  %v87 = vld [vmem:[%s1 + $0x160] sm:$0xff]
  %v88 = vld [vmem:[%s1 + $0x168] sm:$0xff]
  %v89 = vld [vmem:[%s1 + $0x170] sm:$0xff]
  %v90 = vld [vmem:[%s1 + $0x178] sm:$0xff]
  %v91 = vld [vmem:[%s1 + $0x180] sm:$0xff]
  %v92 = vld [vmem:[%s1 + $0x188] sm:$0xff]
  %v93 = vld [vmem:[%s1 + $0x190] sm:$0xff]
  %v94 = vld [vmem:[%s1 + $0x198] sm:$0xff]
  %v95 = vld [vmem:[%s1 + $0x1a0] sm:$0xff]
  %v96 = vld [vmem:[%s1 + $0x1a8] sm:$0xff]
  %v97 = vld [vmem:[%s1 + $0x1b0] sm:$0xff]
  %v98 = vld [vmem:[%s1 + $0x1b8] sm:$0xff]
  %v99 = vld [vmem:[%s1 + $0x1c0] sm:$0xff]
  %v100 = vld [vmem:[%s1 + $0x1c8] sm:$0xff]
  %v101 = vld [vmem:[%s1 + $0x1d0] sm:$0xff]
  %v102 = vld [vmem:[%s1 + $0x1d8] sm:$0xff]
  %v103 = vld [vmem:[%s1 + $0x1e0] sm:$0xff]
  %v104 = vld [vmem:[%s1 + $0x1e8] sm:$0xff]
  %v105 = vld [vmem:[%s1 + $0x1f0] sm:$0xff]
  %v106 = vld [vmem:[%s1 + $0x1f8] sm:$0xff]
  %v107 = vld [vmem:[%s1 + $0x200] sm:$0xff]
  %v108 = vld [vmem:[%s1 + $0x208] sm:$0xff]
  %v109 = vld [vmem:[%s1 + $0x210] sm:$0xff]
  %v110 = vld [vmem:[%s1 + $0x218] sm:$0xff]
  %v111 = vld [vmem:[%s1 + $0x220] sm:$0xff]
  %v112 = vld [vmem:[%s1 + $0x228] sm:$0xff]
  %v113 = vld [vmem:[%s1 + $0x230] sm:$0xff]
  %v114 = vld [vmem:[%s1 + $0x238] sm:$0xff]
  %v115 = vld [vmem:[%s1 + $0x240] sm:$0xff]
  %v116 = vld [vmem:[%s1 + $0x248] sm:$0xff]
  %v117 = vld [vmem:[%s1 + $0x250] sm:$0xff]
  %v118 = vld [vmem:[%s1 + $0x258] sm:$0xff]
  %v119 = vld [vmem:[%s1 + $0x260] sm:$0xff]
  %v120 = vld [vmem:[%s1 + $0x268] sm:$0xff]
  %v121 = vld [vmem:[%s1 + $0x270] sm:$0xff]
  %v122 = vld [vmem:[%s1 + $0x278] sm:$0xff]
  %v123 = vld [vmem:[%s1 + $0x280] sm:$0xff]
  %v124 = vld [vmem:[%s1 + $0x288] sm:$0xff]
  %v125 = vld [vmem:[%s1 + $0x290] sm:$0xff]
  %v126 = vld [vmem:[%s1 + $0x298] sm:$0xff]
  %v127 = vld [vmem:[%s1 + $0x2a0] sm:$0xff]
  %v128 = vld [vmem:[%s1 + $0x2a8] sm:$0xff]
  %v129 = vld [vmem:[%s1 + $0x2b0] sm:$0xff]
  %v130 = vld [vmem:[%s1 + $0x2b8] sm:$0xff]
  %v131 = vld [vmem:[%s1 + $0x2c0] sm:$0xff]
  %v132 = vld [vmem:[%s1 + $0x2c8] sm:$0xff]
  %v133 = vld [vmem:[%s1 + $0x2d0] sm:$0xff]
  %v134 = vld [vmem:[%s1 + $0x2d8] sm:$0xff]
  %v135 = vld [vmem:[%s1 + $0x2e0] sm:$0xff]
  %v136 = vld [vmem:[%s1 + $0x2e8] sm:$0xff]
  %v137 = vld [vmem:[%s1 + $0x2f0] sm:$0xff]
  %v138 = vld [vmem:[%s1 + $0x2f8] sm:$0xff]
  %v139 = vld [vmem:[%s1 + $0x300] sm:$0xff]
  %v140 = vld [vmem:[%s1 + $0x308] sm:$0xff]
  %v141 = vld [vmem:[%s1 + $0x310] sm:$0xff]
  %v142 = vld [vmem:[%s1 + $0x318] sm:$0xff]
  %v143 = vld [vmem:[%s1 + $0x320] sm:$0xff]
  %v144 = vld [vmem:[%s1 + $0x328] sm:$0xff]
  %v145 = vld [vmem:[%s1 + $0x330] sm:$0xff]
  %v146 = vld [vmem:[%s1 + $0x338] sm:$0xff]
  %v147 = vld [vmem:[%s1 + $0x340] sm:$0xff]
  %v148 = vld [vmem:[%s1 + $0x348] sm:$0xff]
  %v149 = vld [vmem:[%s1 + $0x350] sm:$0xff]
  %v150 = vld [vmem:[%s1 + $0x358] sm:$0xff]
  %v151 = vld [vmem:[%s1 + $0x360] sm:$0xff]
  %v152 = vld [vmem:[%s1 + $0x368] sm:$0xff]
  %v153 = vld [vmem:[%s1 + $0x370] sm:$0xff]
  %v154 = vld [vmem:[%s1 + $0x378] sm:$0xff]
  %v155 = vld [vmem:[%s1 + $0x380] sm:$0xff]
  %v156 = vld [vmem:[%s1 + $0x388] sm:$0xff]
  %v157 = vld [vmem:[%s1 + $0x390] sm:$0xff]
  %v158 = vld [vmem:[%s1 + $0x398] sm:$0xff]
  %v159 = vld [vmem:[%s1 + $0x3a0] sm:$0xff]
  %v160 = vld [vmem:[%s1 + $0x3a8] sm:$0xff]
  %v161 = vld [vmem:[%s1 + $0x3b0] sm:$0xff]
  %v162 = vld [vmem:[%s1 + $0x3b8] sm:$0xff]
  %v163 = vld [vmem:[%s1 + $0x3c0] sm:$0xff]
  %v164 = vld [vmem:[%s1 + $0x3c8] sm:$0xff]
  %v165 = vld [vmem:[%s1 + $0x3d0] sm:$0xff]
  %v166 = vld [vmem:[%s1 + $0x3d8] sm:$0xff]
  %v167 = vld [vmem:[%s1 + $0x3e0] sm:$0xff]
  %v168 = vld [vmem:[%s1 + $0x3e8] sm:$0xff]
  %v169 = vld [vmem:[%s1 + $0x3f0] sm:$0xff]
  %v170 = vld [vmem:[%s1 + $0x3f8] sm:$0xff]
  %171 = vmatpush.msra.mxu0 %v58
  %172 = vmatpush.msra.mxu0 %v57
  %173 = vmatpush.msra.mxu0 %v56
  %174 = vmatpush.msra.mxu0 %v55
  %175 = vmatpush.msra.mxu0 %v54
  %176 = vmatpush.msra.mxu0 %v53
  %177 = vmatpush.msra.mxu0 %v52
  %178 = vmatpush.msra.mxu0 %v51
  %179 = vmatpush.msra.mxu0 %v50
  %180 = vmatpush.msra.mxu0 %v49
  %181 = vmatpush.msra.mxu0 %v48
  %182 = vmatpush.msra.mxu0 %v47
  %183 = vmatpush.msra.mxu0 %v46
  %184 = vmatpush.msra.mxu0 %v45
  %185 = vmatpush.msra.mxu0 %v44
  %186 = vmatpush.msra.mxu0 %v43
  %187 = vmatmul.f32.gmra.mxu0 %v35
  %v188 = vpop.f32.mrf.mxu0
  %v189 = vadd.f32 0.0, %v188
  %190 = vdwg.mxu0
  %191 = vmatpush.msra.mxu0 %v74
  %192 = vmatpush.msra.mxu0 %v73
  %193 = vmatpush.msra.mxu0 %v72
  %194 = vmatpush.msra.mxu0 %v71
  %195 = vmatpush.msra.mxu0 %v70
  %196 = vmatpush.msra.mxu0 %v69
  %197 = vmatpush.msra.mxu0 %v68
  %198 = vmatpush.msra.mxu0 %v67
  %199 = vmatpush.msra.mxu0 %v66
  %200 = vmatpush.msra.mxu0 %v65
  %201 = vmatpush.msra.mxu0 %v64
  %202 = vmatpush.msra.mxu0 %v63
  %203 = vmatpush.msra.mxu0 %v62
  %204 = vmatpush.msra.mxu0 %v61
  %205 = vmatpush.msra.mxu0 %v60
  %206 = vmatpush.msra.mxu0 %v59
  %207 = vmatmul.f32.gmra.mxu0 %v36
  %v208 = vpop.f32.mrf.mxu0
  %v209 = vadd.f32 %v189, %v208
  %210 = vdwg.mxu0
  %211 = vmatpush.msra.mxu0 %v90
  %212 = vmatpush.msra.mxu0 %v89
  %213 = vmatpush.msra.mxu0 %v88
  %214 = vmatpush.msra.mxu0 %v87
  %215 = vmatpush.msra.mxu0 %v86
  %216 = vmatpush.msra.mxu0 %v85
  %217 = vmatpush.msra.mxu0 %v84
  %218 = vmatpush.msra.mxu0 %v83
  %219 = vmatpush.msra.mxu0 %v82
  %220 = vmatpush.msra.mxu0 %v81
  %221 = vmatpush.msra.mxu0 %v80
  %222 = vmatpush.msra.mxu0 %v79
  %223 = vmatpush.msra.mxu0 %v78
  %224 = vmatpush.msra.mxu0 %v77
  %225 = vmatpush.msra.mxu0 %v76
  %226 = vmatpush.msra.mxu0 %v75
  %227 = vmatmul.f32.gmra.mxu0 %v37
  %v228 = vpop.f32.mrf.mxu0
  %v229 = vadd.f32 %v209, %v228
  %230 = vdwg.mxu0
  %231 = vmatpush.msra.mxu0 %v106
  %232 = vmatpush.msra.mxu0 %v105
  %233 = vmatpush.msra.mxu0 %v104
  %234 = vmatpush.msra.mxu0 %v103
  %235 = vmatpush.msra.mxu0 %v102
  %236 = vmatpush.msra.mxu0 %v101
  %237 = vmatpush.msra.mxu0 %v100
  %238 = vmatpush.msra.mxu0 %v99
  %239 = vmatpush.msra.mxu0 %v98
  %240 = vmatpush.msra.mxu0 %v97
  %241 = vmatpush.msra.mxu0 %v96
  %242 = vmatpush.msra.mxu0 %v95
  %243 = vmatpush.msra.mxu0 %v94
  %244 = vmatpush.msra.mxu0 %v93
  %245 = vmatpush.msra.mxu0 %v92
  %246 = vmatpush.msra.mxu0 %v91
  %247 = vmatmul.f32.gmra.mxu0 %v38
  %v248 = vpop.f32.mrf.mxu0
  %v249 = vadd.f32 %v229, %v248
  %250 = vdwg.mxu0
  %251 = vmatpush.msra.mxu0 %v122
  %252 = vmatpush.msra.mxu0 %v121
  %253 = vmatpush.msra.mxu0 %v120
  %254 = vmatpush.msra.mxu0 %v119
  %255 = vmatpush.msra.mxu0 %v118
  %256 = vmatpush.msra.mxu0 %v117
  %257 = vmatpush.msra.mxu0 %v116
  %258 = vmatpush.msra.mxu0 %v115
  %259 = vmatpush.msra.mxu0 %v114
  %260 = vmatpush.msra.mxu0 %v113
  %261 = vmatpush.msra.mxu0 %v112
  %262 = vmatpush.msra.mxu0 %v111
  %263 = vmatpush.msra.mxu0 %v110
  %264 = vmatpush.msra.mxu0 %v109
  %265 = vmatpush.msra.mxu0 %v108
  %266 = vmatpush.msra.mxu0 %v107
  %267 = vmatmul.f32.gmra.mxu0 %v39
  %v268 = vpop.f32.mrf.mxu0
  %v269 = vadd.f32 %v249, %v268
  %270 = vdwg.mxu0
  %271 = vmatpush.msra.mxu0 %v138
  %272 = vmatpush.msra.mxu0 %v137
  %273 = vmatpush.msra.mxu0 %v136
  %274 = vmatpush.msra.mxu0 %v135
  %275 = vmatpush.msra.mxu0 %v134
  %276 = vmatpush.msra.mxu0 %v133
  %277 = vmatpush.msra.mxu0 %v132
  %278 = vmatpush.msra.mxu0 %v131
  %279 = vmatpush.msra.mxu0 %v130
  %280 = vmatpush.msra.mxu0 %v129
  %281 = vmatpush.msra.mxu0 %v128
  %282 = vmatpush.msra.mxu0 %v127
  %283 = vmatpush.msra.mxu0 %v126
  %284 = vmatpush.msra.mxu0 %v125
  %285 = vmatpush.msra.mxu0 %v124
  %286 = vmatpush.msra.mxu0 %v123
  %287 = vmatmul.f32.gmra.mxu0 %v40
  %v288 = vpop.f32.mrf.mxu0
  %v289 = vadd.f32 %v269, %v288
  %290 = vdwg.mxu0
  %291 = vmatpush.msra.mxu0 %v154
  %292 = vmatpush.msra.mxu0 %v153
  %293 = vmatpush.msra.mxu0 %v152
  %294 = vmatpush.msra.mxu0 %v151
  %295 = vmatpush.msra.mxu0 %v150
  %296 = vmatpush.msra.mxu0 %v149
  %297 = vmatpush.msra.mxu0 %v148
  %298 = vmatpush.msra.mxu0 %v147
  %299 = vmatpush.msra.mxu0 %v146
  %300 = vmatpush.msra.mxu0 %v145
  %301 = vmatpush.msra.mxu0 %v144
  %302 = vmatpush.msra.mxu0 %v143
  %303 = vmatpush.msra.mxu0 %v142
  %304 = vmatpush.msra.mxu0 %v141
  %305 = vmatpush.msra.mxu0 %v140
  %306 = vmatpush.msra.mxu0 %v139
  %307 = vmatmul.f32.gmra.mxu0 %v41
  %v308 = vpop.f32.mrf.mxu0
  %v309 = vadd.f32 %v289, %v308
  %310 = vdwg.mxu0
  %311 = vmatpush.msra.mxu0 %v170
  %312 = vmatpush.msra.mxu0 %v169
  %313 = vmatpush.msra.mxu0 %v168
  %314 = vmatpush.msra.mxu0 %v167
  %315 = vmatpush.msra.mxu0 %v166
  %316 = vmatpush.msra.mxu0 %v165
  %317 = vmatpush.msra.mxu0 %v164
  %318 = vmatpush.msra.mxu0 %v163
  %319 = vmatpush.msra.mxu0 %v162
  %320 = vmatpush.msra.mxu0 %v161
  %321 = vmatpush.msra.mxu0 %v160
  %322 = vmatpush.msra.mxu0 %v159
  %323 = vmatpush.msra.mxu0 %v158
  %324 = vmatpush.msra.mxu0 %v157
  %325 = vmatpush.msra.mxu0 %v156
  %326 = vmatpush.msra.mxu0 %v155
  %327 = vmatmul.f32.gmra.mxu0 %v42
  %v328 = vpop.f32.mrf.mxu0
  %v329 = vadd.f32 %v309, %v328
  %330 = vdwg.mxu0
  %vm331 = vcmask 523264
  %332 = vst.msk [vmem:[%s2] sm:$0xff] %vm331, %v329
  // Predicated region
  $region10: #{unet_forward.14} parent=0 // pred_check
    _
  $region11: #{unet_forward.14} parent=0 // pred_check_branch
    %334 = sbr.rel (0) target = $region13
  $region12: #{unet_forward.14} parent=0 // pred_region
    _
  $region13: #{unet_forward.14} parent=0 // pred_fallthru
    _
  // Predicated region
  $region14: #{unet_forward.14} parent=0 // pred_check
    _
  $region15: #{unet_forward.14} parent=0 // pred_check_branch
    %336 = sbr.rel (0) target = $region17
  $region16: #{unet_forward.14} parent=0 // pred_region
    _
  $region17: #{unet_forward.14} parent=0 // pred_fallthru
    _

// kernel: unet_forward.15
$region0: #{unet_forward.15}
  #allocation0 [shape = 'u32[]', space=smem, size = 0x4, offset = 0x4, fixed_abs, tag = 'smem constant byte address 0x4 - core index']
  #allocation1 [shape = 'u32[72,128]{1,0:T(1,128)}', space=vmem, size = 0x9000, scoped, tag = 'internal scratch']
  %s0 = inlined_call_operand.vmem [shape: f32[8,1024], index: 0, kind: input, shape index: {}]
  %s1 = inlined_call_operand.vmem [shape: f32[1024,64], index: 1, kind: input, shape index: {}]
  %s2 = inlined_call_operand.vmem [shape: f32[1,64], index: 2, kind: input, shape index: {}]
  %s3 = inlined_call_operand.vmem [shape: f32[1,64], index: 3, kind: input, shape index: {}]
  %s4 = inlined_call_operand.vmem [shape: f32[8,64], index: 4, kind: output, shape index: {}]
  %s5 = sld [smem:[#allocation0]]
  $region26: #{unet_forward.15} parent=0
    _
  %s7 = ssub.s32 1, %s5
  %s8 = scalar_select 0, %s7, %s5
  // Predicated region
  $region2: #{unet_forward.15} parent=0 // pred_check
    _
  $region3: #{unet_forward.15} parent=0 // pred_check_branch
    %10 = sbr.rel (0) target = $region5
  $region4: #{unet_forward.15} parent=0 // pred_region
    _
  $region5: #{unet_forward.15} parent=0 // pred_fallthru
    _
  // Predicated region
  $region6: #{unet_forward.15} parent=0 // pred_check
    _
  $region7: #{unet_forward.15} parent=0 // pred_check_branch
    %12 = sbr.rel (0) target = $region9
  $region8: #{unet_forward.15} parent=0 // pred_region
    _
  $region9: #{unet_forward.15} parent=0 // pred_fallthru
    _
  // Predicated region
  $region10: #{unet_forward.15} parent=0 // pred_check
    _
  $region11: #{unet_forward.15} parent=0 // pred_check_branch
    %14 = sbr.rel (0) target = $region13
  $region12: #{unet_forward.15} parent=0 // pred_region
    _
  $region13: #{unet_forward.15} parent=0 // pred_fallthru
    _
  // Predicated region
  $region14: #{unet_forward.15} parent=0 // pred_check
    _
  $region15: #{unet_forward.15} parent=0 // pred_check_branch
    %16 = sbr.rel (0) target = $region17
  $region16: #{unet_forward.15} parent=0 // pred_region
    _
  $region17: #{unet_forward.15} parent=0 // pred_fallthru
    _
  %v17 = vld [vmem:[%s0] sm:$0xff]
  %v18 = vld [vmem:[%s0 + $0x8] sm:$0xff]
  %v19 = vld [vmem:[%s0 + $0x10] sm:$0xff]
  %v20 = vld [vmem:[%s0 + $0x18] sm:$0xff]
  %v21 = vld [vmem:[%s0 + $0x20] sm:$0xff]
  %v22 = vld [vmem:[%s0 + $0x28] sm:$0xff]
  %v23 = vld [vmem:[%s0 + $0x30] sm:$0xff]
  %v24 = vld [vmem:[%s0 + $0x38] sm:$0xff]
  %v25 = vmax.f32 %v17, 0.0
  %v26 = vmax.f32 %v18, 0.0
  %v27 = vmax.f32 %v19, 0.0
  %v28 = vmax.f32 %v20, 0.0
  %v29 = vmax.f32 %v21, 0.0
  %v30 = vmax.f32 %v22, 0.0
  %v31 = vmax.f32 %v23, 0.0
  %v32 = vmax.f32 %v24, 0.0
  %v33 = vld [vmem:[%s1] sm:$0xff]
  %v34 = vld [vmem:[%s1 + $0x8] sm:$0xff]
  %v35 = vld [vmem:[%s1 + $0x10] sm:$0xff]
  %v36 = vld [vmem:[%s1 + $0x18] sm:$0xff]
  %v37 = vld [vmem:[%s1 + $0x20] sm:$0xff]
  %v38 = vld [vmem:[%s1 + $0x28] sm:$0xff]
  %v39 = vld [vmem:[%s1 + $0x30] sm:$0xff]
  %v40 = vld [vmem:[%s1 + $0x38] sm:$0xff]
  %v41 = vld [vmem:[%s1 + $0x40] sm:$0xff]
  %v42 = vld [vmem:[%s1 + $0x48] sm:$0xff]
  %v43 = vld [vmem:[%s1 + $0x50] sm:$0xff]
  %v44 = vld [vmem:[%s1 + $0x58] sm:$0xff]
  %v45 = vld [vmem:[%s1 + $0x60] sm:$0xff]
  %v46 = vld [vmem:[%s1 + $0x68] sm:$0xff]
  %v47 = vld [vmem:[%s1 + $0x70] sm:$0xff]
  %v48 = vld [vmem:[%s1 + $0x78] sm:$0xff]
  %v49 = vld [vmem:[%s1 + $0x80] sm:$0xff]
  %v50 = vld [vmem:[%s1 + $0x88] sm:$0xff]
  %v51 = vld [vmem:[%s1 + $0x90] sm:$0xff]
  %v52 = vld [vmem:[%s1 + $0x98] sm:$0xff]
  %v53 = vld [vmem:[%s1 + $0xa0] sm:$0xff]
  %v54 = vld [vmem:[%s1 + $0xa8] sm:$0xff]
  %v55 = vld [vmem:[%s1 + $0xb0] sm:$0xff]
  %v56 = vld [vmem:[%s1 + $0xb8] sm:$0xff]
  %v57 = vld [vmem:[%s1 + $0xc0] sm:$0xff]
  %v58 = vld [vmem:[%s1 + $0xc8] sm:$0xff]
  %v59 = vld [vmem:[%s1 + $0xd0] sm:$0xff]
  %v60 = vld [vmem:[%s1 + $0xd8] sm:$0xff]
  %v61 = vld [vmem:[%s1 + $0xe0] sm:$0xff]
  %v62 = vld [vmem:[%s1 + $0xe8] sm:$0xff]
  %v63 = vld [vmem:[%s1 + $0xf0] sm:$0xff]
  %v64 = vld [vmem:[%s1 + $0xf8] sm:$0xff]
  %v65 = vld [vmem:[%s1 + $0x100] sm:$0xff]
  %v66 = vld [vmem:[%s1 + $0x108] sm:$0xff]
  %v67 = vld [vmem:[%s1 + $0x110] sm:$0xff]
  %v68 = vld [vmem:[%s1 + $0x118] sm:$0xff]
  %v69 = vld [vmem:[%s1 + $0x120] sm:$0xff]
  %v70 = vld [vmem:[%s1 + $0x128] sm:$0xff]
  %v71 = vld [vmem:[%s1 + $0x130] sm:$0xff]
  %v72 = vld [vmem:[%s1 + $0x138] sm:$0xff]
  %v73 = vld [vmem:[%s1 + $0x140] sm:$0xff]
  %v74 = vld [vmem:[%s1 + $0x148] sm:$0xff]
  %v75 = vld [vmem:[%s1 + $0x150] sm:$0xff]
  %v76 = vld [vmem:[%s1 + $0x158] sm:$0xff]
  %v77 = vld [vmem:[%s1 + $0x160] sm:$0xff]
  %v78 = vld [vmem:[%s1 + $0x168] sm:$0xff]
  %v79 = vld [vmem:[%s1 + $0x170] sm:$0xff]
  %v80 = vld [vmem:[%s1 + $0x178] sm:$0xff]
  %v81 = vld [vmem:[%s1 + $0x180] sm:$0xff]
  %v82 = vld [vmem:[%s1 + $0x188] sm:$0xff]
  %v83 = vld [vmem:[%s1 + $0x190] sm:$0xff]
  %v84 = vld [vmem:[%s1 + $0x198] sm:$0xff]
  %v85 = vld [vmem:[%s1 + $0x1a0] sm:$0xff]
  %v86 = vld [vmem:[%s1 + $0x1a8] sm:$0xff]
  %v87 = vld [vmem:[%s1 + $0x1b0] sm:$0xff]
  %v88 = vld [vmem:[%s1 + $0x1b8] sm:$0xff]
  %v89 = vld [vmem:[%s1 + $0x1c0] sm:$0xff]
  %v90 = vld [vmem:[%s1 + $0x1c8] sm:$0xff]
  %v91 = vld [vmem:[%s1 + $0x1d0] sm:$0xff]
  %v92 = vld [vmem:[%s1 + $0x1d8] sm:$0xff]
  %v93 = vld [vmem:[%s1 + $0x1e0] sm:$0xff]
  %v94 = vld [vmem:[%s1 + $0x1e8] sm:$0xff]
  %v95 = vld [vmem:[%s1 + $0x1f0] sm:$0xff]
  %v96 = vld [vmem:[%s1 + $0x1f8] sm:$0xff]
  %v97 = vld [vmem:[%s1 + $0x200] sm:$0xff]
  %v98 = vld [vmem:[%s1 + $0x208] sm:$0xff]
  %v99 = vld [vmem:[%s1 + $0x210] sm:$0xff]
  %v100 = vld [vmem:[%s1 + $0x218] sm:$0xff]
  %v101 = vld [vmem:[%s1 + $0x220] sm:$0xff]
  %v102 = vld [vmem:[%s1 + $0x228] sm:$0xff]
  %v103 = vld [vmem:[%s1 + $0x230] sm:$0xff]
  %v104 = vld [vmem:[%s1 + $0x238] sm:$0xff]
  %v105 = vld [vmem:[%s1 + $0x240] sm:$0xff]
  %v106 = vld [vmem:[%s1 + $0x248] sm:$0xff]
  %v107 = vld [vmem:[%s1 + $0x250] sm:$0xff]
  %v108 = vld [vmem:[%s1 + $0x258] sm:$0xff]
  %v109 = vld [vmem:[%s1 + $0x260] sm:$0xff]
  %v110 = vld [vmem:[%s1 + $0x268] sm:$0xff]
  %v111 = vld [vmem:[%s1 + $0x270] sm:$0xff]
  %v112 = vld [vmem:[%s1 + $0x278] sm:$0xff]
  %v113 = vld [vmem:[%s1 + $0x280] sm:$0xff]
  %v114 = vld [vmem:[%s1 + $0x288] sm:$0xff]
  %v115 = vld [vmem:[%s1 + $0x290] sm:$0xff]
  %v116 = vld [vmem:[%s1 + $0x298] sm:$0xff]
  %v117 = vld [vmem:[%s1 + $0x2a0] sm:$0xff]
  %v118 = vld [vmem:[%s1 + $0x2a8] sm:$0xff]
  %v119 = vld [vmem:[%s1 + $0x2b0] sm:$0xff]
  %v120 = vld [vmem:[%s1 + $0x2b8] sm:$0xff]
  %v121 = vld [vmem:[%s1 + $0x2c0] sm:$0xff]
  %v122 = vld [vmem:[%s1 + $0x2c8] sm:$0xff]
  %v123 = vld [vmem:[%s1 + $0x2d0] sm:$0xff]
  %v124 = vld [vmem:[%s1 + $0x2d8] sm:$0xff]
  %v125 = vld [vmem:[%s1 + $0x2e0] sm:$0xff]
  %v126 = vld [vmem:[%s1 + $0x2e8] sm:$0xff]
  %v127 = vld [vmem:[%s1 + $0x2f0] sm:$0xff]
  %v128 = vld [vmem:[%s1 + $0x2f8] sm:$0xff]
  %v129 = vld [vmem:[%s1 + $0x300] sm:$0xff]
  %v130 = vld [vmem:[%s1 + $0x308] sm:$0xff]
  %v131 = vld [vmem:[%s1 + $0x310] sm:$0xff]
  %v132 = vld [vmem:[%s1 + $0x318] sm:$0xff]
  %v133 = vld [vmem:[%s1 + $0x320] sm:$0xff]
  %v134 = vld [vmem:[%s1 + $0x328] sm:$0xff]
  %v135 = vld [vmem:[%s1 + $0x330] sm:$0xff]
  %v136 = vld [vmem:[%s1 + $0x338] sm:$0xff]
  %v137 = vld [vmem:[%s1 + $0x340] sm:$0xff]
  %v138 = vld [vmem:[%s1 + $0x348] sm:$0xff]
  %v139 = vld [vmem:[%s1 + $0x350] sm:$0xff]
  %v140 = vld [vmem:[%s1 + $0x358] sm:$0xff]
  %v141 = vld [vmem:[%s1 + $0x360] sm:$0xff]
  %v142 = vld [vmem:[%s1 + $0x368] sm:$0xff]
  %v143 = vld [vmem:[%s1 + $0x370] sm:$0xff]
  %v144 = vld [vmem:[%s1 + $0x378] sm:$0xff]
  %v145 = vld [vmem:[%s1 + $0x380] sm:$0xff]
  %v146 = vld [vmem:[%s1 + $0x388] sm:$0xff]
  %v147 = vld [vmem:[%s1 + $0x390] sm:$0xff]
  %v148 = vld [vmem:[%s1 + $0x398] sm:$0xff]
  %v149 = vld [vmem:[%s1 + $0x3a0] sm:$0xff]
  %v150 = vld [vmem:[%s1 + $0x3a8] sm:$0xff]
  %v151 = vld [vmem:[%s1 + $0x3b0] sm:$0xff]
  %v152 = vld [vmem:[%s1 + $0x3b8] sm:$0xff]
  %v153 = vld [vmem:[%s1 + $0x3c0] sm:$0xff]
  %v154 = vld [vmem:[%s1 + $0x3c8] sm:$0xff]
  %v155 = vld [vmem:[%s1 + $0x3d0] sm:$0xff]
  %v156 = vld [vmem:[%s1 + $0x3d8] sm:$0xff]
  %v157 = vld [vmem:[%s1 + $0x3e0] sm:$0xff]
  %v158 = vld [vmem:[%s1 + $0x3e8] sm:$0xff]
  %v159 = vld [vmem:[%s1 + $0x3f0] sm:$0xff]
  %v160 = vld [vmem:[%s1 + $0x3f8] sm:$0xff]
  %161 = vmatpush.msra.mxu0 %v48
  %162 = vmatpush.msra.mxu0 %v47
  %163 = vmatpush.msra.mxu0 %v46
  %164 = vmatpush.msra.mxu0 %v45
  %165 = vmatpush.msra.mxu0 %v44
  %166 = vmatpush.msra.mxu0 %v43
  %167 = vmatpush.msra.mxu0 %v42
  %168 = vmatpush.msra.mxu0 %v41
  %169 = vmatpush.msra.mxu0 %v40
  %170 = vmatpush.msra.mxu0 %v39
  %171 = vmatpush.msra.mxu0 %v38
  %172 = vmatpush.msra.mxu0 %v37
  %173 = vmatpush.msra.mxu0 %v36
  %174 = vmatpush.msra.mxu0 %v35
  %175 = vmatpush.msra.mxu0 %v34
  %176 = vmatpush.msra.mxu0 %v33
  %177 = vmatmul.f32.gmra.mxu0 %v25
  %v178 = vpop.f32.mrf.mxu0
  %v179 = vadd.f32 0.0, %v178
  %180 = vdwg.mxu0
  %181 = vmatpush.msra.mxu0 %v64
  %182 = vmatpush.msra.mxu0 %v63
  %183 = vmatpush.msra.mxu0 %v62
  %184 = vmatpush.msra.mxu0 %v61
  %185 = vmatpush.msra.mxu0 %v60
  %186 = vmatpush.msra.mxu0 %v59
  %187 = vmatpush.msra.mxu0 %v58
  %188 = vmatpush.msra.mxu0 %v57
  %189 = vmatpush.msra.mxu0 %v56
  %190 = vmatpush.msra.mxu0 %v55
  %191 = vmatpush.msra.mxu0 %v54
  %192 = vmatpush.msra.mxu0 %v53
  %193 = vmatpush.msra.mxu0 %v52
  %194 = vmatpush.msra.mxu0 %v51
  %195 = vmatpush.msra.mxu0 %v50
  %196 = vmatpush.msra.mxu0 %v49
  %197 = vmatmul.f32.gmra.mxu0 %v26
  %v198 = vpop.f32.mrf.mxu0
  %v199 = vadd.f32 %v179, %v198
  %200 = vdwg.mxu0
  %201 = vmatpush.msra.mxu0 %v80
  %202 = vmatpush.msra.mxu0 %v79
  %203 = vmatpush.msra.mxu0 %v78
  %204 = vmatpush.msra.mxu0 %v77
  %205 = vmatpush.msra.mxu0 %v76
  %206 = vmatpush.msra.mxu0 %v75
  %207 = vmatpush.msra.mxu0 %v74
  %208 = vmatpush.msra.mxu0 %v73
  %209 = vmatpush.msra.mxu0 %v72
  %210 = vmatpush.msra.mxu0 %v71
  %211 = vmatpush.msra.mxu0 %v70
  %212 = vmatpush.msra.mxu0 %v69
  %213 = vmatpush.msra.mxu0 %v68
  %214 = vmatpush.msra.mxu0 %v67
  %215 = vmatpush.msra.mxu0 %v66
  %216 = vmatpush.msra.mxu0 %v65
  %217 = vmatmul.f32.gmra.mxu0 %v27
  %v218 = vpop.f32.mrf.mxu0
  %v219 = vadd.f32 %v199, %v218
  %220 = vdwg.mxu0
  %221 = vmatpush.msra.mxu0 %v96
  %222 = vmatpush.msra.mxu0 %v95
  %223 = vmatpush.msra.mxu0 %v94
  %224 = vmatpush.msra.mxu0 %v93
  %225 = vmatpush.msra.mxu0 %v92
  %226 = vmatpush.msra.mxu0 %v91
  %227 = vmatpush.msra.mxu0 %v90
  %228 = vmatpush.msra.mxu0 %v89
  %229 = vmatpush.msra.mxu0 %v88
  %230 = vmatpush.msra.mxu0 %v87
  %231 = vmatpush.msra.mxu0 %v86
  %232 = vmatpush.msra.mxu0 %v85
  %233 = vmatpush.msra.mxu0 %v84
  %234 = vmatpush.msra.mxu0 %v83
  %235 = vmatpush.msra.mxu0 %v82
  %236 = vmatpush.msra.mxu0 %v81
  %237 = vmatmul.f32.gmra.mxu0 %v28
  %v238 = vpop.f32.mrf.mxu0
  %v239 = vadd.f32 %v219, %v238
  %240 = vdwg.mxu0
  %241 = vmatpush.msra.mxu0 %v112
  %242 = vmatpush.msra.mxu0 %v111
  %243 = vmatpush.msra.mxu0 %v110
  %244 = vmatpush.msra.mxu0 %v109
  %245 = vmatpush.msra.mxu0 %v108
  %246 = vmatpush.msra.mxu0 %v107
  %247 = vmatpush.msra.mxu0 %v106
  %248 = vmatpush.msra.mxu0 %v105
  %249 = vmatpush.msra.mxu0 %v104
  %250 = vmatpush.msra.mxu0 %v103
  %251 = vmatpush.msra.mxu0 %v102
  %252 = vmatpush.msra.mxu0 %v101
  %253 = vmatpush.msra.mxu0 %v100
  %254 = vmatpush.msra.mxu0 %v99
  %255 = vmatpush.msra.mxu0 %v98
  %256 = vmatpush.msra.mxu0 %v97
  %257 = vmatmul.f32.gmra.mxu0 %v29
  %v258 = vpop.f32.mrf.mxu0
  %v259 = vadd.f32 %v239, %v258
  %260 = vdwg.mxu0
  %261 = vmatpush.msra.mxu0 %v128
  %262 = vmatpush.msra.mxu0 %v127
  %263 = vmatpush.msra.mxu0 %v126
  %264 = vmatpush.msra.mxu0 %v125
  %265 = vmatpush.msra.mxu0 %v124
  %266 = vmatpush.msra.mxu0 %v123
  %267 = vmatpush.msra.mxu0 %v122
  %268 = vmatpush.msra.mxu0 %v121
  %269 = vmatpush.msra.mxu0 %v120
  %270 = vmatpush.msra.mxu0 %v119
  %271 = vmatpush.msra.mxu0 %v118
  %272 = vmatpush.msra.mxu0 %v117
  %273 = vmatpush.msra.mxu0 %v116
  %274 = vmatpush.msra.mxu0 %v115
  %275 = vmatpush.msra.mxu0 %v114
  %276 = vmatpush.msra.mxu0 %v113
  %277 = vmatmul.f32.gmra.mxu0 %v30
  %v278 = vpop.f32.mrf.mxu0
  %v279 = vadd.f32 %v259, %v278
  %280 = vdwg.mxu0
  %281 = vmatpush.msra.mxu0 %v144
  %282 = vmatpush.msra.mxu0 %v143
  %283 = vmatpush.msra.mxu0 %v142
  %284 = vmatpush.msra.mxu0 %v141
  %285 = vmatpush.msra.mxu0 %v140
  %286 = vmatpush.msra.mxu0 %v139
  %287 = vmatpush.msra.mxu0 %v138
  %288 = vmatpush.msra.mxu0 %v137
  %289 = vmatpush.msra.mxu0 %v136
  %290 = vmatpush.msra.mxu0 %v135
  %291 = vmatpush.msra.mxu0 %v134
  %292 = vmatpush.msra.mxu0 %v133
  %293 = vmatpush.msra.mxu0 %v132
  %294 = vmatpush.msra.mxu0 %v131
  %295 = vmatpush.msra.mxu0 %v130
  %296 = vmatpush.msra.mxu0 %v129
  %297 = vmatmul.f32.gmra.mxu0 %v31
  %v298 = vpop.f32.mrf.mxu0
  %v299 = vadd.f32 %v279, %v298
  %300 = vdwg.mxu0
  %301 = vmatpush.msra.mxu0 %v160
  %302 = vmatpush.msra.mxu0 %v159
  %303 = vmatpush.msra.mxu0 %v158
  %304 = vmatpush.msra.mxu0 %v157
  %305 = vmatpush.msra.mxu0 %v156
  %306 = vmatpush.msra.mxu0 %v155
  %307 = vmatpush.msra.mxu0 %v154
  %308 = vmatpush.msra.mxu0 %v153
  %309 = vmatpush.msra.mxu0 %v152
  %310 = vmatpush.msra.mxu0 %v151
  %311 = vmatpush.msra.mxu0 %v150
  %312 = vmatpush.msra.mxu0 %v149
  %313 = vmatpush.msra.mxu0 %v148
  %314 = vmatpush.msra.mxu0 %v147
  %315 = vmatpush.msra.mxu0 %v146
  %316 = vmatpush.msra.mxu0 %v145
  %317 = vmatmul.f32.gmra.mxu0 %v32
  %v318 = vpop.f32.mrf.mxu0
  %v319 = vadd.f32 %v299, %v318
  %320 = vdwg.mxu0
  %vm321 = vcmask 523264
  %v322 = vsel %vm321, %v319, 0.0
  %v323 = vrot.slane %v322, 4
  %v324 = vadd.f32 %v322, %v323
  %v325 = vrot.slane %v324, 2
  %v326 = vadd.f32 %v324, %v325
  %v327 = vrot.slane %v326, 1
  %v328 = vadd.f32 %v326, %v327
  %v329 = vrcp.pop 8.0
  %v330 = vmul.f32 8.0, %v329
  %v331 = vsub.f32 1.0, %v330
  %v332 = vmul.f32 %v329, %v331
  %v333 = vadd.f32 %v329, %v332
  %vm334 = vweird.f32 %v329
  %v335 = vsel %vm334, %v329, %v333
  %v336 = vmul.f32 %v328, %v335
  %v337 = vsub.f32 %v319, %v336
  %v338 = vmul.f32 %v337, %v337
  %v339 = vsel %vm321, %v338, 0.0
  %v340 = vrot.slane %v339, 4
  %v341 = vadd.f32 %v339, %v340
  %v342 = vrot.slane %v341, 2
  %v343 = vadd.f32 %v341, %v342
  %v344 = vrot.slane %v343, 1
  %v345 = vadd.f32 %v343, %v344
  %v346 = vmul.f32 %v345, %v335
  %v347 = vadd.f32 %v346, 1e-05
  %v348 = vrsqrt.pop %v347
  %v349 = vmul.f32 %v348, %v347
  %v350 = vmul.f32 %v349, %v348
  %v351 = vmul.f32 0.5, %v350
  %v352 = vsub.f32 1.5, %v351
  %v353 = vmul.f32 %v348, %v352
  %vm354 = vweird.f32 %v347
  %vm355 = vweird.f32 %v348
  %vm356 = vmor %vm354, %vm355
  %v357 = vsel %vm356, %v348, %v353
  %v358 = vld [vmem:[%s2] sm:$0x1]
  %v359 = vmul.f32 %v357, %v358
  %v360 = vperm.slane %v359, 0
  %v361 = vmul.f32 %v337, %v360
  %v362 = vld [vmem:[%s3] sm:$0x1]
  %v364 = vperm.slane %v362, 0
  %v366 = vadd.f32 %v361, %v364
  %367 = vst.msk [vmem:[%s4] sm:$0xff] %vm321, %v366
  // Predicated region
  $region18: #{unet_forward.15} parent=0 // pred_check
    _
  $region19: #{unet_forward.15} parent=0 // pred_check_branch
    %369 = sbr.rel (0) target = $region21
  $region20: #{unet_forward.15} parent=0 // pred_region
    _
  $region21: #{unet_forward.15} parent=0 // pred_fallthru
    _
  // Predicated region
  $region22: #{unet_forward.15} parent=0 // pred_check
    _
  $region23: #{unet_forward.15} parent=0 // pred_check_branch
    %371 = sbr.rel (0) target = $region25
  $region24: #{unet_forward.15} parent=0 // pred_region
    _
  $region25: #{unet_forward.15} parent=0 // pred_fallthru
    _

// kernel: unet_forward.16
$region0: #{unet_forward.16}
  #allocation0 [shape = 'u32[]', space=smem, size = 0x4, offset = 0x4, fixed_abs, tag = 'smem constant byte address 0x4 - core index']
  #allocation1 [shape = 'u32[72,128]{1,0:T(1,128)}', space=vmem, size = 0x9000, scoped, tag = 'internal scratch']
  %s0 = inlined_call_operand.vmem [shape: f32[32,2048], index: 0, kind: input, shape index: {}]
  %s1 = inlined_call_operand.vmem [shape: f32[2048,32], index: 1, kind: input, shape index: {}]
  %s2 = inlined_call_operand.vmem [shape: f32[1,32], index: 2, kind: input, shape index: {}]
  %s3 = inlined_call_operand.vmem [shape: f32[1,32], index: 3, kind: input, shape index: {}]
  %s4 = inlined_call_operand.vmem [shape: f32[32,32], index: 4, kind: output, shape index: {}]
  %s5 = sld [smem:[#allocation0]]
  $region26: #{unet_forward.16} parent=0
    _
  %s7 = ssub.s32 1, %s5
  %s8 = scalar_select 0, %s7, %s5
  // Predicated region
  $region2: #{unet_forward.16} parent=0 // pred_check
    _
  $region3: #{unet_forward.16} parent=0 // pred_check_branch
    %10 = sbr.rel (0) target = $region5
  $region4: #{unet_forward.16} parent=0 // pred_region
    _
  $region5: #{unet_forward.16} parent=0 // pred_fallthru
    _
  // Predicated region
  $region6: #{unet_forward.16} parent=0 // pred_check
    _
  $region7: #{unet_forward.16} parent=0 // pred_check_branch
    %12 = sbr.rel (0) target = $region9
  $region8: #{unet_forward.16} parent=0 // pred_region
    _
  $region9: #{unet_forward.16} parent=0 // pred_fallthru
    _
  // Predicated region
  $region10: #{unet_forward.16} parent=0 // pred_check
    _
  $region11: #{unet_forward.16} parent=0 // pred_check_branch
    %14 = sbr.rel (0) target = $region13
  $region12: #{unet_forward.16} parent=0 // pred_region
    _
  $region13: #{unet_forward.16} parent=0 // pred_fallthru
    _
  // Predicated region
  $region14: #{unet_forward.16} parent=0 // pred_check
    _
  $region15: #{unet_forward.16} parent=0 // pred_check_branch
    %16 = sbr.rel (0) target = $region17
  $region16: #{unet_forward.16} parent=0 // pred_region
    _
  $region17: #{unet_forward.16} parent=0 // pred_fallthru
    _
  %v17 = vld [vmem:[%s0] sm:$0xff]
  %v18 = vld [vmem:[%s0 + $0x8] sm:$0xff]
  %v19 = vld [vmem:[%s0 + $0x10] sm:$0xff]
  %v20 = vld [vmem:[%s0 + $0x18] sm:$0xff]
  %v21 = vld [vmem:[%s0 + $0x20] sm:$0xff]
  %v22 = vld [vmem:[%s0 + $0x28] sm:$0xff]
  %v23 = vld [vmem:[%s0 + $0x30] sm:$0xff]
  %v24 = vld [vmem:[%s0 + $0x38] sm:$0xff]
  %v25 = vld [vmem:[%s0 + $0x40] sm:$0xff]
  %v26 = vld [vmem:[%s0 + $0x48] sm:$0xff]
  %v27 = vld [vmem:[%s0 + $0x50] sm:$0xff]
  %v28 = vld [vmem:[%s0 + $0x58] sm:$0xff]
  %v29 = vld [vmem:[%s0 + $0x60] sm:$0xff]
  %v30 = vld [vmem:[%s0 + $0x68] sm:$0xff]
  %v31 = vld [vmem:[%s0 + $0x70] sm:$0xff]
  %v32 = vld [vmem:[%s0 + $0x78] sm:$0xff]
  %v33 = vld [vmem:[%s0 + $0x80] sm:$0xff]
  %v34 = vld [vmem:[%s0 + $0x88] sm:$0xff]
  %v35 = vld [vmem:[%s0 + $0x90] sm:$0xff]
  %v36 = vld [vmem:[%s0 + $0x98] sm:$0xff]
  %v37 = vld [vmem:[%s0 + $0xa0] sm:$0xff]
  %v38 = vld [vmem:[%s0 + $0xa8] sm:$0xff]
  %v39 = vld [vmem:[%s0 + $0xb0] sm:$0xff]
  %v40 = vld [vmem:[%s0 + $0xb8] sm:$0xff]
  %v41 = vld [vmem:[%s0 + $0xc0] sm:$0xff]
  %v42 = vld [vmem:[%s0 + $0xc8] sm:$0xff]
  %v43 = vld [vmem:[%s0 + $0xd0] sm:$0xff]
  %v44 = vld [vmem:[%s0 + $0xd8] sm:$0xff]
  %v45 = vld [vmem:[%s0 + $0xe0] sm:$0xff]
  %v46 = vld [vmem:[%s0 + $0xe8] sm:$0xff]
  %v47 = vld [vmem:[%s0 + $0xf0] sm:$0xff]
  %v48 = vld [vmem:[%s0 + $0xf8] sm:$0xff]
  %v49 = vld [vmem:[%s0 + $0x100] sm:$0xff]
  %v50 = vld [vmem:[%s0 + $0x108] sm:$0xff]
  %v51 = vld [vmem:[%s0 + $0x110] sm:$0xff]
  %v52 = vld [vmem:[%s0 + $0x118] sm:$0xff]
  %v53 = vld [vmem:[%s0 + $0x120] sm:$0xff]
  %v54 = vld [vmem:[%s0 + $0x128] sm:$0xff]
  %v55 = vld [vmem:[%s0 + $0x130] sm:$0xff]
  %v56 = vld [vmem:[%s0 + $0x138] sm:$0xff]
  %v57 = vld [vmem:[%s0 + $0x140] sm:$0xff]
  %v58 = vld [vmem:[%s0 + $0x148] sm:$0xff]
  %v59 = vld [vmem:[%s0 + $0x150] sm:$0xff]
  %v60 = vld [vmem:[%s0 + $0x158] sm:$0xff]
  %v61 = vld [vmem:[%s0 + $0x160] sm:$0xff]
  %v62 = vld [vmem:[%s0 + $0x168] sm:$0xff]
  %v63 = vld [vmem:[%s0 + $0x170] sm:$0xff]
  %v64 = vld [vmem:[%s0 + $0x178] sm:$0xff]
  %v65 = vld [vmem:[%s0 + $0x180] sm:$0xff]
  %v66 = vld [vmem:[%s0 + $0x188] sm:$0xff]
  %v67 = vld [vmem:[%s0 + $0x190] sm:$0xff]
  %v68 = vld [vmem:[%s0 + $0x198] sm:$0xff]
  %v69 = vld [vmem:[%s0 + $0x1a0] sm:$0xff]
  %v70 = vld [vmem:[%s0 + $0x1a8] sm:$0xff]
  %v71 = vld [vmem:[%s0 + $0x1b0] sm:$0xff]
  %v72 = vld [vmem:[%s0 + $0x1b8] sm:$0xff]
  %v73 = vld [vmem:[%s0 + $0x1c0] sm:$0xff]
  %v74 = vld [vmem:[%s0 + $0x1c8] sm:$0xff]
  %v75 = vld [vmem:[%s0 + $0x1d0] sm:$0xff]
  %v76 = vld [vmem:[%s0 + $0x1d8] sm:$0xff]
  %v77 = vld [vmem:[%s0 + $0x1e0] sm:$0xff]
  %v78 = vld [vmem:[%s0 + $0x1e8] sm:$0xff]
  %v79 = vld [vmem:[%s0 + $0x1f0] sm:$0xff]
  %v80 = vld [vmem:[%s0 + $0x1f8] sm:$0xff]
  %v81 = vmax.f32 %v17, 0.0
  %v82 = vmax.f32 %v18, 0.0
  %v83 = vmax.f32 %v19, 0.0
  %v84 = vmax.f32 %v20, 0.0
  %v85 = vmax.f32 %v21, 0.0
  %v86 = vmax.f32 %v22, 0.0
  %v87 = vmax.f32 %v23, 0.0
  %v88 = vmax.f32 %v24, 0.0
  %v89 = vmax.f32 %v25, 0.0
  %v90 = vmax.f32 %v26, 0.0
  %v91 = vmax.f32 %v27, 0.0
  %v92 = vmax.f32 %v28, 0.0
  %v93 = vmax.f32 %v29, 0.0
  %v94 = vmax.f32 %v30, 0.0
  %v95 = vmax.f32 %v31, 0.0
  %v96 = vmax.f32 %v32, 0.0
  %v97 = vmax.f32 %v33, 0.0
  %v98 = vmax.f32 %v34, 0.0
  %v99 = vmax.f32 %v35, 0.0
  %v100 = vmax.f32 %v36, 0.0
  %v101 = vmax.f32 %v37, 0.0
  %v102 = vmax.f32 %v38, 0.0
  %v103 = vmax.f32 %v39, 0.0
  %v104 = vmax.f32 %v40, 0.0
  %v105 = vmax.f32 %v41, 0.0
  %v106 = vmax.f32 %v42, 0.0
  %v107 = vmax.f32 %v43, 0.0
  %v108 = vmax.f32 %v44, 0.0
  %v109 = vmax.f32 %v45, 0.0
  %v110 = vmax.f32 %v46, 0.0
  %v111 = vmax.f32 %v47, 0.0
  %v112 = vmax.f32 %v48, 0.0
  %v113 = vmax.f32 %v49, 0.0
  %v114 = vmax.f32 %v50, 0.0
  %v115 = vmax.f32 %v51, 0.0
  %v116 = vmax.f32 %v52, 0.0
  %v117 = vmax.f32 %v53, 0.0
  %v118 = vmax.f32 %v54, 0.0
  %v119 = vmax.f32 %v55, 0.0
  %v120 = vmax.f32 %v56, 0.0
  %v121 = vmax.f32 %v57, 0.0
  %v122 = vmax.f32 %v58, 0.0
  %v123 = vmax.f32 %v59, 0.0
  %v124 = vmax.f32 %v60, 0.0
  %v125 = vmax.f32 %v61, 0.0
  %v126 = vmax.f32 %v62, 0.0
  %v127 = vmax.f32 %v63, 0.0
  %v128 = vmax.f32 %v64, 0.0
  %v129 = vmax.f32 %v65, 0.0
  %v130 = vmax.f32 %v66, 0.0
  %v131 = vmax.f32 %v67, 0.0
  %v132 = vmax.f32 %v68, 0.0
  %v133 = vmax.f32 %v69, 0.0
  %v134 = vmax.f32 %v70, 0.0
  %v135 = vmax.f32 %v71, 0.0
  %v136 = vmax.f32 %v72, 0.0
  %v137 = vmax.f32 %v73, 0.0
  %v138 = vmax.f32 %v74, 0.0
  %v139 = vmax.f32 %v75, 0.0
  %v140 = vmax.f32 %v76, 0.0
  %v141 = vmax.f32 %v77, 0.0
  %v142 = vmax.f32 %v78, 0.0
  %v143 = vmax.f32 %v79, 0.0
  %v144 = vmax.f32 %v80, 0.0
  %v145 = vld [vmem:[%s1] sm:$0xff]
  %v146 = vld [vmem:[%s1 + $0x8] sm:$0xff]
  %v147 = vld [vmem:[%s1 + $0x10] sm:$0xff]
  %v148 = vld [vmem:[%s1 + $0x18] sm:$0xff]
  %v149 = vld [vmem:[%s1 + $0x20] sm:$0xff]
  %v150 = vld [vmem:[%s1 + $0x28] sm:$0xff]
  %v151 = vld [vmem:[%s1 + $0x30] sm:$0xff]
  %v152 = vld [vmem:[%s1 + $0x38] sm:$0xff]
  %v153 = vld [vmem:[%s1 + $0x40] sm:$0xff]
  %v154 = vld [vmem:[%s1 + $0x48] sm:$0xff]
  %v155 = vld [vmem:[%s1 + $0x50] sm:$0xff]
  %v156 = vld [vmem:[%s1 + $0x58] sm:$0xff]
  %v157 = vld [vmem:[%s1 + $0x60] sm:$0xff]
  %v158 = vld [vmem:[%s1 + $0x68] sm:$0xff]
  %v159 = vld [vmem:[%s1 + $0x70] sm:$0xff]
  %v160 = vld [vmem:[%s1 + $0x78] sm:$0xff]
  %v161 = vld [vmem:[%s1 + $0x80] sm:$0xff]
  %v162 = vld [vmem:[%s1 + $0x88] sm:$0xff]
  %v163 = vld [vmem:[%s1 + $0x90] sm:$0xff]
  %v164 = vld [vmem:[%s1 + $0x98] sm:$0xff]
  %v165 = vld [vmem:[%s1 + $0xa0] sm:$0xff]
  %v166 = vld [vmem:[%s1 + $0xa8] sm:$0xff]
  %v167 = vld [vmem:[%s1 + $0xb0] sm:$0xff]
  %v168 = vld [vmem:[%s1 + $0xb8] sm:$0xff]
  %v169 = vld [vmem:[%s1 + $0xc0] sm:$0xff]
  %v170 = vld [vmem:[%s1 + $0xc8] sm:$0xff]
  %v171 = vld [vmem:[%s1 + $0xd0] sm:$0xff]
  %v172 = vld [vmem:[%s1 + $0xd8] sm:$0xff]
  %v173 = vld [vmem:[%s1 + $0xe0] sm:$0xff]
  %v174 = vld [vmem:[%s1 + $0xe8] sm:$0xff]
  %v175 = vld [vmem:[%s1 + $0xf0] sm:$0xff]
  %v176 = vld [vmem:[%s1 + $0xf8] sm:$0xff]
  %v177 = vld [vmem:[%s1 + $0x100] sm:$0xff]
  %v178 = vld [vmem:[%s1 + $0x108] sm:$0xff]
  %v179 = vld [vmem:[%s1 + $0x110] sm:$0xff]
  %v180 = vld [vmem:[%s1 + $0x118] sm:$0xff]
  %v181 = vld [vmem:[%s1 + $0x120] sm:$0xff]
  %v182 = vld [vmem:[%s1 + $0x128] sm:$0xff]
  %v183 = vld [vmem:[%s1 + $0x130] sm:$0xff]
  %v184 = vld [vmem:[%s1 + $0x138] sm:$0xff]
  %v185 = vld [vmem:[%s1 + $0x140] sm:$0xff]
  %v186 = vld [vmem:[%s1 + $0x148] sm:$0xff]
  %v187 = vld [vmem:[%s1 + $0x150] sm:$0xff]
  %v188 = vld [vmem:[%s1 + $0x158] sm:$0xff]
  %v189 = vld [vmem:[%s1 + $0x160] sm:$0xff]
  %v190 = vld [vmem:[%s1 + $0x168] sm:$0xff]
  %v191 = vld [vmem:[%s1 + $0x170] sm:$0xff]
  %v192 = vld [vmem:[%s1 + $0x178] sm:$0xff]
  %v193 = vld [vmem:[%s1 + $0x180] sm:$0xff]
  %v194 = vld [vmem:[%s1 + $0x188] sm:$0xff]
  %v195 = vld [vmem:[%s1 + $0x190] sm:$0xff]
  %v196 = vld [vmem:[%s1 + $0x198] sm:$0xff]
  %v197 = vld [vmem:[%s1 + $0x1a0] sm:$0xff]
  %v198 = vld [vmem:[%s1 + $0x1a8] sm:$0xff]
  %v199 = vld [vmem:[%s1 + $0x1b0] sm:$0xff]
  %v200 = vld [vmem:[%s1 + $0x1b8] sm:$0xff]
  %v201 = vld [vmem:[%s1 + $0x1c0] sm:$0xff]
  %v202 = vld [vmem:[%s1 + $0x1c8] sm:$0xff]
  %v203 = vld [vmem:[%s1 + $0x1d0] sm:$0xff]
  %v204 = vld [vmem:[%s1 + $0x1d8] sm:$0xff]
  %v205 = vld [vmem:[%s1 + $0x1e0] sm:$0xff]
  %v206 = vld [vmem:[%s1 + $0x1e8] sm:$0xff]
  %v207 = vld [vmem:[%s1 + $0x1f0] sm:$0xff]
  %v208 = vld [vmem:[%s1 + $0x1f8] sm:$0xff]
  %v209 = vld [vmem:[%s1 + $0x200] sm:$0xff]
  %v210 = vld [vmem:[%s1 + $0x208] sm:$0xff]
  %v211 = vld [vmem:[%s1 + $0x210] sm:$0xff]
  %v212 = vld [vmem:[%s1 + $0x218] sm:$0xff]
  %v213 = vld [vmem:[%s1 + $0x220] sm:$0xff]
  %v214 = vld [vmem:[%s1 + $0x228] sm:$0xff]
  %v215 = vld [vmem:[%s1 + $0x230] sm:$0xff]
  %v216 = vld [vmem:[%s1 + $0x238] sm:$0xff]
  %v217 = vld [vmem:[%s1 + $0x240] sm:$0xff]
  %v218 = vld [vmem:[%s1 + $0x248] sm:$0xff]
  %v219 = vld [vmem:[%s1 + $0x250] sm:$0xff]
  %v220 = vld [vmem:[%s1 + $0x258] sm:$0xff]
  %v221 = vld [vmem:[%s1 + $0x260] sm:$0xff]
  %v222 = vld [vmem:[%s1 + $0x268] sm:$0xff]
  %v223 = vld [vmem:[%s1 + $0x270] sm:$0xff]
  %v224 = vld [vmem:[%s1 + $0x278] sm:$0xff]
  %v225 = vld [vmem:[%s1 + $0x280] sm:$0xff]
  %v226 = vld [vmem:[%s1 + $0x288] sm:$0xff]
  %v227 = vld [vmem:[%s1 + $0x290] sm:$0xff]
  %v228 = vld [vmem:[%s1 + $0x298] sm:$0xff]
  %v229 = vld [vmem:[%s1 + $0x2a0] sm:$0xff]
  %v230 = vld [vmem:[%s1 + $0x2a8] sm:$0xff]
  %v231 = vld [vmem:[%s1 + $0x2b0] sm:$0xff]
  %v232 = vld [vmem:[%s1 + $0x2b8] sm:$0xff]
  %v233 = vld [vmem:[%s1 + $0x2c0] sm:$0xff]
  %v234 = vld [vmem:[%s1 + $0x2c8] sm:$0xff]
  %v235 = vld [vmem:[%s1 + $0x2d0] sm:$0xff]
  %v236 = vld [vmem:[%s1 + $0x2d8] sm:$0xff]
  %v237 = vld [vmem:[%s1 + $0x2e0] sm:$0xff]
  %v238 = vld [vmem:[%s1 + $0x2e8] sm:$0xff]
  %v239 = vld [vmem:[%s1 + $0x2f0] sm:$0xff]
  %v240 = vld [vmem:[%s1 + $0x2f8] sm:$0xff]
  %v241 = vld [vmem:[%s1 + $0x300] sm:$0xff]
  %v242 = vld [vmem:[%s1 + $0x308] sm:$0xff]
  %v243 = vld [vmem:[%s1 + $0x310] sm:$0xff]
  %v244 = vld [vmem:[%s1 + $0x318] sm:$0xff]
  %v245 = vld [vmem:[%s1 + $0x320] sm:$0xff]
  %v246 = vld [vmem:[%s1 + $0x328] sm:$0xff]
  %v247 = vld [vmem:[%s1 + $0x330] sm:$0xff]
  %v248 = vld [vmem:[%s1 + $0x338] sm:$0xff]
  %v249 = vld [vmem:[%s1 + $0x340] sm:$0xff]
  %v250 = vld [vmem:[%s1 + $0x348] sm:$0xff]
  %v251 = vld [vmem:[%s1 + $0x350] sm:$0xff]
  %v252 = vld [vmem:[%s1 + $0x358] sm:$0xff]
  %v253 = vld [vmem:[%s1 + $0x360] sm:$0xff]
  %v254 = vld [vmem:[%s1 + $0x368] sm:$0xff]
  %v255 = vld [vmem:[%s1 + $0x370] sm:$0xff]
  %v256 = vld [vmem:[%s1 + $0x378] sm:$0xff]
  %v257 = vld [vmem:[%s1 + $0x380] sm:$0xff]
  %v258 = vld [vmem:[%s1 + $0x388] sm:$0xff]
  %v259 = vld [vmem:[%s1 + $0x390] sm:$0xff]
  %v260 = vld [vmem:[%s1 + $0x398] sm:$0xff]
  %v261 = vld [vmem:[%s1 + $0x3a0] sm:$0xff]
  %v262 = vld [vmem:[%s1 + $0x3a8] sm:$0xff]
  %v263 = vld [vmem:[%s1 + $0x3b0] sm:$0xff]
  %v264 = vld [vmem:[%s1 + $0x3b8] sm:$0xff]
  %v265 = vld [vmem:[%s1 + $0x3c0] sm:$0xff]
  %v266 = vld [vmem:[%s1 + $0x3c8] sm:$0xff]
  %v267 = vld [vmem:[%s1 + $0x3d0] sm:$0xff]
  %v268 = vld [vmem:[%s1 + $0x3d8] sm:$0xff]
  %v269 = vld [vmem:[%s1 + $0x3e0] sm:$0xff]
  %v270 = vld [vmem:[%s1 + $0x3e8] sm:$0xff]
  %v271 = vld [vmem:[%s1 + $0x3f0] sm:$0xff]
  %v272 = vld [vmem:[%s1 + $0x3f8] sm:$0xff]
  %v273 = vld [vmem:[%s1 + $0x400] sm:$0xff]
  %v274 = vld [vmem:[%s1 + $0x408] sm:$0xff]
  %v275 = vld [vmem:[%s1 + $0x410] sm:$0xff]
  %v276 = vld [vmem:[%s1 + $0x418] sm:$0xff]
  %v277 = vld [vmem:[%s1 + $0x420] sm:$0xff]
  %v278 = vld [vmem:[%s1 + $0x428] sm:$0xff]
  %v279 = vld [vmem:[%s1 + $0x430] sm:$0xff]
  %v280 = vld [vmem:[%s1 + $0x438] sm:$0xff]
  %v281 = vld [vmem:[%s1 + $0x440] sm:$0xff]
  %v282 = vld [vmem:[%s1 + $0x448] sm:$0xff]
  %v283 = vld [vmem:[%s1 + $0x450] sm:$0xff]
  %v284 = vld [vmem:[%s1 + $0x458] sm:$0xff]
  %v285 = vld [vmem:[%s1 + $0x460] sm:$0xff]
  %v286 = vld [vmem:[%s1 + $0x468] sm:$0xff]
  %v287 = vld [vmem:[%s1 + $0x470] sm:$0xff]
  %v288 = vld [vmem:[%s1 + $0x478] sm:$0xff]
  %v289 = vld [vmem:[%s1 + $0x480] sm:$0xff]
  %v290 = vld [vmem:[%s1 + $0x488] sm:$0xff]
  %v291 = vld [vmem:[%s1 + $0x490] sm:$0xff]
  %v292 = vld [vmem:[%s1 + $0x498] sm:$0xff]
  %v293 = vld [vmem:[%s1 + $0x4a0] sm:$0xff]
  %v294 = vld [vmem:[%s1 + $0x4a8] sm:$0xff]
  %v295 = vld [vmem:[%s1 + $0x4b0] sm:$0xff]
  %v296 = vld [vmem:[%s1 + $0x4b8] sm:$0xff]
  %v297 = vld [vmem:[%s1 + $0x4c0] sm:$0xff]
  %v298 = vld [vmem:[%s1 + $0x4c8] sm:$0xff]
  %v299 = vld [vmem:[%s1 + $0x4d0] sm:$0xff]
  %v300 = vld [vmem:[%s1 + $0x4d8] sm:$0xff]
  %v301 = vld [vmem:[%s1 + $0x4e0] sm:$0xff]
  %v302 = vld [vmem:[%s1 + $0x4e8] sm:$0xff]
  %v303 = vld [vmem:[%s1 + $0x4f0] sm:$0xff]
  %v304 = vld [vmem:[%s1 + $0x4f8] sm:$0xff]
  %v305 = vld [vmem:[%s1 + $0x500] sm:$0xff]
  %v306 = vld [vmem:[%s1 + $0x508] sm:$0xff]
  %v307 = vld [vmem:[%s1 + $0x510] sm:$0xff]
  %v308 = vld [vmem:[%s1 + $0x518] sm:$0xff]
  %v309 = vld [vmem:[%s1 + $0x520] sm:$0xff]
  %v310 = vld [vmem:[%s1 + $0x528] sm:$0xff]
  %v311 = vld [vmem:[%s1 + $0x530] sm:$0xff]
  %v312 = vld [vmem:[%s1 + $0x538] sm:$0xff]
  %v313 = vld [vmem:[%s1 + $0x540] sm:$0xff]
  %v314 = vld [vmem:[%s1 + $0x548] sm:$0xff]
  %v315 = vld [vmem:[%s1 + $0x550] sm:$0xff]
  %v316 = vld [vmem:[%s1 + $0x558] sm:$0xff]
  %v317 = vld [vmem:[%s1 + $0x560] sm:$0xff]
  %v318 = vld [vmem:[%s1 + $0x568] sm:$0xff]
  %v319 = vld [vmem:[%s1 + $0x570] sm:$0xff]
  %v320 = vld [vmem:[%s1 + $0x578] sm:$0xff]
  %v321 = vld [vmem:[%s1 + $0x580] sm:$0xff]
  %v322 = vld [vmem:[%s1 + $0x588] sm:$0xff]
  %v323 = vld [vmem:[%s1 + $0x590] sm:$0xff]
  %v324 = vld [vmem:[%s1 + $0x598] sm:$0xff]
  %v325 = vld [vmem:[%s1 + $0x5a0] sm:$0xff]
  %v326 = vld [vmem:[%s1 + $0x5a8] sm:$0xff]
  %v327 = vld [vmem:[%s1 + $0x5b0] sm:$0xff]
  %v328 = vld [vmem:[%s1 + $0x5b8] sm:$0xff]
  %v329 = vld [vmem:[%s1 + $0x5c0] sm:$0xff]
  %v330 = vld [vmem:[%s1 + $0x5c8] sm:$0xff]
  %v331 = vld [vmem:[%s1 + $0x5d0] sm:$0xff]
  %v332 = vld [vmem:[%s1 + $0x5d8] sm:$0xff]
  %v333 = vld [vmem:[%s1 + $0x5e0] sm:$0xff]
  %v334 = vld [vmem:[%s1 + $0x5e8] sm:$0xff]
  %v335 = vld [vmem:[%s1 + $0x5f0] sm:$0xff]
  %v336 = vld [vmem:[%s1 + $0x5f8] sm:$0xff]
  %v337 = vld [vmem:[%s1 + $0x600] sm:$0xff]
  %v338 = vld [vmem:[%s1 + $0x608] sm:$0xff]
  %v339 = vld [vmem:[%s1 + $0x610] sm:$0xff]
  %v340 = vld [vmem:[%s1 + $0x618] sm:$0xff]
  %v341 = vld [vmem:[%s1 + $0x620] sm:$0xff]
  %v342 = vld [vmem:[%s1 + $0x628] sm:$0xff]
  %v343 = vld [vmem:[%s1 + $0x630] sm:$0xff]
  %v344 = vld [vmem:[%s1 + $0x638] sm:$0xff]
  %v345 = vld [vmem:[%s1 + $0x640] sm:$0xff]
  %v346 = vld [vmem:[%s1 + $0x648] sm:$0xff]
  %v347 = vld [vmem:[%s1 + $0x650] sm:$0xff]
  %v348 = vld [vmem:[%s1 + $0x658] sm:$0xff]
  %v349 = vld [vmem:[%s1 + $0x660] sm:$0xff]
  %v350 = vld [vmem:[%s1 + $0x668] sm:$0xff]
  %v351 = vld [vmem:[%s1 + $0x670] sm:$0xff]
  %v352 = vld [vmem:[%s1 + $0x678] sm:$0xff]
  %v353 = vld [vmem:[%s1 + $0x680] sm:$0xff]
  %v354 = vld [vmem:[%s1 + $0x688] sm:$0xff]
  %v355 = vld [vmem:[%s1 + $0x690] sm:$0xff]
  %v356 = vld [vmem:[%s1 + $0x698] sm:$0xff]
  %v357 = vld [vmem:[%s1 + $0x6a0] sm:$0xff]
  %v358 = vld [vmem:[%s1 + $0x6a8] sm:$0xff]
  %v359 = vld [vmem:[%s1 + $0x6b0] sm:$0xff]
  %v360 = vld [vmem:[%s1 + $0x6b8] sm:$0xff]
  %v361 = vld [vmem:[%s1 + $0x6c0] sm:$0xff]
  %v362 = vld [vmem:[%s1 + $0x6c8] sm:$0xff]
  %v363 = vld [vmem:[%s1 + $0x6d0] sm:$0xff]
  %v364 = vld [vmem:[%s1 + $0x6d8] sm:$0xff]
  %v365 = vld [vmem:[%s1 + $0x6e0] sm:$0xff]
  %v366 = vld [vmem:[%s1 + $0x6e8] sm:$0xff]
  %v367 = vld [vmem:[%s1 + $0x6f0] sm:$0xff]
  %v368 = vld [vmem:[%s1 + $0x6f8] sm:$0xff]
  %v369 = vld [vmem:[%s1 + $0x700] sm:$0xff]
  %v370 = vld [vmem:[%s1 + $0x708] sm:$0xff]
  %v371 = vld [vmem:[%s1 + $0x710] sm:$0xff]
  %v372 = vld [vmem:[%s1 + $0x718] sm:$0xff]
  %v373 = vld [vmem:[%s1 + $0x720] sm:$0xff]
  %v374 = vld [vmem:[%s1 + $0x728] sm:$0xff]
  %v375 = vld [vmem:[%s1 + $0x730] sm:$0xff]
  %v376 = vld [vmem:[%s1 + $0x738] sm:$0xff]
  %v377 = vld [vmem:[%s1 + $0x740] sm:$0xff]
  %v378 = vld [vmem:[%s1 + $0x748] sm:$0xff]
  %v379 = vld [vmem:[%s1 + $0x750] sm:$0xff]
  %v380 = vld [vmem:[%s1 + $0x758] sm:$0xff]
  %v381 = vld [vmem:[%s1 + $0x760] sm:$0xff]
  %v382 = vld [vmem:[%s1 + $0x768] sm:$0xff]
  %v383 = vld [vmem:[%s1 + $0x770] sm:$0xff]
  %v384 = vld [vmem:[%s1 + $0x778] sm:$0xff]
  %v385 = vld [vmem:[%s1 + $0x780] sm:$0xff]
  %v386 = vld [vmem:[%s1 + $0x788] sm:$0xff]
  %v387 = vld [vmem:[%s1 + $0x790] sm:$0xff]
  %v388 = vld [vmem:[%s1 + $0x798] sm:$0xff]
  %v389 = vld [vmem:[%s1 + $0x7a0] sm:$0xff]
  %v390 = vld [vmem:[%s1 + $0x7a8] sm:$0xff]
  %v391 = vld [vmem:[%s1 + $0x7b0] sm:$0xff]
  %v392 = vld [vmem:[%s1 + $0x7b8] sm:$0xff]
  %v393 = vld [vmem:[%s1 + $0x7c0] sm:$0xff]
  %v394 = vld [vmem:[%s1 + $0x7c8] sm:$0xff]
  %v395 = vld [vmem:[%s1 + $0x7d0] sm:$0xff]
  %v396 = vld [vmem:[%s1 + $0x7d8] sm:$0xff]
  %v397 = vld [vmem:[%s1 + $0x7e0] sm:$0xff]
  %v398 = vld [vmem:[%s1 + $0x7e8] sm:$0xff]
  %v399 = vld [vmem:[%s1 + $0x7f0] sm:$0xff]
  %v400 = vld [vmem:[%s1 + $0x7f8] sm:$0xff]
  %401 = vmatpush.msra.mxu0 %v160
  %402 = vmatpush.msra.mxu0 %v159
  %403 = vmatpush.msra.mxu0 %v158
  %404 = vmatpush.msra.mxu0 %v157
  %405 = vmatpush.msra.mxu0 %v156
  %406 = vmatpush.msra.mxu0 %v155
  %407 = vmatpush.msra.mxu0 %v154
  %408 = vmatpush.msra.mxu0 %v153
  %409 = vmatpush.msra.mxu0 %v152
  %410 = vmatpush.msra.mxu0 %v151
  %411 = vmatpush.msra.mxu0 %v150
  %412 = vmatpush.msra.mxu0 %v149
  %413 = vmatpush.msra.mxu0 %v148
  %414 = vmatpush.msra.mxu0 %v147
  %415 = vmatpush.msra.mxu0 %v146
  %416 = vmatpush.msra.mxu0 %v145
  %417 = vmatmul.f32.gmra.mxu0 %v81
  %v418 = vpop.f32.mrf.mxu0
  %v419 = vadd.f32 0.0, %v418
  %420 = vmatmul.f32.gmra.mxu0 %v97
  %v421 = vpop.f32.mrf.mxu0
  %v422 = vadd.f32 0.0, %v421
  %423 = vmatmul.f32.gmra.mxu0 %v113
  %v424 = vpop.f32.mrf.mxu0
  %v425 = vadd.f32 0.0, %v424
  %426 = vmatmul.f32.gmra.mxu0 %v129
  %v427 = vpop.f32.mrf.mxu0
  %v428 = vadd.f32 0.0, %v427
  %429 = vdwg.mxu0
  %430 = vmatpush.msra.mxu0 %v176
  %431 = vmatpush.msra.mxu0 %v175
  %432 = vmatpush.msra.mxu0 %v174
  %433 = vmatpush.msra.mxu0 %v173
  %434 = vmatpush.msra.mxu0 %v172
  %435 = vmatpush.msra.mxu0 %v171
  %436 = vmatpush.msra.mxu0 %v170
  %437 = vmatpush.msra.mxu0 %v169
  %438 = vmatpush.msra.mxu0 %v168
  %439 = vmatpush.msra.mxu0 %v167
  %440 = vmatpush.msra.mxu0 %v166
  %441 = vmatpush.msra.mxu0 %v165
  %442 = vmatpush.msra.mxu0 %v164
  %443 = vmatpush.msra.mxu0 %v163
  %444 = vmatpush.msra.mxu0 %v162
  %445 = vmatpush.msra.mxu0 %v161
  %446 = vmatmul.f32.gmra.mxu0 %v82
  %v447 = vpop.f32.mrf.mxu0
  %v448 = vadd.f32 %v419, %v447
  %449 = vmatmul.f32.gmra.mxu0 %v98
  %v450 = vpop.f32.mrf.mxu0
  %v451 = vadd.f32 %v422, %v450
  %452 = vmatmul.f32.gmra.mxu0 %v114
  %v453 = vpop.f32.mrf.mxu0
  %v454 = vadd.f32 %v425, %v453
  %455 = vmatmul.f32.gmra.mxu0 %v130
  %v456 = vpop.f32.mrf.mxu0
  %v457 = vadd.f32 %v428, %v456
  %458 = vdwg.mxu0
  %459 = vmatpush.msra.mxu0 %v192
  %460 = vmatpush.msra.mxu0 %v191
  %461 = vmatpush.msra.mxu0 %v190
  %462 = vmatpush.msra.mxu0 %v189
  %463 = vmatpush.msra.mxu0 %v188
  %464 = vmatpush.msra.mxu0 %v187
  %465 = vmatpush.msra.mxu0 %v186
  %466 = vmatpush.msra.mxu0 %v185
  %467 = vmatpush.msra.mxu0 %v184
  %468 = vmatpush.msra.mxu0 %v183
  %469 = vmatpush.msra.mxu0 %v182
  %470 = vmatpush.msra.mxu0 %v181
  %471 = vmatpush.msra.mxu0 %v180
  %472 = vmatpush.msra.mxu0 %v179
  %473 = vmatpush.msra.mxu0 %v178
  %474 = vmatpush.msra.mxu0 %v177
  %475 = vmatmul.f32.gmra.mxu0 %v83
  %v476 = vpop.f32.mrf.mxu0
  %v477 = vadd.f32 %v448, %v476
  %478 = vmatmul.f32.gmra.mxu0 %v99
  %v479 = vpop.f32.mrf.mxu0
  %v480 = vadd.f32 %v451, %v479
  %481 = vmatmul.f32.gmra.mxu0 %v115
  %v482 = vpop.f32.mrf.mxu0
  %v483 = vadd.f32 %v454, %v482
  %484 = vmatmul.f32.gmra.mxu0 %v131
  %v485 = vpop.f32.mrf.mxu0
  %v486 = vadd.f32 %v457, %v485
  %487 = vdwg.mxu0
  %488 = vmatpush.msra.mxu0 %v208
  %489 = vmatpush.msra.mxu0 %v207
  %490 = vmatpush.msra.mxu0 %v206
  %491 = vmatpush.msra.mxu0 %v205
  %492 = vmatpush.msra.mxu0 %v204
  %493 = vmatpush.msra.mxu0 %v203
  %494 = vmatpush.msra.mxu0 %v202
  %495 = vmatpush.msra.mxu0 %v201
  %496 = vmatpush.msra.mxu0 %v200
  %497 = vmatpush.msra.mxu0 %v199
  %498 = vmatpush.msra.mxu0 %v198
  %499 = vmatpush.msra.mxu0 %v197
  %500 = vmatpush.msra.mxu0 %v196
  %501 = vmatpush.msra.mxu0 %v195
  %502 = vmatpush.msra.mxu0 %v194
  %503 = vmatpush.msra.mxu0 %v193
  %504 = vmatmul.f32.gmra.mxu0 %v84
  %v505 = vpop.f32.mrf.mxu0
  %v506 = vadd.f32 %v477, %v505
  %507 = vmatmul.f32.gmra.mxu0 %v100
  %v508 = vpop.f32.mrf.mxu0
  %v509 = vadd.f32 %v480, %v508
  %510 = vmatmul.f32.gmra.mxu0 %v116
  %v511 = vpop.f32.mrf.mxu0
  %v512 = vadd.f32 %v483, %v511
  %513 = vmatmul.f32.gmra.mxu0 %v132
  %v514 = vpop.f32.mrf.mxu0
  %v515 = vadd.f32 %v486, %v514
  %516 = vdwg.mxu0
  %517 = vmatpush.msra.mxu0 %v224
  %518 = vmatpush.msra.mxu0 %v223
  %519 = vmatpush.msra.mxu0 %v222
  %520 = vmatpush.msra.mxu0 %v221
  %521 = vmatpush.msra.mxu0 %v220
  %522 = vmatpush.msra.mxu0 %v219
  %523 = vmatpush.msra.mxu0 %v218
  %524 = vmatpush.msra.mxu0 %v217
  %525 = vmatpush.msra.mxu0 %v216
  %526 = vmatpush.msra.mxu0 %v215
  %527 = vmatpush.msra.mxu0 %v214
  %528 = vmatpush.msra.mxu0 %v213
  %529 = vmatpush.msra.mxu0 %v212
  %530 = vmatpush.msra.mxu0 %v211
  %531 = vmatpush.msra.mxu0 %v210
  %532 = vmatpush.msra.mxu0 %v209
  %533 = vmatmul.f32.gmra.mxu0 %v85
  %v534 = vpop.f32.mrf.mxu0
  %v535 = vadd.f32 %v506, %v534
  %536 = vmatmul.f32.gmra.mxu0 %v101
  %v537 = vpop.f32.mrf.mxu0
  %v538 = vadd.f32 %v509, %v537
  %539 = vmatmul.f32.gmra.mxu0 %v117
  %v540 = vpop.f32.mrf.mxu0
  %v541 = vadd.f32 %v512, %v540
  %542 = vmatmul.f32.gmra.mxu0 %v133
  %v543 = vpop.f32.mrf.mxu0
  %v544 = vadd.f32 %v515, %v543
  %545 = vdwg.mxu0
  %546 = vmatpush.msra.mxu0 %v240
  %547 = vmatpush.msra.mxu0 %v239
  %548 = vmatpush.msra.mxu0 %v238
  %549 = vmatpush.msra.mxu0 %v237
  %550 = vmatpush.msra.mxu0 %v236
  %551 = vmatpush.msra.mxu0 %v235
  %552 = vmatpush.msra.mxu0 %v234
  %553 = vmatpush.msra.mxu0 %v233
  %554 = vmatpush.msra.mxu0 %v232
  %555 = vmatpush.msra.mxu0 %v231
  %556 = vmatpush.msra.mxu0 %v230
  %557 = vmatpush.msra.mxu0 %v229
  %558 = vmatpush.msra.mxu0 %v228
  %559 = vmatpush.msra.mxu0 %v227
  %560 = vmatpush.msra.mxu0 %v226
  %561 = vmatpush.msra.mxu0 %v225
  %562 = vmatmul.f32.gmra.mxu0 %v86
  %v563 = vpop.f32.mrf.mxu0
  %v564 = vadd.f32 %v535, %v563
  %565 = vmatmul.f32.gmra.mxu0 %v102
  %v566 = vpop.f32.mrf.mxu0
  %v567 = vadd.f32 %v538, %v566
  %568 = vmatmul.f32.gmra.mxu0 %v118
  %v569 = vpop.f32.mrf.mxu0
  %v570 = vadd.f32 %v541, %v569
  %571 = vmatmul.f32.gmra.mxu0 %v134
  %v572 = vpop.f32.mrf.mxu0
  %v573 = vadd.f32 %v544, %v572
  %574 = vdwg.mxu0
  %575 = vmatpush.msra.mxu0 %v256
  %576 = vmatpush.msra.mxu0 %v255
  %577 = vmatpush.msra.mxu0 %v254
  %578 = vmatpush.msra.mxu0 %v253
  %579 = vmatpush.msra.mxu0 %v252
  %580 = vmatpush.msra.mxu0 %v251
  %581 = vmatpush.msra.mxu0 %v250
  %582 = vmatpush.msra.mxu0 %v249
  %583 = vmatpush.msra.mxu0 %v248
  %584 = vmatpush.msra.mxu0 %v247
  %585 = vmatpush.msra.mxu0 %v246
  %586 = vmatpush.msra.mxu0 %v245
  %587 = vmatpush.msra.mxu0 %v244
  %588 = vmatpush.msra.mxu0 %v243
  %589 = vmatpush.msra.mxu0 %v242
  %590 = vmatpush.msra.mxu0 %v241
  %591 = vmatmul.f32.gmra.mxu0 %v87
  %v592 = vpop.f32.mrf.mxu0
  %v593 = vadd.f32 %v564, %v592
  %594 = vmatmul.f32.gmra.mxu0 %v103
  %v595 = vpop.f32.mrf.mxu0
  %v596 = vadd.f32 %v567, %v595
  %597 = vmatmul.f32.gmra.mxu0 %v119
  %v598 = vpop.f32.mrf.mxu0
  %v599 = vadd.f32 %v570, %v598
  %600 = vmatmul.f32.gmra.mxu0 %v135
  %v601 = vpop.f32.mrf.mxu0
  %v602 = vadd.f32 %v573, %v601
  %603 = vdwg.mxu0
  %604 = vmatpush.msra.mxu0 %v272
  %605 = vmatpush.msra.mxu0 %v271
  %606 = vmatpush.msra.mxu0 %v270
  %607 = vmatpush.msra.mxu0 %v269
  %608 = vmatpush.msra.mxu0 %v268
  %609 = vmatpush.msra.mxu0 %v267
  %610 = vmatpush.msra.mxu0 %v266
  %611 = vmatpush.msra.mxu0 %v265
  %612 = vmatpush.msra.mxu0 %v264
  %613 = vmatpush.msra.mxu0 %v263
  %614 = vmatpush.msra.mxu0 %v262
  %615 = vmatpush.msra.mxu0 %v261
  %616 = vmatpush.msra.mxu0 %v260
  %617 = vmatpush.msra.mxu0 %v259
  %618 = vmatpush.msra.mxu0 %v258
  %619 = vmatpush.msra.mxu0 %v257
  %620 = vmatmul.f32.gmra.mxu0 %v88
  %v621 = vpop.f32.mrf.mxu0
  %v622 = vadd.f32 %v593, %v621
  %623 = vmatmul.f32.gmra.mxu0 %v104
  %v624 = vpop.f32.mrf.mxu0
  %v625 = vadd.f32 %v596, %v624
  %626 = vmatmul.f32.gmra.mxu0 %v120
  %v627 = vpop.f32.mrf.mxu0
  %v628 = vadd.f32 %v599, %v627
  %629 = vmatmul.f32.gmra.mxu0 %v136
  %v630 = vpop.f32.mrf.mxu0
  %v631 = vadd.f32 %v602, %v630
  %632 = vdwg.mxu0
  %633 = vmatpush.msra.mxu0 %v288
  %634 = vmatpush.msra.mxu0 %v287
  %635 = vmatpush.msra.mxu0 %v286
  %636 = vmatpush.msra.mxu0 %v285
  %637 = vmatpush.msra.mxu0 %v284
  %638 = vmatpush.msra.mxu0 %v283
  %639 = vmatpush.msra.mxu0 %v282
  %640 = vmatpush.msra.mxu0 %v281
  %641 = vmatpush.msra.mxu0 %v280
  %642 = vmatpush.msra.mxu0 %v279
  %643 = vmatpush.msra.mxu0 %v278
  %644 = vmatpush.msra.mxu0 %v277
  %645 = vmatpush.msra.mxu0 %v276
  %646 = vmatpush.msra.mxu0 %v275
  %647 = vmatpush.msra.mxu0 %v274
  %648 = vmatpush.msra.mxu0 %v273
  %649 = vmatmul.f32.gmra.mxu0 %v89
  %v650 = vpop.f32.mrf.mxu0
  %v651 = vadd.f32 %v622, %v650
  %652 = vmatmul.f32.gmra.mxu0 %v105
  %v653 = vpop.f32.mrf.mxu0
  %v654 = vadd.f32 %v625, %v653
  %655 = vmatmul.f32.gmra.mxu0 %v121
  %v656 = vpop.f32.mrf.mxu0
  %v657 = vadd.f32 %v628, %v656
  %658 = vmatmul.f32.gmra.mxu0 %v137
  %v659 = vpop.f32.mrf.mxu0
  %v660 = vadd.f32 %v631, %v659
  %661 = vdwg.mxu0
  %662 = vmatpush.msra.mxu0 %v304
  %663 = vmatpush.msra.mxu0 %v303
  %664 = vmatpush.msra.mxu0 %v302
  %665 = vmatpush.msra.mxu0 %v301
  %666 = vmatpush.msra.mxu0 %v300
  %667 = vmatpush.msra.mxu0 %v299
  %668 = vmatpush.msra.mxu0 %v298
  %669 = vmatpush.msra.mxu0 %v297
  %670 = vmatpush.msra.mxu0 %v296
  %671 = vmatpush.msra.mxu0 %v295
  %672 = vmatpush.msra.mxu0 %v294
  %673 = vmatpush.msra.mxu0 %v293
  %674 = vmatpush.msra.mxu0 %v292
  %675 = vmatpush.msra.mxu0 %v291
  %676 = vmatpush.msra.mxu0 %v290
  %677 = vmatpush.msra.mxu0 %v289
  %678 = vmatmul.f32.gmra.mxu0 %v90
  %v679 = vpop.f32.mrf.mxu0
  %v680 = vadd.f32 %v651, %v679
  %681 = vmatmul.f32.gmra.mxu0 %v106
  %v682 = vpop.f32.mrf.mxu0
  %v683 = vadd.f32 %v654, %v682
  %684 = vmatmul.f32.gmra.mxu0 %v122
  %v685 = vpop.f32.mrf.mxu0
  %v686 = vadd.f32 %v657, %v685
  %687 = vmatmul.f32.gmra.mxu0 %v138
  %v688 = vpop.f32.mrf.mxu0
  %v689 = vadd.f32 %v660, %v688
  %690 = vdwg.mxu0
  %691 = vmatpush.msra.mxu0 %v320
  %692 = vmatpush.msra.mxu0 %v319
  %693 = vmatpush.msra.mxu0 %v318
  %694 = vmatpush.msra.mxu0 %v317
  %695 = vmatpush.msra.mxu0 %v316
  %696 = vmatpush.msra.mxu0 %v315
  %697 = vmatpush.msra.mxu0 %v314
  %698 = vmatpush.msra.mxu0 %v313
  %699 = vmatpush.msra.mxu0 %v312
  %700 = vmatpush.msra.mxu0 %v311
  %701 = vmatpush.msra.mxu0 %v310
  %702 = vmatpush.msra.mxu0 %v309
  %703 = vmatpush.msra.mxu0 %v308
  %704 = vmatpush.msra.mxu0 %v307
  %705 = vmatpush.msra.mxu0 %v306
  %706 = vmatpush.msra.mxu0 %v305
  %707 = vmatmul.f32.gmra.mxu0 %v91
  %v708 = vpop.f32.mrf.mxu0
  %v709 = vadd.f32 %v680, %v708
  %710 = vmatmul.f32.gmra.mxu0 %v107
  %v711 = vpop.f32.mrf.mxu0
  %v712 = vadd.f32 %v683, %v711
  %713 = vmatmul.f32.gmra.mxu0 %v123
  %v714 = vpop.f32.mrf.mxu0
  %v715 = vadd.f32 %v686, %v714
  %716 = vmatmul.f32.gmra.mxu0 %v139
  %v717 = vpop.f32.mrf.mxu0
  %v718 = vadd.f32 %v689, %v717
  %719 = vdwg.mxu0
  %720 = vmatpush.msra.mxu0 %v336
  %721 = vmatpush.msra.mxu0 %v335
  %722 = vmatpush.msra.mxu0 %v334
  %723 = vmatpush.msra.mxu0 %v333
  %724 = vmatpush.msra.mxu0 %v332
  %725 = vmatpush.msra.mxu0 %v331
  %726 = vmatpush.msra.mxu0 %v330
  %727 = vmatpush.msra.mxu0 %v329
  %728 = vmatpush.msra.mxu0 %v328
  %729 = vmatpush.msra.mxu0 %v327
  %730 = vmatpush.msra.mxu0 %v326
  %731 = vmatpush.msra.mxu0 %v325
  %732 = vmatpush.msra.mxu0 %v324
  %733 = vmatpush.msra.mxu0 %v323
  %734 = vmatpush.msra.mxu0 %v322
  %735 = vmatpush.msra.mxu0 %v321
  %736 = vmatmul.f32.gmra.mxu0 %v92
  %v737 = vpop.f32.mrf.mxu0
  %v738 = vadd.f32 %v709, %v737
  %739 = vmatmul.f32.gmra.mxu0 %v108
  %v740 = vpop.f32.mrf.mxu0
  %v741 = vadd.f32 %v712, %v740
  %742 = vmatmul.f32.gmra.mxu0 %v124
  %v743 = vpop.f32.mrf.mxu0
  %v744 = vadd.f32 %v715, %v743
  %745 = vmatmul.f32.gmra.mxu0 %v140
  %v746 = vpop.f32.mrf.mxu0
  %v747 = vadd.f32 %v718, %v746
  %748 = vdwg.mxu0
  %749 = vmatpush.msra.mxu0 %v352
  %750 = vmatpush.msra.mxu0 %v351
  %751 = vmatpush.msra.mxu0 %v350
  %752 = vmatpush.msra.mxu0 %v349
  %753 = vmatpush.msra.mxu0 %v348
  %754 = vmatpush.msra.mxu0 %v347
  %755 = vmatpush.msra.mxu0 %v346
  %756 = vmatpush.msra.mxu0 %v345
  %757 = vmatpush.msra.mxu0 %v344
  %758 = vmatpush.msra.mxu0 %v343
  %759 = vmatpush.msra.mxu0 %v342
  %760 = vmatpush.msra.mxu0 %v341
  %761 = vmatpush.msra.mxu0 %v340
  %762 = vmatpush.msra.mxu0 %v339
  %763 = vmatpush.msra.mxu0 %v338
  %764 = vmatpush.msra.mxu0 %v337
  %765 = vmatmul.f32.gmra.mxu0 %v93
  %v766 = vpop.f32.mrf.mxu0
  %v767 = vadd.f32 %v738, %v766
  %768 = vmatmul.f32.gmra.mxu0 %v109
  %v769 = vpop.f32.mrf.mxu0
  %v770 = vadd.f32 %v741, %v769
  %771 = vmatmul.f32.gmra.mxu0 %v125
  %v772 = vpop.f32.mrf.mxu0
  %v773 = vadd.f32 %v744, %v772
  %774 = vmatmul.f32.gmra.mxu0 %v141
  %v775 = vpop.f32.mrf.mxu0
  %v776 = vadd.f32 %v747, %v775
  %777 = vdwg.mxu0
  %778 = vmatpush.msra.mxu0 %v368
  %779 = vmatpush.msra.mxu0 %v367
  %780 = vmatpush.msra.mxu0 %v366
  %781 = vmatpush.msra.mxu0 %v365
  %782 = vmatpush.msra.mxu0 %v364
  %783 = vmatpush.msra.mxu0 %v363
  %784 = vmatpush.msra.mxu0 %v362
  %785 = vmatpush.msra.mxu0 %v361
  %786 = vmatpush.msra.mxu0 %v360
  %787 = vmatpush.msra.mxu0 %v359
  %788 = vmatpush.msra.mxu0 %v358
  %789 = vmatpush.msra.mxu0 %v357
  %790 = vmatpush.msra.mxu0 %v356
  %791 = vmatpush.msra.mxu0 %v355
  %792 = vmatpush.msra.mxu0 %v354
  %793 = vmatpush.msra.mxu0 %v353
  %794 = vmatmul.f32.gmra.mxu0 %v94
  %v795 = vpop.f32.mrf.mxu0
  %v796 = vadd.f32 %v767, %v795
  %797 = vmatmul.f32.gmra.mxu0 %v110
  %v798 = vpop.f32.mrf.mxu0
  %v799 = vadd.f32 %v770, %v798
  %800 = vmatmul.f32.gmra.mxu0 %v126
  %v801 = vpop.f32.mrf.mxu0
  %v802 = vadd.f32 %v773, %v801
  %803 = vmatmul.f32.gmra.mxu0 %v142
  %v804 = vpop.f32.mrf.mxu0
  %v805 = vadd.f32 %v776, %v804
  %806 = vdwg.mxu0
  %807 = vmatpush.msra.mxu0 %v384
  %808 = vmatpush.msra.mxu0 %v383
  %809 = vmatpush.msra.mxu0 %v382
  %810 = vmatpush.msra.mxu0 %v381
  %811 = vmatpush.msra.mxu0 %v380
  %812 = vmatpush.msra.mxu0 %v379
  %813 = vmatpush.msra.mxu0 %v378
  %814 = vmatpush.msra.mxu0 %v377
  %815 = vmatpush.msra.mxu0 %v376
  %816 = vmatpush.msra.mxu0 %v375
  %817 = vmatpush.msra.mxu0 %v374
  %818 = vmatpush.msra.mxu0 %v373
  %819 = vmatpush.msra.mxu0 %v372
  %820 = vmatpush.msra.mxu0 %v371
  %821 = vmatpush.msra.mxu0 %v370
  %822 = vmatpush.msra.mxu0 %v369
  %823 = vmatmul.f32.gmra.mxu0 %v95
  %v824 = vpop.f32.mrf.mxu0
  %v825 = vadd.f32 %v796, %v824
  %826 = vmatmul.f32.gmra.mxu0 %v111
  %v827 = vpop.f32.mrf.mxu0
  %v828 = vadd.f32 %v799, %v827
  %829 = vmatmul.f32.gmra.mxu0 %v127
  %v830 = vpop.f32.mrf.mxu0
  %v831 = vadd.f32 %v802, %v830
  %832 = vmatmul.f32.gmra.mxu0 %v143
  %v833 = vpop.f32.mrf.mxu0
  %v834 = vadd.f32 %v805, %v833
  %835 = vdwg.mxu0
  %836 = vmatpush.msra.mxu0 %v400
  %837 = vmatpush.msra.mxu0 %v399
  %838 = vmatpush.msra.mxu0 %v398
  %839 = vmatpush.msra.mxu0 %v397
  %840 = vmatpush.msra.mxu0 %v396
  %841 = vmatpush.msra.mxu0 %v395
  %842 = vmatpush.msra.mxu0 %v394
  %843 = vmatpush.msra.mxu0 %v393
  %844 = vmatpush.msra.mxu0 %v392
  %845 = vmatpush.msra.mxu0 %v391
  %846 = vmatpush.msra.mxu0 %v390
  %847 = vmatpush.msra.mxu0 %v389
  %848 = vmatpush.msra.mxu0 %v388
  %849 = vmatpush.msra.mxu0 %v387
  %850 = vmatpush.msra.mxu0 %v386
  %851 = vmatpush.msra.mxu0 %v385
  %852 = vmatmul.f32.gmra.mxu0 %v96
  %v853 = vpop.f32.mrf.mxu0
  %v854 = vadd.f32 %v825, %v853
  %855 = vmatmul.f32.gmra.mxu0 %v112
  %v856 = vpop.f32.mrf.mxu0
  %v857 = vadd.f32 %v828, %v856
  %858 = vmatmul.f32.gmra.mxu0 %v128
  %v859 = vpop.f32.mrf.mxu0
  %v860 = vadd.f32 %v831, %v859
  %861 = vmatmul.f32.gmra.mxu0 %v144
  %v862 = vpop.f32.mrf.mxu0
  %v863 = vadd.f32 %v834, %v862
  %864 = vdwg.mxu0
  %vm865 = vcmask 261120
  %v866 = vsel %vm865, %v854, 0.0
  %v867 = vsel %vm865, %v857, 0.0
  %v868 = vadd.f32 %v866, %v867
  %v869 = vsel %vm865, %v860, 0.0
  %v870 = vadd.f32 %v868, %v869
  %v871 = vsel %vm865, %v863, 0.0
  %v872 = vadd.f32 %v870, %v871
  %v873 = vrot.slane %v872, 4
  %v874 = vadd.f32 %v872, %v873
  %v875 = vrot.slane %v874, 2
  %v876 = vadd.f32 %v874, %v875
  %v877 = vrot.slane %v876, 1
  %v878 = vadd.f32 %v876, %v877
  %v879 = vrcp.pop 32.0
  %v880 = vmul.f32 32.0, %v879
  %v881 = vsub.f32 1.0, %v880
  %v882 = vmul.f32 %v879, %v881
  %v883 = vadd.f32 %v879, %v882
  %vm884 = vweird.f32 %v879
  %v885 = vsel %vm884, %v879, %v883
  %v886 = vmul.f32 %v878, %v885
  %v887 = vsub.f32 %v854, %v886
  %v888 = vsub.f32 %v857, %v886
  %v889 = vsub.f32 %v860, %v886
  %v890 = vsub.f32 %v863, %v886
  %v891 = vmul.f32 %v887, %v887
  %v892 = vmul.f32 %v888, %v888
  %v893 = vmul.f32 %v889, %v889
  %v894 = vmul.f32 %v890, %v890
  %v895 = vsel %vm865, %v891, 0.0
  %v896 = vsel %vm865, %v892, 0.0
  %v897 = vadd.f32 %v895, %v896
  %v898 = vsel %vm865, %v893, 0.0
  %v899 = vadd.f32 %v897, %v898
  %v900 = vsel %vm865, %v894, 0.0
  %v901 = vadd.f32 %v899, %v900
  %v902 = vrot.slane %v901, 4
  %v903 = vadd.f32 %v901, %v902
  %v904 = vrot.slane %v903, 2
  %v905 = vadd.f32 %v903, %v904
  %v906 = vrot.slane %v905, 1
  %v907 = vadd.f32 %v905, %v906
  %v908 = vmul.f32 %v907, %v885
  %v909 = vadd.f32 %v908, 1e-05
  %v910 = vrsqrt.pop %v909
  %v911 = vmul.f32 %v910, %v909
  %v912 = vmul.f32 %v911, %v910
  %v913 = vmul.f32 0.5, %v912
  %v914 = vsub.f32 1.5, %v913
  %v915 = vmul.f32 %v910, %v914
  %vm916 = vweird.f32 %v909
  %vm917 = vweird.f32 %v910
  %vm918 = vmor %vm916, %vm917
  %v919 = vsel %vm918, %v910, %v915
  %v920 = vld [vmem:[%s2] sm:$0x1]
  %v921 = vmul.f32 %v919, %v920
  %v922 = vperm.slane %v921, 0
  %v923 = vmul.f32 %v887, %v922
  %v924 = vmul.f32 %v888, %v922
  %v925 = vmul.f32 %v889, %v922
  %v926 = vmul.f32 %v890, %v922
  %v927 = vld [vmem:[%s3] sm:$0x1]
  %v929 = vperm.slane %v927, 0
  %v931 = vadd.f32 %v923, %v929
  %v932 = vadd.f32 %v924, %v929
  %v933 = vadd.f32 %v925, %v929
  %v934 = vadd.f32 %v926, %v929
  %935 = vst.msk [vmem:[%s4] sm:$0xff] %vm865, %v931
  %936 = vst.msk [vmem:[%s4 + $0x8] sm:$0xff] %vm865, %v932
  %937 = vst.msk [vmem:[%s4 + $0x10] sm:$0xff] %vm865, %v933
  %938 = vst.msk [vmem:[%s4 + $0x18] sm:$0xff] %vm865, %v934
  // Predicated region
  $region18: #{unet_forward.16} parent=0 // pred_check
    _
  $region19: #{unet_forward.16} parent=0 // pred_check_branch
    %940 = sbr.rel (0) target = $region21
  $region20: #{unet_forward.16} parent=0 // pred_region
    _
  $region21: #{unet_forward.16} parent=0 // pred_fallthru
    _
  // Predicated region
  $region22: #{unet_forward.16} parent=0 // pred_check
    _
  $region23: #{unet_forward.16} parent=0 // pred_check_branch
    %942 = sbr.rel (0) target = $region25
  $region24: #{unet_forward.16} parent=0 // pred_region
    _
  $region25: #{unet_forward.16} parent=0 // pred_fallthru
    _

// kernel: unet_forward.17
$region0: #{unet_forward.17}
  #allocation0 [shape = 'u32[]', space=smem, size = 0x4, offset = 0x4, fixed_abs, tag = 'smem constant byte address 0x4 - core index']
  #allocation1 [shape = 'u32[72,128]{1,0:T(1,128)}', space=vmem, size = 0x9000, scoped, tag = 'internal scratch']
  %s0 = inlined_call_operand.vmem [shape: f32[128,1024], index: 0, kind: input, shape index: {}]
  %s1 = inlined_call_operand.vmem [shape: f32[1024,16], index: 1, kind: input, shape index: {}]
  %s2 = inlined_call_operand.vmem [shape: f32[1,16], index: 2, kind: input, shape index: {}]
  %s3 = inlined_call_operand.vmem [shape: f32[1,16], index: 3, kind: input, shape index: {}]
  %s4 = inlined_call_operand.vmem [shape: f32[128,16], index: 4, kind: output, shape index: {}]
  %s5 = sld [smem:[#allocation0]]
  $region26: #{unet_forward.17} parent=0
    _
  %s7 = ssub.s32 1, %s5
  %s8 = scalar_select 0, %s7, %s5
  // Predicated region
  $region2: #{unet_forward.17} parent=0 // pred_check
    _
  $region3: #{unet_forward.17} parent=0 // pred_check_branch
    %10 = sbr.rel (0) target = $region5
  $region4: #{unet_forward.17} parent=0 // pred_region
    _
  $region5: #{unet_forward.17} parent=0 // pred_fallthru
    _
  // Predicated region
  $region6: #{unet_forward.17} parent=0 // pred_check
    _
  $region7: #{unet_forward.17} parent=0 // pred_check_branch
    %12 = sbr.rel (0) target = $region9
  $region8: #{unet_forward.17} parent=0 // pred_region
    _
  $region9: #{unet_forward.17} parent=0 // pred_fallthru
    _
  // Predicated region
  $region10: #{unet_forward.17} parent=0 // pred_check
    _
  $region11: #{unet_forward.17} parent=0 // pred_check_branch
    %14 = sbr.rel (0) target = $region13
  $region12: #{unet_forward.17} parent=0 // pred_region
    _
  $region13: #{unet_forward.17} parent=0 // pred_fallthru
    _
  // Predicated region
  $region14: #{unet_forward.17} parent=0 // pred_check
    _
  $region15: #{unet_forward.17} parent=0 // pred_check_branch
    %16 = sbr.rel (0) target = $region17
  $region16: #{unet_forward.17} parent=0 // pred_region
    _
  $region17: #{unet_forward.17} parent=0 // pred_fallthru
    _
  %v17 = vld [vmem:[%s0] sm:$0xff]
  %v18 = vld [vmem:[%s0 + $0x8] sm:$0xff]
  %v19 = vld [vmem:[%s0 + $0x10] sm:$0xff]
  %v20 = vld [vmem:[%s0 + $0x18] sm:$0xff]
  %v21 = vld [vmem:[%s0 + $0x20] sm:$0xff]
  %v22 = vld [vmem:[%s0 + $0x28] sm:$0xff]
  %v23 = vld [vmem:[%s0 + $0x30] sm:$0xff]
  %v24 = vld [vmem:[%s0 + $0x38] sm:$0xff]
  %v25 = vld [vmem:[%s0 + $0x40] sm:$0xff]
  %v26 = vld [vmem:[%s0 + $0x48] sm:$0xff]
  %v27 = vld [vmem:[%s0 + $0x50] sm:$0xff]
  %v28 = vld [vmem:[%s0 + $0x58] sm:$0xff]
  %v29 = vld [vmem:[%s0 + $0x60] sm:$0xff]
  %v30 = vld [vmem:[%s0 + $0x68] sm:$0xff]
  %v31 = vld [vmem:[%s0 + $0x70] sm:$0xff]
  %v32 = vld [vmem:[%s0 + $0x78] sm:$0xff]
  %v33 = vld [vmem:[%s0 + $0x80] sm:$0xff]
  %v34 = vld [vmem:[%s0 + $0x88] sm:$0xff]
  %v35 = vld [vmem:[%s0 + $0x90] sm:$0xff]
  %v36 = vld [vmem:[%s0 + $0x98] sm:$0xff]
  %v37 = vld [vmem:[%s0 + $0xa0] sm:$0xff]
  %v38 = vld [vmem:[%s0 + $0xa8] sm:$0xff]
  %v39 = vld [vmem:[%s0 + $0xb0] sm:$0xff]
  %v40 = vld [vmem:[%s0 + $0xb8] sm:$0xff]
  %v41 = vld [vmem:[%s0 + $0xc0] sm:$0xff]
  %v42 = vld [vmem:[%s0 + $0xc8] sm:$0xff]
  %v43 = vld [vmem:[%s0 + $0xd0] sm:$0xff]
  %v44 = vld [vmem:[%s0 + $0xd8] sm:$0xff]
  %v45 = vld [vmem:[%s0 + $0xe0] sm:$0xff]
  %v46 = vld [vmem:[%s0 + $0xe8] sm:$0xff]
  %v47 = vld [vmem:[%s0 + $0xf0] sm:$0xff]
  %v48 = vld [vmem:[%s0 + $0xf8] sm:$0xff]
  %v49 = vld [vmem:[%s0 + $0x100] sm:$0xff]
  %v50 = vld [vmem:[%s0 + $0x108] sm:$0xff]
  %v51 = vld [vmem:[%s0 + $0x110] sm:$0xff]
  %v52 = vld [vmem:[%s0 + $0x118] sm:$0xff]
  %v53 = vld [vmem:[%s0 + $0x120] sm:$0xff]
  %v54 = vld [vmem:[%s0 + $0x128] sm:$0xff]
  %v55 = vld [vmem:[%s0 + $0x130] sm:$0xff]
  %v56 = vld [vmem:[%s0 + $0x138] sm:$0xff]
  %v57 = vld [vmem:[%s0 + $0x140] sm:$0xff]
  %v58 = vld [vmem:[%s0 + $0x148] sm:$0xff]
  %v59 = vld [vmem:[%s0 + $0x150] sm:$0xff]
  %v60 = vld [vmem:[%s0 + $0x158] sm:$0xff]
  %v61 = vld [vmem:[%s0 + $0x160] sm:$0xff]
  %v62 = vld [vmem:[%s0 + $0x168] sm:$0xff]
  %v63 = vld [vmem:[%s0 + $0x170] sm:$0xff]
  %v64 = vld [vmem:[%s0 + $0x178] sm:$0xff]
  %v65 = vld [vmem:[%s0 + $0x180] sm:$0xff]
  %v66 = vld [vmem:[%s0 + $0x188] sm:$0xff]
  %v67 = vld [vmem:[%s0 + $0x190] sm:$0xff]
  %v68 = vld [vmem:[%s0 + $0x198] sm:$0xff]
  %v69 = vld [vmem:[%s0 + $0x1a0] sm:$0xff]
  %v70 = vld [vmem:[%s0 + $0x1a8] sm:$0xff]
  %v71 = vld [vmem:[%s0 + $0x1b0] sm:$0xff]
  %v72 = vld [vmem:[%s0 + $0x1b8] sm:$0xff]
  %v73 = vld [vmem:[%s0 + $0x1c0] sm:$0xff]
  %v74 = vld [vmem:[%s0 + $0x1c8] sm:$0xff]
  %v75 = vld [vmem:[%s0 + $0x1d0] sm:$0xff]
  %v76 = vld [vmem:[%s0 + $0x1d8] sm:$0xff]
  %v77 = vld [vmem:[%s0 + $0x1e0] sm:$0xff]
  %v78 = vld [vmem:[%s0 + $0x1e8] sm:$0xff]
  %v79 = vld [vmem:[%s0 + $0x1f0] sm:$0xff]
  %v80 = vld [vmem:[%s0 + $0x1f8] sm:$0xff]
  %v81 = vld [vmem:[%s0 + $0x200] sm:$0xff]
  %v82 = vld [vmem:[%s0 + $0x208] sm:$0xff]
  %v83 = vld [vmem:[%s0 + $0x210] sm:$0xff]
  %v84 = vld [vmem:[%s0 + $0x218] sm:$0xff]
  %v85 = vld [vmem:[%s0 + $0x220] sm:$0xff]
  %v86 = vld [vmem:[%s0 + $0x228] sm:$0xff]
  %v87 = vld [vmem:[%s0 + $0x230] sm:$0xff]
  %v88 = vld [vmem:[%s0 + $0x238] sm:$0xff]
  %v89 = vld [vmem:[%s0 + $0x240] sm:$0xff]
  %v90 = vld [vmem:[%s0 + $0x248] sm:$0xff]
  %v91 = vld [vmem:[%s0 + $0x250] sm:$0xff]
  %v92 = vld [vmem:[%s0 + $0x258] sm:$0xff]
  %v93 = vld [vmem:[%s0 + $0x260] sm:$0xff]
  %v94 = vld [vmem:[%s0 + $0x268] sm:$0xff]
  %v95 = vld [vmem:[%s0 + $0x270] sm:$0xff]
  %v96 = vld [vmem:[%s0 + $0x278] sm:$0xff]
  %v97 = vld [vmem:[%s0 + $0x280] sm:$0xff]
  %v98 = vld [vmem:[%s0 + $0x288] sm:$0xff]
  %v99 = vld [vmem:[%s0 + $0x290] sm:$0xff]
  %v100 = vld [vmem:[%s0 + $0x298] sm:$0xff]
  %v101 = vld [vmem:[%s0 + $0x2a0] sm:$0xff]
  %v102 = vld [vmem:[%s0 + $0x2a8] sm:$0xff]
  %v103 = vld [vmem:[%s0 + $0x2b0] sm:$0xff]
  %v104 = vld [vmem:[%s0 + $0x2b8] sm:$0xff]
  %v105 = vld [vmem:[%s0 + $0x2c0] sm:$0xff]
  %v106 = vld [vmem:[%s0 + $0x2c8] sm:$0xff]
  %v107 = vld [vmem:[%s0 + $0x2d0] sm:$0xff]
  %v108 = vld [vmem:[%s0 + $0x2d8] sm:$0xff]
  %v109 = vld [vmem:[%s0 + $0x2e0] sm:$0xff]
  %v110 = vld [vmem:[%s0 + $0x2e8] sm:$0xff]
  %v111 = vld [vmem:[%s0 + $0x2f0] sm:$0xff]
  %v112 = vld [vmem:[%s0 + $0x2f8] sm:$0xff]
  %v113 = vld [vmem:[%s0 + $0x300] sm:$0xff]
  %v114 = vld [vmem:[%s0 + $0x308] sm:$0xff]
  %v115 = vld [vmem:[%s0 + $0x310] sm:$0xff]
  %v116 = vld [vmem:[%s0 + $0x318] sm:$0xff]
  %v117 = vld [vmem:[%s0 + $0x320] sm:$0xff]
  %v118 = vld [vmem:[%s0 + $0x328] sm:$0xff]
  %v119 = vld [vmem:[%s0 + $0x330] sm:$0xff]
  %v120 = vld [vmem:[%s0 + $0x338] sm:$0xff]
  %v121 = vld [vmem:[%s0 + $0x340] sm:$0xff]
  %v122 = vld [vmem:[%s0 + $0x348] sm:$0xff]
  %v123 = vld [vmem:[%s0 + $0x350] sm:$0xff]
  %v124 = vld [vmem:[%s0 + $0x358] sm:$0xff]
  %v125 = vld [vmem:[%s0 + $0x360] sm:$0xff]
  %v126 = vld [vmem:[%s0 + $0x368] sm:$0xff]
  %v127 = vld [vmem:[%s0 + $0x370] sm:$0xff]
  %v128 = vld [vmem:[%s0 + $0x378] sm:$0xff]
  %v129 = vld [vmem:[%s0 + $0x380] sm:$0xff]
  %v130 = vld [vmem:[%s0 + $0x388] sm:$0xff]
  %v131 = vld [vmem:[%s0 + $0x390] sm:$0xff]
  %v132 = vld [vmem:[%s0 + $0x398] sm:$0xff]
  %v133 = vld [vmem:[%s0 + $0x3a0] sm:$0xff]
  %v134 = vld [vmem:[%s0 + $0x3a8] sm:$0xff]
  %v135 = vld [vmem:[%s0 + $0x3b0] sm:$0xff]
  %v136 = vld [vmem:[%s0 + $0x3b8] sm:$0xff]
  %v137 = vld [vmem:[%s0 + $0x3c0] sm:$0xff]
  %v138 = vld [vmem:[%s0 + $0x3c8] sm:$0xff]
  %v139 = vld [vmem:[%s0 + $0x3d0] sm:$0xff]
  %v140 = vld [vmem:[%s0 + $0x3d8] sm:$0xff]
  %v141 = vld [vmem:[%s0 + $0x3e0] sm:$0xff]
  %v142 = vld [vmem:[%s0 + $0x3e8] sm:$0xff]
  %v143 = vld [vmem:[%s0 + $0x3f0] sm:$0xff]
  %v144 = vld [vmem:[%s0 + $0x3f8] sm:$0xff]
  %v145 = vmax.f32 %v17, 0.0
  %v146 = vmax.f32 %v18, 0.0
  %v147 = vmax.f32 %v19, 0.0
  %v148 = vmax.f32 %v20, 0.0
  %v149 = vmax.f32 %v21, 0.0
  %v150 = vmax.f32 %v22, 0.0
  %v151 = vmax.f32 %v23, 0.0
  %v152 = vmax.f32 %v24, 0.0
  %v153 = vmax.f32 %v25, 0.0
  %v154 = vmax.f32 %v26, 0.0
  %v155 = vmax.f32 %v27, 0.0
  %v156 = vmax.f32 %v28, 0.0
  %v157 = vmax.f32 %v29, 0.0
  %v158 = vmax.f32 %v30, 0.0
  %v159 = vmax.f32 %v31, 0.0
  %v160 = vmax.f32 %v32, 0.0
  %v161 = vmax.f32 %v33, 0.0
  %v162 = vmax.f32 %v34, 0.0
  %v163 = vmax.f32 %v35, 0.0
  %v164 = vmax.f32 %v36, 0.0
  %v165 = vmax.f32 %v37, 0.0
  %v166 = vmax.f32 %v38, 0.0
  %v167 = vmax.f32 %v39, 0.0
  %v168 = vmax.f32 %v40, 0.0
  %v169 = vmax.f32 %v41, 0.0
  %v170 = vmax.f32 %v42, 0.0
  %v171 = vmax.f32 %v43, 0.0
  %v172 = vmax.f32 %v44, 0.0
  %v173 = vmax.f32 %v45, 0.0
  %v174 = vmax.f32 %v46, 0.0
  %v175 = vmax.f32 %v47, 0.0
  %v176 = vmax.f32 %v48, 0.0
  %v177 = vmax.f32 %v49, 0.0
  %v178 = vmax.f32 %v50, 0.0
  %v179 = vmax.f32 %v51, 0.0
  %v180 = vmax.f32 %v52, 0.0
  %v181 = vmax.f32 %v53, 0.0
  %v182 = vmax.f32 %v54, 0.0
  %v183 = vmax.f32 %v55, 0.0
  %v184 = vmax.f32 %v56, 0.0
  %v185 = vmax.f32 %v57, 0.0
  %v186 = vmax.f32 %v58, 0.0
  %v187 = vmax.f32 %v59, 0.0
  %v188 = vmax.f32 %v60, 0.0
  %v189 = vmax.f32 %v61, 0.0
  %v190 = vmax.f32 %v62, 0.0
  %v191 = vmax.f32 %v63, 0.0
  %v192 = vmax.f32 %v64, 0.0
  %v193 = vmax.f32 %v65, 0.0
  %v194 = vmax.f32 %v66, 0.0
  %v195 = vmax.f32 %v67, 0.0
  %v196 = vmax.f32 %v68, 0.0
  %v197 = vmax.f32 %v69, 0.0
  %v198 = vmax.f32 %v70, 0.0
  %v199 = vmax.f32 %v71, 0.0
  %v200 = vmax.f32 %v72, 0.0
  %v201 = vmax.f32 %v73, 0.0
  %v202 = vmax.f32 %v74, 0.0
  %v203 = vmax.f32 %v75, 0.0
  %v204 = vmax.f32 %v76, 0.0
  %v205 = vmax.f32 %v77, 0.0
  %v206 = vmax.f32 %v78, 0.0
  %v207 = vmax.f32 %v79, 0.0
  %v208 = vmax.f32 %v80, 0.0
  %v209 = vmax.f32 %v81, 0.0
  %v210 = vmax.f32 %v82, 0.0
  %v211 = vmax.f32 %v83, 0.0
  %v212 = vmax.f32 %v84, 0.0
  %v213 = vmax.f32 %v85, 0.0
  %v214 = vmax.f32 %v86, 0.0
  %v215 = vmax.f32 %v87, 0.0
  %v216 = vmax.f32 %v88, 0.0
  %v217 = vmax.f32 %v89, 0.0
  %v218 = vmax.f32 %v90, 0.0
  %v219 = vmax.f32 %v91, 0.0
  %v220 = vmax.f32 %v92, 0.0
  %v221 = vmax.f32 %v93, 0.0
  %v222 = vmax.f32 %v94, 0.0
  %v223 = vmax.f32 %v95, 0.0
  %v224 = vmax.f32 %v96, 0.0
  %v225 = vmax.f32 %v97, 0.0
  %v226 = vmax.f32 %v98, 0.0
  %v227 = vmax.f32 %v99, 0.0
  %v228 = vmax.f32 %v100, 0.0
  %v229 = vmax.f32 %v101, 0.0
  %v230 = vmax.f32 %v102, 0.0
  %v231 = vmax.f32 %v103, 0.0
  %v232 = vmax.f32 %v104, 0.0
  %v233 = vmax.f32 %v105, 0.0
  %v234 = vmax.f32 %v106, 0.0
  %v235 = vmax.f32 %v107, 0.0
  %v236 = vmax.f32 %v108, 0.0
  %v237 = vmax.f32 %v109, 0.0
  %v238 = vmax.f32 %v110, 0.0
  %v239 = vmax.f32 %v111, 0.0
  %v240 = vmax.f32 %v112, 0.0
  %v241 = vmax.f32 %v113, 0.0
  %v242 = vmax.f32 %v114, 0.0
  %v243 = vmax.f32 %v115, 0.0
  %v244 = vmax.f32 %v116, 0.0
  %v245 = vmax.f32 %v117, 0.0
  %v246 = vmax.f32 %v118, 0.0
  %v247 = vmax.f32 %v119, 0.0
  %v248 = vmax.f32 %v120, 0.0
  %v249 = vmax.f32 %v121, 0.0
  %v250 = vmax.f32 %v122, 0.0
  %v251 = vmax.f32 %v123, 0.0
  %v252 = vmax.f32 %v124, 0.0
  %v253 = vmax.f32 %v125, 0.0
  %v254 = vmax.f32 %v126, 0.0
  %v255 = vmax.f32 %v127, 0.0
  %v256 = vmax.f32 %v128, 0.0
  %v257 = vmax.f32 %v129, 0.0
  %v258 = vmax.f32 %v130, 0.0
  %v259 = vmax.f32 %v131, 0.0
  %v260 = vmax.f32 %v132, 0.0
  %v261 = vmax.f32 %v133, 0.0
  %v262 = vmax.f32 %v134, 0.0
  %v263 = vmax.f32 %v135, 0.0
  %v264 = vmax.f32 %v136, 0.0
  %v265 = vmax.f32 %v137, 0.0
  %v266 = vmax.f32 %v138, 0.0
  %v267 = vmax.f32 %v139, 0.0
  %v268 = vmax.f32 %v140, 0.0
  %v269 = vmax.f32 %v141, 0.0
  %v270 = vmax.f32 %v142, 0.0
  %v271 = vmax.f32 %v143, 0.0
  %v272 = vmax.f32 %v144, 0.0
  %v273 = vld [vmem:[%s1] sm:$0xff]
  %v274 = vld [vmem:[%s1 + $0x8] sm:$0xff]
  %v275 = vld [vmem:[%s1 + $0x10] sm:$0xff]
  %v276 = vld [vmem:[%s1 + $0x18] sm:$0xff]
  %v277 = vld [vmem:[%s1 + $0x20] sm:$0xff]
  %v278 = vld [vmem:[%s1 + $0x28] sm:$0xff]
  %v279 = vld [vmem:[%s1 + $0x30] sm:$0xff]
  %v280 = vld [vmem:[%s1 + $0x38] sm:$0xff]
  %v281 = vld [vmem:[%s1 + $0x40] sm:$0xff]
  %v282 = vld [vmem:[%s1 + $0x48] sm:$0xff]
  %v283 = vld [vmem:[%s1 + $0x50] sm:$0xff]
  %v284 = vld [vmem:[%s1 + $0x58] sm:$0xff]
  %v285 = vld [vmem:[%s1 + $0x60] sm:$0xff]
  %v286 = vld [vmem:[%s1 + $0x68] sm:$0xff]
  %v287 = vld [vmem:[%s1 + $0x70] sm:$0xff]
  %v288 = vld [vmem:[%s1 + $0x78] sm:$0xff]
  %v289 = vld [vmem:[%s1 + $0x80] sm:$0xff]
  %v290 = vld [vmem:[%s1 + $0x88] sm:$0xff]
  %v291 = vld [vmem:[%s1 + $0x90] sm:$0xff]
  %v292 = vld [vmem:[%s1 + $0x98] sm:$0xff]
  %v293 = vld [vmem:[%s1 + $0xa0] sm:$0xff]
  %v294 = vld [vmem:[%s1 + $0xa8] sm:$0xff]
  %v295 = vld [vmem:[%s1 + $0xb0] sm:$0xff]
  %v296 = vld [vmem:[%s1 + $0xb8] sm:$0xff]
  %v297 = vld [vmem:[%s1 + $0xc0] sm:$0xff]
  %v298 = vld [vmem:[%s1 + $0xc8] sm:$0xff]
  %v299 = vld [vmem:[%s1 + $0xd0] sm:$0xff]
  %v300 = vld [vmem:[%s1 + $0xd8] sm:$0xff]
  %v301 = vld [vmem:[%s1 + $0xe0] sm:$0xff]
  %v302 = vld [vmem:[%s1 + $0xe8] sm:$0xff]
  %v303 = vld [vmem:[%s1 + $0xf0] sm:$0xff]
  %v304 = vld [vmem:[%s1 + $0xf8] sm:$0xff]
  %v305 = vld [vmem:[%s1 + $0x100] sm:$0xff]
  %v306 = vld [vmem:[%s1 + $0x108] sm:$0xff]
  %v307 = vld [vmem:[%s1 + $0x110] sm:$0xff]
  %v308 = vld [vmem:[%s1 + $0x118] sm:$0xff]
  %v309 = vld [vmem:[%s1 + $0x120] sm:$0xff]
  %v310 = vld [vmem:[%s1 + $0x128] sm:$0xff]
  %v311 = vld [vmem:[%s1 + $0x130] sm:$0xff]
  %v312 = vld [vmem:[%s1 + $0x138] sm:$0xff]
  %v313 = vld [vmem:[%s1 + $0x140] sm:$0xff]
  %v314 = vld [vmem:[%s1 + $0x148] sm:$0xff]
  %v315 = vld [vmem:[%s1 + $0x150] sm:$0xff]
  %v316 = vld [vmem:[%s1 + $0x158] sm:$0xff]
  %v317 = vld [vmem:[%s1 + $0x160] sm:$0xff]
  %v318 = vld [vmem:[%s1 + $0x168] sm:$0xff]
  %v319 = vld [vmem:[%s1 + $0x170] sm:$0xff]
  %v320 = vld [vmem:[%s1 + $0x178] sm:$0xff]
  %v321 = vld [vmem:[%s1 + $0x180] sm:$0xff]
  %v322 = vld [vmem:[%s1 + $0x188] sm:$0xff]
  %v323 = vld [vmem:[%s1 + $0x190] sm:$0xff]
  %v324 = vld [vmem:[%s1 + $0x198] sm:$0xff]
  %v325 = vld [vmem:[%s1 + $0x1a0] sm:$0xff]
  %v326 = vld [vmem:[%s1 + $0x1a8] sm:$0xff]
  %v327 = vld [vmem:[%s1 + $0x1b0] sm:$0xff]
  %v328 = vld [vmem:[%s1 + $0x1b8] sm:$0xff]
  %v329 = vld [vmem:[%s1 + $0x1c0] sm:$0xff]
  %v330 = vld [vmem:[%s1 + $0x1c8] sm:$0xff]
  %v331 = vld [vmem:[%s1 + $0x1d0] sm:$0xff]
  %v332 = vld [vmem:[%s1 + $0x1d8] sm:$0xff]
  %v333 = vld [vmem:[%s1 + $0x1e0] sm:$0xff]
  %v334 = vld [vmem:[%s1 + $0x1e8] sm:$0xff]
  %v335 = vld [vmem:[%s1 + $0x1f0] sm:$0xff]
  %v336 = vld [vmem:[%s1 + $0x1f8] sm:$0xff]
  %v337 = vld [vmem:[%s1 + $0x200] sm:$0xff]
  %v338 = vld [vmem:[%s1 + $0x208] sm:$0xff]
  %v339 = vld [vmem:[%s1 + $0x210] sm:$0xff]
  %v340 = vld [vmem:[%s1 + $0x218] sm:$0xff]
  %v341 = vld [vmem:[%s1 + $0x220] sm:$0xff]
  %v342 = vld [vmem:[%s1 + $0x228] sm:$0xff]
  %v343 = vld [vmem:[%s1 + $0x230] sm:$0xff]
  %v344 = vld [vmem:[%s1 + $0x238] sm:$0xff]
  %v345 = vld [vmem:[%s1 + $0x240] sm:$0xff]
  %v346 = vld [vmem:[%s1 + $0x248] sm:$0xff]
  %v347 = vld [vmem:[%s1 + $0x250] sm:$0xff]
  %v348 = vld [vmem:[%s1 + $0x258] sm:$0xff]
  %v349 = vld [vmem:[%s1 + $0x260] sm:$0xff]
  %v350 = vld [vmem:[%s1 + $0x268] sm:$0xff]
  %v351 = vld [vmem:[%s1 + $0x270] sm:$0xff]
  %v352 = vld [vmem:[%s1 + $0x278] sm:$0xff]
  %v353 = vld [vmem:[%s1 + $0x280] sm:$0xff]
  %v354 = vld [vmem:[%s1 + $0x288] sm:$0xff]
  %v355 = vld [vmem:[%s1 + $0x290] sm:$0xff]
  %v356 = vld [vmem:[%s1 + $0x298] sm:$0xff]
  %v357 = vld [vmem:[%s1 + $0x2a0] sm:$0xff]
  %v358 = vld [vmem:[%s1 + $0x2a8] sm:$0xff]
  %v359 = vld [vmem:[%s1 + $0x2b0] sm:$0xff]
  %v360 = vld [vmem:[%s1 + $0x2b8] sm:$0xff]
  %v361 = vld [vmem:[%s1 + $0x2c0] sm:$0xff]
  %v362 = vld [vmem:[%s1 + $0x2c8] sm:$0xff]
  %v363 = vld [vmem:[%s1 + $0x2d0] sm:$0xff]
  %v364 = vld [vmem:[%s1 + $0x2d8] sm:$0xff]
  %v365 = vld [vmem:[%s1 + $0x2e0] sm:$0xff]
  %v366 = vld [vmem:[%s1 + $0x2e8] sm:$0xff]
  %v367 = vld [vmem:[%s1 + $0x2f0] sm:$0xff]
  %v368 = vld [vmem:[%s1 + $0x2f8] sm:$0xff]
  %v369 = vld [vmem:[%s1 + $0x300] sm:$0xff]
  %v370 = vld [vmem:[%s1 + $0x308] sm:$0xff]
  %v371 = vld [vmem:[%s1 + $0x310] sm:$0xff]
  %v372 = vld [vmem:[%s1 + $0x318] sm:$0xff]
  %v373 = vld [vmem:[%s1 + $0x320] sm:$0xff]
  %v374 = vld [vmem:[%s1 + $0x328] sm:$0xff]
  %v375 = vld [vmem:[%s1 + $0x330] sm:$0xff]
  %v376 = vld [vmem:[%s1 + $0x338] sm:$0xff]
  %v377 = vld [vmem:[%s1 + $0x340] sm:$0xff]
  %v378 = vld [vmem:[%s1 + $0x348] sm:$0xff]
  %v379 = vld [vmem:[%s1 + $0x350] sm:$0xff]
  %v380 = vld [vmem:[%s1 + $0x358] sm:$0xff]
  %v381 = vld [vmem:[%s1 + $0x360] sm:$0xff]
  %v382 = vld [vmem:[%s1 + $0x368] sm:$0xff]
  %v383 = vld [vmem:[%s1 + $0x370] sm:$0xff]
  %v384 = vld [vmem:[%s1 + $0x378] sm:$0xff]
  %v385 = vld [vmem:[%s1 + $0x380] sm:$0xff]
  %v386 = vld [vmem:[%s1 + $0x388] sm:$0xff]
  %v387 = vld [vmem:[%s1 + $0x390] sm:$0xff]
  %v388 = vld [vmem:[%s1 + $0x398] sm:$0xff]
  %v389 = vld [vmem:[%s1 + $0x3a0] sm:$0xff]
  %v390 = vld [vmem:[%s1 + $0x3a8] sm:$0xff]
  %v391 = vld [vmem:[%s1 + $0x3b0] sm:$0xff]
  %v392 = vld [vmem:[%s1 + $0x3b8] sm:$0xff]
  %v393 = vld [vmem:[%s1 + $0x3c0] sm:$0xff]
  %v394 = vld [vmem:[%s1 + $0x3c8] sm:$0xff]
  %v395 = vld [vmem:[%s1 + $0x3d0] sm:$0xff]
  %v396 = vld [vmem:[%s1 + $0x3d8] sm:$0xff]
  %v397 = vld [vmem:[%s1 + $0x3e0] sm:$0xff]
  %v398 = vld [vmem:[%s1 + $0x3e8] sm:$0xff]
  %v399 = vld [vmem:[%s1 + $0x3f0] sm:$0xff]
  %v400 = vld [vmem:[%s1 + $0x3f8] sm:$0xff]
  %401 = vmatpush.msra.mxu0 %v288
  %402 = vmatpush.msra.mxu0 %v287
  %403 = vmatpush.msra.mxu0 %v286
  %404 = vmatpush.msra.mxu0 %v285
  %405 = vmatpush.msra.mxu0 %v284
  %406 = vmatpush.msra.mxu0 %v283
  %407 = vmatpush.msra.mxu0 %v282
  %408 = vmatpush.msra.mxu0 %v281
  %409 = vmatpush.msra.mxu0 %v280
  %410 = vmatpush.msra.mxu0 %v279
  %411 = vmatpush.msra.mxu0 %v278
  %412 = vmatpush.msra.mxu0 %v277
  %413 = vmatpush.msra.mxu0 %v276
  %414 = vmatpush.msra.mxu0 %v275
  %415 = vmatpush.msra.mxu0 %v274
  %416 = vmatpush.msra.mxu0 %v273
  %417 = vmatmul.f32.gmra.mxu0 %v145
  %v418 = vpop.f32.mrf.mxu0
  %v419 = vadd.f32 0.0, %v418
  %420 = vmatmul.f32.gmra.mxu0 %v153
  %v421 = vpop.f32.mrf.mxu0
  %v422 = vadd.f32 0.0, %v421
  %423 = vmatmul.f32.gmra.mxu0 %v161
  %v424 = vpop.f32.mrf.mxu0
  %v425 = vadd.f32 0.0, %v424
  %426 = vmatmul.f32.gmra.mxu0 %v169
  %v427 = vpop.f32.mrf.mxu0
  %v428 = vadd.f32 0.0, %v427
  %429 = vmatmul.f32.gmra.mxu0 %v177
  %v430 = vpop.f32.mrf.mxu0
  %v431 = vadd.f32 0.0, %v430
  %432 = vmatmul.f32.gmra.mxu0 %v185
  %v433 = vpop.f32.mrf.mxu0
  %v434 = vadd.f32 0.0, %v433
  %435 = vmatmul.f32.gmra.mxu0 %v193
  %v436 = vpop.f32.mrf.mxu0
  %v437 = vadd.f32 0.0, %v436
  %438 = vmatmul.f32.gmra.mxu0 %v201
  %v439 = vpop.f32.mrf.mxu0
  %v440 = vadd.f32 0.0, %v439
  %441 = vmatmul.f32.gmra.mxu0 %v209
  %v442 = vpop.f32.mrf.mxu0
  %v443 = vadd.f32 0.0, %v442
  %444 = vmatmul.f32.gmra.mxu0 %v217
  %v445 = vpop.f32.mrf.mxu0
  %v446 = vadd.f32 0.0, %v445
  %447 = vmatmul.f32.gmra.mxu0 %v225
  %v448 = vpop.f32.mrf.mxu0
  %v449 = vadd.f32 0.0, %v448
  %450 = vmatmul.f32.gmra.mxu0 %v233
  %v451 = vpop.f32.mrf.mxu0
  %v452 = vadd.f32 0.0, %v451
  %453 = vmatmul.f32.gmra.mxu0 %v241
  %v454 = vpop.f32.mrf.mxu0
  %v455 = vadd.f32 0.0, %v454
  %456 = vmatmul.f32.gmra.mxu0 %v249
  %v457 = vpop.f32.mrf.mxu0
  %v458 = vadd.f32 0.0, %v457
  %459 = vmatmul.f32.gmra.mxu0 %v257
  %v460 = vpop.f32.mrf.mxu0
  %v461 = vadd.f32 0.0, %v460
  %462 = vmatmul.f32.gmra.mxu0 %v265
  %v463 = vpop.f32.mrf.mxu0
  %v464 = vadd.f32 0.0, %v463
  %465 = vdwg.mxu0
  %466 = vmatpush.msra.mxu0 %v304
  %467 = vmatpush.msra.mxu0 %v303
  %468 = vmatpush.msra.mxu0 %v302
  %469 = vmatpush.msra.mxu0 %v301
  %470 = vmatpush.msra.mxu0 %v300
  %471 = vmatpush.msra.mxu0 %v299
  %472 = vmatpush.msra.mxu0 %v298
  %473 = vmatpush.msra.mxu0 %v297
  %474 = vmatpush.msra.mxu0 %v296
  %475 = vmatpush.msra.mxu0 %v295
  %476 = vmatpush.msra.mxu0 %v294
  %477 = vmatpush.msra.mxu0 %v293
  %478 = vmatpush.msra.mxu0 %v292
  %479 = vmatpush.msra.mxu0 %v291
  %480 = vmatpush.msra.mxu0 %v290
  %481 = vmatpush.msra.mxu0 %v289
  %482 = vmatmul.f32.gmra.mxu0 %v146
  %v483 = vpop.f32.mrf.mxu0
  %v484 = vadd.f32 %v419, %v483
  %485 = vmatmul.f32.gmra.mxu0 %v154
  %v486 = vpop.f32.mrf.mxu0
  %v487 = vadd.f32 %v422, %v486
  %488 = vmatmul.f32.gmra.mxu0 %v162
  %v489 = vpop.f32.mrf.mxu0
  %v490 = vadd.f32 %v425, %v489
  %491 = vmatmul.f32.gmra.mxu0 %v170
  %v492 = vpop.f32.mrf.mxu0
  %v493 = vadd.f32 %v428, %v492
  %494 = vmatmul.f32.gmra.mxu0 %v178
  %v495 = vpop.f32.mrf.mxu0
  %v496 = vadd.f32 %v431, %v495
  %497 = vmatmul.f32.gmra.mxu0 %v186
  %v498 = vpop.f32.mrf.mxu0
  %v499 = vadd.f32 %v434, %v498
  %500 = vmatmul.f32.gmra.mxu0 %v194
  %v501 = vpop.f32.mrf.mxu0
  %v502 = vadd.f32 %v437, %v501
  %503 = vmatmul.f32.gmra.mxu0 %v202
  %v504 = vpop.f32.mrf.mxu0
  %v505 = vadd.f32 %v440, %v504
  %506 = vmatmul.f32.gmra.mxu0 %v210
  %v507 = vpop.f32.mrf.mxu0
  %v508 = vadd.f32 %v443, %v507
  %509 = vmatmul.f32.gmra.mxu0 %v218
  %v510 = vpop.f32.mrf.mxu0
  %v511 = vadd.f32 %v446, %v510
  %512 = vmatmul.f32.gmra.mxu0 %v226
  %v513 = vpop.f32.mrf.mxu0
  %v514 = vadd.f32 %v449, %v513
  %515 = vmatmul.f32.gmra.mxu0 %v234
  %v516 = vpop.f32.mrf.mxu0
  %v517 = vadd.f32 %v452, %v516
  %518 = vmatmul.f32.gmra.mxu0 %v242
  %v519 = vpop.f32.mrf.mxu0
  %v520 = vadd.f32 %v455, %v519
  %521 = vmatmul.f32.gmra.mxu0 %v250
  %v522 = vpop.f32.mrf.mxu0
  %v523 = vadd.f32 %v458, %v522
  %524 = vmatmul.f32.gmra.mxu0 %v258
  %v525 = vpop.f32.mrf.mxu0
  %v526 = vadd.f32 %v461, %v525
  %527 = vmatmul.f32.gmra.mxu0 %v266
  %v528 = vpop.f32.mrf.mxu0
  %v529 = vadd.f32 %v464, %v528
  %530 = vdwg.mxu0
  %531 = vmatpush.msra.mxu0 %v320
  %532 = vmatpush.msra.mxu0 %v319
  %533 = vmatpush.msra.mxu0 %v318
  %534 = vmatpush.msra.mxu0 %v317
  %535 = vmatpush.msra.mxu0 %v316
  %536 = vmatpush.msra.mxu0 %v315
  %537 = vmatpush.msra.mxu0 %v314
  %538 = vmatpush.msra.mxu0 %v313
  %539 = vmatpush.msra.mxu0 %v312
  %540 = vmatpush.msra.mxu0 %v311
  %541 = vmatpush.msra.mxu0 %v310
  %542 = vmatpush.msra.mxu0 %v309
  %543 = vmatpush.msra.mxu0 %v308
  %544 = vmatpush.msra.mxu0 %v307
  %545 = vmatpush.msra.mxu0 %v306
  %546 = vmatpush.msra.mxu0 %v305
  %547 = vmatmul.f32.gmra.mxu0 %v147
  %v548 = vpop.f32.mrf.mxu0
  %v549 = vadd.f32 %v484, %v548
  %550 = vmatmul.f32.gmra.mxu0 %v155
  %v551 = vpop.f32.mrf.mxu0
  %v552 = vadd.f32 %v487, %v551
  %553 = vmatmul.f32.gmra.mxu0 %v163
  %v554 = vpop.f32.mrf.mxu0
  %v555 = vadd.f32 %v490, %v554
  %556 = vmatmul.f32.gmra.mxu0 %v171
  %v557 = vpop.f32.mrf.mxu0
  %v558 = vadd.f32 %v493, %v557
  %559 = vmatmul.f32.gmra.mxu0 %v179
  %v560 = vpop.f32.mrf.mxu0
  %v561 = vadd.f32 %v496, %v560
  %562 = vmatmul.f32.gmra.mxu0 %v187
  %v563 = vpop.f32.mrf.mxu0
  %v564 = vadd.f32 %v499, %v563
  %565 = vmatmul.f32.gmra.mxu0 %v195
  %v566 = vpop.f32.mrf.mxu0
  %v567 = vadd.f32 %v502, %v566
  %568 = vmatmul.f32.gmra.mxu0 %v203
  %v569 = vpop.f32.mrf.mxu0
  %v570 = vadd.f32 %v505, %v569
  %571 = vmatmul.f32.gmra.mxu0 %v211
  %v572 = vpop.f32.mrf.mxu0
  %v573 = vadd.f32 %v508, %v572
  %574 = vmatmul.f32.gmra.mxu0 %v219
  %v575 = vpop.f32.mrf.mxu0
  %v576 = vadd.f32 %v511, %v575
  %577 = vmatmul.f32.gmra.mxu0 %v227
  %v578 = vpop.f32.mrf.mxu0
  %v579 = vadd.f32 %v514, %v578
  %580 = vmatmul.f32.gmra.mxu0 %v235
  %v581 = vpop.f32.mrf.mxu0
  %v582 = vadd.f32 %v517, %v581
  %583 = vmatmul.f32.gmra.mxu0 %v243
  %v584 = vpop.f32.mrf.mxu0
  %v585 = vadd.f32 %v520, %v584
  %586 = vmatmul.f32.gmra.mxu0 %v251
  %v587 = vpop.f32.mrf.mxu0
  %v588 = vadd.f32 %v523, %v587
  %589 = vmatmul.f32.gmra.mxu0 %v259
  %v590 = vpop.f32.mrf.mxu0
  %v591 = vadd.f32 %v526, %v590
  %592 = vmatmul.f32.gmra.mxu0 %v267
  %v593 = vpop.f32.mrf.mxu0
  %v594 = vadd.f32 %v529, %v593
  %595 = vdwg.mxu0
  %596 = vmatpush.msra.mxu0 %v336
  %597 = vmatpush.msra.mxu0 %v335
  %598 = vmatpush.msra.mxu0 %v334
  %599 = vmatpush.msra.mxu0 %v333
  %600 = vmatpush.msra.mxu0 %v332
  %601 = vmatpush.msra.mxu0 %v331
  %602 = vmatpush.msra.mxu0 %v330
  %603 = vmatpush.msra.mxu0 %v329
  %604 = vmatpush.msra.mxu0 %v328
  %605 = vmatpush.msra.mxu0 %v327
  %606 = vmatpush.msra.mxu0 %v326
  %607 = vmatpush.msra.mxu0 %v325
  %608 = vmatpush.msra.mxu0 %v324
  %609 = vmatpush.msra.mxu0 %v323
  %610 = vmatpush.msra.mxu0 %v322
  %611 = vmatpush.msra.mxu0 %v321
  %612 = vmatmul.f32.gmra.mxu0 %v148
  %v613 = vpop.f32.mrf.mxu0
  %v614 = vadd.f32 %v549, %v613
  %615 = vmatmul.f32.gmra.mxu0 %v156
  %v616 = vpop.f32.mrf.mxu0
  %v617 = vadd.f32 %v552, %v616
  %618 = vmatmul.f32.gmra.mxu0 %v164
  %v619 = vpop.f32.mrf.mxu0
  %v620 = vadd.f32 %v555, %v619
  %621 = vmatmul.f32.gmra.mxu0 %v172
  %v622 = vpop.f32.mrf.mxu0
  %v623 = vadd.f32 %v558, %v622
  %624 = vmatmul.f32.gmra.mxu0 %v180
  %v625 = vpop.f32.mrf.mxu0
  %v626 = vadd.f32 %v561, %v625
  %627 = vmatmul.f32.gmra.mxu0 %v188
  %v628 = vpop.f32.mrf.mxu0
  %v629 = vadd.f32 %v564, %v628
  %630 = vmatmul.f32.gmra.mxu0 %v196
  %v631 = vpop.f32.mrf.mxu0
  %v632 = vadd.f32 %v567, %v631
  %633 = vmatmul.f32.gmra.mxu0 %v204
  %v634 = vpop.f32.mrf.mxu0
  %v635 = vadd.f32 %v570, %v634
  %636 = vmatmul.f32.gmra.mxu0 %v212
  %v637 = vpop.f32.mrf.mxu0
  %v638 = vadd.f32 %v573, %v637
  %639 = vmatmul.f32.gmra.mxu0 %v220
  %v640 = vpop.f32.mrf.mxu0
  %v641 = vadd.f32 %v576, %v640
  %642 = vmatmul.f32.gmra.mxu0 %v228
  %v643 = vpop.f32.mrf.mxu0
  %v644 = vadd.f32 %v579, %v643
  %645 = vmatmul.f32.gmra.mxu0 %v236
  %v646 = vpop.f32.mrf.mxu0
  %v647 = vadd.f32 %v582, %v646
  %648 = vmatmul.f32.gmra.mxu0 %v244
  %v649 = vpop.f32.mrf.mxu0
  %v650 = vadd.f32 %v585, %v649
  %651 = vmatmul.f32.gmra.mxu0 %v252
  %v652 = vpop.f32.mrf.mxu0
  %v653 = vadd.f32 %v588, %v652
  %654 = vmatmul.f32.gmra.mxu0 %v260
  %v655 = vpop.f32.mrf.mxu0
  %v656 = vadd.f32 %v591, %v655
  %657 = vmatmul.f32.gmra.mxu0 %v268
  %v658 = vpop.f32.mrf.mxu0
  %v659 = vadd.f32 %v594, %v658
  %660 = vdwg.mxu0
  %661 = vmatpush.msra.mxu0 %v352
  %662 = vmatpush.msra.mxu0 %v351
  %663 = vmatpush.msra.mxu0 %v350
  %664 = vmatpush.msra.mxu0 %v349
  %665 = vmatpush.msra.mxu0 %v348
  %666 = vmatpush.msra.mxu0 %v347
  %667 = vmatpush.msra.mxu0 %v346
  %668 = vmatpush.msra.mxu0 %v345
  %669 = vmatpush.msra.mxu0 %v344
  %670 = vmatpush.msra.mxu0 %v343
  %671 = vmatpush.msra.mxu0 %v342
  %672 = vmatpush.msra.mxu0 %v341
  %673 = vmatpush.msra.mxu0 %v340
  %674 = vmatpush.msra.mxu0 %v339
  %675 = vmatpush.msra.mxu0 %v338
  %676 = vmatpush.msra.mxu0 %v337
  %677 = vmatmul.f32.gmra.mxu0 %v149
  %v678 = vpop.f32.mrf.mxu0
  %v679 = vadd.f32 %v614, %v678
  %680 = vmatmul.f32.gmra.mxu0 %v157
  %v681 = vpop.f32.mrf.mxu0
  %v682 = vadd.f32 %v617, %v681
  %683 = vmatmul.f32.gmra.mxu0 %v165
  %v684 = vpop.f32.mrf.mxu0
  %v685 = vadd.f32 %v620, %v684
  %686 = vmatmul.f32.gmra.mxu0 %v173
  %v687 = vpop.f32.mrf.mxu0
  %v688 = vadd.f32 %v623, %v687
  %689 = vmatmul.f32.gmra.mxu0 %v181
  %v690 = vpop.f32.mrf.mxu0
  %v691 = vadd.f32 %v626, %v690
  %692 = vmatmul.f32.gmra.mxu0 %v189
  %v693 = vpop.f32.mrf.mxu0
  %v694 = vadd.f32 %v629, %v693
  %695 = vmatmul.f32.gmra.mxu0 %v197
  %v696 = vpop.f32.mrf.mxu0
  %v697 = vadd.f32 %v632, %v696
  %698 = vmatmul.f32.gmra.mxu0 %v205
  %v699 = vpop.f32.mrf.mxu0
  %v700 = vadd.f32 %v635, %v699
  %701 = vmatmul.f32.gmra.mxu0 %v213
  %v702 = vpop.f32.mrf.mxu0
  %v703 = vadd.f32 %v638, %v702
  %704 = vmatmul.f32.gmra.mxu0 %v221
  %v705 = vpop.f32.mrf.mxu0
  %v706 = vadd.f32 %v641, %v705
  %707 = vmatmul.f32.gmra.mxu0 %v229
  %v708 = vpop.f32.mrf.mxu0
  %v709 = vadd.f32 %v644, %v708
  %710 = vmatmul.f32.gmra.mxu0 %v237
  %v711 = vpop.f32.mrf.mxu0
  %v712 = vadd.f32 %v647, %v711
  %713 = vmatmul.f32.gmra.mxu0 %v245
  %v714 = vpop.f32.mrf.mxu0
  %v715 = vadd.f32 %v650, %v714
  %716 = vmatmul.f32.gmra.mxu0 %v253
  %v717 = vpop.f32.mrf.mxu0
  %v718 = vadd.f32 %v653, %v717
  %719 = vmatmul.f32.gmra.mxu0 %v261
  %v720 = vpop.f32.mrf.mxu0
  %v721 = vadd.f32 %v656, %v720
  %722 = vmatmul.f32.gmra.mxu0 %v269
  %v723 = vpop.f32.mrf.mxu0
  %v724 = vadd.f32 %v659, %v723
  %725 = vdwg.mxu0
  %726 = vmatpush.msra.mxu0 %v368
  %727 = vmatpush.msra.mxu0 %v367
  %728 = vmatpush.msra.mxu0 %v366
  %729 = vmatpush.msra.mxu0 %v365
  %730 = vmatpush.msra.mxu0 %v364
  %731 = vmatpush.msra.mxu0 %v363
  %732 = vmatpush.msra.mxu0 %v362
  %733 = vmatpush.msra.mxu0 %v361
  %734 = vmatpush.msra.mxu0 %v360
  %735 = vmatpush.msra.mxu0 %v359
  %736 = vmatpush.msra.mxu0 %v358
  %737 = vmatpush.msra.mxu0 %v357
  %738 = vmatpush.msra.mxu0 %v356
  %739 = vmatpush.msra.mxu0 %v355
  %740 = vmatpush.msra.mxu0 %v354
  %741 = vmatpush.msra.mxu0 %v353
  %742 = vmatmul.f32.gmra.mxu0 %v150
  %v743 = vpop.f32.mrf.mxu0
  %v744 = vadd.f32 %v679, %v743
  %745 = vmatmul.f32.gmra.mxu0 %v158
  %v746 = vpop.f32.mrf.mxu0
  %v747 = vadd.f32 %v682, %v746
  %748 = vmatmul.f32.gmra.mxu0 %v166
  %v749 = vpop.f32.mrf.mxu0
  %v750 = vadd.f32 %v685, %v749
  %751 = vmatmul.f32.gmra.mxu0 %v174
  %v752 = vpop.f32.mrf.mxu0
  %v753 = vadd.f32 %v688, %v752
  %754 = vmatmul.f32.gmra.mxu0 %v182
  %v755 = vpop.f32.mrf.mxu0
  %v756 = vadd.f32 %v691, %v755
  %757 = vmatmul.f32.gmra.mxu0 %v190
  %v758 = vpop.f32.mrf.mxu0
  %v759 = vadd.f32 %v694, %v758
  %760 = vmatmul.f32.gmra.mxu0 %v198
  %v761 = vpop.f32.mrf.mxu0
  %v762 = vadd.f32 %v697, %v761
  %763 = vmatmul.f32.gmra.mxu0 %v206
  %v764 = vpop.f32.mrf.mxu0
  %v765 = vadd.f32 %v700, %v764
  %766 = vmatmul.f32.gmra.mxu0 %v214
  %v767 = vpop.f32.mrf.mxu0
  %v768 = vadd.f32 %v703, %v767
  %769 = vmatmul.f32.gmra.mxu0 %v222
  %v770 = vpop.f32.mrf.mxu0
  %v771 = vadd.f32 %v706, %v770
  %772 = vmatmul.f32.gmra.mxu0 %v230
  %v773 = vpop.f32.mrf.mxu0
  %v774 = vadd.f32 %v709, %v773
  %775 = vmatmul.f32.gmra.mxu0 %v238
  %v776 = vpop.f32.mrf.mxu0
  %v777 = vadd.f32 %v712, %v776
  %778 = vmatmul.f32.gmra.mxu0 %v246
  %v779 = vpop.f32.mrf.mxu0
  %v780 = vadd.f32 %v715, %v779
  %781 = vmatmul.f32.gmra.mxu0 %v254
  %v782 = vpop.f32.mrf.mxu0
  %v783 = vadd.f32 %v718, %v782
  %784 = vmatmul.f32.gmra.mxu0 %v262
  %v785 = vpop.f32.mrf.mxu0
  %v786 = vadd.f32 %v721, %v785
  %787 = vmatmul.f32.gmra.mxu0 %v270
  %v788 = vpop.f32.mrf.mxu0
  %v789 = vadd.f32 %v724, %v788
  %790 = vdwg.mxu0
  %791 = vmatpush.msra.mxu0 %v384
  %792 = vmatpush.msra.mxu0 %v383
  %793 = vmatpush.msra.mxu0 %v382
  %794 = vmatpush.msra.mxu0 %v381
  %795 = vmatpush.msra.mxu0 %v380
  %796 = vmatpush.msra.mxu0 %v379
  %797 = vmatpush.msra.mxu0 %v378
  %798 = vmatpush.msra.mxu0 %v377
  %799 = vmatpush.msra.mxu0 %v376
  %800 = vmatpush.msra.mxu0 %v375
  %801 = vmatpush.msra.mxu0 %v374
  %802 = vmatpush.msra.mxu0 %v373
  %803 = vmatpush.msra.mxu0 %v372
  %804 = vmatpush.msra.mxu0 %v371
  %805 = vmatpush.msra.mxu0 %v370
  %806 = vmatpush.msra.mxu0 %v369
  %807 = vmatmul.f32.gmra.mxu0 %v151
  %v808 = vpop.f32.mrf.mxu0
  %v809 = vadd.f32 %v744, %v808
  %810 = vmatmul.f32.gmra.mxu0 %v159
  %v811 = vpop.f32.mrf.mxu0
  %v812 = vadd.f32 %v747, %v811
  %813 = vmatmul.f32.gmra.mxu0 %v167
  %v814 = vpop.f32.mrf.mxu0
  %v815 = vadd.f32 %v750, %v814
  %816 = vmatmul.f32.gmra.mxu0 %v175
  %v817 = vpop.f32.mrf.mxu0
  %v818 = vadd.f32 %v753, %v817
  %819 = vmatmul.f32.gmra.mxu0 %v183
  %v820 = vpop.f32.mrf.mxu0
  %v821 = vadd.f32 %v756, %v820
  %822 = vmatmul.f32.gmra.mxu0 %v191
  %v823 = vpop.f32.mrf.mxu0
  %v824 = vadd.f32 %v759, %v823
  %825 = vmatmul.f32.gmra.mxu0 %v199
  %v826 = vpop.f32.mrf.mxu0
  %v827 = vadd.f32 %v762, %v826
  %828 = vmatmul.f32.gmra.mxu0 %v207
  %v829 = vpop.f32.mrf.mxu0
  %v830 = vadd.f32 %v765, %v829
  %831 = vmatmul.f32.gmra.mxu0 %v215
  %v832 = vpop.f32.mrf.mxu0
  %v833 = vadd.f32 %v768, %v832
  %834 = vmatmul.f32.gmra.mxu0 %v223
  %v835 = vpop.f32.mrf.mxu0
  %v836 = vadd.f32 %v771, %v835
  %837 = vmatmul.f32.gmra.mxu0 %v231
  %v838 = vpop.f32.mrf.mxu0
  %v839 = vadd.f32 %v774, %v838
  %840 = vmatmul.f32.gmra.mxu0 %v239
  %v841 = vpop.f32.mrf.mxu0
  %v842 = vadd.f32 %v777, %v841
  %843 = vmatmul.f32.gmra.mxu0 %v247
  %v844 = vpop.f32.mrf.mxu0
  %v845 = vadd.f32 %v780, %v844
  %846 = vmatmul.f32.gmra.mxu0 %v255
  %v847 = vpop.f32.mrf.mxu0
  %v848 = vadd.f32 %v783, %v847
  %849 = vmatmul.f32.gmra.mxu0 %v263
  %v850 = vpop.f32.mrf.mxu0
  %v851 = vadd.f32 %v786, %v850
  %852 = vmatmul.f32.gmra.mxu0 %v271
  %v853 = vpop.f32.mrf.mxu0
  %v854 = vadd.f32 %v789, %v853
  %855 = vdwg.mxu0
  %856 = vmatpush.msra.mxu0 %v400
  %857 = vmatpush.msra.mxu0 %v399
  %858 = vmatpush.msra.mxu0 %v398
  %859 = vmatpush.msra.mxu0 %v397
  %860 = vmatpush.msra.mxu0 %v396
  %861 = vmatpush.msra.mxu0 %v395
  %862 = vmatpush.msra.mxu0 %v394
  %863 = vmatpush.msra.mxu0 %v393
  %864 = vmatpush.msra.mxu0 %v392
  %865 = vmatpush.msra.mxu0 %v391
  %866 = vmatpush.msra.mxu0 %v390
  %867 = vmatpush.msra.mxu0 %v389
  %868 = vmatpush.msra.mxu0 %v388
  %869 = vmatpush.msra.mxu0 %v387
  %870 = vmatpush.msra.mxu0 %v386
  %871 = vmatpush.msra.mxu0 %v385
  %872 = vmatmul.f32.gmra.mxu0 %v152
  %v873 = vpop.f32.mrf.mxu0
  %v874 = vadd.f32 %v809, %v873
  %875 = vmatmul.f32.gmra.mxu0 %v160
  %v876 = vpop.f32.mrf.mxu0
  %v877 = vadd.f32 %v812, %v876
  %878 = vmatmul.f32.gmra.mxu0 %v168
  %v879 = vpop.f32.mrf.mxu0
  %v880 = vadd.f32 %v815, %v879
  %881 = vmatmul.f32.gmra.mxu0 %v176
  %v882 = vpop.f32.mrf.mxu0
  %v883 = vadd.f32 %v818, %v882
  %884 = vmatmul.f32.gmra.mxu0 %v184
  %v885 = vpop.f32.mrf.mxu0
  %v886 = vadd.f32 %v821, %v885
  %887 = vmatmul.f32.gmra.mxu0 %v192
  %v888 = vpop.f32.mrf.mxu0
  %v889 = vadd.f32 %v824, %v888
  %890 = vmatmul.f32.gmra.mxu0 %v200
  %v891 = vpop.f32.mrf.mxu0
  %v892 = vadd.f32 %v827, %v891
  %893 = vmatmul.f32.gmra.mxu0 %v208
  %v894 = vpop.f32.mrf.mxu0
  %v895 = vadd.f32 %v830, %v894
  %896 = vmatmul.f32.gmra.mxu0 %v216
  %v897 = vpop.f32.mrf.mxu0
  %v898 = vadd.f32 %v833, %v897
  %899 = vmatmul.f32.gmra.mxu0 %v224
  %v900 = vpop.f32.mrf.mxu0
  %v901 = vadd.f32 %v836, %v900
  %902 = vmatmul.f32.gmra.mxu0 %v232
  %v903 = vpop.f32.mrf.mxu0
  %v904 = vadd.f32 %v839, %v903
  %905 = vmatmul.f32.gmra.mxu0 %v240
  %v906 = vpop.f32.mrf.mxu0
  %v907 = vadd.f32 %v842, %v906
  %908 = vmatmul.f32.gmra.mxu0 %v248
  %v909 = vpop.f32.mrf.mxu0
  %v910 = vadd.f32 %v845, %v909
  %911 = vmatmul.f32.gmra.mxu0 %v256
  %v912 = vpop.f32.mrf.mxu0
  %v913 = vadd.f32 %v848, %v912
  %914 = vmatmul.f32.gmra.mxu0 %v264
  %v915 = vpop.f32.mrf.mxu0
  %v916 = vadd.f32 %v851, %v915
  %917 = vmatmul.f32.gmra.mxu0 %v272
  %v918 = vpop.f32.mrf.mxu0
  %v919 = vadd.f32 %v854, %v918
  %920 = vdwg.mxu0
  %vm921 = vcmask 130048
  %v922 = vsel %vm921, %v874, 0.0
  %v923 = vsel %vm921, %v877, 0.0
  %v924 = vadd.f32 %v922, %v923
  %v925 = vsel %vm921, %v880, 0.0
  %v926 = vadd.f32 %v924, %v925
  %v927 = vsel %vm921, %v883, 0.0
  %v928 = vadd.f32 %v926, %v927
  %v929 = vsel %vm921, %v886, 0.0
  %v930 = vadd.f32 %v928, %v929
  %v931 = vsel %vm921, %v889, 0.0
  %v932 = vadd.f32 %v930, %v931
  %v933 = vsel %vm921, %v892, 0.0
  %v934 = vadd.f32 %v932, %v933
  %v935 = vsel %vm921, %v895, 0.0
  %v936 = vadd.f32 %v934, %v935
  %v937 = vsel %vm921, %v898, 0.0
  %v938 = vadd.f32 %v936, %v937
  %v939 = vsel %vm921, %v901, 0.0
  %v940 = vadd.f32 %v938, %v939
  %v941 = vsel %vm921, %v904, 0.0
  %v942 = vadd.f32 %v940, %v941
  %v943 = vsel %vm921, %v907, 0.0
  %v944 = vadd.f32 %v942, %v943
  %v945 = vsel %vm921, %v910, 0.0
  %v946 = vadd.f32 %v944, %v945
  %v947 = vsel %vm921, %v913, 0.0
  %v948 = vadd.f32 %v946, %v947
  %v949 = vsel %vm921, %v916, 0.0
  %v950 = vadd.f32 %v948, %v949
  %v951 = vsel %vm921, %v919, 0.0
  %v952 = vadd.f32 %v950, %v951
  %v953 = vrot.slane %v952, 4
  %v954 = vadd.f32 %v952, %v953
  %v955 = vrot.slane %v954, 2
  %v956 = vadd.f32 %v954, %v955
  %v957 = vrot.slane %v956, 1
  %v958 = vadd.f32 %v956, %v957
  %v959 = vrcp.pop 128.0
  %v960 = vmul.f32 128.0, %v959
  %v961 = vsub.f32 1.0, %v960
  %v962 = vmul.f32 %v959, %v961
  %v963 = vadd.f32 %v959, %v962
  %vm964 = vweird.f32 %v959
  %v965 = vsel %vm964, %v959, %v963
  %v966 = vmul.f32 %v958, %v965
  %v967 = vsub.f32 %v874, %v966
  %v968 = vsub.f32 %v877, %v966
  %v969 = vsub.f32 %v880, %v966
  %v970 = vsub.f32 %v883, %v966
  %v971 = vsub.f32 %v886, %v966
  %v972 = vsub.f32 %v889, %v966
  %v973 = vsub.f32 %v892, %v966
  %v974 = vsub.f32 %v895, %v966
  %v975 = vsub.f32 %v898, %v966
  %v976 = vsub.f32 %v901, %v966
  %v977 = vsub.f32 %v904, %v966
  %v978 = vsub.f32 %v907, %v966
  %v979 = vsub.f32 %v910, %v966
  %v980 = vsub.f32 %v913, %v966
  %v981 = vsub.f32 %v916, %v966
  %v982 = vsub.f32 %v919, %v966
  %v983 = vmul.f32 %v967, %v967
  %v984 = vmul.f32 %v968, %v968
  %v985 = vmul.f32 %v969, %v969
  %v986 = vmul.f32 %v970, %v970
  %v987 = vmul.f32 %v971, %v971
  %v988 = vmul.f32 %v972, %v972
  %v989 = vmul.f32 %v973, %v973
  %v990 = vmul.f32 %v974, %v974
  %v991 = vmul.f32 %v975, %v975
  %v992 = vmul.f32 %v976, %v976
  %v993 = vmul.f32 %v977, %v977
  %v994 = vmul.f32 %v978, %v978
  %v995 = vmul.f32 %v979, %v979
  %v996 = vmul.f32 %v980, %v980
  %v997 = vmul.f32 %v981, %v981
  %v998 = vmul.f32 %v982, %v982
  %v999 = vsel %vm921, %v983, 0.0
  %v1000 = vsel %vm921, %v984, 0.0
  %v1001 = vadd.f32 %v999, %v1000
  %v1002 = vsel %vm921, %v985, 0.0
  %v1003 = vadd.f32 %v1001, %v1002
  %v1004 = vsel %vm921, %v986, 0.0
  %v1005 = vadd.f32 %v1003, %v1004
  %v1006 = vsel %vm921, %v987, 0.0
  %v1007 = vadd.f32 %v1005, %v1006
  %v1008 = vsel %vm921, %v988, 0.0
  %v1009 = vadd.f32 %v1007, %v1008
  %v1010 = vsel %vm921, %v989, 0.0
  %v1011 = vadd.f32 %v1009, %v1010
  %v1012 = vsel %vm921, %v990, 0.0
  %v1013 = vadd.f32 %v1011, %v1012
  %v1014 = vsel %vm921, %v991, 0.0
  %v1015 = vadd.f32 %v1013, %v1014
  %v1016 = vsel %vm921, %v992, 0.0
  %v1017 = vadd.f32 %v1015, %v1016
  %v1018 = vsel %vm921, %v993, 0.0
  %v1019 = vadd.f32 %v1017, %v1018
  %v1020 = vsel %vm921, %v994, 0.0
  %v1021 = vadd.f32 %v1019, %v1020
  %v1022 = vsel %vm921, %v995, 0.0
  %v1023 = vadd.f32 %v1021, %v1022
  %v1024 = vsel %vm921, %v996, 0.0
  %v1025 = vadd.f32 %v1023, %v1024
  %v1026 = vsel %vm921, %v997, 0.0
  %v1027 = vadd.f32 %v1025, %v1026
  %v1028 = vsel %vm921, %v998, 0.0
  %v1029 = vadd.f32 %v1027, %v1028
  %v1030 = vrot.slane %v1029, 4
  %v1031 = vadd.f32 %v1029, %v1030
  %v1032 = vrot.slane %v1031, 2
  %v1033 = vadd.f32 %v1031, %v1032
  %v1034 = vrot.slane %v1033, 1
  %v1035 = vadd.f32 %v1033, %v1034
  %v1036 = vmul.f32 %v1035, %v965
  %v1037 = vadd.f32 %v1036, 1e-05
  %v1038 = vrsqrt.pop %v1037
  %v1039 = vmul.f32 %v1038, %v1037
  %v1040 = vmul.f32 %v1039, %v1038
  %v1041 = vmul.f32 0.5, %v1040
  %v1042 = vsub.f32 1.5, %v1041
  %v1043 = vmul.f32 %v1038, %v1042
  %vm1044 = vweird.f32 %v1037
  %vm1045 = vweird.f32 %v1038
  %vm1046 = vmor %vm1044, %vm1045
  %v1047 = vsel %vm1046, %v1038, %v1043
  %v1048 = vld [vmem:[%s2] sm:$0x1]
  %v1049 = vmul.f32 %v1047, %v1048
  %v1050 = vperm.slane %v1049, 0
  %v1051 = vmul.f32 %v967, %v1050
  %v1052 = vmul.f32 %v968, %v1050
  %v1053 = vmul.f32 %v969, %v1050
  %v1054 = vmul.f32 %v970, %v1050
  %v1055 = vmul.f32 %v971, %v1050
  %v1056 = vmul.f32 %v972, %v1050
  %v1057 = vmul.f32 %v973, %v1050
  %v1058 = vmul.f32 %v974, %v1050
  %v1059 = vmul.f32 %v975, %v1050
  %v1060 = vmul.f32 %v976, %v1050
  %v1061 = vmul.f32 %v977, %v1050
  %v1062 = vmul.f32 %v978, %v1050
  %v1063 = vmul.f32 %v979, %v1050
  %v1064 = vmul.f32 %v980, %v1050
  %v1065 = vmul.f32 %v981, %v1050
  %v1066 = vmul.f32 %v982, %v1050
  %v1067 = vld [vmem:[%s3] sm:$0x1]
  %v1069 = vperm.slane %v1067, 0
  %v1071 = vadd.f32 %v1051, %v1069
  %v1072 = vadd.f32 %v1052, %v1069
  %v1073 = vadd.f32 %v1053, %v1069
  %v1074 = vadd.f32 %v1054, %v1069
  %v1075 = vadd.f32 %v1055, %v1069
  %v1076 = vadd.f32 %v1056, %v1069
  %v1077 = vadd.f32 %v1057, %v1069
  %v1078 = vadd.f32 %v1058, %v1069
  %v1079 = vadd.f32 %v1059, %v1069
  %v1080 = vadd.f32 %v1060, %v1069
  %v1081 = vadd.f32 %v1061, %v1069
  %v1082 = vadd.f32 %v1062, %v1069
  %v1083 = vadd.f32 %v1063, %v1069
  %v1084 = vadd.f32 %v1064, %v1069
  %v1085 = vadd.f32 %v1065, %v1069
  %v1086 = vadd.f32 %v1066, %v1069
  %1087 = vst.msk [vmem:[%s4] sm:$0xff] %vm921, %v1071
  %1088 = vst.msk [vmem:[%s4 + $0x8] sm:$0xff] %vm921, %v1072
  %1089 = vst.msk [vmem:[%s4 + $0x10] sm:$0xff] %vm921, %v1073
  %1090 = vst.msk [vmem:[%s4 + $0x18] sm:$0xff] %vm921, %v1074
  %1091 = vst.msk [vmem:[%s4 + $0x20] sm:$0xff] %vm921, %v1075
  %1092 = vst.msk [vmem:[%s4 + $0x28] sm:$0xff] %vm921, %v1076
  %1093 = vst.msk [vmem:[%s4 + $0x30] sm:$0xff] %vm921, %v1077
  %1094 = vst.msk [vmem:[%s4 + $0x38] sm:$0xff] %vm921, %v1078
  %1095 = vst.msk [vmem:[%s4 + $0x40] sm:$0xff] %vm921, %v1079
  %1096 = vst.msk [vmem:[%s4 + $0x48] sm:$0xff] %vm921, %v1080
  %1097 = vst.msk [vmem:[%s4 + $0x50] sm:$0xff] %vm921, %v1081
  %1098 = vst.msk [vmem:[%s4 + $0x58] sm:$0xff] %vm921, %v1082
  %1099 = vst.msk [vmem:[%s4 + $0x60] sm:$0xff] %vm921, %v1083
  %1100 = vst.msk [vmem:[%s4 + $0x68] sm:$0xff] %vm921, %v1084
  %1101 = vst.msk [vmem:[%s4 + $0x70] sm:$0xff] %vm921, %v1085
  %1102 = vst.msk [vmem:[%s4 + $0x78] sm:$0xff] %vm921, %v1086
  // Predicated region
  $region18: #{unet_forward.17} parent=0 // pred_check
    _
  $region19: #{unet_forward.17} parent=0 // pred_check_branch
    %1104 = sbr.rel (0) target = $region21
  $region20: #{unet_forward.17} parent=0 // pred_region
    _
  $region21: #{unet_forward.17} parent=0 // pred_fallthru
    _
  // Predicated region
  $region22: #{unet_forward.17} parent=0 // pred_check
    _
  $region23: #{unet_forward.17} parent=0 // pred_check_branch
    %1106 = sbr.rel (0) target = $region25
  $region24: #{unet_forward.17} parent=0 // pred_region
    _
  $region25: #{unet_forward.17} parent=0 // pred_fallthru
    _

// kernel: unet_forward.18
$region0: #{unet_forward.18}
  #allocation0 [shape = 'u32[]', space=smem, size = 0x4, offset = 0x4, fixed_abs, tag = 'smem constant byte address 0x4 - core index']
  #allocation1 [shape = 'u32[72,128]{1,0:T(1,128)}', space=vmem, size = 0x9000, scoped, tag = 'internal scratch']
  %s0 = inlined_call_operand.vmem [shape: f32[512,512], index: 0, kind: input, shape index: {}]
  %s1 = inlined_call_operand.vmem [shape: f32[512,8], index: 1, kind: input, shape index: {}]
  %s2 = inlined_call_operand.vmem [shape: f32[1,8], index: 2, kind: input, shape index: {}]
  %s3 = inlined_call_operand.vmem [shape: f32[1,8], index: 3, kind: input, shape index: {}]
  %s4 = inlined_call_operand.vmem [shape: f32[512,8], index: 4, kind: output, shape index: {}]
  %s5 = sld [smem:[#allocation0]]
  $region26: #{unet_forward.18} parent=0
    _
  %s7 = ssub.s32 1, %s5
  %s8 = scalar_select 0, %s7, %s5
  // Predicated region
  $region2: #{unet_forward.18} parent=0 // pred_check
    _
  $region3: #{unet_forward.18} parent=0 // pred_check_branch
    %10 = sbr.rel (0) target = $region5
  $region4: #{unet_forward.18} parent=0 // pred_region
    _
  $region5: #{unet_forward.18} parent=0 // pred_fallthru
    _
  // Predicated region
  $region6: #{unet_forward.18} parent=0 // pred_check
    _
  $region7: #{unet_forward.18} parent=0 // pred_check_branch
    %12 = sbr.rel (0) target = $region9
  $region8: #{unet_forward.18} parent=0 // pred_region
    _
  $region9: #{unet_forward.18} parent=0 // pred_fallthru
    _
  // Predicated region
  $region10: #{unet_forward.18} parent=0 // pred_check
    _
  $region11: #{unet_forward.18} parent=0 // pred_check_branch
    %14 = sbr.rel (0) target = $region13
  $region12: #{unet_forward.18} parent=0 // pred_region
    _
  $region13: #{unet_forward.18} parent=0 // pred_fallthru
    _
  // Predicated region
  $region14: #{unet_forward.18} parent=0 // pred_check
    _
  $region15: #{unet_forward.18} parent=0 // pred_check_branch
    %16 = sbr.rel (0) target = $region17
  $region16: #{unet_forward.18} parent=0 // pred_region
    _
  $region17: #{unet_forward.18} parent=0 // pred_fallthru
    _
  %v17 = vld [vmem:[%s0] sm:$0xff]
  %v18 = vld [vmem:[%s0 + $0x8] sm:$0xff]
  %v19 = vld [vmem:[%s0 + $0x10] sm:$0xff]
  %v20 = vld [vmem:[%s0 + $0x18] sm:$0xff]
  %v21 = vld [vmem:[%s0 + $0x20] sm:$0xff]
  %v22 = vld [vmem:[%s0 + $0x28] sm:$0xff]
  %v23 = vld [vmem:[%s0 + $0x30] sm:$0xff]
  %v24 = vld [vmem:[%s0 + $0x38] sm:$0xff]
  %v25 = vld [vmem:[%s0 + $0x40] sm:$0xff]
  %v26 = vld [vmem:[%s0 + $0x48] sm:$0xff]
  %v27 = vld [vmem:[%s0 + $0x50] sm:$0xff]
  %v28 = vld [vmem:[%s0 + $0x58] sm:$0xff]
  %v29 = vld [vmem:[%s0 + $0x60] sm:$0xff]
  %v30 = vld [vmem:[%s0 + $0x68] sm:$0xff]
  %v31 = vld [vmem:[%s0 + $0x70] sm:$0xff]
  %v32 = vld [vmem:[%s0 + $0x78] sm:$0xff]
  %v33 = vld [vmem:[%s0 + $0x80] sm:$0xff]
  %v34 = vld [vmem:[%s0 + $0x88] sm:$0xff]
  %v35 = vld [vmem:[%s0 + $0x90] sm:$0xff]
  %v36 = vld [vmem:[%s0 + $0x98] sm:$0xff]
  %v37 = vld [vmem:[%s0 + $0xa0] sm:$0xff]
  %v38 = vld [vmem:[%s0 + $0xa8] sm:$0xff]
  %v39 = vld [vmem:[%s0 + $0xb0] sm:$0xff]
  %v40 = vld [vmem:[%s0 + $0xb8] sm:$0xff]
  %v41 = vld [vmem:[%s0 + $0xc0] sm:$0xff]
  %v42 = vld [vmem:[%s0 + $0xc8] sm:$0xff]
  %v43 = vld [vmem:[%s0 + $0xd0] sm:$0xff]
  %v44 = vld [vmem:[%s0 + $0xd8] sm:$0xff]
  %v45 = vld [vmem:[%s0 + $0xe0] sm:$0xff]
  %v46 = vld [vmem:[%s0 + $0xe8] sm:$0xff]
  %v47 = vld [vmem:[%s0 + $0xf0] sm:$0xff]
  %v48 = vld [vmem:[%s0 + $0xf8] sm:$0xff]
  %v49 = vld [vmem:[%s0 + $0x100] sm:$0xff]
  %v50 = vld [vmem:[%s0 + $0x108] sm:$0xff]
  %v51 = vld [vmem:[%s0 + $0x110] sm:$0xff]
  %v52 = vld [vmem:[%s0 + $0x118] sm:$0xff]
  %v53 = vld [vmem:[%s0 + $0x120] sm:$0xff]
  %v54 = vld [vmem:[%s0 + $0x128] sm:$0xff]
  %v55 = vld [vmem:[%s0 + $0x130] sm:$0xff]
  %v56 = vld [vmem:[%s0 + $0x138] sm:$0xff]
  %v57 = vld [vmem:[%s0 + $0x140] sm:$0xff]
  %v58 = vld [vmem:[%s0 + $0x148] sm:$0xff]
  %v59 = vld [vmem:[%s0 + $0x150] sm:$0xff]
  %v60 = vld [vmem:[%s0 + $0x158] sm:$0xff]
  %v61 = vld [vmem:[%s0 + $0x160] sm:$0xff]
  %v62 = vld [vmem:[%s0 + $0x168] sm:$0xff]
  %v63 = vld [vmem:[%s0 + $0x170] sm:$0xff]
  %v64 = vld [vmem:[%s0 + $0x178] sm:$0xff]
  %v65 = vld [vmem:[%s0 + $0x180] sm:$0xff]
  %v66 = vld [vmem:[%s0 + $0x188] sm:$0xff]
  %v67 = vld [vmem:[%s0 + $0x190] sm:$0xff]
  %v68 = vld [vmem:[%s0 + $0x198] sm:$0xff]
  %v69 = vld [vmem:[%s0 + $0x1a0] sm:$0xff]
  %v70 = vld [vmem:[%s0 + $0x1a8] sm:$0xff]
  %v71 = vld [vmem:[%s0 + $0x1b0] sm:$0xff]
  %v72 = vld [vmem:[%s0 + $0x1b8] sm:$0xff]
  %v73 = vld [vmem:[%s0 + $0x1c0] sm:$0xff]
  %v74 = vld [vmem:[%s0 + $0x1c8] sm:$0xff]
  %v75 = vld [vmem:[%s0 + $0x1d0] sm:$0xff]
  %v76 = vld [vmem:[%s0 + $0x1d8] sm:$0xff]
  %v77 = vld [vmem:[%s0 + $0x1e0] sm:$0xff]
  %v78 = vld [vmem:[%s0 + $0x1e8] sm:$0xff]
  %v79 = vld [vmem:[%s0 + $0x1f0] sm:$0xff]
  %v80 = vld [vmem:[%s0 + $0x1f8] sm:$0xff]
  %v81 = vld [vmem:[%s0 + $0x200] sm:$0xff]
  %v82 = vld [vmem:[%s0 + $0x208] sm:$0xff]
  %v83 = vld [vmem:[%s0 + $0x210] sm:$0xff]
  %v84 = vld [vmem:[%s0 + $0x218] sm:$0xff]
  %v85 = vld [vmem:[%s0 + $0x220] sm:$0xff]
  %v86 = vld [vmem:[%s0 + $0x228] sm:$0xff]
  %v87 = vld [vmem:[%s0 + $0x230] sm:$0xff]
  %v88 = vld [vmem:[%s0 + $0x238] sm:$0xff]
  %v89 = vld [vmem:[%s0 + $0x240] sm:$0xff]
  %v90 = vld [vmem:[%s0 + $0x248] sm:$0xff]
  %v91 = vld [vmem:[%s0 + $0x250] sm:$0xff]
  %v92 = vld [vmem:[%s0 + $0x258] sm:$0xff]
  %v93 = vld [vmem:[%s0 + $0x260] sm:$0xff]
  %v94 = vld [vmem:[%s0 + $0x268] sm:$0xff]
  %v95 = vld [vmem:[%s0 + $0x270] sm:$0xff]
  %v96 = vld [vmem:[%s0 + $0x278] sm:$0xff]
  %v97 = vld [vmem:[%s0 + $0x280] sm:$0xff]
  %v98 = vld [vmem:[%s0 + $0x288] sm:$0xff]
  %v99 = vld [vmem:[%s0 + $0x290] sm:$0xff]
  %v100 = vld [vmem:[%s0 + $0x298] sm:$0xff]
  %v101 = vld [vmem:[%s0 + $0x2a0] sm:$0xff]
  %v102 = vld [vmem:[%s0 + $0x2a8] sm:$0xff]
  %v103 = vld [vmem:[%s0 + $0x2b0] sm:$0xff]
  %v104 = vld [vmem:[%s0 + $0x2b8] sm:$0xff]
  %v105 = vld [vmem:[%s0 + $0x2c0] sm:$0xff]
  %v106 = vld [vmem:[%s0 + $0x2c8] sm:$0xff]
  %v107 = vld [vmem:[%s0 + $0x2d0] sm:$0xff]
  %v108 = vld [vmem:[%s0 + $0x2d8] sm:$0xff]
  %v109 = vld [vmem:[%s0 + $0x2e0] sm:$0xff]
  %v110 = vld [vmem:[%s0 + $0x2e8] sm:$0xff]
  %v111 = vld [vmem:[%s0 + $0x2f0] sm:$0xff]
  %v112 = vld [vmem:[%s0 + $0x2f8] sm:$0xff]
  %v113 = vld [vmem:[%s0 + $0x300] sm:$0xff]
  %v114 = vld [vmem:[%s0 + $0x308] sm:$0xff]
  %v115 = vld [vmem:[%s0 + $0x310] sm:$0xff]
  %v116 = vld [vmem:[%s0 + $0x318] sm:$0xff]
  %v117 = vld [vmem:[%s0 + $0x320] sm:$0xff]
  %v118 = vld [vmem:[%s0 + $0x328] sm:$0xff]
  %v119 = vld [vmem:[%s0 + $0x330] sm:$0xff]
  %v120 = vld [vmem:[%s0 + $0x338] sm:$0xff]
  %v121 = vld [vmem:[%s0 + $0x340] sm:$0xff]
  %v122 = vld [vmem:[%s0 + $0x348] sm:$0xff]
  %v123 = vld [vmem:[%s0 + $0x350] sm:$0xff]
  %v124 = vld [vmem:[%s0 + $0x358] sm:$0xff]
  %v125 = vld [vmem:[%s0 + $0x360] sm:$0xff]
  %v126 = vld [vmem:[%s0 + $0x368] sm:$0xff]
  %v127 = vld [vmem:[%s0 + $0x370] sm:$0xff]
  %v128 = vld [vmem:[%s0 + $0x378] sm:$0xff]
  %v129 = vld [vmem:[%s0 + $0x380] sm:$0xff]
  %v130 = vld [vmem:[%s0 + $0x388] sm:$0xff]
  %v131 = vld [vmem:[%s0 + $0x390] sm:$0xff]
  %v132 = vld [vmem:[%s0 + $0x398] sm:$0xff]
  %v133 = vld [vmem:[%s0 + $0x3a0] sm:$0xff]
  %v134 = vld [vmem:[%s0 + $0x3a8] sm:$0xff]
  %v135 = vld [vmem:[%s0 + $0x3b0] sm:$0xff]
  %v136 = vld [vmem:[%s0 + $0x3b8] sm:$0xff]
  %v137 = vld [vmem:[%s0 + $0x3c0] sm:$0xff]
  %v138 = vld [vmem:[%s0 + $0x3c8] sm:$0xff]
  %v139 = vld [vmem:[%s0 + $0x3d0] sm:$0xff]
  %v140 = vld [vmem:[%s0 + $0x3d8] sm:$0xff]
  %v141 = vld [vmem:[%s0 + $0x3e0] sm:$0xff]
  %v142 = vld [vmem:[%s0 + $0x3e8] sm:$0xff]
  %v143 = vld [vmem:[%s0 + $0x3f0] sm:$0xff]
  %v144 = vld [vmem:[%s0 + $0x3f8] sm:$0xff]
  %v145 = vld [vmem:[%s0 + $0x400] sm:$0xff]
  %v146 = vld [vmem:[%s0 + $0x408] sm:$0xff]
  %v147 = vld [vmem:[%s0 + $0x410] sm:$0xff]
  %v148 = vld [vmem:[%s0 + $0x418] sm:$0xff]
  %v149 = vld [vmem:[%s0 + $0x420] sm:$0xff]
  %v150 = vld [vmem:[%s0 + $0x428] sm:$0xff]
  %v151 = vld [vmem:[%s0 + $0x430] sm:$0xff]
  %v152 = vld [vmem:[%s0 + $0x438] sm:$0xff]
  %v153 = vld [vmem:[%s0 + $0x440] sm:$0xff]
  %v154 = vld [vmem:[%s0 + $0x448] sm:$0xff]
  %v155 = vld [vmem:[%s0 + $0x450] sm:$0xff]
  %v156 = vld [vmem:[%s0 + $0x458] sm:$0xff]
  %v157 = vld [vmem:[%s0 + $0x460] sm:$0xff]
  %v158 = vld [vmem:[%s0 + $0x468] sm:$0xff]
  %v159 = vld [vmem:[%s0 + $0x470] sm:$0xff]
  %v160 = vld [vmem:[%s0 + $0x478] sm:$0xff]
  %v161 = vld [vmem:[%s0 + $0x480] sm:$0xff]
  %v162 = vld [vmem:[%s0 + $0x488] sm:$0xff]
  %v163 = vld [vmem:[%s0 + $0x490] sm:$0xff]
  %v164 = vld [vmem:[%s0 + $0x498] sm:$0xff]
  %v165 = vld [vmem:[%s0 + $0x4a0] sm:$0xff]
  %v166 = vld [vmem:[%s0 + $0x4a8] sm:$0xff]
  %v167 = vld [vmem:[%s0 + $0x4b0] sm:$0xff]
  %v168 = vld [vmem:[%s0 + $0x4b8] sm:$0xff]
  %v169 = vld [vmem:[%s0 + $0x4c0] sm:$0xff]
  %v170 = vld [vmem:[%s0 + $0x4c8] sm:$0xff]
  %v171 = vld [vmem:[%s0 + $0x4d0] sm:$0xff]
  %v172 = vld [vmem:[%s0 + $0x4d8] sm:$0xff]
  %v173 = vld [vmem:[%s0 + $0x4e0] sm:$0xff]
  %v174 = vld [vmem:[%s0 + $0x4e8] sm:$0xff]
  %v175 = vld [vmem:[%s0 + $0x4f0] sm:$0xff]
  %v176 = vld [vmem:[%s0 + $0x4f8] sm:$0xff]
  %v177 = vld [vmem:[%s0 + $0x500] sm:$0xff]
  %v178 = vld [vmem:[%s0 + $0x508] sm:$0xff]
  %v179 = vld [vmem:[%s0 + $0x510] sm:$0xff]
  %v180 = vld [vmem:[%s0 + $0x518] sm:$0xff]
  %v181 = vld [vmem:[%s0 + $0x520] sm:$0xff]
  %v182 = vld [vmem:[%s0 + $0x528] sm:$0xff]
  %v183 = vld [vmem:[%s0 + $0x530] sm:$0xff]
  %v184 = vld [vmem:[%s0 + $0x538] sm:$0xff]
  %v185 = vld [vmem:[%s0 + $0x540] sm:$0xff]
  %v186 = vld [vmem:[%s0 + $0x548] sm:$0xff]
  %v187 = vld [vmem:[%s0 + $0x550] sm:$0xff]
  %v188 = vld [vmem:[%s0 + $0x558] sm:$0xff]
  %v189 = vld [vmem:[%s0 + $0x560] sm:$0xff]
  %v190 = vld [vmem:[%s0 + $0x568] sm:$0xff]
  %v191 = vld [vmem:[%s0 + $0x570] sm:$0xff]
  %v192 = vld [vmem:[%s0 + $0x578] sm:$0xff]
  %v193 = vld [vmem:[%s0 + $0x580] sm:$0xff]
  %v194 = vld [vmem:[%s0 + $0x588] sm:$0xff]
  %v195 = vld [vmem:[%s0 + $0x590] sm:$0xff]
  %v196 = vld [vmem:[%s0 + $0x598] sm:$0xff]
  %v197 = vld [vmem:[%s0 + $0x5a0] sm:$0xff]
  %v198 = vld [vmem:[%s0 + $0x5a8] sm:$0xff]
  %v199 = vld [vmem:[%s0 + $0x5b0] sm:$0xff]
  %v200 = vld [vmem:[%s0 + $0x5b8] sm:$0xff]
  %v201 = vld [vmem:[%s0 + $0x5c0] sm:$0xff]
  %v202 = vld [vmem:[%s0 + $0x5c8] sm:$0xff]
  %v203 = vld [vmem:[%s0 + $0x5d0] sm:$0xff]
  %v204 = vld [vmem:[%s0 + $0x5d8] sm:$0xff]
  %v205 = vld [vmem:[%s0 + $0x5e0] sm:$0xff]
  %v206 = vld [vmem:[%s0 + $0x5e8] sm:$0xff]
  %v207 = vld [vmem:[%s0 + $0x5f0] sm:$0xff]
  %v208 = vld [vmem:[%s0 + $0x5f8] sm:$0xff]
  %v209 = vld [vmem:[%s0 + $0x600] sm:$0xff]
  %v210 = vld [vmem:[%s0 + $0x608] sm:$0xff]
  %v211 = vld [vmem:[%s0 + $0x610] sm:$0xff]
  %v212 = vld [vmem:[%s0 + $0x618] sm:$0xff]
  %v213 = vld [vmem:[%s0 + $0x620] sm:$0xff]
  %v214 = vld [vmem:[%s0 + $0x628] sm:$0xff]
  %v215 = vld [vmem:[%s0 + $0x630] sm:$0xff]
  %v216 = vld [vmem:[%s0 + $0x638] sm:$0xff]
  %v217 = vld [vmem:[%s0 + $0x640] sm:$0xff]
  %v218 = vld [vmem:[%s0 + $0x648] sm:$0xff]
  %v219 = vld [vmem:[%s0 + $0x650] sm:$0xff]
  %v220 = vld [vmem:[%s0 + $0x658] sm:$0xff]
  %v221 = vld [vmem:[%s0 + $0x660] sm:$0xff]
  %v222 = vld [vmem:[%s0 + $0x668] sm:$0xff]
  %v223 = vld [vmem:[%s0 + $0x670] sm:$0xff]
  %v224 = vld [vmem:[%s0 + $0x678] sm:$0xff]
  %v225 = vld [vmem:[%s0 + $0x680] sm:$0xff]
  %v226 = vld [vmem:[%s0 + $0x688] sm:$0xff]
  %v227 = vld [vmem:[%s0 + $0x690] sm:$0xff]
  %v228 = vld [vmem:[%s0 + $0x698] sm:$0xff]
  %v229 = vld [vmem:[%s0 + $0x6a0] sm:$0xff]
  %v230 = vld [vmem:[%s0 + $0x6a8] sm:$0xff]
  %v231 = vld [vmem:[%s0 + $0x6b0] sm:$0xff]
  %v232 = vld [vmem:[%s0 + $0x6b8] sm:$0xff]
  %v233 = vld [vmem:[%s0 + $0x6c0] sm:$0xff]
  %v234 = vld [vmem:[%s0 + $0x6c8] sm:$0xff]
  %v235 = vld [vmem:[%s0 + $0x6d0] sm:$0xff]
  %v236 = vld [vmem:[%s0 + $0x6d8] sm:$0xff]
  %v237 = vld [vmem:[%s0 + $0x6e0] sm:$0xff]
  %v238 = vld [vmem:[%s0 + $0x6e8] sm:$0xff]
  %v239 = vld [vmem:[%s0 + $0x6f0] sm:$0xff]
  %v240 = vld [vmem:[%s0 + $0x6f8] sm:$0xff]
  %v241 = vld [vmem:[%s0 + $0x700] sm:$0xff]
  %v242 = vld [vmem:[%s0 + $0x708] sm:$0xff]
  %v243 = vld [vmem:[%s0 + $0x710] sm:$0xff]
  %v244 = vld [vmem:[%s0 + $0x718] sm:$0xff]
  %v245 = vld [vmem:[%s0 + $0x720] sm:$0xff]
  %v246 = vld [vmem:[%s0 + $0x728] sm:$0xff]
  %v247 = vld [vmem:[%s0 + $0x730] sm:$0xff]
  %v248 = vld [vmem:[%s0 + $0x738] sm:$0xff]
  %v249 = vld [vmem:[%s0 + $0x740] sm:$0xff]
  %v250 = vld [vmem:[%s0 + $0x748] sm:$0xff]
  %v251 = vld [vmem:[%s0 + $0x750] sm:$0xff]
  %v252 = vld [vmem:[%s0 + $0x758] sm:$0xff]
  %v253 = vld [vmem:[%s0 + $0x760] sm:$0xff]
  %v254 = vld [vmem:[%s0 + $0x768] sm:$0xff]
  %v255 = vld [vmem:[%s0 + $0x770] sm:$0xff]
  %v256 = vld [vmem:[%s0 + $0x778] sm:$0xff]
  %v257 = vld [vmem:[%s0 + $0x780] sm:$0xff]
  %v258 = vld [vmem:[%s0 + $0x788] sm:$0xff]
  %v259 = vld [vmem:[%s0 + $0x790] sm:$0xff]
  %v260 = vld [vmem:[%s0 + $0x798] sm:$0xff]
  %v261 = vld [vmem:[%s0 + $0x7a0] sm:$0xff]
  %v262 = vld [vmem:[%s0 + $0x7a8] sm:$0xff]
  %v263 = vld [vmem:[%s0 + $0x7b0] sm:$0xff]
  %v264 = vld [vmem:[%s0 + $0x7b8] sm:$0xff]
  %v265 = vld [vmem:[%s0 + $0x7c0] sm:$0xff]
  %v266 = vld [vmem:[%s0 + $0x7c8] sm:$0xff]
  %v267 = vld [vmem:[%s0 + $0x7d0] sm:$0xff]
  %v268 = vld [vmem:[%s0 + $0x7d8] sm:$0xff]
  %v269 = vld [vmem:[%s0 + $0x7e0] sm:$0xff]
  %v270 = vld [vmem:[%s0 + $0x7e8] sm:$0xff]
  %v271 = vld [vmem:[%s0 + $0x7f0] sm:$0xff]
  %v272 = vld [vmem:[%s0 + $0x7f8] sm:$0xff]
  %v273 = vmax.f32 %v17, 0.0
  %v274 = vmax.f32 %v18, 0.0
  %v275 = vmax.f32 %v19, 0.0
  %v276 = vmax.f32 %v20, 0.0
  %v277 = vmax.f32 %v21, 0.0
  %v278 = vmax.f32 %v22, 0.0
  %v279 = vmax.f32 %v23, 0.0
  %v280 = vmax.f32 %v24, 0.0
  %v281 = vmax.f32 %v25, 0.0
  %v282 = vmax.f32 %v26, 0.0
  %v283 = vmax.f32 %v27, 0.0
  %v284 = vmax.f32 %v28, 0.0
  %v285 = vmax.f32 %v29, 0.0
  %v286 = vmax.f32 %v30, 0.0
  %v287 = vmax.f32 %v31, 0.0
  %v288 = vmax.f32 %v32, 0.0
  %v289 = vmax.f32 %v33, 0.0
  %v290 = vmax.f32 %v34, 0.0
  %v291 = vmax.f32 %v35, 0.0
  %v292 = vmax.f32 %v36, 0.0
  %v293 = vmax.f32 %v37, 0.0
  %v294 = vmax.f32 %v38, 0.0
  %v295 = vmax.f32 %v39, 0.0
  %v296 = vmax.f32 %v40, 0.0
  %v297 = vmax.f32 %v41, 0.0
  %v298 = vmax.f32 %v42, 0.0
  %v299 = vmax.f32 %v43, 0.0
  %v300 = vmax.f32 %v44, 0.0
  %v301 = vmax.f32 %v45, 0.0
  %v302 = vmax.f32 %v46, 0.0
  %v303 = vmax.f32 %v47, 0.0
  %v304 = vmax.f32 %v48, 0.0
  %v305 = vmax.f32 %v49, 0.0
  %v306 = vmax.f32 %v50, 0.0
  %v307 = vmax.f32 %v51, 0.0
  %v308 = vmax.f32 %v52, 0.0
  %v309 = vmax.f32 %v53, 0.0
  %v310 = vmax.f32 %v54, 0.0
  %v311 = vmax.f32 %v55, 0.0
  %v312 = vmax.f32 %v56, 0.0
  %v313 = vmax.f32 %v57, 0.0
  %v314 = vmax.f32 %v58, 0.0
  %v315 = vmax.f32 %v59, 0.0
  %v316 = vmax.f32 %v60, 0.0
  %v317 = vmax.f32 %v61, 0.0
  %v318 = vmax.f32 %v62, 0.0
  %v319 = vmax.f32 %v63, 0.0
  %v320 = vmax.f32 %v64, 0.0
  %v321 = vmax.f32 %v65, 0.0
  %v322 = vmax.f32 %v66, 0.0
  %v323 = vmax.f32 %v67, 0.0
  %v324 = vmax.f32 %v68, 0.0
  %v325 = vmax.f32 %v69, 0.0
  %v326 = vmax.f32 %v70, 0.0
  %v327 = vmax.f32 %v71, 0.0
  %v328 = vmax.f32 %v72, 0.0
  %v329 = vmax.f32 %v73, 0.0
  %v330 = vmax.f32 %v74, 0.0
  %v331 = vmax.f32 %v75, 0.0
  %v332 = vmax.f32 %v76, 0.0
  %v333 = vmax.f32 %v77, 0.0
  %v334 = vmax.f32 %v78, 0.0
  %v335 = vmax.f32 %v79, 0.0
  %v336 = vmax.f32 %v80, 0.0
  %v337 = vmax.f32 %v81, 0.0
  %v338 = vmax.f32 %v82, 0.0
  %v339 = vmax.f32 %v83, 0.0
  %v340 = vmax.f32 %v84, 0.0
  %v341 = vmax.f32 %v85, 0.0
  %v342 = vmax.f32 %v86, 0.0
  %v343 = vmax.f32 %v87, 0.0
  %v344 = vmax.f32 %v88, 0.0
  %v345 = vmax.f32 %v89, 0.0
  %v346 = vmax.f32 %v90, 0.0
  %v347 = vmax.f32 %v91, 0.0
  %v348 = vmax.f32 %v92, 0.0
  %v349 = vmax.f32 %v93, 0.0
  %v350 = vmax.f32 %v94, 0.0
  %v351 = vmax.f32 %v95, 0.0
  %v352 = vmax.f32 %v96, 0.0
  %v353 = vmax.f32 %v97, 0.0
  %v354 = vmax.f32 %v98, 0.0
  %v355 = vmax.f32 %v99, 0.0
  %v356 = vmax.f32 %v100, 0.0
  %v357 = vmax.f32 %v101, 0.0
  %v358 = vmax.f32 %v102, 0.0
  %v359 = vmax.f32 %v103, 0.0
  %v360 = vmax.f32 %v104, 0.0
  %v361 = vmax.f32 %v105, 0.0
  %v362 = vmax.f32 %v106, 0.0
  %v363 = vmax.f32 %v107, 0.0
  %v364 = vmax.f32 %v108, 0.0
  %v365 = vmax.f32 %v109, 0.0
  %v366 = vmax.f32 %v110, 0.0
  %v367 = vmax.f32 %v111, 0.0
  %v368 = vmax.f32 %v112, 0.0
  %v369 = vmax.f32 %v113, 0.0
  %v370 = vmax.f32 %v114, 0.0
  %v371 = vmax.f32 %v115, 0.0
  %v372 = vmax.f32 %v116, 0.0
  %v373 = vmax.f32 %v117, 0.0
  %v374 = vmax.f32 %v118, 0.0
  %v375 = vmax.f32 %v119, 0.0
  %v376 = vmax.f32 %v120, 0.0
  %v377 = vmax.f32 %v121, 0.0
  %v378 = vmax.f32 %v122, 0.0
  %v379 = vmax.f32 %v123, 0.0
  %v380 = vmax.f32 %v124, 0.0
  %v381 = vmax.f32 %v125, 0.0
  %v382 = vmax.f32 %v126, 0.0
  %v383 = vmax.f32 %v127, 0.0
  %v384 = vmax.f32 %v128, 0.0
  %v385 = vmax.f32 %v129, 0.0
  %v386 = vmax.f32 %v130, 0.0
  %v387 = vmax.f32 %v131, 0.0
  %v388 = vmax.f32 %v132, 0.0
  %v389 = vmax.f32 %v133, 0.0
  %v390 = vmax.f32 %v134, 0.0
  %v391 = vmax.f32 %v135, 0.0
  %v392 = vmax.f32 %v136, 0.0
  %v393 = vmax.f32 %v137, 0.0
  %v394 = vmax.f32 %v138, 0.0
  %v395 = vmax.f32 %v139, 0.0
  %v396 = vmax.f32 %v140, 0.0
  %v397 = vmax.f32 %v141, 0.0
  %v398 = vmax.f32 %v142, 0.0
  %v399 = vmax.f32 %v143, 0.0
  %v400 = vmax.f32 %v144, 0.0
  %v401 = vmax.f32 %v145, 0.0
  %v402 = vmax.f32 %v146, 0.0
  %v403 = vmax.f32 %v147, 0.0
  %v404 = vmax.f32 %v148, 0.0
  %v405 = vmax.f32 %v149, 0.0
  %v406 = vmax.f32 %v150, 0.0
  %v407 = vmax.f32 %v151, 0.0
  %v408 = vmax.f32 %v152, 0.0
  %v409 = vmax.f32 %v153, 0.0
  %v410 = vmax.f32 %v154, 0.0
  %v411 = vmax.f32 %v155, 0.0
  %v412 = vmax.f32 %v156, 0.0
  %v413 = vmax.f32 %v157, 0.0
  %v414 = vmax.f32 %v158, 0.0
  %v415 = vmax.f32 %v159, 0.0
  %v416 = vmax.f32 %v160, 0.0
  %v417 = vmax.f32 %v161, 0.0
  %v418 = vmax.f32 %v162, 0.0
  %v419 = vmax.f32 %v163, 0.0
  %v420 = vmax.f32 %v164, 0.0
  %v421 = vmax.f32 %v165, 0.0
  %v422 = vmax.f32 %v166, 0.0
  %v423 = vmax.f32 %v167, 0.0
  %v424 = vmax.f32 %v168, 0.0
  %v425 = vmax.f32 %v169, 0.0
  %v426 = vmax.f32 %v170, 0.0
  %v427 = vmax.f32 %v171, 0.0
  %v428 = vmax.f32 %v172, 0.0
  %v429 = vmax.f32 %v173, 0.0
  %v430 = vmax.f32 %v174, 0.0
  %v431 = vmax.f32 %v175, 0.0
  %v432 = vmax.f32 %v176, 0.0
  %v433 = vmax.f32 %v177, 0.0
  %v434 = vmax.f32 %v178, 0.0
  %v435 = vmax.f32 %v179, 0.0
  %v436 = vmax.f32 %v180, 0.0
  %v437 = vmax.f32 %v181, 0.0
  %v438 = vmax.f32 %v182, 0.0
  %v439 = vmax.f32 %v183, 0.0
  %v440 = vmax.f32 %v184, 0.0
  %v441 = vmax.f32 %v185, 0.0
  %v442 = vmax.f32 %v186, 0.0
  %v443 = vmax.f32 %v187, 0.0
  %v444 = vmax.f32 %v188, 0.0
  %v445 = vmax.f32 %v189, 0.0
  %v446 = vmax.f32 %v190, 0.0
  %v447 = vmax.f32 %v191, 0.0
  %v448 = vmax.f32 %v192, 0.0
  %v449 = vmax.f32 %v193, 0.0
  %v450 = vmax.f32 %v194, 0.0
  %v451 = vmax.f32 %v195, 0.0
  %v452 = vmax.f32 %v196, 0.0
  %v453 = vmax.f32 %v197, 0.0
  %v454 = vmax.f32 %v198, 0.0
  %v455 = vmax.f32 %v199, 0.0
  %v456 = vmax.f32 %v200, 0.0
  %v457 = vmax.f32 %v201, 0.0
  %v458 = vmax.f32 %v202, 0.0
  %v459 = vmax.f32 %v203, 0.0
  %v460 = vmax.f32 %v204, 0.0
  %v461 = vmax.f32 %v205, 0.0
  %v462 = vmax.f32 %v206, 0.0
  %v463 = vmax.f32 %v207, 0.0
  %v464 = vmax.f32 %v208, 0.0
  %v465 = vmax.f32 %v209, 0.0
  %v466 = vmax.f32 %v210, 0.0
  %v467 = vmax.f32 %v211, 0.0
  %v468 = vmax.f32 %v212, 0.0
  %v469 = vmax.f32 %v213, 0.0
  %v470 = vmax.f32 %v214, 0.0
  %v471 = vmax.f32 %v215, 0.0
  %v472 = vmax.f32 %v216, 0.0
  %v473 = vmax.f32 %v217, 0.0
  %v474 = vmax.f32 %v218, 0.0
  %v475 = vmax.f32 %v219, 0.0
  %v476 = vmax.f32 %v220, 0.0
  %v477 = vmax.f32 %v221, 0.0
  %v478 = vmax.f32 %v222, 0.0
  %v479 = vmax.f32 %v223, 0.0
  %v480 = vmax.f32 %v224, 0.0
  %v481 = vmax.f32 %v225, 0.0
  %v482 = vmax.f32 %v226, 0.0
  %v483 = vmax.f32 %v227, 0.0
  %v484 = vmax.f32 %v228, 0.0
  %v485 = vmax.f32 %v229, 0.0
  %v486 = vmax.f32 %v230, 0.0
  %v487 = vmax.f32 %v231, 0.0
  %v488 = vmax.f32 %v232, 0.0
  %v489 = vmax.f32 %v233, 0.0
  %v490 = vmax.f32 %v234, 0.0
  %v491 = vmax.f32 %v235, 0.0
  %v492 = vmax.f32 %v236, 0.0
  %v493 = vmax.f32 %v237, 0.0
  %v494 = vmax.f32 %v238, 0.0
  %v495 = vmax.f32 %v239, 0.0
  %v496 = vmax.f32 %v240, 0.0
  %v497 = vmax.f32 %v241, 0.0
  %v498 = vmax.f32 %v242, 0.0
  %v499 = vmax.f32 %v243, 0.0
  %v500 = vmax.f32 %v244, 0.0
  %v501 = vmax.f32 %v245, 0.0
  %v502 = vmax.f32 %v246, 0.0
  %v503 = vmax.f32 %v247, 0.0
  %v504 = vmax.f32 %v248, 0.0
  %v505 = vmax.f32 %v249, 0.0
  %v506 = vmax.f32 %v250, 0.0
  %v507 = vmax.f32 %v251, 0.0
  %v508 = vmax.f32 %v252, 0.0
  %v509 = vmax.f32 %v253, 0.0
  %v510 = vmax.f32 %v254, 0.0
  %v511 = vmax.f32 %v255, 0.0
  %v512 = vmax.f32 %v256, 0.0
  %v513 = vmax.f32 %v257, 0.0
  %v514 = vmax.f32 %v258, 0.0
  %v515 = vmax.f32 %v259, 0.0
  %v516 = vmax.f32 %v260, 0.0
  %v517 = vmax.f32 %v261, 0.0
  %v518 = vmax.f32 %v262, 0.0
  %v519 = vmax.f32 %v263, 0.0
  %v520 = vmax.f32 %v264, 0.0
  %v521 = vmax.f32 %v265, 0.0
  %v522 = vmax.f32 %v266, 0.0
  %v523 = vmax.f32 %v267, 0.0
  %v524 = vmax.f32 %v268, 0.0
  %v525 = vmax.f32 %v269, 0.0
  %v526 = vmax.f32 %v270, 0.0
  %v527 = vmax.f32 %v271, 0.0
  %v528 = vmax.f32 %v272, 0.0
  %v529 = vld [vmem:[%s1] sm:$0xff]
  %v530 = vld [vmem:[%s1 + $0x8] sm:$0xff]
  %v531 = vld [vmem:[%s1 + $0x10] sm:$0xff]
  %v532 = vld [vmem:[%s1 + $0x18] sm:$0xff]
  %v533 = vld [vmem:[%s1 + $0x20] sm:$0xff]
  %v534 = vld [vmem:[%s1 + $0x28] sm:$0xff]
  %v535 = vld [vmem:[%s1 + $0x30] sm:$0xff]
  %v536 = vld [vmem:[%s1 + $0x38] sm:$0xff]
  %v537 = vld [vmem:[%s1 + $0x40] sm:$0xff]
  %v538 = vld [vmem:[%s1 + $0x48] sm:$0xff]
  %v539 = vld [vmem:[%s1 + $0x50] sm:$0xff]
  %v540 = vld [vmem:[%s1 + $0x58] sm:$0xff]
  %v541 = vld [vmem:[%s1 + $0x60] sm:$0xff]
  %v542 = vld [vmem:[%s1 + $0x68] sm:$0xff]
  %v543 = vld [vmem:[%s1 + $0x70] sm:$0xff]
  %v544 = vld [vmem:[%s1 + $0x78] sm:$0xff]
  %v545 = vld [vmem:[%s1 + $0x80] sm:$0xff]
  %v546 = vld [vmem:[%s1 + $0x88] sm:$0xff]
  %v547 = vld [vmem:[%s1 + $0x90] sm:$0xff]
  %v548 = vld [vmem:[%s1 + $0x98] sm:$0xff]
  %v549 = vld [vmem:[%s1 + $0xa0] sm:$0xff]
  %v550 = vld [vmem:[%s1 + $0xa8] sm:$0xff]
  %v551 = vld [vmem:[%s1 + $0xb0] sm:$0xff]
  %v552 = vld [vmem:[%s1 + $0xb8] sm:$0xff]
  %v553 = vld [vmem:[%s1 + $0xc0] sm:$0xff]
  %v554 = vld [vmem:[%s1 + $0xc8] sm:$0xff]
  %v555 = vld [vmem:[%s1 + $0xd0] sm:$0xff]
  %v556 = vld [vmem:[%s1 + $0xd8] sm:$0xff]
  %v557 = vld [vmem:[%s1 + $0xe0] sm:$0xff]
  %v558 = vld [vmem:[%s1 + $0xe8] sm:$0xff]
  %v559 = vld [vmem:[%s1 + $0xf0] sm:$0xff]
  %v560 = vld [vmem:[%s1 + $0xf8] sm:$0xff]
  %v561 = vld [vmem:[%s1 + $0x100] sm:$0xff]
  %v562 = vld [vmem:[%s1 + $0x108] sm:$0xff]
  %v563 = vld [vmem:[%s1 + $0x110] sm:$0xff]
  %v564 = vld [vmem:[%s1 + $0x118] sm:$0xff]
  %v565 = vld [vmem:[%s1 + $0x120] sm:$0xff]
  %v566 = vld [vmem:[%s1 + $0x128] sm:$0xff]
  %v567 = vld [vmem:[%s1 + $0x130] sm:$0xff]
  %v568 = vld [vmem:[%s1 + $0x138] sm:$0xff]
  %v569 = vld [vmem:[%s1 + $0x140] sm:$0xff]
  %v570 = vld [vmem:[%s1 + $0x148] sm:$0xff]
  %v571 = vld [vmem:[%s1 + $0x150] sm:$0xff]
  %v572 = vld [vmem:[%s1 + $0x158] sm:$0xff]
  %v573 = vld [vmem:[%s1 + $0x160] sm:$0xff]
  %v574 = vld [vmem:[%s1 + $0x168] sm:$0xff]
  %v575 = vld [vmem:[%s1 + $0x170] sm:$0xff]
  %v576 = vld [vmem:[%s1 + $0x178] sm:$0xff]
  %v577 = vld [vmem:[%s1 + $0x180] sm:$0xff]
  %v578 = vld [vmem:[%s1 + $0x188] sm:$0xff]
  %v579 = vld [vmem:[%s1 + $0x190] sm:$0xff]
  %v580 = vld [vmem:[%s1 + $0x198] sm:$0xff]
  %v581 = vld [vmem:[%s1 + $0x1a0] sm:$0xff]
  %v582 = vld [vmem:[%s1 + $0x1a8] sm:$0xff]
  %v583 = vld [vmem:[%s1 + $0x1b0] sm:$0xff]
  %v584 = vld [vmem:[%s1 + $0x1b8] sm:$0xff]
  %v585 = vld [vmem:[%s1 + $0x1c0] sm:$0xff]
  %v586 = vld [vmem:[%s1 + $0x1c8] sm:$0xff]
  %v587 = vld [vmem:[%s1 + $0x1d0] sm:$0xff]
  %v588 = vld [vmem:[%s1 + $0x1d8] sm:$0xff]
  %v589 = vld [vmem:[%s1 + $0x1e0] sm:$0xff]
  %v590 = vld [vmem:[%s1 + $0x1e8] sm:$0xff]
  %v591 = vld [vmem:[%s1 + $0x1f0] sm:$0xff]
  %v592 = vld [vmem:[%s1 + $0x1f8] sm:$0xff]
  %593 = vmatpush.msra.mxu0 %v544
  %594 = vmatpush.msra.mxu0 %v543
  %595 = vmatpush.msra.mxu0 %v542
  %596 = vmatpush.msra.mxu0 %v541
  %597 = vmatpush.msra.mxu0 %v540
  %598 = vmatpush.msra.mxu0 %v539
  %599 = vmatpush.msra.mxu0 %v538
  %600 = vmatpush.msra.mxu0 %v537
  %601 = vmatpush.msra.mxu0 %v536
  %602 = vmatpush.msra.mxu0 %v535
  %603 = vmatpush.msra.mxu0 %v534
  %604 = vmatpush.msra.mxu0 %v533
  %605 = vmatpush.msra.mxu0 %v532
  %606 = vmatpush.msra.mxu0 %v531
  %607 = vmatpush.msra.mxu0 %v530
  %608 = vmatpush.msra.mxu0 %v529
  %609 = vmatmul.f32.gmra.mxu0 %v273
  %v610 = vpop.f32.mrf.mxu0
  %v611 = vadd.f32 0.0, %v610
  %612 = vmatmul.f32.gmra.mxu0 %v277
  %v613 = vpop.f32.mrf.mxu0
  %v614 = vadd.f32 0.0, %v613
  %615 = vmatmul.f32.gmra.mxu0 %v281
  %v616 = vpop.f32.mrf.mxu0
  %v617 = vadd.f32 0.0, %v616
  %618 = vmatmul.f32.gmra.mxu0 %v285
  %v619 = vpop.f32.mrf.mxu0
  %v620 = vadd.f32 0.0, %v619
  %621 = vmatmul.f32.gmra.mxu0 %v289
  %v622 = vpop.f32.mrf.mxu0
  %v623 = vadd.f32 0.0, %v622
  %624 = vmatmul.f32.gmra.mxu0 %v293
  %v625 = vpop.f32.mrf.mxu0
  %v626 = vadd.f32 0.0, %v625
  %627 = vmatmul.f32.gmra.mxu0 %v297
  %v628 = vpop.f32.mrf.mxu0
  %v629 = vadd.f32 0.0, %v628
  %630 = vmatmul.f32.gmra.mxu0 %v301
  %v631 = vpop.f32.mrf.mxu0
  %v632 = vadd.f32 0.0, %v631
  %633 = vmatmul.f32.gmra.mxu0 %v305
  %v634 = vpop.f32.mrf.mxu0
  %v635 = vadd.f32 0.0, %v634
  %636 = vmatmul.f32.gmra.mxu0 %v309
  %v637 = vpop.f32.mrf.mxu0
  %v638 = vadd.f32 0.0, %v637
  %639 = vmatmul.f32.gmra.mxu0 %v313
  %v640 = vpop.f32.mrf.mxu0
  %v641 = vadd.f32 0.0, %v640
  %642 = vmatmul.f32.gmra.mxu0 %v317
  %v643 = vpop.f32.mrf.mxu0
  %v644 = vadd.f32 0.0, %v643
  %645 = vmatmul.f32.gmra.mxu0 %v321
  %v646 = vpop.f32.mrf.mxu0
  %v647 = vadd.f32 0.0, %v646
  %648 = vmatmul.f32.gmra.mxu0 %v325
  %v649 = vpop.f32.mrf.mxu0
  %v650 = vadd.f32 0.0, %v649
  %651 = vmatmul.f32.gmra.mxu0 %v329
  %v652 = vpop.f32.mrf.mxu0
  %v653 = vadd.f32 0.0, %v652
  %654 = vmatmul.f32.gmra.mxu0 %v333
  %v655 = vpop.f32.mrf.mxu0
  %v656 = vadd.f32 0.0, %v655
  %657 = vmatmul.f32.gmra.mxu0 %v337
  %v658 = vpop.f32.mrf.mxu0
  %v659 = vadd.f32 0.0, %v658
  %660 = vmatmul.f32.gmra.mxu0 %v341
  %v661 = vpop.f32.mrf.mxu0
  %v662 = vadd.f32 0.0, %v661
  %663 = vmatmul.f32.gmra.mxu0 %v345
  %v664 = vpop.f32.mrf.mxu0
  %v665 = vadd.f32 0.0, %v664
  %666 = vmatmul.f32.gmra.mxu0 %v349
  %v667 = vpop.f32.mrf.mxu0
  %v668 = vadd.f32 0.0, %v667
  %669 = vmatmul.f32.gmra.mxu0 %v353
  %v670 = vpop.f32.mrf.mxu0
  %v671 = vadd.f32 0.0, %v670
  %672 = vmatmul.f32.gmra.mxu0 %v357
  %v673 = vpop.f32.mrf.mxu0
  %v674 = vadd.f32 0.0, %v673
  %675 = vmatmul.f32.gmra.mxu0 %v361
  %v676 = vpop.f32.mrf.mxu0
  %v677 = vadd.f32 0.0, %v676
  %678 = vmatmul.f32.gmra.mxu0 %v365
  %v679 = vpop.f32.mrf.mxu0
  %v680 = vadd.f32 0.0, %v679
  %681 = vmatmul.f32.gmra.mxu0 %v369
  %v682 = vpop.f32.mrf.mxu0
  %v683 = vadd.f32 0.0, %v682
  %684 = vmatmul.f32.gmra.mxu0 %v373
  %v685 = vpop.f32.mrf.mxu0
  %v686 = vadd.f32 0.0, %v685
  %687 = vmatmul.f32.gmra.mxu0 %v377
  %v688 = vpop.f32.mrf.mxu0
  %v689 = vadd.f32 0.0, %v688
  %690 = vmatmul.f32.gmra.mxu0 %v381
  %v691 = vpop.f32.mrf.mxu0
  %v692 = vadd.f32 0.0, %v691
  %693 = vmatmul.f32.gmra.mxu0 %v385
  %v694 = vpop.f32.mrf.mxu0
  %v695 = vadd.f32 0.0, %v694
  %696 = vmatmul.f32.gmra.mxu0 %v389
  %v697 = vpop.f32.mrf.mxu0
  %v698 = vadd.f32 0.0, %v697
  %699 = vmatmul.f32.gmra.mxu0 %v393
  %v700 = vpop.f32.mrf.mxu0
  %v701 = vadd.f32 0.0, %v700
  %702 = vmatmul.f32.gmra.mxu0 %v397
  %v703 = vpop.f32.mrf.mxu0
  %v704 = vadd.f32 0.0, %v703
  %705 = vmatmul.f32.gmra.mxu0 %v401
  %v706 = vpop.f32.mrf.mxu0
  %v707 = vadd.f32 0.0, %v706
  %708 = vmatmul.f32.gmra.mxu0 %v405
  %v709 = vpop.f32.mrf.mxu0
  %v710 = vadd.f32 0.0, %v709
  %711 = vmatmul.f32.gmra.mxu0 %v409
  %v712 = vpop.f32.mrf.mxu0
  %v713 = vadd.f32 0.0, %v712
  %714 = vmatmul.f32.gmra.mxu0 %v413
  %v715 = vpop.f32.mrf.mxu0
  %v716 = vadd.f32 0.0, %v715
  %717 = vmatmul.f32.gmra.mxu0 %v417
  %v718 = vpop.f32.mrf.mxu0
  %v719 = vadd.f32 0.0, %v718
  %720 = vmatmul.f32.gmra.mxu0 %v421
  %v721 = vpop.f32.mrf.mxu0
  %v722 = vadd.f32 0.0, %v721
  %723 = vmatmul.f32.gmra.mxu0 %v425
  %v724 = vpop.f32.mrf.mxu0
  %v725 = vadd.f32 0.0, %v724
  %726 = vmatmul.f32.gmra.mxu0 %v429
  %v727 = vpop.f32.mrf.mxu0
  %v728 = vadd.f32 0.0, %v727
  %729 = vmatmul.f32.gmra.mxu0 %v433
  %v730 = vpop.f32.mrf.mxu0
  %v731 = vadd.f32 0.0, %v730
  %732 = vmatmul.f32.gmra.mxu0 %v437
  %v733 = vpop.f32.mrf.mxu0
  %v734 = vadd.f32 0.0, %v733
  %735 = vmatmul.f32.gmra.mxu0 %v441
  %v736 = vpop.f32.mrf.mxu0
  %v737 = vadd.f32 0.0, %v736
  %738 = vmatmul.f32.gmra.mxu0 %v445
  %v739 = vpop.f32.mrf.mxu0
  %v740 = vadd.f32 0.0, %v739
  %741 = vmatmul.f32.gmra.mxu0 %v449
  %v742 = vpop.f32.mrf.mxu0
  %v743 = vadd.f32 0.0, %v742
  %744 = vmatmul.f32.gmra.mxu0 %v453
  %v745 = vpop.f32.mrf.mxu0
  %v746 = vadd.f32 0.0, %v745
  %747 = vmatmul.f32.gmra.mxu0 %v457
  %v748 = vpop.f32.mrf.mxu0
  %v749 = vadd.f32 0.0, %v748
  %750 = vmatmul.f32.gmra.mxu0 %v461
  %v751 = vpop.f32.mrf.mxu0
  %v752 = vadd.f32 0.0, %v751
  %753 = vmatmul.f32.gmra.mxu0 %v465
  %v754 = vpop.f32.mrf.mxu0
  %v755 = vadd.f32 0.0, %v754
  %756 = vmatmul.f32.gmra.mxu0 %v469
  %v757 = vpop.f32.mrf.mxu0
  %v758 = vadd.f32 0.0, %v757
  %759 = vmatmul.f32.gmra.mxu0 %v473
  %v760 = vpop.f32.mrf.mxu0
  %v761 = vadd.f32 0.0, %v760
  %762 = vmatmul.f32.gmra.mxu0 %v477
  %v763 = vpop.f32.mrf.mxu0
  %v764 = vadd.f32 0.0, %v763
  %765 = vmatmul.f32.gmra.mxu0 %v481
  %v766 = vpop.f32.mrf.mxu0
  %v767 = vadd.f32 0.0, %v766
  %768 = vmatmul.f32.gmra.mxu0 %v485
  %v769 = vpop.f32.mrf.mxu0
  %v770 = vadd.f32 0.0, %v769
  %771 = vmatmul.f32.gmra.mxu0 %v489
  %v772 = vpop.f32.mrf.mxu0
  %v773 = vadd.f32 0.0, %v772
  %774 = vmatmul.f32.gmra.mxu0 %v493
  %v775 = vpop.f32.mrf.mxu0
  %v776 = vadd.f32 0.0, %v775
  %777 = vmatmul.f32.gmra.mxu0 %v497
  %v778 = vpop.f32.mrf.mxu0
  %v779 = vadd.f32 0.0, %v778
  %780 = vmatmul.f32.gmra.mxu0 %v501
  %v781 = vpop.f32.mrf.mxu0
  %v782 = vadd.f32 0.0, %v781
  %783 = vmatmul.f32.gmra.mxu0 %v505
  %v784 = vpop.f32.mrf.mxu0
  %v785 = vadd.f32 0.0, %v784
  %786 = vmatmul.f32.gmra.mxu0 %v509
  %v787 = vpop.f32.mrf.mxu0
  %v788 = vadd.f32 0.0, %v787
  %789 = vmatmul.f32.gmra.mxu0 %v513
  %v790 = vpop.f32.mrf.mxu0
  %v791 = vadd.f32 0.0, %v790
  %792 = vmatmul.f32.gmra.mxu0 %v517
  %v793 = vpop.f32.mrf.mxu0
  %v794 = vadd.f32 0.0, %v793
  %795 = vmatmul.f32.gmra.mxu0 %v521
  %v796 = vpop.f32.mrf.mxu0
  %v797 = vadd.f32 0.0, %v796
  %798 = vmatmul.f32.gmra.mxu0 %v525
  %v799 = vpop.f32.mrf.mxu0
  %v800 = vadd.f32 0.0, %v799
  %801 = vdwg.mxu0
  %802 = vmatpush.msra.mxu0 %v560
  %803 = vmatpush.msra.mxu0 %v559
  %804 = vmatpush.msra.mxu0 %v558
  %805 = vmatpush.msra.mxu0 %v557
  %806 = vmatpush.msra.mxu0 %v556
  %807 = vmatpush.msra.mxu0 %v555
  %808 = vmatpush.msra.mxu0 %v554
  %809 = vmatpush.msra.mxu0 %v553
  %810 = vmatpush.msra.mxu0 %v552
  %811 = vmatpush.msra.mxu0 %v551
  %812 = vmatpush.msra.mxu0 %v550
  %813 = vmatpush.msra.mxu0 %v549
  %814 = vmatpush.msra.mxu0 %v548
  %815 = vmatpush.msra.mxu0 %v547
  %816 = vmatpush.msra.mxu0 %v546
  %817 = vmatpush.msra.mxu0 %v545
  %818 = vmatmul.f32.gmra.mxu0 %v274
  %v819 = vpop.f32.mrf.mxu0
  %v820 = vadd.f32 %v611, %v819
  %821 = vmatmul.f32.gmra.mxu0 %v278
  %v822 = vpop.f32.mrf.mxu0
  %v823 = vadd.f32 %v614, %v822
  %824 = vmatmul.f32.gmra.mxu0 %v282
  %v825 = vpop.f32.mrf.mxu0
  %v826 = vadd.f32 %v617, %v825
  %827 = vmatmul.f32.gmra.mxu0 %v286
  %v828 = vpop.f32.mrf.mxu0
  %v829 = vadd.f32 %v620, %v828
  %830 = vmatmul.f32.gmra.mxu0 %v290
  %v831 = vpop.f32.mrf.mxu0
  %v832 = vadd.f32 %v623, %v831
  %833 = vmatmul.f32.gmra.mxu0 %v294
  %v834 = vpop.f32.mrf.mxu0
  %v835 = vadd.f32 %v626, %v834
  %836 = vmatmul.f32.gmra.mxu0 %v298
  %v837 = vpop.f32.mrf.mxu0
  %v838 = vadd.f32 %v629, %v837
  %839 = vmatmul.f32.gmra.mxu0 %v302
  %v840 = vpop.f32.mrf.mxu0
  %v841 = vadd.f32 %v632, %v840
  %842 = vmatmul.f32.gmra.mxu0 %v306
  %v843 = vpop.f32.mrf.mxu0
  %v844 = vadd.f32 %v635, %v843
  %845 = vmatmul.f32.gmra.mxu0 %v310
  %v846 = vpop.f32.mrf.mxu0
  %v847 = vadd.f32 %v638, %v846
  %848 = vmatmul.f32.gmra.mxu0 %v314
  %v849 = vpop.f32.mrf.mxu0
  %v850 = vadd.f32 %v641, %v849
  %851 = vmatmul.f32.gmra.mxu0 %v318
  %v852 = vpop.f32.mrf.mxu0
  %v853 = vadd.f32 %v644, %v852
  %854 = vmatmul.f32.gmra.mxu0 %v322
  %v855 = vpop.f32.mrf.mxu0
  %v856 = vadd.f32 %v647, %v855
  %857 = vmatmul.f32.gmra.mxu0 %v326
  %v858 = vpop.f32.mrf.mxu0
  %v859 = vadd.f32 %v650, %v858
  %860 = vmatmul.f32.gmra.mxu0 %v330
  %v861 = vpop.f32.mrf.mxu0
  %v862 = vadd.f32 %v653, %v861
  %863 = vmatmul.f32.gmra.mxu0 %v334
  %v864 = vpop.f32.mrf.mxu0
  %v865 = vadd.f32 %v656, %v864
  %866 = vmatmul.f32.gmra.mxu0 %v338
  %v867 = vpop.f32.mrf.mxu0
  %v868 = vadd.f32 %v659, %v867
  %869 = vmatmul.f32.gmra.mxu0 %v342
  %v870 = vpop.f32.mrf.mxu0
  %v871 = vadd.f32 %v662, %v870
  %872 = vmatmul.f32.gmra.mxu0 %v346
  %v873 = vpop.f32.mrf.mxu0
  %v874 = vadd.f32 %v665, %v873
  %875 = vmatmul.f32.gmra.mxu0 %v350
  %v876 = vpop.f32.mrf.mxu0
  %v877 = vadd.f32 %v668, %v876
  %878 = vmatmul.f32.gmra.mxu0 %v354
  %v879 = vpop.f32.mrf.mxu0
  %v880 = vadd.f32 %v671, %v879
  %881 = vmatmul.f32.gmra.mxu0 %v358
  %v882 = vpop.f32.mrf.mxu0
  %v883 = vadd.f32 %v674, %v882
  %884 = vmatmul.f32.gmra.mxu0 %v362
  %v885 = vpop.f32.mrf.mxu0
  %v886 = vadd.f32 %v677, %v885
  %887 = vmatmul.f32.gmra.mxu0 %v366
  %v888 = vpop.f32.mrf.mxu0
  %v889 = vadd.f32 %v680, %v888
  %890 = vmatmul.f32.gmra.mxu0 %v370
  %v891 = vpop.f32.mrf.mxu0
  %v892 = vadd.f32 %v683, %v891
  %893 = vmatmul.f32.gmra.mxu0 %v374
  %v894 = vpop.f32.mrf.mxu0
  %v895 = vadd.f32 %v686, %v894
  %896 = vmatmul.f32.gmra.mxu0 %v378
  %v897 = vpop.f32.mrf.mxu0
  %v898 = vadd.f32 %v689, %v897
  %899 = vmatmul.f32.gmra.mxu0 %v382
  %v900 = vpop.f32.mrf.mxu0
  %v901 = vadd.f32 %v692, %v900
  %902 = vmatmul.f32.gmra.mxu0 %v386
  %v903 = vpop.f32.mrf.mxu0
  %v904 = vadd.f32 %v695, %v903
  %905 = vmatmul.f32.gmra.mxu0 %v390
  %v906 = vpop.f32.mrf.mxu0
  %v907 = vadd.f32 %v698, %v906
  %908 = vmatmul.f32.gmra.mxu0 %v394
  %v909 = vpop.f32.mrf.mxu0
  %v910 = vadd.f32 %v701, %v909
  %911 = vmatmul.f32.gmra.mxu0 %v398
  %v912 = vpop.f32.mrf.mxu0
  %v913 = vadd.f32 %v704, %v912
  %914 = vmatmul.f32.gmra.mxu0 %v402
  %v915 = vpop.f32.mrf.mxu0
  %v916 = vadd.f32 %v707, %v915
  %917 = vmatmul.f32.gmra.mxu0 %v406
  %v918 = vpop.f32.mrf.mxu0
  %v919 = vadd.f32 %v710, %v918
  %920 = vmatmul.f32.gmra.mxu0 %v410
  %v921 = vpop.f32.mrf.mxu0
  %v922 = vadd.f32 %v713, %v921
  %923 = vmatmul.f32.gmra.mxu0 %v414
  %v924 = vpop.f32.mrf.mxu0
  %v925 = vadd.f32 %v716, %v924
  %926 = vmatmul.f32.gmra.mxu0 %v418
  %v927 = vpop.f32.mrf.mxu0
  %v928 = vadd.f32 %v719, %v927
  %929 = vmatmul.f32.gmra.mxu0 %v422
  %v930 = vpop.f32.mrf.mxu0
  %v931 = vadd.f32 %v722, %v930
  %932 = vmatmul.f32.gmra.mxu0 %v426
  %v933 = vpop.f32.mrf.mxu0
  %v934 = vadd.f32 %v725, %v933
  %935 = vmatmul.f32.gmra.mxu0 %v430
  %v936 = vpop.f32.mrf.mxu0
  %v937 = vadd.f32 %v728, %v936
  %938 = vmatmul.f32.gmra.mxu0 %v434
  %v939 = vpop.f32.mrf.mxu0
  %v940 = vadd.f32 %v731, %v939
  %941 = vmatmul.f32.gmra.mxu0 %v438
  %v942 = vpop.f32.mrf.mxu0
  %v943 = vadd.f32 %v734, %v942
  %944 = vmatmul.f32.gmra.mxu0 %v442
  %v945 = vpop.f32.mrf.mxu0
  %v946 = vadd.f32 %v737, %v945
  %947 = vmatmul.f32.gmra.mxu0 %v446
  %v948 = vpop.f32.mrf.mxu0
  %v949 = vadd.f32 %v740, %v948
  %950 = vmatmul.f32.gmra.mxu0 %v450
  %v951 = vpop.f32.mrf.mxu0
  %v952 = vadd.f32 %v743, %v951
  %953 = vmatmul.f32.gmra.mxu0 %v454
  %v954 = vpop.f32.mrf.mxu0
  %v955 = vadd.f32 %v746, %v954
  %956 = vmatmul.f32.gmra.mxu0 %v458
  %v957 = vpop.f32.mrf.mxu0
  %v958 = vadd.f32 %v749, %v957
  %959 = vmatmul.f32.gmra.mxu0 %v462
  %v960 = vpop.f32.mrf.mxu0
  %v961 = vadd.f32 %v752, %v960
  %962 = vmatmul.f32.gmra.mxu0 %v466
  %v963 = vpop.f32.mrf.mxu0
  %v964 = vadd.f32 %v755, %v963
  %965 = vmatmul.f32.gmra.mxu0 %v470
  %v966 = vpop.f32.mrf.mxu0
  %v967 = vadd.f32 %v758, %v966
  %968 = vmatmul.f32.gmra.mxu0 %v474
  %v969 = vpop.f32.mrf.mxu0
  %v970 = vadd.f32 %v761, %v969
  %971 = vmatmul.f32.gmra.mxu0 %v478
  %v972 = vpop.f32.mrf.mxu0
  %v973 = vadd.f32 %v764, %v972
  %974 = vmatmul.f32.gmra.mxu0 %v482
  %v975 = vpop.f32.mrf.mxu0
  %v976 = vadd.f32 %v767, %v975
  %977 = vmatmul.f32.gmra.mxu0 %v486
  %v978 = vpop.f32.mrf.mxu0
  %v979 = vadd.f32 %v770, %v978
  %980 = vmatmul.f32.gmra.mxu0 %v490
  %v981 = vpop.f32.mrf.mxu0
  %v982 = vadd.f32 %v773, %v981
  %983 = vmatmul.f32.gmra.mxu0 %v494
  %v984 = vpop.f32.mrf.mxu0
  %v985 = vadd.f32 %v776, %v984
  %986 = vmatmul.f32.gmra.mxu0 %v498
  %v987 = vpop.f32.mrf.mxu0
  %v988 = vadd.f32 %v779, %v987
  %989 = vmatmul.f32.gmra.mxu0 %v502
  %v990 = vpop.f32.mrf.mxu0
  %v991 = vadd.f32 %v782, %v990
  %992 = vmatmul.f32.gmra.mxu0 %v506
  %v993 = vpop.f32.mrf.mxu0
  %v994 = vadd.f32 %v785, %v993
  %995 = vmatmul.f32.gmra.mxu0 %v510
  %v996 = vpop.f32.mrf.mxu0
  %v997 = vadd.f32 %v788, %v996
  %998 = vmatmul.f32.gmra.mxu0 %v514
  %v999 = vpop.f32.mrf.mxu0
  %v1000 = vadd.f32 %v791, %v999
  %1001 = vmatmul.f32.gmra.mxu0 %v518
  %v1002 = vpop.f32.mrf.mxu0
  %v1003 = vadd.f32 %v794, %v1002
  %1004 = vmatmul.f32.gmra.mxu0 %v522
  %v1005 = vpop.f32.mrf.mxu0
  %v1006 = vadd.f32 %v797, %v1005
  %1007 = vmatmul.f32.gmra.mxu0 %v526
  %v1008 = vpop.f32.mrf.mxu0
  %v1009 = vadd.f32 %v800, %v1008
  %1010 = vdwg.mxu0
  %1011 = vmatpush.msra.mxu0 %v576
  %1012 = vmatpush.msra.mxu0 %v575
  %1013 = vmatpush.msra.mxu0 %v574
  %1014 = vmatpush.msra.mxu0 %v573
  %1015 = vmatpush.msra.mxu0 %v572
  %1016 = vmatpush.msra.mxu0 %v571
  %1017 = vmatpush.msra.mxu0 %v570
  %1018 = vmatpush.msra.mxu0 %v569
  %1019 = vmatpush.msra.mxu0 %v568
  %1020 = vmatpush.msra.mxu0 %v567
  %1021 = vmatpush.msra.mxu0 %v566
  %1022 = vmatpush.msra.mxu0 %v565
  %1023 = vmatpush.msra.mxu0 %v564
  %1024 = vmatpush.msra.mxu0 %v563
  %1025 = vmatpush.msra.mxu0 %v562
  %1026 = vmatpush.msra.mxu0 %v561
  %1027 = vmatmul.f32.gmra.mxu0 %v275
  %v1028 = vpop.f32.mrf.mxu0
  %v1029 = vadd.f32 %v820, %v1028
  %1030 = vmatmul.f32.gmra.mxu0 %v279
  %v1031 = vpop.f32.mrf.mxu0
  %v1032 = vadd.f32 %v823, %v1031
  %1033 = vmatmul.f32.gmra.mxu0 %v283
  %v1034 = vpop.f32.mrf.mxu0
  %v1035 = vadd.f32 %v826, %v1034
  %1036 = vmatmul.f32.gmra.mxu0 %v287
  %v1037 = vpop.f32.mrf.mxu0
  %v1038 = vadd.f32 %v829, %v1037
  %1039 = vmatmul.f32.gmra.mxu0 %v291
  %v1040 = vpop.f32.mrf.mxu0
  %v1041 = vadd.f32 %v832, %v1040
  %1042 = vmatmul.f32.gmra.mxu0 %v295
  %v1043 = vpop.f32.mrf.mxu0
  %v1044 = vadd.f32 %v835, %v1043
  %1045 = vmatmul.f32.gmra.mxu0 %v299
  %v1046 = vpop.f32.mrf.mxu0
  %v1047 = vadd.f32 %v838, %v1046
  %1048 = vmatmul.f32.gmra.mxu0 %v303
  %v1049 = vpop.f32.mrf.mxu0
  %v1050 = vadd.f32 %v841, %v1049
  %1051 = vmatmul.f32.gmra.mxu0 %v307
  %v1052 = vpop.f32.mrf.mxu0
  %v1053 = vadd.f32 %v844, %v1052
  %1054 = vmatmul.f32.gmra.mxu0 %v311
  %v1055 = vpop.f32.mrf.mxu0
  %v1056 = vadd.f32 %v847, %v1055
  %1057 = vmatmul.f32.gmra.mxu0 %v315
  %v1058 = vpop.f32.mrf.mxu0
  %v1059 = vadd.f32 %v850, %v1058
  %1060 = vmatmul.f32.gmra.mxu0 %v319
  %v1061 = vpop.f32.mrf.mxu0
  %v1062 = vadd.f32 %v853, %v1061
  %1063 = vmatmul.f32.gmra.mxu0 %v323
  %v1064 = vpop.f32.mrf.mxu0
  %v1065 = vadd.f32 %v856, %v1064
  %1066 = vmatmul.f32.gmra.mxu0 %v327
  %v1067 = vpop.f32.mrf.mxu0
  %v1068 = vadd.f32 %v859, %v1067
  %1069 = vmatmul.f32.gmra.mxu0 %v331
  %v1070 = vpop.f32.mrf.mxu0
  %v1071 = vadd.f32 %v862, %v1070
  %1072 = vmatmul.f32.gmra.mxu0 %v335
  %v1073 = vpop.f32.mrf.mxu0
  %v1074 = vadd.f32 %v865, %v1073
  %1075 = vmatmul.f32.gmra.mxu0 %v339
  %v1076 = vpop.f32.mrf.mxu0
  %v1077 = vadd.f32 %v868, %v1076
  %1078 = vmatmul.f32.gmra.mxu0 %v343
  %v1079 = vpop.f32.mrf.mxu0
  %v1080 = vadd.f32 %v871, %v1079
  %1081 = vmatmul.f32.gmra.mxu0 %v347
  %v1082 = vpop.f32.mrf.mxu0
  %v1083 = vadd.f32 %v874, %v1082
  %1084 = vmatmul.f32.gmra.mxu0 %v351
  %v1085 = vpop.f32.mrf.mxu0
  %v1086 = vadd.f32 %v877, %v1085
  %1087 = vmatmul.f32.gmra.mxu0 %v355
  %v1088 = vpop.f32.mrf.mxu0
  %v1089 = vadd.f32 %v880, %v1088
  %1090 = vmatmul.f32.gmra.mxu0 %v359
  %v1091 = vpop.f32.mrf.mxu0
  %v1092 = vadd.f32 %v883, %v1091
  %1093 = vmatmul.f32.gmra.mxu0 %v363
  %v1094 = vpop.f32.mrf.mxu0
  %v1095 = vadd.f32 %v886, %v1094
  %1096 = vmatmul.f32.gmra.mxu0 %v367
  %v1097 = vpop.f32.mrf.mxu0
  %v1098 = vadd.f32 %v889, %v1097
  %1099 = vmatmul.f32.gmra.mxu0 %v371
  %v1100 = vpop.f32.mrf.mxu0
  %v1101 = vadd.f32 %v892, %v1100
  %1102 = vmatmul.f32.gmra.mxu0 %v375
  %v1103 = vpop.f32.mrf.mxu0
  %v1104 = vadd.f32 %v895, %v1103
  %1105 = vmatmul.f32.gmra.mxu0 %v379
  %v1106 = vpop.f32.mrf.mxu0
  %v1107 = vadd.f32 %v898, %v1106
  %1108 = vmatmul.f32.gmra.mxu0 %v383
  %v1109 = vpop.f32.mrf.mxu0
  %v1110 = vadd.f32 %v901, %v1109
  %1111 = vmatmul.f32.gmra.mxu0 %v387
  %v1112 = vpop.f32.mrf.mxu0
  %v1113 = vadd.f32 %v904, %v1112
  %1114 = vmatmul.f32.gmra.mxu0 %v391
  %v1115 = vpop.f32.mrf.mxu0
  %v1116 = vadd.f32 %v907, %v1115
  %1117 = vmatmul.f32.gmra.mxu0 %v395
  %v1118 = vpop.f32.mrf.mxu0
  %v1119 = vadd.f32 %v910, %v1118
  %1120 = vmatmul.f32.gmra.mxu0 %v399
  %v1121 = vpop.f32.mrf.mxu0
  %v1122 = vadd.f32 %v913, %v1121
  %1123 = vmatmul.f32.gmra.mxu0 %v403
  %v1124 = vpop.f32.mrf.mxu0
  %v1125 = vadd.f32 %v916, %v1124
  %1126 = vmatmul.f32.gmra.mxu0 %v407
  %v1127 = vpop.f32.mrf.mxu0
  %v1128 = vadd.f32 %v919, %v1127
  %1129 = vmatmul.f32.gmra.mxu0 %v411
  %v1130 = vpop.f32.mrf.mxu0
  %v1131 = vadd.f32 %v922, %v1130
  %1132 = vmatmul.f32.gmra.mxu0 %v415
  %v1133 = vpop.f32.mrf.mxu0
  %v1134 = vadd.f32 %v925, %v1133
  %1135 = vmatmul.f32.gmra.mxu0 %v419
  %v1136 = vpop.f32.mrf.mxu0
  %v1137 = vadd.f32 %v928, %v1136
  %1138 = vmatmul.f32.gmra.mxu0 %v423
  %v1139 = vpop.f32.mrf.mxu0
  %v1140 = vadd.f32 %v931, %v1139
  %1141 = vmatmul.f32.gmra.mxu0 %v427
  %v1142 = vpop.f32.mrf.mxu0
  %v1143 = vadd.f32 %v934, %v1142
  %1144 = vmatmul.f32.gmra.mxu0 %v431
  %v1145 = vpop.f32.mrf.mxu0
  %v1146 = vadd.f32 %v937, %v1145
  %1147 = vmatmul.f32.gmra.mxu0 %v435
  %v1148 = vpop.f32.mrf.mxu0
  %v1149 = vadd.f32 %v940, %v1148
  %1150 = vmatmul.f32.gmra.mxu0 %v439
  %v1151 = vpop.f32.mrf.mxu0
  %v1152 = vadd.f32 %v943, %v1151
  %1153 = vmatmul.f32.gmra.mxu0 %v443
  %v1154 = vpop.f32.mrf.mxu0
  %v1155 = vadd.f32 %v946, %v1154
  %1156 = vmatmul.f32.gmra.mxu0 %v447
  %v1157 = vpop.f32.mrf.mxu0
  %v1158 = vadd.f32 %v949, %v1157
  %1159 = vmatmul.f32.gmra.mxu0 %v451
  %v1160 = vpop.f32.mrf.mxu0
  %v1161 = vadd.f32 %v952, %v1160
  %1162 = vmatmul.f32.gmra.mxu0 %v455
  %v1163 = vpop.f32.mrf.mxu0
  %v1164 = vadd.f32 %v955, %v1163
  %1165 = vmatmul.f32.gmra.mxu0 %v459
  %v1166 = vpop.f32.mrf.mxu0
  %v1167 = vadd.f32 %v958, %v1166
  %1168 = vmatmul.f32.gmra.mxu0 %v463
  %v1169 = vpop.f32.mrf.mxu0
  %v1170 = vadd.f32 %v961, %v1169
  %1171 = vmatmul.f32.gmra.mxu0 %v467
  %v1172 = vpop.f32.mrf.mxu0
  %v1173 = vadd.f32 %v964, %v1172
  %1174 = vmatmul.f32.gmra.mxu0 %v471
  %v1175 = vpop.f32.mrf.mxu0
  %v1176 = vadd.f32 %v967, %v1175
  %1177 = vmatmul.f32.gmra.mxu0 %v475
  %v1178 = vpop.f32.mrf.mxu0
  %v1179 = vadd.f32 %v970, %v1178
  %1180 = vmatmul.f32.gmra.mxu0 %v479
  %v1181 = vpop.f32.mrf.mxu0
  %v1182 = vadd.f32 %v973, %v1181
  %1183 = vmatmul.f32.gmra.mxu0 %v483
  %v1184 = vpop.f32.mrf.mxu0
  %v1185 = vadd.f32 %v976, %v1184
  %1186 = vmatmul.f32.gmra.mxu0 %v487
  %v1187 = vpop.f32.mrf.mxu0
  %v1188 = vadd.f32 %v979, %v1187
  %1189 = vmatmul.f32.gmra.mxu0 %v491
  %v1190 = vpop.f32.mrf.mxu0
  %v1191 = vadd.f32 %v982, %v1190
  %1192 = vmatmul.f32.gmra.mxu0 %v495
  %v1193 = vpop.f32.mrf.mxu0
  %v1194 = vadd.f32 %v985, %v1193
  %1195 = vmatmul.f32.gmra.mxu0 %v499
  %v1196 = vpop.f32.mrf.mxu0
  %v1197 = vadd.f32 %v988, %v1196
  %1198 = vmatmul.f32.gmra.mxu0 %v503
  %v1199 = vpop.f32.mrf.mxu0
  %v1200 = vadd.f32 %v991, %v1199
  %1201 = vmatmul.f32.gmra.mxu0 %v507
  %v1202 = vpop.f32.mrf.mxu0
  %v1203 = vadd.f32 %v994, %v1202
  %1204 = vmatmul.f32.gmra.mxu0 %v511
  %v1205 = vpop.f32.mrf.mxu0
  %v1206 = vadd.f32 %v997, %v1205
  %1207 = vmatmul.f32.gmra.mxu0 %v515
  %v1208 = vpop.f32.mrf.mxu0
  %v1209 = vadd.f32 %v1000, %v1208
  %1210 = vmatmul.f32.gmra.mxu0 %v519
  %v1211 = vpop.f32.mrf.mxu0
  %v1212 = vadd.f32 %v1003, %v1211
  %1213 = vmatmul.f32.gmra.mxu0 %v523
  %v1214 = vpop.f32.mrf.mxu0
  %v1215 = vadd.f32 %v1006, %v1214
  %1216 = vmatmul.f32.gmra.mxu0 %v527
  %v1217 = vpop.f32.mrf.mxu0
  %v1218 = vadd.f32 %v1009, %v1217
  %1219 = vdwg.mxu0
  %1220 = vmatpush.msra.mxu0 %v592
  %1221 = vmatpush.msra.mxu0 %v591
  %1222 = vmatpush.msra.mxu0 %v590
  %1223 = vmatpush.msra.mxu0 %v589
  %1224 = vmatpush.msra.mxu0 %v588
  %1225 = vmatpush.msra.mxu0 %v587
  %1226 = vmatpush.msra.mxu0 %v586
  %1227 = vmatpush.msra.mxu0 %v585
  %1228 = vmatpush.msra.mxu0 %v584
  %1229 = vmatpush.msra.mxu0 %v583
  %1230 = vmatpush.msra.mxu0 %v582
  %1231 = vmatpush.msra.mxu0 %v581
  %1232 = vmatpush.msra.mxu0 %v580
  %1233 = vmatpush.msra.mxu0 %v579
  %1234 = vmatpush.msra.mxu0 %v578
  %1235 = vmatpush.msra.mxu0 %v577
  %1236 = vmatmul.f32.gmra.mxu0 %v276
  %v1237 = vpop.f32.mrf.mxu0
  %v1238 = vadd.f32 %v1029, %v1237
  %1239 = vmatmul.f32.gmra.mxu0 %v280
  %v1240 = vpop.f32.mrf.mxu0
  %v1241 = vadd.f32 %v1032, %v1240
  %1242 = vmatmul.f32.gmra.mxu0 %v284
  %v1243 = vpop.f32.mrf.mxu0
  %v1244 = vadd.f32 %v1035, %v1243
  %1245 = vmatmul.f32.gmra.mxu0 %v288
  %v1246 = vpop.f32.mrf.mxu0
  %v1247 = vadd.f32 %v1038, %v1246
  %1248 = vmatmul.f32.gmra.mxu0 %v292
  %v1249 = vpop.f32.mrf.mxu0
  %v1250 = vadd.f32 %v1041, %v1249
  %1251 = vmatmul.f32.gmra.mxu0 %v296
  %v1252 = vpop.f32.mrf.mxu0
  %v1253 = vadd.f32 %v1044, %v1252
  %1254 = vmatmul.f32.gmra.mxu0 %v300
  %v1255 = vpop.f32.mrf.mxu0
  %v1256 = vadd.f32 %v1047, %v1255
  %1257 = vmatmul.f32.gmra.mxu0 %v304
  %v1258 = vpop.f32.mrf.mxu0
  %v1259 = vadd.f32 %v1050, %v1258
  %1260 = vmatmul.f32.gmra.mxu0 %v308
  %v1261 = vpop.f32.mrf.mxu0
  %v1262 = vadd.f32 %v1053, %v1261
  %1263 = vmatmul.f32.gmra.mxu0 %v312
  %v1264 = vpop.f32.mrf.mxu0
  %v1265 = vadd.f32 %v1056, %v1264
  %1266 = vmatmul.f32.gmra.mxu0 %v316
  %v1267 = vpop.f32.mrf.mxu0
  %v1268 = vadd.f32 %v1059, %v1267
  %1269 = vmatmul.f32.gmra.mxu0 %v320
  %v1270 = vpop.f32.mrf.mxu0
  %v1271 = vadd.f32 %v1062, %v1270
  %1272 = vmatmul.f32.gmra.mxu0 %v324
  %v1273 = vpop.f32.mrf.mxu0
  %v1274 = vadd.f32 %v1065, %v1273
  %1275 = vmatmul.f32.gmra.mxu0 %v328
  %v1276 = vpop.f32.mrf.mxu0
  %v1277 = vadd.f32 %v1068, %v1276
  %1278 = vmatmul.f32.gmra.mxu0 %v332
  %v1279 = vpop.f32.mrf.mxu0
  %v1280 = vadd.f32 %v1071, %v1279
  %1281 = vmatmul.f32.gmra.mxu0 %v336
  %v1282 = vpop.f32.mrf.mxu0
  %v1283 = vadd.f32 %v1074, %v1282
  %1284 = vmatmul.f32.gmra.mxu0 %v340
  %v1285 = vpop.f32.mrf.mxu0
  %v1286 = vadd.f32 %v1077, %v1285
  %1287 = vmatmul.f32.gmra.mxu0 %v344
  %v1288 = vpop.f32.mrf.mxu0
  %v1289 = vadd.f32 %v1080, %v1288
  %1290 = vmatmul.f32.gmra.mxu0 %v348
  %v1291 = vpop.f32.mrf.mxu0
  %v1292 = vadd.f32 %v1083, %v1291
  %1293 = vmatmul.f32.gmra.mxu0 %v352
  %v1294 = vpop.f32.mrf.mxu0
  %v1295 = vadd.f32 %v1086, %v1294
  %1296 = vmatmul.f32.gmra.mxu0 %v356
  %v1297 = vpop.f32.mrf.mxu0
  %v1298 = vadd.f32 %v1089, %v1297
  %1299 = vmatmul.f32.gmra.mxu0 %v360
  %v1300 = vpop.f32.mrf.mxu0
  %v1301 = vadd.f32 %v1092, %v1300
  %1302 = vmatmul.f32.gmra.mxu0 %v364
  %v1303 = vpop.f32.mrf.mxu0
  %v1304 = vadd.f32 %v1095, %v1303
  %1305 = vmatmul.f32.gmra.mxu0 %v368
  %v1306 = vpop.f32.mrf.mxu0
  %v1307 = vadd.f32 %v1098, %v1306
  %1308 = vmatmul.f32.gmra.mxu0 %v372
  %v1309 = vpop.f32.mrf.mxu0
  %v1310 = vadd.f32 %v1101, %v1309
  %1311 = vmatmul.f32.gmra.mxu0 %v376
  %v1312 = vpop.f32.mrf.mxu0
  %v1313 = vadd.f32 %v1104, %v1312
  %1314 = vmatmul.f32.gmra.mxu0 %v380
  %v1315 = vpop.f32.mrf.mxu0
  %v1316 = vadd.f32 %v1107, %v1315
  %1317 = vmatmul.f32.gmra.mxu0 %v384
  %v1318 = vpop.f32.mrf.mxu0
  %v1319 = vadd.f32 %v1110, %v1318
  %1320 = vmatmul.f32.gmra.mxu0 %v388
  %v1321 = vpop.f32.mrf.mxu0
  %v1322 = vadd.f32 %v1113, %v1321
  %1323 = vmatmul.f32.gmra.mxu0 %v392
  %v1324 = vpop.f32.mrf.mxu0
  %v1325 = vadd.f32 %v1116, %v1324
  %1326 = vmatmul.f32.gmra.mxu0 %v396
  %v1327 = vpop.f32.mrf.mxu0
  %v1328 = vadd.f32 %v1119, %v1327
  %1329 = vmatmul.f32.gmra.mxu0 %v400
  %v1330 = vpop.f32.mrf.mxu0
  %v1331 = vadd.f32 %v1122, %v1330
  %1332 = vmatmul.f32.gmra.mxu0 %v404
  %v1333 = vpop.f32.mrf.mxu0
  %v1334 = vadd.f32 %v1125, %v1333
  %1335 = vmatmul.f32.gmra.mxu0 %v408
  %v1336 = vpop.f32.mrf.mxu0
  %v1337 = vadd.f32 %v1128, %v1336
  %1338 = vmatmul.f32.gmra.mxu0 %v412
  %v1339 = vpop.f32.mrf.mxu0
  %v1340 = vadd.f32 %v1131, %v1339
  %1341 = vmatmul.f32.gmra.mxu0 %v416
  %v1342 = vpop.f32.mrf.mxu0
  %v1343 = vadd.f32 %v1134, %v1342
  %1344 = vmatmul.f32.gmra.mxu0 %v420
  %v1345 = vpop.f32.mrf.mxu0
  %v1346 = vadd.f32 %v1137, %v1345
  %1347 = vmatmul.f32.gmra.mxu0 %v424
  %v1348 = vpop.f32.mrf.mxu0
  %v1349 = vadd.f32 %v1140, %v1348
  %1350 = vmatmul.f32.gmra.mxu0 %v428
  %v1351 = vpop.f32.mrf.mxu0
  %v1352 = vadd.f32 %v1143, %v1351
  %1353 = vmatmul.f32.gmra.mxu0 %v432
  %v1354 = vpop.f32.mrf.mxu0
  %v1355 = vadd.f32 %v1146, %v1354
  %1356 = vmatmul.f32.gmra.mxu0 %v436
  %v1357 = vpop.f32.mrf.mxu0
  %v1358 = vadd.f32 %v1149, %v1357
  %1359 = vmatmul.f32.gmra.mxu0 %v440
  %v1360 = vpop.f32.mrf.mxu0
  %v1361 = vadd.f32 %v1152, %v1360
  %1362 = vmatmul.f32.gmra.mxu0 %v444
  %v1363 = vpop.f32.mrf.mxu0
  %v1364 = vadd.f32 %v1155, %v1363
  %1365 = vmatmul.f32.gmra.mxu0 %v448
  %v1366 = vpop.f32.mrf.mxu0
  %v1367 = vadd.f32 %v1158, %v1366
  %1368 = vmatmul.f32.gmra.mxu0 %v452
  %v1369 = vpop.f32.mrf.mxu0
  %v1370 = vadd.f32 %v1161, %v1369
  %1371 = vmatmul.f32.gmra.mxu0 %v456
  %v1372 = vpop.f32.mrf.mxu0
  %v1373 = vadd.f32 %v1164, %v1372
  %1374 = vmatmul.f32.gmra.mxu0 %v460
  %v1375 = vpop.f32.mrf.mxu0
  %v1376 = vadd.f32 %v1167, %v1375
  %1377 = vmatmul.f32.gmra.mxu0 %v464
  %v1378 = vpop.f32.mrf.mxu0
  %v1379 = vadd.f32 %v1170, %v1378
  %1380 = vmatmul.f32.gmra.mxu0 %v468
  %v1381 = vpop.f32.mrf.mxu0
  %v1382 = vadd.f32 %v1173, %v1381
  %1383 = vmatmul.f32.gmra.mxu0 %v472
  %v1384 = vpop.f32.mrf.mxu0
  %v1385 = vadd.f32 %v1176, %v1384
  %1386 = vmatmul.f32.gmra.mxu0 %v476
  %v1387 = vpop.f32.mrf.mxu0
  %v1388 = vadd.f32 %v1179, %v1387
  %1389 = vmatmul.f32.gmra.mxu0 %v480
  %v1390 = vpop.f32.mrf.mxu0
  %v1391 = vadd.f32 %v1182, %v1390
  %1392 = vmatmul.f32.gmra.mxu0 %v484
  %v1393 = vpop.f32.mrf.mxu0
  %v1394 = vadd.f32 %v1185, %v1393
  %1395 = vmatmul.f32.gmra.mxu0 %v488
  %v1396 = vpop.f32.mrf.mxu0
  %v1397 = vadd.f32 %v1188, %v1396
  %1398 = vmatmul.f32.gmra.mxu0 %v492
  %v1399 = vpop.f32.mrf.mxu0
  %v1400 = vadd.f32 %v1191, %v1399
  %1401 = vmatmul.f32.gmra.mxu0 %v496
  %v1402 = vpop.f32.mrf.mxu0
  %v1403 = vadd.f32 %v1194, %v1402
  %1404 = vmatmul.f32.gmra.mxu0 %v500
  %v1405 = vpop.f32.mrf.mxu0
  %v1406 = vadd.f32 %v1197, %v1405
  %1407 = vmatmul.f32.gmra.mxu0 %v504
  %v1408 = vpop.f32.mrf.mxu0
  %v1409 = vadd.f32 %v1200, %v1408
  %1410 = vmatmul.f32.gmra.mxu0 %v508
  %v1411 = vpop.f32.mrf.mxu0
  %v1412 = vadd.f32 %v1203, %v1411
  %1413 = vmatmul.f32.gmra.mxu0 %v512
  %v1414 = vpop.f32.mrf.mxu0
  %v1415 = vadd.f32 %v1206, %v1414
  %1416 = vmatmul.f32.gmra.mxu0 %v516
  %v1417 = vpop.f32.mrf.mxu0
  %v1418 = vadd.f32 %v1209, %v1417
  %1419 = vmatmul.f32.gmra.mxu0 %v520
  %v1420 = vpop.f32.mrf.mxu0
  %v1421 = vadd.f32 %v1212, %v1420
  %1422 = vmatmul.f32.gmra.mxu0 %v524
  %v1423 = vpop.f32.mrf.mxu0
  %v1424 = vadd.f32 %v1215, %v1423
  %1425 = vmatmul.f32.gmra.mxu0 %v528
  %v1426 = vpop.f32.mrf.mxu0
  %v1427 = vadd.f32 %v1218, %v1426
  %1428 = vdwg.mxu0
  %vm1429 = vcmask 64512
  %v1430 = vsel %vm1429, %v1238, 0.0
  %v1431 = vsel %vm1429, %v1241, 0.0
  %v1432 = vadd.f32 %v1430, %v1431
  %v1433 = vsel %vm1429, %v1244, 0.0
  %v1434 = vadd.f32 %v1432, %v1433
  %v1435 = vsel %vm1429, %v1247, 0.0
  %v1436 = vadd.f32 %v1434, %v1435
  %v1437 = vsel %vm1429, %v1250, 0.0
  %v1438 = vadd.f32 %v1436, %v1437
  %v1439 = vsel %vm1429, %v1253, 0.0
  %v1440 = vadd.f32 %v1438, %v1439
  %v1441 = vsel %vm1429, %v1256, 0.0
  %v1442 = vadd.f32 %v1440, %v1441
  %v1443 = vsel %vm1429, %v1259, 0.0
  %v1444 = vadd.f32 %v1442, %v1443
  %v1445 = vsel %vm1429, %v1262, 0.0
  %v1446 = vadd.f32 %v1444, %v1445
  %v1447 = vsel %vm1429, %v1265, 0.0
  %v1448 = vadd.f32 %v1446, %v1447
  %v1449 = vsel %vm1429, %v1268, 0.0
  %v1450 = vadd.f32 %v1448, %v1449
  %v1451 = vsel %vm1429, %v1271, 0.0
  %v1452 = vadd.f32 %v1450, %v1451
  %v1453 = vsel %vm1429, %v1274, 0.0
  %v1454 = vadd.f32 %v1452, %v1453
  %v1455 = vsel %vm1429, %v1277, 0.0
  %v1456 = vadd.f32 %v1454, %v1455
  %v1457 = vsel %vm1429, %v1280, 0.0
  %v1458 = vadd.f32 %v1456, %v1457
  %v1459 = vsel %vm1429, %v1283, 0.0
  %v1460 = vadd.f32 %v1458, %v1459
  %v1461 = vsel %vm1429, %v1286, 0.0
  %v1462 = vadd.f32 %v1460, %v1461
  %v1463 = vsel %vm1429, %v1289, 0.0
  %v1464 = vadd.f32 %v1462, %v1463
  %v1465 = vsel %vm1429, %v1292, 0.0
  %v1466 = vadd.f32 %v1464, %v1465
  %v1467 = vsel %vm1429, %v1295, 0.0
  %v1468 = vadd.f32 %v1466, %v1467
  %v1469 = vsel %vm1429, %v1298, 0.0
  %v1470 = vadd.f32 %v1468, %v1469
  %v1471 = vsel %vm1429, %v1301, 0.0
  %v1472 = vadd.f32 %v1470, %v1471
  %v1473 = vsel %vm1429, %v1304, 0.0
  %v1474 = vadd.f32 %v1472, %v1473
  %v1475 = vsel %vm1429, %v1307, 0.0
  %v1476 = vadd.f32 %v1474, %v1475
  %v1477 = vsel %vm1429, %v1310, 0.0
  %v1478 = vadd.f32 %v1476, %v1477
  %v1479 = vsel %vm1429, %v1313, 0.0
  %v1480 = vadd.f32 %v1478, %v1479
  %v1481 = vsel %vm1429, %v1316, 0.0
  %v1482 = vadd.f32 %v1480, %v1481
  %v1483 = vsel %vm1429, %v1319, 0.0
  %v1484 = vadd.f32 %v1482, %v1483
  %v1485 = vsel %vm1429, %v1322, 0.0
  %v1486 = vadd.f32 %v1484, %v1485
  %v1487 = vsel %vm1429, %v1325, 0.0
  %v1488 = vadd.f32 %v1486, %v1487
  %v1489 = vsel %vm1429, %v1328, 0.0
  %v1490 = vadd.f32 %v1488, %v1489
  %v1491 = vsel %vm1429, %v1331, 0.0
  %v1492 = vadd.f32 %v1490, %v1491
  %v1493 = vsel %vm1429, %v1334, 0.0
  %v1494 = vadd.f32 %v1492, %v1493
  %v1495 = vsel %vm1429, %v1337, 0.0
  %v1496 = vadd.f32 %v1494, %v1495
  %v1497 = vsel %vm1429, %v1340, 0.0
  %v1498 = vadd.f32 %v1496, %v1497
  %v1499 = vsel %vm1429, %v1343, 0.0
  %v1500 = vadd.f32 %v1498, %v1499
  %v1501 = vsel %vm1429, %v1346, 0.0
  %v1502 = vadd.f32 %v1500, %v1501
  %v1503 = vsel %vm1429, %v1349, 0.0
  %v1504 = vadd.f32 %v1502, %v1503
  %v1505 = vsel %vm1429, %v1352, 0.0
  %v1506 = vadd.f32 %v1504, %v1505
  %v1507 = vsel %vm1429, %v1355, 0.0
  %v1508 = vadd.f32 %v1506, %v1507
  %v1509 = vsel %vm1429, %v1358, 0.0
  %v1510 = vadd.f32 %v1508, %v1509
  %v1511 = vsel %vm1429, %v1361, 0.0
  %v1512 = vadd.f32 %v1510, %v1511
  %v1513 = vsel %vm1429, %v1364, 0.0
  %v1514 = vadd.f32 %v1512, %v1513
  %v1515 = vsel %vm1429, %v1367, 0.0
  %v1516 = vadd.f32 %v1514, %v1515
  %v1517 = vsel %vm1429, %v1370, 0.0
  %v1518 = vadd.f32 %v1516, %v1517
  %v1519 = vsel %vm1429, %v1373, 0.0
  %v1520 = vadd.f32 %v1518, %v1519
  %v1521 = vsel %vm1429, %v1376, 0.0
  %v1522 = vadd.f32 %v1520, %v1521
  %v1523 = vsel %vm1429, %v1379, 0.0
  %v1524 = vadd.f32 %v1522, %v1523
  %v1525 = vsel %vm1429, %v1382, 0.0
  %v1526 = vadd.f32 %v1524, %v1525
  %v1527 = vsel %vm1429, %v1385, 0.0
  %v1528 = vadd.f32 %v1526, %v1527
  %v1529 = vsel %vm1429, %v1388, 0.0
  %v1530 = vadd.f32 %v1528, %v1529
  %v1531 = vsel %vm1429, %v1391, 0.0
  %v1532 = vadd.f32 %v1530, %v1531
  %v1533 = vsel %vm1429, %v1394, 0.0
  %v1534 = vadd.f32 %v1532, %v1533
  %v1535 = vsel %vm1429, %v1397, 0.0
  %v1536 = vadd.f32 %v1534, %v1535
  %v1537 = vsel %vm1429, %v1400, 0.0
  %v1538 = vadd.f32 %v1536, %v1537
  %v1539 = vsel %vm1429, %v1403, 0.0
  %v1540 = vadd.f32 %v1538, %v1539
  %v1541 = vsel %vm1429, %v1406, 0.0
  %v1542 = vadd.f32 %v1540, %v1541
  %v1543 = vsel %vm1429, %v1409, 0.0
  %v1544 = vadd.f32 %v1542, %v1543
  %v1545 = vsel %vm1429, %v1412, 0.0
  %v1546 = vadd.f32 %v1544, %v1545
  %v1547 = vsel %vm1429, %v1415, 0.0
  %v1548 = vadd.f32 %v1546, %v1547
  %v1549 = vsel %vm1429, %v1418, 0.0
  %v1550 = vadd.f32 %v1548, %v1549
  %v1551 = vsel %vm1429, %v1421, 0.0
  %v1552 = vadd.f32 %v1550, %v1551
  %v1553 = vsel %vm1429, %v1424, 0.0
  %v1554 = vadd.f32 %v1552, %v1553
  %v1555 = vsel %vm1429, %v1427, 0.0
  %v1556 = vadd.f32 %v1554, %v1555
  %v1557 = vrot.slane %v1556, 4
  %v1558 = vadd.f32 %v1556, %v1557
  %v1559 = vrot.slane %v1558, 2
  %v1560 = vadd.f32 %v1558, %v1559
  %v1561 = vrot.slane %v1560, 1
  %v1562 = vadd.f32 %v1560, %v1561
  %v1563 = vrcp.pop 512.0
  %v1564 = vmul.f32 512.0, %v1563
  %v1565 = vsub.f32 1.0, %v1564
  %v1566 = vmul.f32 %v1563, %v1565
  %v1567 = vadd.f32 %v1563, %v1566
  %vm1568 = vweird.f32 %v1563
  %v1569 = vsel %vm1568, %v1563, %v1567
  %v1570 = vmul.f32 %v1562, %v1569
  %v1571 = vsub.f32 %v1238, %v1570
  %v1572 = vsub.f32 %v1241, %v1570
  %v1573 = vsub.f32 %v1244, %v1570
  %v1574 = vsub.f32 %v1247, %v1570
  %v1575 = vsub.f32 %v1250, %v1570
  %v1576 = vsub.f32 %v1253, %v1570
  %v1577 = vsub.f32 %v1256, %v1570
  %v1578 = vsub.f32 %v1259, %v1570
  %v1579 = vsub.f32 %v1262, %v1570
  %v1580 = vsub.f32 %v1265, %v1570
  %v1581 = vsub.f32 %v1268, %v1570
  %v1582 = vsub.f32 %v1271, %v1570
  %v1583 = vsub.f32 %v1274, %v1570
  %v1584 = vsub.f32 %v1277, %v1570
  %v1585 = vsub.f32 %v1280, %v1570
  %v1586 = vsub.f32 %v1283, %v1570
  %v1587 = vsub.f32 %v1286, %v1570
  %v1588 = vsub.f32 %v1289, %v1570
  %v1589 = vsub.f32 %v1292, %v1570
  %v1590 = vsub.f32 %v1295, %v1570
  %v1591 = vsub.f32 %v1298, %v1570
  %v1592 = vsub.f32 %v1301, %v1570
  %v1593 = vsub.f32 %v1304, %v1570
  %v1594 = vsub.f32 %v1307, %v1570
  %v1595 = vsub.f32 %v1310, %v1570
  %v1596 = vsub.f32 %v1313, %v1570
  %v1597 = vsub.f32 %v1316, %v1570
  %v1598 = vsub.f32 %v1319, %v1570
  %v1599 = vsub.f32 %v1322, %v1570
  %v1600 = vsub.f32 %v1325, %v1570
  %v1601 = vsub.f32 %v1328, %v1570
  %v1602 = vsub.f32 %v1331, %v1570
  %v1603 = vsub.f32 %v1334, %v1570
  %v1604 = vsub.f32 %v1337, %v1570
  %v1605 = vsub.f32 %v1340, %v1570
  %v1606 = vsub.f32 %v1343, %v1570
  %v1607 = vsub.f32 %v1346, %v1570
  %v1608 = vsub.f32 %v1349, %v1570
  %v1609 = vsub.f32 %v1352, %v1570
  %v1610 = vsub.f32 %v1355, %v1570
  %v1611 = vsub.f32 %v1358, %v1570
  %v1612 = vsub.f32 %v1361, %v1570
  %v1613 = vsub.f32 %v1364, %v1570
  %v1614 = vsub.f32 %v1367, %v1570
  %v1615 = vsub.f32 %v1370, %v1570
  %v1616 = vsub.f32 %v1373, %v1570
  %v1617 = vsub.f32 %v1376, %v1570
  %v1618 = vsub.f32 %v1379, %v1570
  %v1619 = vsub.f32 %v1382, %v1570
  %v1620 = vsub.f32 %v1385, %v1570
  %v1621 = vsub.f32 %v1388, %v1570
  %v1622 = vsub.f32 %v1391, %v1570
  %v1623 = vsub.f32 %v1394, %v1570
  %v1624 = vsub.f32 %v1397, %v1570
  %v1625 = vsub.f32 %v1400, %v1570
  %v1626 = vsub.f32 %v1403, %v1570
  %v1627 = vsub.f32 %v1406, %v1570
  %v1628 = vsub.f32 %v1409, %v1570
  %v1629 = vsub.f32 %v1412, %v1570
  %v1630 = vsub.f32 %v1415, %v1570
  %v1631 = vsub.f32 %v1418, %v1570
  %v1632 = vsub.f32 %v1421, %v1570
  %v1633 = vsub.f32 %v1424, %v1570
  %v1634 = vsub.f32 %v1427, %v1570
  %v1635 = vmul.f32 %v1571, %v1571
  %v1636 = vmul.f32 %v1572, %v1572
  %v1637 = vmul.f32 %v1573, %v1573
  %v1638 = vmul.f32 %v1574, %v1574
  %v1639 = vmul.f32 %v1575, %v1575
  %v1640 = vmul.f32 %v1576, %v1576
  %v1641 = vmul.f32 %v1577, %v1577
  %v1642 = vmul.f32 %v1578, %v1578
  %v1643 = vmul.f32 %v1579, %v1579
  %v1644 = vmul.f32 %v1580, %v1580
  %v1645 = vmul.f32 %v1581, %v1581
  %v1646 = vmul.f32 %v1582, %v1582
  %v1647 = vmul.f32 %v1583, %v1583
  %v1648 = vmul.f32 %v1584, %v1584
  %v1649 = vmul.f32 %v1585, %v1585
  %v1650 = vmul.f32 %v1586, %v1586
  %v1651 = vmul.f32 %v1587, %v1587
  %v1652 = vmul.f32 %v1588, %v1588
  %v1653 = vmul.f32 %v1589, %v1589
  %v1654 = vmul.f32 %v1590, %v1590
  %v1655 = vmul.f32 %v1591, %v1591
  %v1656 = vmul.f32 %v1592, %v1592
  %v1657 = vmul.f32 %v1593, %v1593
  %v1658 = vmul.f32 %v1594, %v1594
  %v1659 = vmul.f32 %v1595, %v1595
  %v1660 = vmul.f32 %v1596, %v1596
  %v1661 = vmul.f32 %v1597, %v1597
  %v1662 = vmul.f32 %v1598, %v1598
  %v1663 = vmul.f32 %v1599, %v1599
  %v1664 = vmul.f32 %v1600, %v1600
  %v1665 = vmul.f32 %v1601, %v1601
  %v1666 = vmul.f32 %v1602, %v1602
  %v1667 = vmul.f32 %v1603, %v1603
  %v1668 = vmul.f32 %v1604, %v1604
  %v1669 = vmul.f32 %v1605, %v1605
  %v1670 = vmul.f32 %v1606, %v1606
  %v1671 = vmul.f32 %v1607, %v1607
  %v1672 = vmul.f32 %v1608, %v1608
  %v1673 = vmul.f32 %v1609, %v1609
  %v1674 = vmul.f32 %v1610, %v1610
  %v1675 = vmul.f32 %v1611, %v1611
  %v1676 = vmul.f32 %v1612, %v1612
  %v1677 = vmul.f32 %v1613, %v1613
  %v1678 = vmul.f32 %v1614, %v1614
  %v1679 = vmul.f32 %v1615, %v1615
  %v1680 = vmul.f32 %v1616, %v1616
  %v1681 = vmul.f32 %v1617, %v1617
  %v1682 = vmul.f32 %v1618, %v1618
  %v1683 = vmul.f32 %v1619, %v1619
  %v1684 = vmul.f32 %v1620, %v1620
  %v1685 = vmul.f32 %v1621, %v1621
  %v1686 = vmul.f32 %v1622, %v1622
  %v1687 = vmul.f32 %v1623, %v1623
  %v1688 = vmul.f32 %v1624, %v1624
  %v1689 = vmul.f32 %v1625, %v1625
  %v1690 = vmul.f32 %v1626, %v1626
  %v1691 = vmul.f32 %v1627, %v1627
  %v1692 = vmul.f32 %v1628, %v1628
  %v1693 = vmul.f32 %v1629, %v1629
  %v1694 = vmul.f32 %v1630, %v1630
  %v1695 = vmul.f32 %v1631, %v1631
  %v1696 = vmul.f32 %v1632, %v1632
  %v1697 = vmul.f32 %v1633, %v1633
  %v1698 = vmul.f32 %v1634, %v1634
  %v1699 = vsel %vm1429, %v1635, 0.0
  %v1700 = vsel %vm1429, %v1636, 0.0
  %v1701 = vadd.f32 %v1699, %v1700
  %v1702 = vsel %vm1429, %v1637, 0.0
  %v1703 = vadd.f32 %v1701, %v1702
  %v1704 = vsel %vm1429, %v1638, 0.0
  %v1705 = vadd.f32 %v1703, %v1704
  %v1706 = vsel %vm1429, %v1639, 0.0
  %v1707 = vadd.f32 %v1705, %v1706
  %v1708 = vsel %vm1429, %v1640, 0.0
  %v1709 = vadd.f32 %v1707, %v1708
  %v1710 = vsel %vm1429, %v1641, 0.0
  %v1711 = vadd.f32 %v1709, %v1710
  %v1712 = vsel %vm1429, %v1642, 0.0
  %v1713 = vadd.f32 %v1711, %v1712
  %v1714 = vsel %vm1429, %v1643, 0.0
  %v1715 = vadd.f32 %v1713, %v1714
  %v1716 = vsel %vm1429, %v1644, 0.0
  %v1717 = vadd.f32 %v1715, %v1716
  %v1718 = vsel %vm1429, %v1645, 0.0
  %v1719 = vadd.f32 %v1717, %v1718
  %v1720 = vsel %vm1429, %v1646, 0.0
  %v1721 = vadd.f32 %v1719, %v1720
  %v1722 = vsel %vm1429, %v1647, 0.0
  %v1723 = vadd.f32 %v1721, %v1722
  %v1724 = vsel %vm1429, %v1648, 0.0
  %v1725 = vadd.f32 %v1723, %v1724
  %v1726 = vsel %vm1429, %v1649, 0.0
  %v1727 = vadd.f32 %v1725, %v1726
  %v1728 = vsel %vm1429, %v1650, 0.0
  %v1729 = vadd.f32 %v1727, %v1728
  %v1730 = vsel %vm1429, %v1651, 0.0
  %v1731 = vadd.f32 %v1729, %v1730
  %v1732 = vsel %vm1429, %v1652, 0.0
  %v1733 = vadd.f32 %v1731, %v1732
  %v1734 = vsel %vm1429, %v1653, 0.0
  %v1735 = vadd.f32 %v1733, %v1734
  %v1736 = vsel %vm1429, %v1654, 0.0
  %v1737 = vadd.f32 %v1735, %v1736
  %v1738 = vsel %vm1429, %v1655, 0.0
  %v1739 = vadd.f32 %v1737, %v1738
  %v1740 = vsel %vm1429, %v1656, 0.0
  %v1741 = vadd.f32 %v1739, %v1740
  %v1742 = vsel %vm1429, %v1657, 0.0
  %v1743 = vadd.f32 %v1741, %v1742
  %v1744 = vsel %vm1429, %v1658, 0.0
  %v1745 = vadd.f32 %v1743, %v1744
  %v1746 = vsel %vm1429, %v1659, 0.0
  %v1747 = vadd.f32 %v1745, %v1746
  %v1748 = vsel %vm1429, %v1660, 0.0
  %v1749 = vadd.f32 %v1747, %v1748
  %v1750 = vsel %vm1429, %v1661, 0.0
  %v1751 = vadd.f32 %v1749, %v1750
  %v1752 = vsel %vm1429, %v1662, 0.0
  %v1753 = vadd.f32 %v1751, %v1752
  %v1754 = vsel %vm1429, %v1663, 0.0
  %v1755 = vadd.f32 %v1753, %v1754
  %v1756 = vsel %vm1429, %v1664, 0.0
  %v1757 = vadd.f32 %v1755, %v1756
  %v1758 = vsel %vm1429, %v1665, 0.0
  %v1759 = vadd.f32 %v1757, %v1758
  %v1760 = vsel %vm1429, %v1666, 0.0
  %v1761 = vadd.f32 %v1759, %v1760
  %v1762 = vsel %vm1429, %v1667, 0.0
  %v1763 = vadd.f32 %v1761, %v1762
  %v1764 = vsel %vm1429, %v1668, 0.0
  %v1765 = vadd.f32 %v1763, %v1764
  %v1766 = vsel %vm1429, %v1669, 0.0
  %v1767 = vadd.f32 %v1765, %v1766
  %v1768 = vsel %vm1429, %v1670, 0.0
  %v1769 = vadd.f32 %v1767, %v1768
  %v1770 = vsel %vm1429, %v1671, 0.0
  %v1771 = vadd.f32 %v1769, %v1770
  %v1772 = vsel %vm1429, %v1672, 0.0
  %v1773 = vadd.f32 %v1771, %v1772
  %v1774 = vsel %vm1429, %v1673, 0.0
  %v1775 = vadd.f32 %v1773, %v1774
  %v1776 = vsel %vm1429, %v1674, 0.0
  %v1777 = vadd.f32 %v1775, %v1776
  %v1778 = vsel %vm1429, %v1675, 0.0
  %v1779 = vadd.f32 %v1777, %v1778
  %v1780 = vsel %vm1429, %v1676, 0.0
  %v1781 = vadd.f32 %v1779, %v1780
  %v1782 = vsel %vm1429, %v1677, 0.0
  %v1783 = vadd.f32 %v1781, %v1782
  %v1784 = vsel %vm1429, %v1678, 0.0
  %v1785 = vadd.f32 %v1783, %v1784
  %v1786 = vsel %vm1429, %v1679, 0.0
  %v1787 = vadd.f32 %v1785, %v1786
  %v1788 = vsel %vm1429, %v1680, 0.0
  %v1789 = vadd.f32 %v1787, %v1788
  %v1790 = vsel %vm1429, %v1681, 0.0
  %v1791 = vadd.f32 %v1789, %v1790
  %v1792 = vsel %vm1429, %v1682, 0.0
  %v1793 = vadd.f32 %v1791, %v1792
  %v1794 = vsel %vm1429, %v1683, 0.0
  %v1795 = vadd.f32 %v1793, %v1794
  %v1796 = vsel %vm1429, %v1684, 0.0
  %v1797 = vadd.f32 %v1795, %v1796
  %v1798 = vsel %vm1429, %v1685, 0.0
  %v1799 = vadd.f32 %v1797, %v1798
  %v1800 = vsel %vm1429, %v1686, 0.0
  %v1801 = vadd.f32 %v1799, %v1800
  %v1802 = vsel %vm1429, %v1687, 0.0
  %v1803 = vadd.f32 %v1801, %v1802
  %v1804 = vsel %vm1429, %v1688, 0.0
  %v1805 = vadd.f32 %v1803, %v1804
  %v1806 = vsel %vm1429, %v1689, 0.0
  %v1807 = vadd.f32 %v1805, %v1806
  %v1808 = vsel %vm1429, %v1690, 0.0
  %v1809 = vadd.f32 %v1807, %v1808
  %v1810 = vsel %vm1429, %v1691, 0.0
  %v1811 = vadd.f32 %v1809, %v1810
  %v1812 = vsel %vm1429, %v1692, 0.0
  %v1813 = vadd.f32 %v1811, %v1812
  %v1814 = vsel %vm1429, %v1693, 0.0
  %v1815 = vadd.f32 %v1813, %v1814
  %v1816 = vsel %vm1429, %v1694, 0.0
  %v1817 = vadd.f32 %v1815, %v1816
  %v1818 = vsel %vm1429, %v1695, 0.0
  %v1819 = vadd.f32 %v1817, %v1818
  %v1820 = vsel %vm1429, %v1696, 0.0
  %v1821 = vadd.f32 %v1819, %v1820
  %v1822 = vsel %vm1429, %v1697, 0.0
  %v1823 = vadd.f32 %v1821, %v1822
  %v1824 = vsel %vm1429, %v1698, 0.0
  %v1825 = vadd.f32 %v1823, %v1824
  %v1826 = vrot.slane %v1825, 4
  %v1827 = vadd.f32 %v1825, %v1826
  %v1828 = vrot.slane %v1827, 2
  %v1829 = vadd.f32 %v1827, %v1828
  %v1830 = vrot.slane %v1829, 1
  %v1831 = vadd.f32 %v1829, %v1830
  %v1832 = vmul.f32 %v1831, %v1569
  %v1833 = vadd.f32 %v1832, 1e-05
  %v1834 = vrsqrt.pop %v1833
  %v1835 = vmul.f32 %v1834, %v1833
  %v1836 = vmul.f32 %v1835, %v1834
  %v1837 = vmul.f32 0.5, %v1836
  %v1838 = vsub.f32 1.5, %v1837
  %v1839 = vmul.f32 %v1834, %v1838
  %vm1840 = vweird.f32 %v1833
  %vm1841 = vweird.f32 %v1834
  %vm1842 = vmor %vm1840, %vm1841
  %v1843 = vsel %vm1842, %v1834, %v1839
  %v1844 = vld [vmem:[%s2] sm:$0x1]
  %v1845 = vmul.f32 %v1843, %v1844
  %v1846 = vperm.slane %v1845, 0
  %v1847 = vmul.f32 %v1571, %v1846
  %v1848 = vmul.f32 %v1572, %v1846
  %v1849 = vmul.f32 %v1573, %v1846
  %v1850 = vmul.f32 %v1574, %v1846
  %v1851 = vmul.f32 %v1575, %v1846
  %v1852 = vmul.f32 %v1576, %v1846
  %v1853 = vmul.f32 %v1577, %v1846
  %v1854 = vmul.f32 %v1578, %v1846
  %v1855 = vmul.f32 %v1579, %v1846
  %v1856 = vmul.f32 %v1580, %v1846
  %v1857 = vmul.f32 %v1581, %v1846
  %v1858 = vmul.f32 %v1582, %v1846
  %v1859 = vmul.f32 %v1583, %v1846
  %v1860 = vmul.f32 %v1584, %v1846
  %v1861 = vmul.f32 %v1585, %v1846
  %v1862 = vmul.f32 %v1586, %v1846
  %v1863 = vmul.f32 %v1587, %v1846
  %v1864 = vmul.f32 %v1588, %v1846
  %v1865 = vmul.f32 %v1589, %v1846
  %v1866 = vmul.f32 %v1590, %v1846
  %v1867 = vmul.f32 %v1591, %v1846
  %v1868 = vmul.f32 %v1592, %v1846
  %v1869 = vmul.f32 %v1593, %v1846
  %v1870 = vmul.f32 %v1594, %v1846
  %v1871 = vmul.f32 %v1595, %v1846
  %v1872 = vmul.f32 %v1596, %v1846
  %v1873 = vmul.f32 %v1597, %v1846
  %v1874 = vmul.f32 %v1598, %v1846
  %v1875 = vmul.f32 %v1599, %v1846
  %v1876 = vmul.f32 %v1600, %v1846
  %v1877 = vmul.f32 %v1601, %v1846
  %v1878 = vmul.f32 %v1602, %v1846
  %v1879 = vmul.f32 %v1603, %v1846
  %v1880 = vmul.f32 %v1604, %v1846
  %v1881 = vmul.f32 %v1605, %v1846
  %v1882 = vmul.f32 %v1606, %v1846
  %v1883 = vmul.f32 %v1607, %v1846
  %v1884 = vmul.f32 %v1608, %v1846
  %v1885 = vmul.f32 %v1609, %v1846
  %v1886 = vmul.f32 %v1610, %v1846
  %v1887 = vmul.f32 %v1611, %v1846
  %v1888 = vmul.f32 %v1612, %v1846
  %v1889 = vmul.f32 %v1613, %v1846
  %v1890 = vmul.f32 %v1614, %v1846
  %v1891 = vmul.f32 %v1615, %v1846
  %v1892 = vmul.f32 %v1616, %v1846
  %v1893 = vmul.f32 %v1617, %v1846
  %v1894 = vmul.f32 %v1618, %v1846
  %v1895 = vmul.f32 %v1619, %v1846
  %v1896 = vmul.f32 %v1620, %v1846
  %v1897 = vmul.f32 %v1621, %v1846
  %v1898 = vmul.f32 %v1622, %v1846
  %v1899 = vmul.f32 %v1623, %v1846
  %v1900 = vmul.f32 %v1624, %v1846
  %v1901 = vmul.f32 %v1625, %v1846
  %v1902 = vmul.f32 %v1626, %v1846
  %v1903 = vmul.f32 %v1627, %v1846
  %v1904 = vmul.f32 %v1628, %v1846
  %v1905 = vmul.f32 %v1629, %v1846
  %v1906 = vmul.f32 %v1630, %v1846
  %v1907 = vmul.f32 %v1631, %v1846
  %v1908 = vmul.f32 %v1632, %v1846
  %v1909 = vmul.f32 %v1633, %v1846
  %v1910 = vmul.f32 %v1634, %v1846
  %v1911 = vld [vmem:[%s3] sm:$0x1]
  %v1913 = vperm.slane %v1911, 0
  %v1915 = vadd.f32 %v1847, %v1913
  %v1916 = vadd.f32 %v1848, %v1913
  %v1917 = vadd.f32 %v1849, %v1913
  %v1918 = vadd.f32 %v1850, %v1913
  %v1919 = vadd.f32 %v1851, %v1913
  %v1920 = vadd.f32 %v1852, %v1913
  %v1921 = vadd.f32 %v1853, %v1913
  %v1922 = vadd.f32 %v1854, %v1913
  %v1923 = vadd.f32 %v1855, %v1913
  %v1924 = vadd.f32 %v1856, %v1913
  %v1925 = vadd.f32 %v1857, %v1913
  %v1926 = vadd.f32 %v1858, %v1913
  %v1927 = vadd.f32 %v1859, %v1913
  %v1928 = vadd.f32 %v1860, %v1913
  %v1929 = vadd.f32 %v1861, %v1913
  %v1930 = vadd.f32 %v1862, %v1913
  %v1931 = vadd.f32 %v1863, %v1913
  %v1932 = vadd.f32 %v1864, %v1913
  %v1933 = vadd.f32 %v1865, %v1913
  %v1934 = vadd.f32 %v1866, %v1913
  %v1935 = vadd.f32 %v1867, %v1913
  %v1936 = vadd.f32 %v1868, %v1913
  %v1937 = vadd.f32 %v1869, %v1913
  %v1938 = vadd.f32 %v1870, %v1913
  %v1939 = vadd.f32 %v1871, %v1913
  %v1940 = vadd.f32 %v1872, %v1913
  %v1941 = vadd.f32 %v1873, %v1913
  %v1942 = vadd.f32 %v1874, %v1913
  %v1943 = vadd.f32 %v1875, %v1913
  %v1944 = vadd.f32 %v1876, %v1913
  %v1945 = vadd.f32 %v1877, %v1913
  %v1946 = vadd.f32 %v1878, %v1913
  %v1947 = vadd.f32 %v1879, %v1913
  %v1948 = vadd.f32 %v1880, %v1913
  %v1949 = vadd.f32 %v1881, %v1913
  %v1950 = vadd.f32 %v1882, %v1913
  %v1951 = vadd.f32 %v1883, %v1913
  %v1952 = vadd.f32 %v1884, %v1913
  %v1953 = vadd.f32 %v1885, %v1913
  %v1954 = vadd.f32 %v1886, %v1913
  %v1955 = vadd.f32 %v1887, %v1913
  %v1956 = vadd.f32 %v1888, %v1913
  %v1957 = vadd.f32 %v1889, %v1913
  %v1958 = vadd.f32 %v1890, %v1913
  %v1959 = vadd.f32 %v1891, %v1913
  %v1960 = vadd.f32 %v1892, %v1913
  %v1961 = vadd.f32 %v1893, %v1913
  %v1962 = vadd.f32 %v1894, %v1913
  %v1963 = vadd.f32 %v1895, %v1913
  %v1964 = vadd.f32 %v1896, %v1913
  %v1965 = vadd.f32 %v1897, %v1913
  %v1966 = vadd.f32 %v1898, %v1913
  %v1967 = vadd.f32 %v1899, %v1913
  %v1968 = vadd.f32 %v1900, %v1913
  %v1969 = vadd.f32 %v1901, %v1913
  %v1970 = vadd.f32 %v1902, %v1913
  %v1971 = vadd.f32 %v1903, %v1913
  %v1972 = vadd.f32 %v1904, %v1913
  %v1973 = vadd.f32 %v1905, %v1913
  %v1974 = vadd.f32 %v1906, %v1913
  %v1975 = vadd.f32 %v1907, %v1913
  %v1976 = vadd.f32 %v1908, %v1913
  %v1977 = vadd.f32 %v1909, %v1913
  %v1978 = vadd.f32 %v1910, %v1913
  %1979 = vst.msk [vmem:[%s4] sm:$0xff] %vm1429, %v1915
  %1980 = vst.msk [vmem:[%s4 + $0x8] sm:$0xff] %vm1429, %v1916
  %1981 = vst.msk [vmem:[%s4 + $0x10] sm:$0xff] %vm1429, %v1917
  %1982 = vst.msk [vmem:[%s4 + $0x18] sm:$0xff] %vm1429, %v1918
  %1983 = vst.msk [vmem:[%s4 + $0x20] sm:$0xff] %vm1429, %v1919
  %1984 = vst.msk [vmem:[%s4 + $0x28] sm:$0xff] %vm1429, %v1920
  %1985 = vst.msk [vmem:[%s4 + $0x30] sm:$0xff] %vm1429, %v1921
  %1986 = vst.msk [vmem:[%s4 + $0x38] sm:$0xff] %vm1429, %v1922
  %1987 = vst.msk [vmem:[%s4 + $0x40] sm:$0xff] %vm1429, %v1923
  %1988 = vst.msk [vmem:[%s4 + $0x48] sm:$0xff] %vm1429, %v1924
  %1989 = vst.msk [vmem:[%s4 + $0x50] sm:$0xff] %vm1429, %v1925
  %1990 = vst.msk [vmem:[%s4 + $0x58] sm:$0xff] %vm1429, %v1926
  %1991 = vst.msk [vmem:[%s4 + $0x60] sm:$0xff] %vm1429, %v1927
  %1992 = vst.msk [vmem:[%s4 + $0x68] sm:$0xff] %vm1429, %v1928
  %1993 = vst.msk [vmem:[%s4 + $0x70] sm:$0xff] %vm1429, %v1929
  %1994 = vst.msk [vmem:[%s4 + $0x78] sm:$0xff] %vm1429, %v1930
  %1995 = vst.msk [vmem:[%s4 + $0x80] sm:$0xff] %vm1429, %v1931
  %1996 = vst.msk [vmem:[%s4 + $0x88] sm:$0xff] %vm1429, %v1932
  %1997 = vst.msk [vmem:[%s4 + $0x90] sm:$0xff] %vm1429, %v1933
  %1998 = vst.msk [vmem:[%s4 + $0x98] sm:$0xff] %vm1429, %v1934
  %1999 = vst.msk [vmem:[%s4 + $0xa0] sm:$0xff] %vm1429, %v1935
  %2000 = vst.msk [vmem:[%s4 + $0xa8] sm:$0xff] %vm1429, %v1936
  %2001 = vst.msk [vmem:[%s4 + $0xb0] sm:$0xff] %vm1429, %v1937
  %2002 = vst.msk [vmem:[%s4 + $0xb8] sm:$0xff] %vm1429, %v1938
  %2003 = vst.msk [vmem:[%s4 + $0xc0] sm:$0xff] %vm1429, %v1939
  %2004 = vst.msk [vmem:[%s4 + $0xc8] sm:$0xff] %vm1429, %v1940
  %2005 = vst.msk [vmem:[%s4 + $0xd0] sm:$0xff] %vm1429, %v1941
  %2006 = vst.msk [vmem:[%s4 + $0xd8] sm:$0xff] %vm1429, %v1942
  %2007 = vst.msk [vmem:[%s4 + $0xe0] sm:$0xff] %vm1429, %v1943
  %2008 = vst.msk [vmem:[%s4 + $0xe8] sm:$0xff] %vm1429, %v1944
  %2009 = vst.msk [vmem:[%s4 + $0xf0] sm:$0xff] %vm1429, %v1945
  %2010 = vst.msk [vmem:[%s4 + $0xf8] sm:$0xff] %vm1429, %v1946
  %2011 = vst.msk [vmem:[%s4 + $0x100] sm:$0xff] %vm1429, %v1947
  %2012 = vst.msk [vmem:[%s4 + $0x108] sm:$0xff] %vm1429, %v1948
  %2013 = vst.msk [vmem:[%s4 + $0x110] sm:$0xff] %vm1429, %v1949
  %2014 = vst.msk [vmem:[%s4 + $0x118] sm:$0xff] %vm1429, %v1950
  %2015 = vst.msk [vmem:[%s4 + $0x120] sm:$0xff] %vm1429, %v1951
  %2016 = vst.msk [vmem:[%s4 + $0x128] sm:$0xff] %vm1429, %v1952
  %2017 = vst.msk [vmem:[%s4 + $0x130] sm:$0xff] %vm1429, %v1953
  %2018 = vst.msk [vmem:[%s4 + $0x138] sm:$0xff] %vm1429, %v1954
  %2019 = vst.msk [vmem:[%s4 + $0x140] sm:$0xff] %vm1429, %v1955
  %2020 = vst.msk [vmem:[%s4 + $0x148] sm:$0xff] %vm1429, %v1956
  %2021 = vst.msk [vmem:[%s4 + $0x150] sm:$0xff] %vm1429, %v1957
  %2022 = vst.msk [vmem:[%s4 + $0x158] sm:$0xff] %vm1429, %v1958
  %2023 = vst.msk [vmem:[%s4 + $0x160] sm:$0xff] %vm1429, %v1959
  %2024 = vst.msk [vmem:[%s4 + $0x168] sm:$0xff] %vm1429, %v1960
  %2025 = vst.msk [vmem:[%s4 + $0x170] sm:$0xff] %vm1429, %v1961
  %2026 = vst.msk [vmem:[%s4 + $0x178] sm:$0xff] %vm1429, %v1962
  %2027 = vst.msk [vmem:[%s4 + $0x180] sm:$0xff] %vm1429, %v1963
  %2028 = vst.msk [vmem:[%s4 + $0x188] sm:$0xff] %vm1429, %v1964
  %2029 = vst.msk [vmem:[%s4 + $0x190] sm:$0xff] %vm1429, %v1965
  %2030 = vst.msk [vmem:[%s4 + $0x198] sm:$0xff] %vm1429, %v1966
  %2031 = vst.msk [vmem:[%s4 + $0x1a0] sm:$0xff] %vm1429, %v1967
  %2032 = vst.msk [vmem:[%s4 + $0x1a8] sm:$0xff] %vm1429, %v1968
  %2033 = vst.msk [vmem:[%s4 + $0x1b0] sm:$0xff] %vm1429, %v1969
  %2034 = vst.msk [vmem:[%s4 + $0x1b8] sm:$0xff] %vm1429, %v1970
  %2035 = vst.msk [vmem:[%s4 + $0x1c0] sm:$0xff] %vm1429, %v1971
  %2036 = vst.msk [vmem:[%s4 + $0x1c8] sm:$0xff] %vm1429, %v1972
  %2037 = vst.msk [vmem:[%s4 + $0x1d0] sm:$0xff] %vm1429, %v1973
  %2038 = vst.msk [vmem:[%s4 + $0x1d8] sm:$0xff] %vm1429, %v1974
  %2039 = vst.msk [vmem:[%s4 + $0x1e0] sm:$0xff] %vm1429, %v1975
  %2040 = vst.msk [vmem:[%s4 + $0x1e8] sm:$0xff] %vm1429, %v1976
  %2041 = vst.msk [vmem:[%s4 + $0x1f0] sm:$0xff] %vm1429, %v1977
  %2042 = vst.msk [vmem:[%s4 + $0x1f8] sm:$0xff] %vm1429, %v1978
  // Predicated region
  $region18: #{unet_forward.18} parent=0 // pred_check
    _
  $region19: #{unet_forward.18} parent=0 // pred_check_branch
    %2044 = sbr.rel (0) target = $region21
  $region20: #{unet_forward.18} parent=0 // pred_region
    _
  $region21: #{unet_forward.18} parent=0 // pred_fallthru
    _
  // Predicated region
  $region22: #{unet_forward.18} parent=0 // pred_check
    _
  $region23: #{unet_forward.18} parent=0 // pred_check_branch
    %2046 = sbr.rel (0) target = $region25
  $region24: #{unet_forward.18} parent=0 // pred_region
    _
  $region25: #{unet_forward.18} parent=0 // pred_fallthru
    _

// kernel: unet_forward.19
$region0: #{unet_forward.19}
  #allocation0 [shape = 'u32[]', space=smem, size = 0x4, offset = 0x4, fixed_abs, tag = 'smem constant byte address 0x4 - core index']
  #allocation1 [shape = 'u32[72,128]{1,0:T(1,128)}', space=vmem, size = 0x9000, scoped, tag = 'internal scratch']
  %s0 = inlined_call_operand.vmem [shape: f32[2048,256], index: 0, kind: input, shape index: {}]
  %s1 = inlined_call_operand.vmem [shape: f32[256,2], index: 1, kind: input, shape index: {}]
  %s2 = inlined_call_operand.vmem [shape: f32[1,2], index: 2, kind: input, shape index: {}]
  %s3 = inlined_call_operand.vmem [shape: f32[2048,2], index: 3, kind: output, shape index: {}]
  %s4 = sld [smem:[#allocation0]]
  $region22: #{unet_forward.19} parent=0
    _
  %s6 = ssub.s32 1, %s4
  %s7 = scalar_select 0, %s6, %s4
  // Predicated region
  $region2: #{unet_forward.19} parent=0 // pred_check
    _
  $region3: #{unet_forward.19} parent=0 // pred_check_branch
    %9 = sbr.rel (0) target = $region5
  $region4: #{unet_forward.19} parent=0 // pred_region
    _
  $region5: #{unet_forward.19} parent=0 // pred_fallthru
    _
  // Predicated region
  $region6: #{unet_forward.19} parent=0 // pred_check
    _
  $region7: #{unet_forward.19} parent=0 // pred_check_branch
    %11 = sbr.rel (0) target = $region9
  $region8: #{unet_forward.19} parent=0 // pred_region
    _
  $region9: #{unet_forward.19} parent=0 // pred_fallthru
    _
  // Predicated region
  $region10: #{unet_forward.19} parent=0 // pred_check
    _
  $region11: #{unet_forward.19} parent=0 // pred_check_branch
    %13 = sbr.rel (0) target = $region13
  $region12: #{unet_forward.19} parent=0 // pred_region
    _
  $region13: #{unet_forward.19} parent=0 // pred_fallthru
    _
  %v14 = vld [vmem:[%s0] sm:$0xff]
  %v15 = vld [vmem:[%s0 + $0x8] sm:$0xff]
  %v16 = vld [vmem:[%s0 + $0x10] sm:$0xff]
  %v17 = vld [vmem:[%s0 + $0x18] sm:$0xff]
  %v18 = vld [vmem:[%s0 + $0x20] sm:$0xff]
  %v19 = vld [vmem:[%s0 + $0x28] sm:$0xff]
  %v20 = vld [vmem:[%s0 + $0x30] sm:$0xff]
  %v21 = vld [vmem:[%s0 + $0x38] sm:$0xff]
  %v22 = vld [vmem:[%s0 + $0x40] sm:$0xff]
  %v23 = vld [vmem:[%s0 + $0x48] sm:$0xff]
  %v24 = vld [vmem:[%s0 + $0x50] sm:$0xff]
  %v25 = vld [vmem:[%s0 + $0x58] sm:$0xff]
  %v26 = vld [vmem:[%s0 + $0x60] sm:$0xff]
  %v27 = vld [vmem:[%s0 + $0x68] sm:$0xff]
  %v28 = vld [vmem:[%s0 + $0x70] sm:$0xff]
  %v29 = vld [vmem:[%s0 + $0x78] sm:$0xff]
  %v30 = vld [vmem:[%s0 + $0x80] sm:$0xff]
  %v31 = vld [vmem:[%s0 + $0x88] sm:$0xff]
  %v32 = vld [vmem:[%s0 + $0x90] sm:$0xff]
  %v33 = vld [vmem:[%s0 + $0x98] sm:$0xff]
  %v34 = vld [vmem:[%s0 + $0xa0] sm:$0xff]
  %v35 = vld [vmem:[%s0 + $0xa8] sm:$0xff]
  %v36 = vld [vmem:[%s0 + $0xb0] sm:$0xff]
  %v37 = vld [vmem:[%s0 + $0xb8] sm:$0xff]
  %v38 = vld [vmem:[%s0 + $0xc0] sm:$0xff]
  %v39 = vld [vmem:[%s0 + $0xc8] sm:$0xff]
  %v40 = vld [vmem:[%s0 + $0xd0] sm:$0xff]
  %v41 = vld [vmem:[%s0 + $0xd8] sm:$0xff]
  %v42 = vld [vmem:[%s0 + $0xe0] sm:$0xff]
  %v43 = vld [vmem:[%s0 + $0xe8] sm:$0xff]
  %v44 = vld [vmem:[%s0 + $0xf0] sm:$0xff]
  %v45 = vld [vmem:[%s0 + $0xf8] sm:$0xff]
  %v46 = vld [vmem:[%s0 + $0x100] sm:$0xff]
  %v47 = vld [vmem:[%s0 + $0x108] sm:$0xff]
  %v48 = vld [vmem:[%s0 + $0x110] sm:$0xff]
  %v49 = vld [vmem:[%s0 + $0x118] sm:$0xff]
  %v50 = vld [vmem:[%s0 + $0x120] sm:$0xff]
  %v51 = vld [vmem:[%s0 + $0x128] sm:$0xff]
  %v52 = vld [vmem:[%s0 + $0x130] sm:$0xff]
  %v53 = vld [vmem:[%s0 + $0x138] sm:$0xff]
  %v54 = vld [vmem:[%s0 + $0x140] sm:$0xff]
  %v55 = vld [vmem:[%s0 + $0x148] sm:$0xff]
  %v56 = vld [vmem:[%s0 + $0x150] sm:$0xff]
  %v57 = vld [vmem:[%s0 + $0x158] sm:$0xff]
  %v58 = vld [vmem:[%s0 + $0x160] sm:$0xff]
  %v59 = vld [vmem:[%s0 + $0x168] sm:$0xff]
  %v60 = vld [vmem:[%s0 + $0x170] sm:$0xff]
  %v61 = vld [vmem:[%s0 + $0x178] sm:$0xff]
  %v62 = vld [vmem:[%s0 + $0x180] sm:$0xff]
  %v63 = vld [vmem:[%s0 + $0x188] sm:$0xff]
  %v64 = vld [vmem:[%s0 + $0x190] sm:$0xff]
  %v65 = vld [vmem:[%s0 + $0x198] sm:$0xff]
  %v66 = vld [vmem:[%s0 + $0x1a0] sm:$0xff]
  %v67 = vld [vmem:[%s0 + $0x1a8] sm:$0xff]
  %v68 = vld [vmem:[%s0 + $0x1b0] sm:$0xff]
  %v69 = vld [vmem:[%s0 + $0x1b8] sm:$0xff]
  %v70 = vld [vmem:[%s0 + $0x1c0] sm:$0xff]
  %v71 = vld [vmem:[%s0 + $0x1c8] sm:$0xff]
  %v72 = vld [vmem:[%s0 + $0x1d0] sm:$0xff]
  %v73 = vld [vmem:[%s0 + $0x1d8] sm:$0xff]
  %v74 = vld [vmem:[%s0 + $0x1e0] sm:$0xff]
  %v75 = vld [vmem:[%s0 + $0x1e8] sm:$0xff]
  %v76 = vld [vmem:[%s0 + $0x1f0] sm:$0xff]
  %v77 = vld [vmem:[%s0 + $0x1f8] sm:$0xff]
  %v78 = vld [vmem:[%s0 + $0x200] sm:$0xff]
  %v79 = vld [vmem:[%s0 + $0x208] sm:$0xff]
  %v80 = vld [vmem:[%s0 + $0x210] sm:$0xff]
  %v81 = vld [vmem:[%s0 + $0x218] sm:$0xff]
  %v82 = vld [vmem:[%s0 + $0x220] sm:$0xff]
  %v83 = vld [vmem:[%s0 + $0x228] sm:$0xff]
  %v84 = vld [vmem:[%s0 + $0x230] sm:$0xff]
  %v85 = vld [vmem:[%s0 + $0x238] sm:$0xff]
  %v86 = vld [vmem:[%s0 + $0x240] sm:$0xff]
  %v87 = vld [vmem:[%s0 + $0x248] sm:$0xff]
  %v88 = vld [vmem:[%s0 + $0x250] sm:$0xff]
  %v89 = vld [vmem:[%s0 + $0x258] sm:$0xff]
  %v90 = vld [vmem:[%s0 + $0x260] sm:$0xff]
  %v91 = vld [vmem:[%s0 + $0x268] sm:$0xff]
  %v92 = vld [vmem:[%s0 + $0x270] sm:$0xff]
  %v93 = vld [vmem:[%s0 + $0x278] sm:$0xff]
  %v94 = vld [vmem:[%s0 + $0x280] sm:$0xff]
  %v95 = vld [vmem:[%s0 + $0x288] sm:$0xff]
  %v96 = vld [vmem:[%s0 + $0x290] sm:$0xff]
  %v97 = vld [vmem:[%s0 + $0x298] sm:$0xff]
  %v98 = vld [vmem:[%s0 + $0x2a0] sm:$0xff]
  %v99 = vld [vmem:[%s0 + $0x2a8] sm:$0xff]
  %v100 = vld [vmem:[%s0 + $0x2b0] sm:$0xff]
  %v101 = vld [vmem:[%s0 + $0x2b8] sm:$0xff]
  %v102 = vld [vmem:[%s0 + $0x2c0] sm:$0xff]
  %v103 = vld [vmem:[%s0 + $0x2c8] sm:$0xff]
  %v104 = vld [vmem:[%s0 + $0x2d0] sm:$0xff]
  %v105 = vld [vmem:[%s0 + $0x2d8] sm:$0xff]
  %v106 = vld [vmem:[%s0 + $0x2e0] sm:$0xff]
  %v107 = vld [vmem:[%s0 + $0x2e8] sm:$0xff]
  %v108 = vld [vmem:[%s0 + $0x2f0] sm:$0xff]
  %v109 = vld [vmem:[%s0 + $0x2f8] sm:$0xff]
  %v110 = vld [vmem:[%s0 + $0x300] sm:$0xff]
  %v111 = vld [vmem:[%s0 + $0x308] sm:$0xff]
  %v112 = vld [vmem:[%s0 + $0x310] sm:$0xff]
  %v113 = vld [vmem:[%s0 + $0x318] sm:$0xff]
  %v114 = vld [vmem:[%s0 + $0x320] sm:$0xff]
  %v115 = vld [vmem:[%s0 + $0x328] sm:$0xff]
  %v116 = vld [vmem:[%s0 + $0x330] sm:$0xff]
  %v117 = vld [vmem:[%s0 + $0x338] sm:$0xff]
  %v118 = vld [vmem:[%s0 + $0x340] sm:$0xff]
  %v119 = vld [vmem:[%s0 + $0x348] sm:$0xff]
  %v120 = vld [vmem:[%s0 + $0x350] sm:$0xff]
  %v121 = vld [vmem:[%s0 + $0x358] sm:$0xff]
  %v122 = vld [vmem:[%s0 + $0x360] sm:$0xff]
  %v123 = vld [vmem:[%s0 + $0x368] sm:$0xff]
  %v124 = vld [vmem:[%s0 + $0x370] sm:$0xff]
  %v125 = vld [vmem:[%s0 + $0x378] sm:$0xff]
  %v126 = vld [vmem:[%s0 + $0x380] sm:$0xff]
  %v127 = vld [vmem:[%s0 + $0x388] sm:$0xff]
  %v128 = vld [vmem:[%s0 + $0x390] sm:$0xff]
  %v129 = vld [vmem:[%s0 + $0x398] sm:$0xff]
  %v130 = vld [vmem:[%s0 + $0x3a0] sm:$0xff]
  %v131 = vld [vmem:[%s0 + $0x3a8] sm:$0xff]
  %v132 = vld [vmem:[%s0 + $0x3b0] sm:$0xff]
  %v133 = vld [vmem:[%s0 + $0x3b8] sm:$0xff]
  %v134 = vld [vmem:[%s0 + $0x3c0] sm:$0xff]
  %v135 = vld [vmem:[%s0 + $0x3c8] sm:$0xff]
  %v136 = vld [vmem:[%s0 + $0x3d0] sm:$0xff]
  %v137 = vld [vmem:[%s0 + $0x3d8] sm:$0xff]
  %v138 = vld [vmem:[%s0 + $0x3e0] sm:$0xff]
  %v139 = vld [vmem:[%s0 + $0x3e8] sm:$0xff]
  %v140 = vld [vmem:[%s0 + $0x3f0] sm:$0xff]
  %v141 = vld [vmem:[%s0 + $0x3f8] sm:$0xff]
  %v142 = vld [vmem:[%s0 + $0x400] sm:$0xff]
  %v143 = vld [vmem:[%s0 + $0x408] sm:$0xff]
  %v144 = vld [vmem:[%s0 + $0x410] sm:$0xff]
  %v145 = vld [vmem:[%s0 + $0x418] sm:$0xff]
  %v146 = vld [vmem:[%s0 + $0x420] sm:$0xff]
  %v147 = vld [vmem:[%s0 + $0x428] sm:$0xff]
  %v148 = vld [vmem:[%s0 + $0x430] sm:$0xff]
  %v149 = vld [vmem:[%s0 + $0x438] sm:$0xff]
  %v150 = vld [vmem:[%s0 + $0x440] sm:$0xff]
  %v151 = vld [vmem:[%s0 + $0x448] sm:$0xff]
  %v152 = vld [vmem:[%s0 + $0x450] sm:$0xff]
  %v153 = vld [vmem:[%s0 + $0x458] sm:$0xff]
  %v154 = vld [vmem:[%s0 + $0x460] sm:$0xff]
  %v155 = vld [vmem:[%s0 + $0x468] sm:$0xff]
  %v156 = vld [vmem:[%s0 + $0x470] sm:$0xff]
  %v157 = vld [vmem:[%s0 + $0x478] sm:$0xff]
  %v158 = vld [vmem:[%s0 + $0x480] sm:$0xff]
  %v159 = vld [vmem:[%s0 + $0x488] sm:$0xff]
  %v160 = vld [vmem:[%s0 + $0x490] sm:$0xff]
  %v161 = vld [vmem:[%s0 + $0x498] sm:$0xff]
  %v162 = vld [vmem:[%s0 + $0x4a0] sm:$0xff]
  %v163 = vld [vmem:[%s0 + $0x4a8] sm:$0xff]
  %v164 = vld [vmem:[%s0 + $0x4b0] sm:$0xff]
  %v165 = vld [vmem:[%s0 + $0x4b8] sm:$0xff]
  %v166 = vld [vmem:[%s0 + $0x4c0] sm:$0xff]
  %v167 = vld [vmem:[%s0 + $0x4c8] sm:$0xff]
  %v168 = vld [vmem:[%s0 + $0x4d0] sm:$0xff]
  %v169 = vld [vmem:[%s0 + $0x4d8] sm:$0xff]
  %v170 = vld [vmem:[%s0 + $0x4e0] sm:$0xff]
  %v171 = vld [vmem:[%s0 + $0x4e8] sm:$0xff]
  %v172 = vld [vmem:[%s0 + $0x4f0] sm:$0xff]
  %v173 = vld [vmem:[%s0 + $0x4f8] sm:$0xff]
  %v174 = vld [vmem:[%s0 + $0x500] sm:$0xff]
  %v175 = vld [vmem:[%s0 + $0x508] sm:$0xff]
  %v176 = vld [vmem:[%s0 + $0x510] sm:$0xff]
  %v177 = vld [vmem:[%s0 + $0x518] sm:$0xff]
  %v178 = vld [vmem:[%s0 + $0x520] sm:$0xff]
  %v179 = vld [vmem:[%s0 + $0x528] sm:$0xff]
  %v180 = vld [vmem:[%s0 + $0x530] sm:$0xff]
  %v181 = vld [vmem:[%s0 + $0x538] sm:$0xff]
  %v182 = vld [vmem:[%s0 + $0x540] sm:$0xff]
  %v183 = vld [vmem:[%s0 + $0x548] sm:$0xff]
  %v184 = vld [vmem:[%s0 + $0x550] sm:$0xff]
  %v185 = vld [vmem:[%s0 + $0x558] sm:$0xff]
  %v186 = vld [vmem:[%s0 + $0x560] sm:$0xff]
  %v187 = vld [vmem:[%s0 + $0x568] sm:$0xff]
  %v188 = vld [vmem:[%s0 + $0x570] sm:$0xff]
  %v189 = vld [vmem:[%s0 + $0x578] sm:$0xff]
  %v190 = vld [vmem:[%s0 + $0x580] sm:$0xff]
  %v191 = vld [vmem:[%s0 + $0x588] sm:$0xff]
  %v192 = vld [vmem:[%s0 + $0x590] sm:$0xff]
  %v193 = vld [vmem:[%s0 + $0x598] sm:$0xff]
  %v194 = vld [vmem:[%s0 + $0x5a0] sm:$0xff]
  %v195 = vld [vmem:[%s0 + $0x5a8] sm:$0xff]
  %v196 = vld [vmem:[%s0 + $0x5b0] sm:$0xff]
  %v197 = vld [vmem:[%s0 + $0x5b8] sm:$0xff]
  %v198 = vld [vmem:[%s0 + $0x5c0] sm:$0xff]
  %v199 = vld [vmem:[%s0 + $0x5c8] sm:$0xff]
  %v200 = vld [vmem:[%s0 + $0x5d0] sm:$0xff]
  %v201 = vld [vmem:[%s0 + $0x5d8] sm:$0xff]
  %v202 = vld [vmem:[%s0 + $0x5e0] sm:$0xff]
  %v203 = vld [vmem:[%s0 + $0x5e8] sm:$0xff]
  %v204 = vld [vmem:[%s0 + $0x5f0] sm:$0xff]
  %v205 = vld [vmem:[%s0 + $0x5f8] sm:$0xff]
  %v206 = vld [vmem:[%s0 + $0x600] sm:$0xff]
  %v207 = vld [vmem:[%s0 + $0x608] sm:$0xff]
  %v208 = vld [vmem:[%s0 + $0x610] sm:$0xff]
  %v209 = vld [vmem:[%s0 + $0x618] sm:$0xff]
  %v210 = vld [vmem:[%s0 + $0x620] sm:$0xff]
  %v211 = vld [vmem:[%s0 + $0x628] sm:$0xff]
  %v212 = vld [vmem:[%s0 + $0x630] sm:$0xff]
  %v213 = vld [vmem:[%s0 + $0x638] sm:$0xff]
  %v214 = vld [vmem:[%s0 + $0x640] sm:$0xff]
  %v215 = vld [vmem:[%s0 + $0x648] sm:$0xff]
  %v216 = vld [vmem:[%s0 + $0x650] sm:$0xff]
  %v217 = vld [vmem:[%s0 + $0x658] sm:$0xff]
  %v218 = vld [vmem:[%s0 + $0x660] sm:$0xff]
  %v219 = vld [vmem:[%s0 + $0x668] sm:$0xff]
  %v220 = vld [vmem:[%s0 + $0x670] sm:$0xff]
  %v221 = vld [vmem:[%s0 + $0x678] sm:$0xff]
  %v222 = vld [vmem:[%s0 + $0x680] sm:$0xff]
  %v223 = vld [vmem:[%s0 + $0x688] sm:$0xff]
  %v224 = vld [vmem:[%s0 + $0x690] sm:$0xff]
  %v225 = vld [vmem:[%s0 + $0x698] sm:$0xff]
  %v226 = vld [vmem:[%s0 + $0x6a0] sm:$0xff]
  %v227 = vld [vmem:[%s0 + $0x6a8] sm:$0xff]
  %v228 = vld [vmem:[%s0 + $0x6b0] sm:$0xff]
  %v229 = vld [vmem:[%s0 + $0x6b8] sm:$0xff]
  %v230 = vld [vmem:[%s0 + $0x6c0] sm:$0xff]
  %v231 = vld [vmem:[%s0 + $0x6c8] sm:$0xff]
  %v232 = vld [vmem:[%s0 + $0x6d0] sm:$0xff]
  %v233 = vld [vmem:[%s0 + $0x6d8] sm:$0xff]
  %v234 = vld [vmem:[%s0 + $0x6e0] sm:$0xff]
  %v235 = vld [vmem:[%s0 + $0x6e8] sm:$0xff]
  %v236 = vld [vmem:[%s0 + $0x6f0] sm:$0xff]
  %v237 = vld [vmem:[%s0 + $0x6f8] sm:$0xff]
  %v238 = vld [vmem:[%s0 + $0x700] sm:$0xff]
  %v239 = vld [vmem:[%s0 + $0x708] sm:$0xff]
  %v240 = vld [vmem:[%s0 + $0x710] sm:$0xff]
  %v241 = vld [vmem:[%s0 + $0x718] sm:$0xff]
  %v242 = vld [vmem:[%s0 + $0x720] sm:$0xff]
  %v243 = vld [vmem:[%s0 + $0x728] sm:$0xff]
  %v244 = vld [vmem:[%s0 + $0x730] sm:$0xff]
  %v245 = vld [vmem:[%s0 + $0x738] sm:$0xff]
  %v246 = vld [vmem:[%s0 + $0x740] sm:$0xff]
  %v247 = vld [vmem:[%s0 + $0x748] sm:$0xff]
  %v248 = vld [vmem:[%s0 + $0x750] sm:$0xff]
  %v249 = vld [vmem:[%s0 + $0x758] sm:$0xff]
  %v250 = vld [vmem:[%s0 + $0x760] sm:$0xff]
  %v251 = vld [vmem:[%s0 + $0x768] sm:$0xff]
  %v252 = vld [vmem:[%s0 + $0x770] sm:$0xff]
  %v253 = vld [vmem:[%s0 + $0x778] sm:$0xff]
  %v254 = vld [vmem:[%s0 + $0x780] sm:$0xff]
  %v255 = vld [vmem:[%s0 + $0x788] sm:$0xff]
  %v256 = vld [vmem:[%s0 + $0x790] sm:$0xff]
  %v257 = vld [vmem:[%s0 + $0x798] sm:$0xff]
  %v258 = vld [vmem:[%s0 + $0x7a0] sm:$0xff]
  %v259 = vld [vmem:[%s0 + $0x7a8] sm:$0xff]
  %v260 = vld [vmem:[%s0 + $0x7b0] sm:$0xff]
  %v261 = vld [vmem:[%s0 + $0x7b8] sm:$0xff]
  %v262 = vld [vmem:[%s0 + $0x7c0] sm:$0xff]
  %v263 = vld [vmem:[%s0 + $0x7c8] sm:$0xff]
  %v264 = vld [vmem:[%s0 + $0x7d0] sm:$0xff]
  %v265 = vld [vmem:[%s0 + $0x7d8] sm:$0xff]
  %v266 = vld [vmem:[%s0 + $0x7e0] sm:$0xff]
  %v267 = vld [vmem:[%s0 + $0x7e8] sm:$0xff]
  %v268 = vld [vmem:[%s0 + $0x7f0] sm:$0xff]
  %v269 = vld [vmem:[%s0 + $0x7f8] sm:$0xff]
  %v270 = vld [vmem:[%s0 + $0x800] sm:$0xff]
  %v271 = vld [vmem:[%s0 + $0x808] sm:$0xff]
  %v272 = vld [vmem:[%s0 + $0x810] sm:$0xff]
  %v273 = vld [vmem:[%s0 + $0x818] sm:$0xff]
  %v274 = vld [vmem:[%s0 + $0x820] sm:$0xff]
  %v275 = vld [vmem:[%s0 + $0x828] sm:$0xff]
  %v276 = vld [vmem:[%s0 + $0x830] sm:$0xff]
  %v277 = vld [vmem:[%s0 + $0x838] sm:$0xff]
  %v278 = vld [vmem:[%s0 + $0x840] sm:$0xff]
  %v279 = vld [vmem:[%s0 + $0x848] sm:$0xff]
  %v280 = vld [vmem:[%s0 + $0x850] sm:$0xff]
  %v281 = vld [vmem:[%s0 + $0x858] sm:$0xff]
  %v282 = vld [vmem:[%s0 + $0x860] sm:$0xff]
  %v283 = vld [vmem:[%s0 + $0x868] sm:$0xff]
  %v284 = vld [vmem:[%s0 + $0x870] sm:$0xff]
  %v285 = vld [vmem:[%s0 + $0x878] sm:$0xff]
  %v286 = vld [vmem:[%s0 + $0x880] sm:$0xff]
  %v287 = vld [vmem:[%s0 + $0x888] sm:$0xff]
  %v288 = vld [vmem:[%s0 + $0x890] sm:$0xff]
  %v289 = vld [vmem:[%s0 + $0x898] sm:$0xff]
  %v290 = vld [vmem:[%s0 + $0x8a0] sm:$0xff]
  %v291 = vld [vmem:[%s0 + $0x8a8] sm:$0xff]
  %v292 = vld [vmem:[%s0 + $0x8b0] sm:$0xff]
  %v293 = vld [vmem:[%s0 + $0x8b8] sm:$0xff]
  %v294 = vld [vmem:[%s0 + $0x8c0] sm:$0xff]
  %v295 = vld [vmem:[%s0 + $0x8c8] sm:$0xff]
  %v296 = vld [vmem:[%s0 + $0x8d0] sm:$0xff]
  %v297 = vld [vmem:[%s0 + $0x8d8] sm:$0xff]
  %v298 = vld [vmem:[%s0 + $0x8e0] sm:$0xff]
  %v299 = vld [vmem:[%s0 + $0x8e8] sm:$0xff]
  %v300 = vld [vmem:[%s0 + $0x8f0] sm:$0xff]
  %v301 = vld [vmem:[%s0 + $0x8f8] sm:$0xff]
  %v302 = vld [vmem:[%s0 + $0x900] sm:$0xff]
  %v303 = vld [vmem:[%s0 + $0x908] sm:$0xff]
  %v304 = vld [vmem:[%s0 + $0x910] sm:$0xff]
  %v305 = vld [vmem:[%s0 + $0x918] sm:$0xff]
  %v306 = vld [vmem:[%s0 + $0x920] sm:$0xff]
  %v307 = vld [vmem:[%s0 + $0x928] sm:$0xff]
  %v308 = vld [vmem:[%s0 + $0x930] sm:$0xff]
  %v309 = vld [vmem:[%s0 + $0x938] sm:$0xff]
  %v310 = vld [vmem:[%s0 + $0x940] sm:$0xff]
  %v311 = vld [vmem:[%s0 + $0x948] sm:$0xff]
  %v312 = vld [vmem:[%s0 + $0x950] sm:$0xff]
  %v313 = vld [vmem:[%s0 + $0x958] sm:$0xff]
  %v314 = vld [vmem:[%s0 + $0x960] sm:$0xff]
  %v315 = vld [vmem:[%s0 + $0x968] sm:$0xff]
  %v316 = vld [vmem:[%s0 + $0x970] sm:$0xff]
  %v317 = vld [vmem:[%s0 + $0x978] sm:$0xff]
  %v318 = vld [vmem:[%s0 + $0x980] sm:$0xff]
  %v319 = vld [vmem:[%s0 + $0x988] sm:$0xff]
  %v320 = vld [vmem:[%s0 + $0x990] sm:$0xff]
  %v321 = vld [vmem:[%s0 + $0x998] sm:$0xff]
  %v322 = vld [vmem:[%s0 + $0x9a0] sm:$0xff]
  %v323 = vld [vmem:[%s0 + $0x9a8] sm:$0xff]
  %v324 = vld [vmem:[%s0 + $0x9b0] sm:$0xff]
  %v325 = vld [vmem:[%s0 + $0x9b8] sm:$0xff]
  %v326 = vld [vmem:[%s0 + $0x9c0] sm:$0xff]
  %v327 = vld [vmem:[%s0 + $0x9c8] sm:$0xff]
  %v328 = vld [vmem:[%s0 + $0x9d0] sm:$0xff]
  %v329 = vld [vmem:[%s0 + $0x9d8] sm:$0xff]
  %v330 = vld [vmem:[%s0 + $0x9e0] sm:$0xff]
  %v331 = vld [vmem:[%s0 + $0x9e8] sm:$0xff]
  %v332 = vld [vmem:[%s0 + $0x9f0] sm:$0xff]
  %v333 = vld [vmem:[%s0 + $0x9f8] sm:$0xff]
  %v334 = vld [vmem:[%s0 + $0xa00] sm:$0xff]
  %v335 = vld [vmem:[%s0 + $0xa08] sm:$0xff]
  %v336 = vld [vmem:[%s0 + $0xa10] sm:$0xff]
  %v337 = vld [vmem:[%s0 + $0xa18] sm:$0xff]
  %v338 = vld [vmem:[%s0 + $0xa20] sm:$0xff]
  %v339 = vld [vmem:[%s0 + $0xa28] sm:$0xff]
  %v340 = vld [vmem:[%s0 + $0xa30] sm:$0xff]
  %v341 = vld [vmem:[%s0 + $0xa38] sm:$0xff]
  %v342 = vld [vmem:[%s0 + $0xa40] sm:$0xff]
  %v343 = vld [vmem:[%s0 + $0xa48] sm:$0xff]
  %v344 = vld [vmem:[%s0 + $0xa50] sm:$0xff]
  %v345 = vld [vmem:[%s0 + $0xa58] sm:$0xff]
  %v346 = vld [vmem:[%s0 + $0xa60] sm:$0xff]
  %v347 = vld [vmem:[%s0 + $0xa68] sm:$0xff]
  %v348 = vld [vmem:[%s0 + $0xa70] sm:$0xff]
  %v349 = vld [vmem:[%s0 + $0xa78] sm:$0xff]
  %v350 = vld [vmem:[%s0 + $0xa80] sm:$0xff]
  %v351 = vld [vmem:[%s0 + $0xa88] sm:$0xff]
  %v352 = vld [vmem:[%s0 + $0xa90] sm:$0xff]
  %v353 = vld [vmem:[%s0 + $0xa98] sm:$0xff]
  %v354 = vld [vmem:[%s0 + $0xaa0] sm:$0xff]
  %v355 = vld [vmem:[%s0 + $0xaa8] sm:$0xff]
  %v356 = vld [vmem:[%s0 + $0xab0] sm:$0xff]
  %v357 = vld [vmem:[%s0 + $0xab8] sm:$0xff]
  %v358 = vld [vmem:[%s0 + $0xac0] sm:$0xff]
  %v359 = vld [vmem:[%s0 + $0xac8] sm:$0xff]
  %v360 = vld [vmem:[%s0 + $0xad0] sm:$0xff]
  %v361 = vld [vmem:[%s0 + $0xad8] sm:$0xff]
  %v362 = vld [vmem:[%s0 + $0xae0] sm:$0xff]
  %v363 = vld [vmem:[%s0 + $0xae8] sm:$0xff]
  %v364 = vld [vmem:[%s0 + $0xaf0] sm:$0xff]
  %v365 = vld [vmem:[%s0 + $0xaf8] sm:$0xff]
  %v366 = vld [vmem:[%s0 + $0xb00] sm:$0xff]
  %v367 = vld [vmem:[%s0 + $0xb08] sm:$0xff]
  %v368 = vld [vmem:[%s0 + $0xb10] sm:$0xff]
  %v369 = vld [vmem:[%s0 + $0xb18] sm:$0xff]
  %v370 = vld [vmem:[%s0 + $0xb20] sm:$0xff]
  %v371 = vld [vmem:[%s0 + $0xb28] sm:$0xff]
  %v372 = vld [vmem:[%s0 + $0xb30] sm:$0xff]
  %v373 = vld [vmem:[%s0 + $0xb38] sm:$0xff]
  %v374 = vld [vmem:[%s0 + $0xb40] sm:$0xff]
  %v375 = vld [vmem:[%s0 + $0xb48] sm:$0xff]
  %v376 = vld [vmem:[%s0 + $0xb50] sm:$0xff]
  %v377 = vld [vmem:[%s0 + $0xb58] sm:$0xff]
  %v378 = vld [vmem:[%s0 + $0xb60] sm:$0xff]
  %v379 = vld [vmem:[%s0 + $0xb68] sm:$0xff]
  %v380 = vld [vmem:[%s0 + $0xb70] sm:$0xff]
  %v381 = vld [vmem:[%s0 + $0xb78] sm:$0xff]
  %v382 = vld [vmem:[%s0 + $0xb80] sm:$0xff]
  %v383 = vld [vmem:[%s0 + $0xb88] sm:$0xff]
  %v384 = vld [vmem:[%s0 + $0xb90] sm:$0xff]
  %v385 = vld [vmem:[%s0 + $0xb98] sm:$0xff]
  %v386 = vld [vmem:[%s0 + $0xba0] sm:$0xff]
  %v387 = vld [vmem:[%s0 + $0xba8] sm:$0xff]
  %v388 = vld [vmem:[%s0 + $0xbb0] sm:$0xff]
  %v389 = vld [vmem:[%s0 + $0xbb8] sm:$0xff]
  %v390 = vld [vmem:[%s0 + $0xbc0] sm:$0xff]
  %v391 = vld [vmem:[%s0 + $0xbc8] sm:$0xff]
  %v392 = vld [vmem:[%s0 + $0xbd0] sm:$0xff]
  %v393 = vld [vmem:[%s0 + $0xbd8] sm:$0xff]
  %v394 = vld [vmem:[%s0 + $0xbe0] sm:$0xff]
  %v395 = vld [vmem:[%s0 + $0xbe8] sm:$0xff]
  %v396 = vld [vmem:[%s0 + $0xbf0] sm:$0xff]
  %v397 = vld [vmem:[%s0 + $0xbf8] sm:$0xff]
  %v398 = vld [vmem:[%s0 + $0xc00] sm:$0xff]
  %v399 = vld [vmem:[%s0 + $0xc08] sm:$0xff]
  %v400 = vld [vmem:[%s0 + $0xc10] sm:$0xff]
  %v401 = vld [vmem:[%s0 + $0xc18] sm:$0xff]
  %v402 = vld [vmem:[%s0 + $0xc20] sm:$0xff]
  %v403 = vld [vmem:[%s0 + $0xc28] sm:$0xff]
  %v404 = vld [vmem:[%s0 + $0xc30] sm:$0xff]
  %v405 = vld [vmem:[%s0 + $0xc38] sm:$0xff]
  %v406 = vld [vmem:[%s0 + $0xc40] sm:$0xff]
  %v407 = vld [vmem:[%s0 + $0xc48] sm:$0xff]
  %v408 = vld [vmem:[%s0 + $0xc50] sm:$0xff]
  %v409 = vld [vmem:[%s0 + $0xc58] sm:$0xff]
  %v410 = vld [vmem:[%s0 + $0xc60] sm:$0xff]
  %v411 = vld [vmem:[%s0 + $0xc68] sm:$0xff]
  %v412 = vld [vmem:[%s0 + $0xc70] sm:$0xff]
  %v413 = vld [vmem:[%s0 + $0xc78] sm:$0xff]
  %v414 = vld [vmem:[%s0 + $0xc80] sm:$0xff]
  %v415 = vld [vmem:[%s0 + $0xc88] sm:$0xff]
  %v416 = vld [vmem:[%s0 + $0xc90] sm:$0xff]
  %v417 = vld [vmem:[%s0 + $0xc98] sm:$0xff]
  %v418 = vld [vmem:[%s0 + $0xca0] sm:$0xff]
  %v419 = vld [vmem:[%s0 + $0xca8] sm:$0xff]
  %v420 = vld [vmem:[%s0 + $0xcb0] sm:$0xff]
  %v421 = vld [vmem:[%s0 + $0xcb8] sm:$0xff]
  %v422 = vld [vmem:[%s0 + $0xcc0] sm:$0xff]
  %v423 = vld [vmem:[%s0 + $0xcc8] sm:$0xff]
  %v424 = vld [vmem:[%s0 + $0xcd0] sm:$0xff]
  %v425 = vld [vmem:[%s0 + $0xcd8] sm:$0xff]
  %v426 = vld [vmem:[%s0 + $0xce0] sm:$0xff]
  %v427 = vld [vmem:[%s0 + $0xce8] sm:$0xff]
  %v428 = vld [vmem:[%s0 + $0xcf0] sm:$0xff]
  %v429 = vld [vmem:[%s0 + $0xcf8] sm:$0xff]
  %v430 = vld [vmem:[%s0 + $0xd00] sm:$0xff]
  %v431 = vld [vmem:[%s0 + $0xd08] sm:$0xff]
  %v432 = vld [vmem:[%s0 + $0xd10] sm:$0xff]
  %v433 = vld [vmem:[%s0 + $0xd18] sm:$0xff]
  %v434 = vld [vmem:[%s0 + $0xd20] sm:$0xff]
  %v435 = vld [vmem:[%s0 + $0xd28] sm:$0xff]
  %v436 = vld [vmem:[%s0 + $0xd30] sm:$0xff]
  %v437 = vld [vmem:[%s0 + $0xd38] sm:$0xff]
  %v438 = vld [vmem:[%s0 + $0xd40] sm:$0xff]
  %v439 = vld [vmem:[%s0 + $0xd48] sm:$0xff]
  %v440 = vld [vmem:[%s0 + $0xd50] sm:$0xff]
  %v441 = vld [vmem:[%s0 + $0xd58] sm:$0xff]
  %v442 = vld [vmem:[%s0 + $0xd60] sm:$0xff]
  %v443 = vld [vmem:[%s0 + $0xd68] sm:$0xff]
  %v444 = vld [vmem:[%s0 + $0xd70] sm:$0xff]
  %v445 = vld [vmem:[%s0 + $0xd78] sm:$0xff]
  %v446 = vld [vmem:[%s0 + $0xd80] sm:$0xff]
  %v447 = vld [vmem:[%s0 + $0xd88] sm:$0xff]
  %v448 = vld [vmem:[%s0 + $0xd90] sm:$0xff]
  %v449 = vld [vmem:[%s0 + $0xd98] sm:$0xff]
  %v450 = vld [vmem:[%s0 + $0xda0] sm:$0xff]
  %v451 = vld [vmem:[%s0 + $0xda8] sm:$0xff]
  %v452 = vld [vmem:[%s0 + $0xdb0] sm:$0xff]
  %v453 = vld [vmem:[%s0 + $0xdb8] sm:$0xff]
  %v454 = vld [vmem:[%s0 + $0xdc0] sm:$0xff]
  %v455 = vld [vmem:[%s0 + $0xdc8] sm:$0xff]
  %v456 = vld [vmem:[%s0 + $0xdd0] sm:$0xff]
  %v457 = vld [vmem:[%s0 + $0xdd8] sm:$0xff]
  %v458 = vld [vmem:[%s0 + $0xde0] sm:$0xff]
  %v459 = vld [vmem:[%s0 + $0xde8] sm:$0xff]
  %v460 = vld [vmem:[%s0 + $0xdf0] sm:$0xff]
  %v461 = vld [vmem:[%s0 + $0xdf8] sm:$0xff]
  %v462 = vld [vmem:[%s0 + $0xe00] sm:$0xff]
  %v463 = vld [vmem:[%s0 + $0xe08] sm:$0xff]
  %v464 = vld [vmem:[%s0 + $0xe10] sm:$0xff]
  %v465 = vld [vmem:[%s0 + $0xe18] sm:$0xff]
  %v466 = vld [vmem:[%s0 + $0xe20] sm:$0xff]
  %v467 = vld [vmem:[%s0 + $0xe28] sm:$0xff]
  %v468 = vld [vmem:[%s0 + $0xe30] sm:$0xff]
  %v469 = vld [vmem:[%s0 + $0xe38] sm:$0xff]
  %v470 = vld [vmem:[%s0 + $0xe40] sm:$0xff]
  %v471 = vld [vmem:[%s0 + $0xe48] sm:$0xff]
  %v472 = vld [vmem:[%s0 + $0xe50] sm:$0xff]
  %v473 = vld [vmem:[%s0 + $0xe58] sm:$0xff]
  %v474 = vld [vmem:[%s0 + $0xe60] sm:$0xff]
  %v475 = vld [vmem:[%s0 + $0xe68] sm:$0xff]
  %v476 = vld [vmem:[%s0 + $0xe70] sm:$0xff]
  %v477 = vld [vmem:[%s0 + $0xe78] sm:$0xff]
  %v478 = vld [vmem:[%s0 + $0xe80] sm:$0xff]
  %v479 = vld [vmem:[%s0 + $0xe88] sm:$0xff]
  %v480 = vld [vmem:[%s0 + $0xe90] sm:$0xff]
  %v481 = vld [vmem:[%s0 + $0xe98] sm:$0xff]
  %v482 = vld [vmem:[%s0 + $0xea0] sm:$0xff]
  %v483 = vld [vmem:[%s0 + $0xea8] sm:$0xff]
  %v484 = vld [vmem:[%s0 + $0xeb0] sm:$0xff]
  %v485 = vld [vmem:[%s0 + $0xeb8] sm:$0xff]
  %v486 = vld [vmem:[%s0 + $0xec0] sm:$0xff]
  %v487 = vld [vmem:[%s0 + $0xec8] sm:$0xff]
  %v488 = vld [vmem:[%s0 + $0xed0] sm:$0xff]
  %v489 = vld [vmem:[%s0 + $0xed8] sm:$0xff]
  %v490 = vld [vmem:[%s0 + $0xee0] sm:$0xff]
  %v491 = vld [vmem:[%s0 + $0xee8] sm:$0xff]
  %v492 = vld [vmem:[%s0 + $0xef0] sm:$0xff]
  %v493 = vld [vmem:[%s0 + $0xef8] sm:$0xff]
  %v494 = vld [vmem:[%s0 + $0xf00] sm:$0xff]
  %v495 = vld [vmem:[%s0 + $0xf08] sm:$0xff]
  %v496 = vld [vmem:[%s0 + $0xf10] sm:$0xff]
  %v497 = vld [vmem:[%s0 + $0xf18] sm:$0xff]
  %v498 = vld [vmem:[%s0 + $0xf20] sm:$0xff]
  %v499 = vld [vmem:[%s0 + $0xf28] sm:$0xff]
  %v500 = vld [vmem:[%s0 + $0xf30] sm:$0xff]
  %v501 = vld [vmem:[%s0 + $0xf38] sm:$0xff]
  %v502 = vld [vmem:[%s0 + $0xf40] sm:$0xff]
  %v503 = vld [vmem:[%s0 + $0xf48] sm:$0xff]
  %v504 = vld [vmem:[%s0 + $0xf50] sm:$0xff]
  %v505 = vld [vmem:[%s0 + $0xf58] sm:$0xff]
  %v506 = vld [vmem:[%s0 + $0xf60] sm:$0xff]
  %v507 = vld [vmem:[%s0 + $0xf68] sm:$0xff]
  %v508 = vld [vmem:[%s0 + $0xf70] sm:$0xff]
  %v509 = vld [vmem:[%s0 + $0xf78] sm:$0xff]
  %v510 = vld [vmem:[%s0 + $0xf80] sm:$0xff]
  %v511 = vld [vmem:[%s0 + $0xf88] sm:$0xff]
  %v512 = vld [vmem:[%s0 + $0xf90] sm:$0xff]
  %v513 = vld [vmem:[%s0 + $0xf98] sm:$0xff]
  %v514 = vld [vmem:[%s0 + $0xfa0] sm:$0xff]
  %v515 = vld [vmem:[%s0 + $0xfa8] sm:$0xff]
  %v516 = vld [vmem:[%s0 + $0xfb0] sm:$0xff]
  %v517 = vld [vmem:[%s0 + $0xfb8] sm:$0xff]
  %v518 = vld [vmem:[%s0 + $0xfc0] sm:$0xff]
  %v519 = vld [vmem:[%s0 + $0xfc8] sm:$0xff]
  %v520 = vld [vmem:[%s0 + $0xfd0] sm:$0xff]
  %v521 = vld [vmem:[%s0 + $0xfd8] sm:$0xff]
  %v522 = vld [vmem:[%s0 + $0xfe0] sm:$0xff]
  %v523 = vld [vmem:[%s0 + $0xfe8] sm:$0xff]
  %v524 = vld [vmem:[%s0 + $0xff0] sm:$0xff]
  %v525 = vld [vmem:[%s0 + $0xff8] sm:$0xff]
  %v526 = vmax.f32 %v14, 0.0
  %v527 = vmax.f32 %v15, 0.0
  %v528 = vmax.f32 %v16, 0.0
  %v529 = vmax.f32 %v17, 0.0
  %v530 = vmax.f32 %v18, 0.0
  %v531 = vmax.f32 %v19, 0.0
  %v532 = vmax.f32 %v20, 0.0
  %v533 = vmax.f32 %v21, 0.0
  %v534 = vmax.f32 %v22, 0.0
  %v535 = vmax.f32 %v23, 0.0
  %v536 = vmax.f32 %v24, 0.0
  %v537 = vmax.f32 %v25, 0.0
  %v538 = vmax.f32 %v26, 0.0
  %v539 = vmax.f32 %v27, 0.0
  %v540 = vmax.f32 %v28, 0.0
  %v541 = vmax.f32 %v29, 0.0
  %v542 = vmax.f32 %v30, 0.0
  %v543 = vmax.f32 %v31, 0.0
  %v544 = vmax.f32 %v32, 0.0
  %v545 = vmax.f32 %v33, 0.0
  %v546 = vmax.f32 %v34, 0.0
  %v547 = vmax.f32 %v35, 0.0
  %v548 = vmax.f32 %v36, 0.0
  %v549 = vmax.f32 %v37, 0.0
  %v550 = vmax.f32 %v38, 0.0
  %v551 = vmax.f32 %v39, 0.0
  %v552 = vmax.f32 %v40, 0.0
  %v553 = vmax.f32 %v41, 0.0
  %v554 = vmax.f32 %v42, 0.0
  %v555 = vmax.f32 %v43, 0.0
  %v556 = vmax.f32 %v44, 0.0
  %v557 = vmax.f32 %v45, 0.0
  %v558 = vmax.f32 %v46, 0.0
  %v559 = vmax.f32 %v47, 0.0
  %v560 = vmax.f32 %v48, 0.0
  %v561 = vmax.f32 %v49, 0.0
  %v562 = vmax.f32 %v50, 0.0
  %v563 = vmax.f32 %v51, 0.0
  %v564 = vmax.f32 %v52, 0.0
  %v565 = vmax.f32 %v53, 0.0
  %v566 = vmax.f32 %v54, 0.0
  %v567 = vmax.f32 %v55, 0.0
  %v568 = vmax.f32 %v56, 0.0
  %v569 = vmax.f32 %v57, 0.0
  %v570 = vmax.f32 %v58, 0.0
  %v571 = vmax.f32 %v59, 0.0
  %v572 = vmax.f32 %v60, 0.0
  %v573 = vmax.f32 %v61, 0.0
  %v574 = vmax.f32 %v62, 0.0
  %v575 = vmax.f32 %v63, 0.0
  %v576 = vmax.f32 %v64, 0.0
  %v577 = vmax.f32 %v65, 0.0
  %v578 = vmax.f32 %v66, 0.0
  %v579 = vmax.f32 %v67, 0.0
  %v580 = vmax.f32 %v68, 0.0
  %v581 = vmax.f32 %v69, 0.0
  %v582 = vmax.f32 %v70, 0.0
  %v583 = vmax.f32 %v71, 0.0
  %v584 = vmax.f32 %v72, 0.0
  %v585 = vmax.f32 %v73, 0.0
  %v586 = vmax.f32 %v74, 0.0
  %v587 = vmax.f32 %v75, 0.0
  %v588 = vmax.f32 %v76, 0.0
  %v589 = vmax.f32 %v77, 0.0
  %v590 = vmax.f32 %v78, 0.0
  %v591 = vmax.f32 %v79, 0.0
  %v592 = vmax.f32 %v80, 0.0
  %v593 = vmax.f32 %v81, 0.0
  %v594 = vmax.f32 %v82, 0.0
  %v595 = vmax.f32 %v83, 0.0
  %v596 = vmax.f32 %v84, 0.0
  %v597 = vmax.f32 %v85, 0.0
  %v598 = vmax.f32 %v86, 0.0
  %v599 = vmax.f32 %v87, 0.0
  %v600 = vmax.f32 %v88, 0.0
  %v601 = vmax.f32 %v89, 0.0
  %v602 = vmax.f32 %v90, 0.0
  %v603 = vmax.f32 %v91, 0.0
  %v604 = vmax.f32 %v92, 0.0
  %v605 = vmax.f32 %v93, 0.0
  %v606 = vmax.f32 %v94, 0.0
  %v607 = vmax.f32 %v95, 0.0
  %v608 = vmax.f32 %v96, 0.0
  %v609 = vmax.f32 %v97, 0.0
  %v610 = vmax.f32 %v98, 0.0
  %v611 = vmax.f32 %v99, 0.0
  %v612 = vmax.f32 %v100, 0.0
  %v613 = vmax.f32 %v101, 0.0
  %v614 = vmax.f32 %v102, 0.0
  %v615 = vmax.f32 %v103, 0.0
  %v616 = vmax.f32 %v104, 0.0
  %v617 = vmax.f32 %v105, 0.0
  %v618 = vmax.f32 %v106, 0.0
  %v619 = vmax.f32 %v107, 0.0
  %v620 = vmax.f32 %v108, 0.0
  %v621 = vmax.f32 %v109, 0.0
  %v622 = vmax.f32 %v110, 0.0
  %v623 = vmax.f32 %v111, 0.0
  %v624 = vmax.f32 %v112, 0.0
  %v625 = vmax.f32 %v113, 0.0
  %v626 = vmax.f32 %v114, 0.0
  %v627 = vmax.f32 %v115, 0.0
  %v628 = vmax.f32 %v116, 0.0
  %v629 = vmax.f32 %v117, 0.0
  %v630 = vmax.f32 %v118, 0.0
  %v631 = vmax.f32 %v119, 0.0
  %v632 = vmax.f32 %v120, 0.0
  %v633 = vmax.f32 %v121, 0.0
  %v634 = vmax.f32 %v122, 0.0
  %v635 = vmax.f32 %v123, 0.0
  %v636 = vmax.f32 %v124, 0.0
  %v637 = vmax.f32 %v125, 0.0
  %v638 = vmax.f32 %v126, 0.0
  %v639 = vmax.f32 %v127, 0.0
  %v640 = vmax.f32 %v128, 0.0
  %v641 = vmax.f32 %v129, 0.0
  %v642 = vmax.f32 %v130, 0.0
  %v643 = vmax.f32 %v131, 0.0
  %v644 = vmax.f32 %v132, 0.0
  %v645 = vmax.f32 %v133, 0.0
  %v646 = vmax.f32 %v134, 0.0
  %v647 = vmax.f32 %v135, 0.0
  %v648 = vmax.f32 %v136, 0.0
  %v649 = vmax.f32 %v137, 0.0
  %v650 = vmax.f32 %v138, 0.0
  %v651 = vmax.f32 %v139, 0.0
  %v652 = vmax.f32 %v140, 0.0
  %v653 = vmax.f32 %v141, 0.0
  %v654 = vmax.f32 %v142, 0.0
  %v655 = vmax.f32 %v143, 0.0
  %v656 = vmax.f32 %v144, 0.0
  %v657 = vmax.f32 %v145, 0.0
  %v658 = vmax.f32 %v146, 0.0
  %v659 = vmax.f32 %v147, 0.0
  %v660 = vmax.f32 %v148, 0.0
  %v661 = vmax.f32 %v149, 0.0
  %v662 = vmax.f32 %v150, 0.0
  %v663 = vmax.f32 %v151, 0.0
  %v664 = vmax.f32 %v152, 0.0
  %v665 = vmax.f32 %v153, 0.0
  %v666 = vmax.f32 %v154, 0.0
  %v667 = vmax.f32 %v155, 0.0
  %v668 = vmax.f32 %v156, 0.0
  %v669 = vmax.f32 %v157, 0.0
  %v670 = vmax.f32 %v158, 0.0
  %v671 = vmax.f32 %v159, 0.0
  %v672 = vmax.f32 %v160, 0.0
  %v673 = vmax.f32 %v161, 0.0
  %v674 = vmax.f32 %v162, 0.0
  %v675 = vmax.f32 %v163, 0.0
  %v676 = vmax.f32 %v164, 0.0
  %v677 = vmax.f32 %v165, 0.0
  %v678 = vmax.f32 %v166, 0.0
  %v679 = vmax.f32 %v167, 0.0
  %v680 = vmax.f32 %v168, 0.0
  %v681 = vmax.f32 %v169, 0.0
  %v682 = vmax.f32 %v170, 0.0
  %v683 = vmax.f32 %v171, 0.0
  %v684 = vmax.f32 %v172, 0.0
  %v685 = vmax.f32 %v173, 0.0
  %v686 = vmax.f32 %v174, 0.0
  %v687 = vmax.f32 %v175, 0.0
  %v688 = vmax.f32 %v176, 0.0
  %v689 = vmax.f32 %v177, 0.0
  %v690 = vmax.f32 %v178, 0.0
  %v691 = vmax.f32 %v179, 0.0
  %v692 = vmax.f32 %v180, 0.0
  %v693 = vmax.f32 %v181, 0.0
  %v694 = vmax.f32 %v182, 0.0
  %v695 = vmax.f32 %v183, 0.0
  %v696 = vmax.f32 %v184, 0.0
  %v697 = vmax.f32 %v185, 0.0
  %v698 = vmax.f32 %v186, 0.0
  %v699 = vmax.f32 %v187, 0.0
  %v700 = vmax.f32 %v188, 0.0
  %v701 = vmax.f32 %v189, 0.0
  %v702 = vmax.f32 %v190, 0.0
  %v703 = vmax.f32 %v191, 0.0
  %v704 = vmax.f32 %v192, 0.0
  %v705 = vmax.f32 %v193, 0.0
  %v706 = vmax.f32 %v194, 0.0
  %v707 = vmax.f32 %v195, 0.0
  %v708 = vmax.f32 %v196, 0.0
  %v709 = vmax.f32 %v197, 0.0
  %v710 = vmax.f32 %v198, 0.0
  %v711 = vmax.f32 %v199, 0.0
  %v712 = vmax.f32 %v200, 0.0
  %v713 = vmax.f32 %v201, 0.0
  %v714 = vmax.f32 %v202, 0.0
  %v715 = vmax.f32 %v203, 0.0
  %v716 = vmax.f32 %v204, 0.0
  %v717 = vmax.f32 %v205, 0.0
  %v718 = vmax.f32 %v206, 0.0
  %v719 = vmax.f32 %v207, 0.0
  %v720 = vmax.f32 %v208, 0.0
  %v721 = vmax.f32 %v209, 0.0
  %v722 = vmax.f32 %v210, 0.0
  %v723 = vmax.f32 %v211, 0.0
  %v724 = vmax.f32 %v212, 0.0
  %v725 = vmax.f32 %v213, 0.0
  %v726 = vmax.f32 %v214, 0.0
  %v727 = vmax.f32 %v215, 0.0
  %v728 = vmax.f32 %v216, 0.0
  %v729 = vmax.f32 %v217, 0.0
  %v730 = vmax.f32 %v218, 0.0
  %v731 = vmax.f32 %v219, 0.0
  %v732 = vmax.f32 %v220, 0.0
  %v733 = vmax.f32 %v221, 0.0
  %v734 = vmax.f32 %v222, 0.0
  %v735 = vmax.f32 %v223, 0.0
  %v736 = vmax.f32 %v224, 0.0
  %v737 = vmax.f32 %v225, 0.0
  %v738 = vmax.f32 %v226, 0.0
  %v739 = vmax.f32 %v227, 0.0
  %v740 = vmax.f32 %v228, 0.0
  %v741 = vmax.f32 %v229, 0.0
  %v742 = vmax.f32 %v230, 0.0
  %v743 = vmax.f32 %v231, 0.0
  %v744 = vmax.f32 %v232, 0.0
  %v745 = vmax.f32 %v233, 0.0
  %v746 = vmax.f32 %v234, 0.0
  %v747 = vmax.f32 %v235, 0.0
  %v748 = vmax.f32 %v236, 0.0
  %v749 = vmax.f32 %v237, 0.0
  %v750 = vmax.f32 %v238, 0.0
  %v751 = vmax.f32 %v239, 0.0
  %v752 = vmax.f32 %v240, 0.0
  %v753 = vmax.f32 %v241, 0.0
  %v754 = vmax.f32 %v242, 0.0
  %v755 = vmax.f32 %v243, 0.0
  %v756 = vmax.f32 %v244, 0.0
  %v757 = vmax.f32 %v245, 0.0
  %v758 = vmax.f32 %v246, 0.0
  %v759 = vmax.f32 %v247, 0.0
  %v760 = vmax.f32 %v248, 0.0
  %v761 = vmax.f32 %v249, 0.0
  %v762 = vmax.f32 %v250, 0.0
  %v763 = vmax.f32 %v251, 0.0
  %v764 = vmax.f32 %v252, 0.0
  %v765 = vmax.f32 %v253, 0.0
  %v766 = vmax.f32 %v254, 0.0
  %v767 = vmax.f32 %v255, 0.0
  %v768 = vmax.f32 %v256, 0.0
  %v769 = vmax.f32 %v257, 0.0
  %v770 = vmax.f32 %v258, 0.0
  %v771 = vmax.f32 %v259, 0.0
  %v772 = vmax.f32 %v260, 0.0
  %v773 = vmax.f32 %v261, 0.0
  %v774 = vmax.f32 %v262, 0.0
  %v775 = vmax.f32 %v263, 0.0
  %v776 = vmax.f32 %v264, 0.0
  %v777 = vmax.f32 %v265, 0.0
  %v778 = vmax.f32 %v266, 0.0
  %v779 = vmax.f32 %v267, 0.0
  %v780 = vmax.f32 %v268, 0.0
  %v781 = vmax.f32 %v269, 0.0
  %v782 = vmax.f32 %v270, 0.0
  %v783 = vmax.f32 %v271, 0.0
  %v784 = vmax.f32 %v272, 0.0
  %v785 = vmax.f32 %v273, 0.0
  %v786 = vmax.f32 %v274, 0.0
  %v787 = vmax.f32 %v275, 0.0
  %v788 = vmax.f32 %v276, 0.0
  %v789 = vmax.f32 %v277, 0.0
  %v790 = vmax.f32 %v278, 0.0
  %v791 = vmax.f32 %v279, 0.0
  %v792 = vmax.f32 %v280, 0.0
  %v793 = vmax.f32 %v281, 0.0
  %v794 = vmax.f32 %v282, 0.0
  %v795 = vmax.f32 %v283, 0.0
  %v796 = vmax.f32 %v284, 0.0
  %v797 = vmax.f32 %v285, 0.0
  %v798 = vmax.f32 %v286, 0.0
  %v799 = vmax.f32 %v287, 0.0
  %v800 = vmax.f32 %v288, 0.0
  %v801 = vmax.f32 %v289, 0.0
  %v802 = vmax.f32 %v290, 0.0
  %v803 = vmax.f32 %v291, 0.0
  %v804 = vmax.f32 %v292, 0.0
  %v805 = vmax.f32 %v293, 0.0
  %v806 = vmax.f32 %v294, 0.0
  %v807 = vmax.f32 %v295, 0.0
  %v808 = vmax.f32 %v296, 0.0
  %v809 = vmax.f32 %v297, 0.0
  %v810 = vmax.f32 %v298, 0.0
  %v811 = vmax.f32 %v299, 0.0
  %v812 = vmax.f32 %v300, 0.0
  %v813 = vmax.f32 %v301, 0.0
  %v814 = vmax.f32 %v302, 0.0
  %v815 = vmax.f32 %v303, 0.0
  %v816 = vmax.f32 %v304, 0.0
  %v817 = vmax.f32 %v305, 0.0
  %v818 = vmax.f32 %v306, 0.0
  %v819 = vmax.f32 %v307, 0.0
  %v820 = vmax.f32 %v308, 0.0
  %v821 = vmax.f32 %v309, 0.0
  %v822 = vmax.f32 %v310, 0.0
  %v823 = vmax.f32 %v311, 0.0
  %v824 = vmax.f32 %v312, 0.0
  %v825 = vmax.f32 %v313, 0.0
  %v826 = vmax.f32 %v314, 0.0
  %v827 = vmax.f32 %v315, 0.0
  %v828 = vmax.f32 %v316, 0.0
  %v829 = vmax.f32 %v317, 0.0
  %v830 = vmax.f32 %v318, 0.0
  %v831 = vmax.f32 %v319, 0.0
  %v832 = vmax.f32 %v320, 0.0
  %v833 = vmax.f32 %v321, 0.0
  %v834 = vmax.f32 %v322, 0.0
  %v835 = vmax.f32 %v323, 0.0
  %v836 = vmax.f32 %v324, 0.0
  %v837 = vmax.f32 %v325, 0.0
  %v838 = vmax.f32 %v326, 0.0
  %v839 = vmax.f32 %v327, 0.0
  %v840 = vmax.f32 %v328, 0.0
  %v841 = vmax.f32 %v329, 0.0
  %v842 = vmax.f32 %v330, 0.0
  %v843 = vmax.f32 %v331, 0.0
  %v844 = vmax.f32 %v332, 0.0
  %v845 = vmax.f32 %v333, 0.0
  %v846 = vmax.f32 %v334, 0.0
  %v847 = vmax.f32 %v335, 0.0
  %v848 = vmax.f32 %v336, 0.0
  %v849 = vmax.f32 %v337, 0.0
  %v850 = vmax.f32 %v338, 0.0
  %v851 = vmax.f32 %v339, 0.0
  %v852 = vmax.f32 %v340, 0.0
  %v853 = vmax.f32 %v341, 0.0
  %v854 = vmax.f32 %v342, 0.0
  %v855 = vmax.f32 %v343, 0.0
  %v856 = vmax.f32 %v344, 0.0
  %v857 = vmax.f32 %v345, 0.0
  %v858 = vmax.f32 %v346, 0.0
  %v859 = vmax.f32 %v347, 0.0
  %v860 = vmax.f32 %v348, 0.0
  %v861 = vmax.f32 %v349, 0.0
  %v862 = vmax.f32 %v350, 0.0
  %v863 = vmax.f32 %v351, 0.0
  %v864 = vmax.f32 %v352, 0.0
  %v865 = vmax.f32 %v353, 0.0
  %v866 = vmax.f32 %v354, 0.0
  %v867 = vmax.f32 %v355, 0.0
  %v868 = vmax.f32 %v356, 0.0
  %v869 = vmax.f32 %v357, 0.0
  %v870 = vmax.f32 %v358, 0.0
  %v871 = vmax.f32 %v359, 0.0
  %v872 = vmax.f32 %v360, 0.0
  %v873 = vmax.f32 %v361, 0.0
  %v874 = vmax.f32 %v362, 0.0
  %v875 = vmax.f32 %v363, 0.0
  %v876 = vmax.f32 %v364, 0.0
  %v877 = vmax.f32 %v365, 0.0
  %v878 = vmax.f32 %v366, 0.0
  %v879 = vmax.f32 %v367, 0.0
  %v880 = vmax.f32 %v368, 0.0
  %v881 = vmax.f32 %v369, 0.0
  %v882 = vmax.f32 %v370, 0.0
  %v883 = vmax.f32 %v371, 0.0
  %v884 = vmax.f32 %v372, 0.0
  %v885 = vmax.f32 %v373, 0.0
  %v886 = vmax.f32 %v374, 0.0
  %v887 = vmax.f32 %v375, 0.0
  %v888 = vmax.f32 %v376, 0.0
  %v889 = vmax.f32 %v377, 0.0
  %v890 = vmax.f32 %v378, 0.0
  %v891 = vmax.f32 %v379, 0.0
  %v892 = vmax.f32 %v380, 0.0
  %v893 = vmax.f32 %v381, 0.0
  %v894 = vmax.f32 %v382, 0.0
  %v895 = vmax.f32 %v383, 0.0
  %v896 = vmax.f32 %v384, 0.0
  %v897 = vmax.f32 %v385, 0.0
  %v898 = vmax.f32 %v386, 0.0
  %v899 = vmax.f32 %v387, 0.0
  %v900 = vmax.f32 %v388, 0.0
  %v901 = vmax.f32 %v389, 0.0
  %v902 = vmax.f32 %v390, 0.0
  %v903 = vmax.f32 %v391, 0.0
  %v904 = vmax.f32 %v392, 0.0
  %v905 = vmax.f32 %v393, 0.0
  %v906 = vmax.f32 %v394, 0.0
  %v907 = vmax.f32 %v395, 0.0
  %v908 = vmax.f32 %v396, 0.0
  %v909 = vmax.f32 %v397, 0.0
  %v910 = vmax.f32 %v398, 0.0
  %v911 = vmax.f32 %v399, 0.0
  %v912 = vmax.f32 %v400, 0.0
  %v913 = vmax.f32 %v401, 0.0
  %v914 = vmax.f32 %v402, 0.0
  %v915 = vmax.f32 %v403, 0.0
  %v916 = vmax.f32 %v404, 0.0
  %v917 = vmax.f32 %v405, 0.0
  %v918 = vmax.f32 %v406, 0.0
  %v919 = vmax.f32 %v407, 0.0
  %v920 = vmax.f32 %v408, 0.0
  %v921 = vmax.f32 %v409, 0.0
  %v922 = vmax.f32 %v410, 0.0
  %v923 = vmax.f32 %v411, 0.0
  %v924 = vmax.f32 %v412, 0.0
  %v925 = vmax.f32 %v413, 0.0
  %v926 = vmax.f32 %v414, 0.0
  %v927 = vmax.f32 %v415, 0.0
  %v928 = vmax.f32 %v416, 0.0
  %v929 = vmax.f32 %v417, 0.0
  %v930 = vmax.f32 %v418, 0.0
  %v931 = vmax.f32 %v419, 0.0
  %v932 = vmax.f32 %v420, 0.0
  %v933 = vmax.f32 %v421, 0.0
  %v934 = vmax.f32 %v422, 0.0
  %v935 = vmax.f32 %v423, 0.0
  %v936 = vmax.f32 %v424, 0.0
  %v937 = vmax.f32 %v425, 0.0
  %v938 = vmax.f32 %v426, 0.0
  %v939 = vmax.f32 %v427, 0.0
  %v940 = vmax.f32 %v428, 0.0
  %v941 = vmax.f32 %v429, 0.0
  %v942 = vmax.f32 %v430, 0.0
  %v943 = vmax.f32 %v431, 0.0
  %v944 = vmax.f32 %v432, 0.0
  %v945 = vmax.f32 %v433, 0.0
  %v946 = vmax.f32 %v434, 0.0
  %v947 = vmax.f32 %v435, 0.0
  %v948 = vmax.f32 %v436, 0.0
  %v949 = vmax.f32 %v437, 0.0
  %v950 = vmax.f32 %v438, 0.0
  %v951 = vmax.f32 %v439, 0.0
  %v952 = vmax.f32 %v440, 0.0
  %v953 = vmax.f32 %v441, 0.0
  %v954 = vmax.f32 %v442, 0.0
  %v955 = vmax.f32 %v443, 0.0
  %v956 = vmax.f32 %v444, 0.0
  %v957 = vmax.f32 %v445, 0.0
  %v958 = vmax.f32 %v446, 0.0
  %v959 = vmax.f32 %v447, 0.0
  %v960 = vmax.f32 %v448, 0.0
  %v961 = vmax.f32 %v449, 0.0
  %v962 = vmax.f32 %v450, 0.0
  %v963 = vmax.f32 %v451, 0.0
  %v964 = vmax.f32 %v452, 0.0
  %v965 = vmax.f32 %v453, 0.0
  %v966 = vmax.f32 %v454, 0.0
  %v967 = vmax.f32 %v455, 0.0
  %v968 = vmax.f32 %v456, 0.0
  %v969 = vmax.f32 %v457, 0.0
  %v970 = vmax.f32 %v458, 0.0
  %v971 = vmax.f32 %v459, 0.0
  %v972 = vmax.f32 %v460, 0.0
  %v973 = vmax.f32 %v461, 0.0
  %v974 = vmax.f32 %v462, 0.0
  %v975 = vmax.f32 %v463, 0.0
  %v976 = vmax.f32 %v464, 0.0
  %v977 = vmax.f32 %v465, 0.0
  %v978 = vmax.f32 %v466, 0.0
  %v979 = vmax.f32 %v467, 0.0
  %v980 = vmax.f32 %v468, 0.0
  %v981 = vmax.f32 %v469, 0.0
  %v982 = vmax.f32 %v470, 0.0
  %v983 = vmax.f32 %v471, 0.0
  %v984 = vmax.f32 %v472, 0.0
  %v985 = vmax.f32 %v473, 0.0
  %v986 = vmax.f32 %v474, 0.0
  %v987 = vmax.f32 %v475, 0.0
  %v988 = vmax.f32 %v476, 0.0
  %v989 = vmax.f32 %v477, 0.0
  %v990 = vmax.f32 %v478, 0.0
  %v991 = vmax.f32 %v479, 0.0
  %v992 = vmax.f32 %v480, 0.0
  %v993 = vmax.f32 %v481, 0.0
  %v994 = vmax.f32 %v482, 0.0
  %v995 = vmax.f32 %v483, 0.0
  %v996 = vmax.f32 %v484, 0.0
  %v997 = vmax.f32 %v485, 0.0
  %v998 = vmax.f32 %v486, 0.0
  %v999 = vmax.f32 %v487, 0.0
  %v1000 = vmax.f32 %v488, 0.0
  %v1001 = vmax.f32 %v489, 0.0
  %v1002 = vmax.f32 %v490, 0.0
  %v1003 = vmax.f32 %v491, 0.0
  %v1004 = vmax.f32 %v492, 0.0
  %v1005 = vmax.f32 %v493, 0.0
  %v1006 = vmax.f32 %v494, 0.0
  %v1007 = vmax.f32 %v495, 0.0
  %v1008 = vmax.f32 %v496, 0.0
  %v1009 = vmax.f32 %v497, 0.0
  %v1010 = vmax.f32 %v498, 0.0
  %v1011 = vmax.f32 %v499, 0.0
  %v1012 = vmax.f32 %v500, 0.0
  %v1013 = vmax.f32 %v501, 0.0
  %v1014 = vmax.f32 %v502, 0.0
  %v1015 = vmax.f32 %v503, 0.0
  %v1016 = vmax.f32 %v504, 0.0
  %v1017 = vmax.f32 %v505, 0.0
  %v1018 = vmax.f32 %v506, 0.0
  %v1019 = vmax.f32 %v507, 0.0
  %v1020 = vmax.f32 %v508, 0.0
  %v1021 = vmax.f32 %v509, 0.0
  %v1022 = vmax.f32 %v510, 0.0
  %v1023 = vmax.f32 %v511, 0.0
  %v1024 = vmax.f32 %v512, 0.0
  %v1025 = vmax.f32 %v513, 0.0
  %v1026 = vmax.f32 %v514, 0.0
  %v1027 = vmax.f32 %v515, 0.0
  %v1028 = vmax.f32 %v516, 0.0
  %v1029 = vmax.f32 %v517, 0.0
  %v1030 = vmax.f32 %v518, 0.0
  %v1031 = vmax.f32 %v519, 0.0
  %v1032 = vmax.f32 %v520, 0.0
  %v1033 = vmax.f32 %v521, 0.0
  %v1034 = vmax.f32 %v522, 0.0
  %v1035 = vmax.f32 %v523, 0.0
  %v1036 = vmax.f32 %v524, 0.0
  %v1037 = vmax.f32 %v525, 0.0
  %v1038 = vld [vmem:[%s1] sm:$0xff]
  %v1039 = vld [vmem:[%s1 + $0x8] sm:$0xff]
  %v1040 = vld [vmem:[%s1 + $0x10] sm:$0xff]
  %v1041 = vld [vmem:[%s1 + $0x18] sm:$0xff]
  %v1042 = vld [vmem:[%s1 + $0x20] sm:$0xff]
  %v1043 = vld [vmem:[%s1 + $0x28] sm:$0xff]
  %v1044 = vld [vmem:[%s1 + $0x30] sm:$0xff]
  %v1045 = vld [vmem:[%s1 + $0x38] sm:$0xff]
  %v1046 = vld [vmem:[%s1 + $0x40] sm:$0xff]
  %v1047 = vld [vmem:[%s1 + $0x48] sm:$0xff]
  %v1048 = vld [vmem:[%s1 + $0x50] sm:$0xff]
  %v1049 = vld [vmem:[%s1 + $0x58] sm:$0xff]
  %v1050 = vld [vmem:[%s1 + $0x60] sm:$0xff]
  %v1051 = vld [vmem:[%s1 + $0x68] sm:$0xff]
  %v1052 = vld [vmem:[%s1 + $0x70] sm:$0xff]
  %v1053 = vld [vmem:[%s1 + $0x78] sm:$0xff]
  %v1054 = vld [vmem:[%s1 + $0x80] sm:$0xff]
  %v1055 = vld [vmem:[%s1 + $0x88] sm:$0xff]
  %v1056 = vld [vmem:[%s1 + $0x90] sm:$0xff]
  %v1057 = vld [vmem:[%s1 + $0x98] sm:$0xff]
  %v1058 = vld [vmem:[%s1 + $0xa0] sm:$0xff]
  %v1059 = vld [vmem:[%s1 + $0xa8] sm:$0xff]
  %v1060 = vld [vmem:[%s1 + $0xb0] sm:$0xff]
  %v1061 = vld [vmem:[%s1 + $0xb8] sm:$0xff]
  %v1062 = vld [vmem:[%s1 + $0xc0] sm:$0xff]
  %v1063 = vld [vmem:[%s1 + $0xc8] sm:$0xff]
  %v1064 = vld [vmem:[%s1 + $0xd0] sm:$0xff]
  %v1065 = vld [vmem:[%s1 + $0xd8] sm:$0xff]
  %v1066 = vld [vmem:[%s1 + $0xe0] sm:$0xff]
  %v1067 = vld [vmem:[%s1 + $0xe8] sm:$0xff]
  %v1068 = vld [vmem:[%s1 + $0xf0] sm:$0xff]
  %v1069 = vld [vmem:[%s1 + $0xf8] sm:$0xff]
  %v1070 = vld [vmem:[%s2] sm:$0x1]
  %v1072 = vperm.slane %v1070, 0
  %1074 = vmatpush.msra.mxu0 %v1053
  %1075 = vmatpush.msra.mxu0 %v1052
  %1076 = vmatpush.msra.mxu0 %v1051
  %1077 = vmatpush.msra.mxu0 %v1050
  %1078 = vmatpush.msra.mxu0 %v1049
  %1079 = vmatpush.msra.mxu0 %v1048
  %1080 = vmatpush.msra.mxu0 %v1047
  %1081 = vmatpush.msra.mxu0 %v1046
  %1082 = vmatpush.msra.mxu0 %v1045
  %1083 = vmatpush.msra.mxu0 %v1044
  %1084 = vmatpush.msra.mxu0 %v1043
  %1085 = vmatpush.msra.mxu0 %v1042
  %1086 = vmatpush.msra.mxu0 %v1041
  %1087 = vmatpush.msra.mxu0 %v1040
  %1088 = vmatpush.msra.mxu0 %v1039
  %1089 = vmatpush.msra.mxu0 %v1038
  %1090 = vmatmul.f32.gmra.mxu0 %v526
  %v1091 = vpop.f32.mrf.mxu0
  %v1092 = vadd.f32 %v1072, %v1091
  %1093 = vmatmul.f32.gmra.mxu0 %v528
  %v1094 = vpop.f32.mrf.mxu0
  %v1095 = vadd.f32 %v1072, %v1094
  %1096 = vmatmul.f32.gmra.mxu0 %v530
  %v1097 = vpop.f32.mrf.mxu0
  %v1098 = vadd.f32 %v1072, %v1097
  %1099 = vmatmul.f32.gmra.mxu0 %v532
  %v1100 = vpop.f32.mrf.mxu0
  %v1101 = vadd.f32 %v1072, %v1100
  %1102 = vmatmul.f32.gmra.mxu0 %v534
  %v1103 = vpop.f32.mrf.mxu0
  %v1104 = vadd.f32 %v1072, %v1103
  %1105 = vmatmul.f32.gmra.mxu0 %v536
  %v1106 = vpop.f32.mrf.mxu0
  %v1107 = vadd.f32 %v1072, %v1106
  %1108 = vmatmul.f32.gmra.mxu0 %v538
  %v1109 = vpop.f32.mrf.mxu0
  %v1110 = vadd.f32 %v1072, %v1109
  %1111 = vmatmul.f32.gmra.mxu0 %v540
  %v1112 = vpop.f32.mrf.mxu0
  %v1113 = vadd.f32 %v1072, %v1112
  %1114 = vmatmul.f32.gmra.mxu0 %v542
  %v1115 = vpop.f32.mrf.mxu0
  %v1116 = vadd.f32 %v1072, %v1115
  %1117 = vmatmul.f32.gmra.mxu0 %v544
  %v1118 = vpop.f32.mrf.mxu0
  %v1119 = vadd.f32 %v1072, %v1118
  %1120 = vmatmul.f32.gmra.mxu0 %v546
  %v1121 = vpop.f32.mrf.mxu0
  %v1122 = vadd.f32 %v1072, %v1121
  %1123 = vmatmul.f32.gmra.mxu0 %v548
  %v1124 = vpop.f32.mrf.mxu0
  %v1125 = vadd.f32 %v1072, %v1124
  %1126 = vmatmul.f32.gmra.mxu0 %v550
  %v1127 = vpop.f32.mrf.mxu0
  %v1128 = vadd.f32 %v1072, %v1127
  %1129 = vmatmul.f32.gmra.mxu0 %v552
  %v1130 = vpop.f32.mrf.mxu0
  %v1131 = vadd.f32 %v1072, %v1130
  %1132 = vmatmul.f32.gmra.mxu0 %v554
  %v1133 = vpop.f32.mrf.mxu0
  %v1134 = vadd.f32 %v1072, %v1133
  %1135 = vmatmul.f32.gmra.mxu0 %v556
  %v1136 = vpop.f32.mrf.mxu0
  %v1137 = vadd.f32 %v1072, %v1136
  %1138 = vmatmul.f32.gmra.mxu0 %v558
  %v1139 = vpop.f32.mrf.mxu0
  %v1140 = vadd.f32 %v1072, %v1139
  %1141 = vmatmul.f32.gmra.mxu0 %v560
  %v1142 = vpop.f32.mrf.mxu0
  %v1143 = vadd.f32 %v1072, %v1142
  %1144 = vmatmul.f32.gmra.mxu0 %v562
  %v1145 = vpop.f32.mrf.mxu0
  %v1146 = vadd.f32 %v1072, %v1145
  %1147 = vmatmul.f32.gmra.mxu0 %v564
  %v1148 = vpop.f32.mrf.mxu0
  %v1149 = vadd.f32 %v1072, %v1148
  %1150 = vmatmul.f32.gmra.mxu0 %v566
  %v1151 = vpop.f32.mrf.mxu0
  %v1152 = vadd.f32 %v1072, %v1151
  %1153 = vmatmul.f32.gmra.mxu0 %v568
  %v1154 = vpop.f32.mrf.mxu0
  %v1155 = vadd.f32 %v1072, %v1154
  %1156 = vmatmul.f32.gmra.mxu0 %v570
  %v1157 = vpop.f32.mrf.mxu0
  %v1158 = vadd.f32 %v1072, %v1157
  %1159 = vmatmul.f32.gmra.mxu0 %v572
  %v1160 = vpop.f32.mrf.mxu0
  %v1161 = vadd.f32 %v1072, %v1160
  %1162 = vmatmul.f32.gmra.mxu0 %v574
  %v1163 = vpop.f32.mrf.mxu0
  %v1164 = vadd.f32 %v1072, %v1163
  %1165 = vmatmul.f32.gmra.mxu0 %v576
  %v1166 = vpop.f32.mrf.mxu0
  %v1167 = vadd.f32 %v1072, %v1166
  %1168 = vmatmul.f32.gmra.mxu0 %v578
  %v1169 = vpop.f32.mrf.mxu0
  %v1170 = vadd.f32 %v1072, %v1169
  %1171 = vmatmul.f32.gmra.mxu0 %v580
  %v1172 = vpop.f32.mrf.mxu0
  %v1173 = vadd.f32 %v1072, %v1172
  %1174 = vmatmul.f32.gmra.mxu0 %v582
  %v1175 = vpop.f32.mrf.mxu0
  %v1176 = vadd.f32 %v1072, %v1175
  %1177 = vmatmul.f32.gmra.mxu0 %v584
  %v1178 = vpop.f32.mrf.mxu0
  %v1179 = vadd.f32 %v1072, %v1178
  %1180 = vmatmul.f32.gmra.mxu0 %v586
  %v1181 = vpop.f32.mrf.mxu0
  %v1182 = vadd.f32 %v1072, %v1181
  %1183 = vmatmul.f32.gmra.mxu0 %v588
  %v1184 = vpop.f32.mrf.mxu0
  %v1185 = vadd.f32 %v1072, %v1184
  %1186 = vmatmul.f32.gmra.mxu0 %v590
  %v1187 = vpop.f32.mrf.mxu0
  %v1188 = vadd.f32 %v1072, %v1187
  %1189 = vmatmul.f32.gmra.mxu0 %v592
  %v1190 = vpop.f32.mrf.mxu0
  %v1191 = vadd.f32 %v1072, %v1190
  %1192 = vmatmul.f32.gmra.mxu0 %v594
  %v1193 = vpop.f32.mrf.mxu0
  %v1194 = vadd.f32 %v1072, %v1193
  %1195 = vmatmul.f32.gmra.mxu0 %v596
  %v1196 = vpop.f32.mrf.mxu0
  %v1197 = vadd.f32 %v1072, %v1196
  %1198 = vmatmul.f32.gmra.mxu0 %v598
  %v1199 = vpop.f32.mrf.mxu0
  %v1200 = vadd.f32 %v1072, %v1199
  %1201 = vmatmul.f32.gmra.mxu0 %v600
  %v1202 = vpop.f32.mrf.mxu0
  %v1203 = vadd.f32 %v1072, %v1202
  %1204 = vmatmul.f32.gmra.mxu0 %v602
  %v1205 = vpop.f32.mrf.mxu0
  %v1206 = vadd.f32 %v1072, %v1205
  %1207 = vmatmul.f32.gmra.mxu0 %v604
  %v1208 = vpop.f32.mrf.mxu0
  %v1209 = vadd.f32 %v1072, %v1208
  %1210 = vmatmul.f32.gmra.mxu0 %v606
  %v1211 = vpop.f32.mrf.mxu0
  %v1212 = vadd.f32 %v1072, %v1211
  %1213 = vmatmul.f32.gmra.mxu0 %v608
  %v1214 = vpop.f32.mrf.mxu0
  %v1215 = vadd.f32 %v1072, %v1214
  %1216 = vmatmul.f32.gmra.mxu0 %v610
  %v1217 = vpop.f32.mrf.mxu0
  %v1218 = vadd.f32 %v1072, %v1217
  %1219 = vmatmul.f32.gmra.mxu0 %v612
  %v1220 = vpop.f32.mrf.mxu0
  %v1221 = vadd.f32 %v1072, %v1220
  %1222 = vmatmul.f32.gmra.mxu0 %v614
  %v1223 = vpop.f32.mrf.mxu0
  %v1224 = vadd.f32 %v1072, %v1223
  %1225 = vmatmul.f32.gmra.mxu0 %v616
  %v1226 = vpop.f32.mrf.mxu0
  %v1227 = vadd.f32 %v1072, %v1226
  %1228 = vmatmul.f32.gmra.mxu0 %v618
  %v1229 = vpop.f32.mrf.mxu0
  %v1230 = vadd.f32 %v1072, %v1229
  %1231 = vmatmul.f32.gmra.mxu0 %v620
  %v1232 = vpop.f32.mrf.mxu0
  %v1233 = vadd.f32 %v1072, %v1232
  %1234 = vmatmul.f32.gmra.mxu0 %v622
  %v1235 = vpop.f32.mrf.mxu0
  %v1236 = vadd.f32 %v1072, %v1235
  %1237 = vmatmul.f32.gmra.mxu0 %v624
  %v1238 = vpop.f32.mrf.mxu0
  %v1239 = vadd.f32 %v1072, %v1238
  %1240 = vmatmul.f32.gmra.mxu0 %v626
  %v1241 = vpop.f32.mrf.mxu0
  %v1242 = vadd.f32 %v1072, %v1241
  %1243 = vmatmul.f32.gmra.mxu0 %v628
  %v1244 = vpop.f32.mrf.mxu0
  %v1245 = vadd.f32 %v1072, %v1244
  %1246 = vmatmul.f32.gmra.mxu0 %v630
  %v1247 = vpop.f32.mrf.mxu0
  %v1248 = vadd.f32 %v1072, %v1247
  %1249 = vmatmul.f32.gmra.mxu0 %v632
  %v1250 = vpop.f32.mrf.mxu0
  %v1251 = vadd.f32 %v1072, %v1250
  %1252 = vmatmul.f32.gmra.mxu0 %v634
  %v1253 = vpop.f32.mrf.mxu0
  %v1254 = vadd.f32 %v1072, %v1253
  %1255 = vmatmul.f32.gmra.mxu0 %v636
  %v1256 = vpop.f32.mrf.mxu0
  %v1257 = vadd.f32 %v1072, %v1256
  %1258 = vmatmul.f32.gmra.mxu0 %v638
  %v1259 = vpop.f32.mrf.mxu0
  %v1260 = vadd.f32 %v1072, %v1259
  %1261 = vmatmul.f32.gmra.mxu0 %v640
  %v1262 = vpop.f32.mrf.mxu0
  %v1263 = vadd.f32 %v1072, %v1262
  %1264 = vmatmul.f32.gmra.mxu0 %v642
  %v1265 = vpop.f32.mrf.mxu0
  %v1266 = vadd.f32 %v1072, %v1265
  %1267 = vmatmul.f32.gmra.mxu0 %v644
  %v1268 = vpop.f32.mrf.mxu0
  %v1269 = vadd.f32 %v1072, %v1268
  %1270 = vmatmul.f32.gmra.mxu0 %v646
  %v1271 = vpop.f32.mrf.mxu0
  %v1272 = vadd.f32 %v1072, %v1271
  %1273 = vmatmul.f32.gmra.mxu0 %v648
  %v1274 = vpop.f32.mrf.mxu0
  %v1275 = vadd.f32 %v1072, %v1274
  %1276 = vmatmul.f32.gmra.mxu0 %v650
  %v1277 = vpop.f32.mrf.mxu0
  %v1278 = vadd.f32 %v1072, %v1277
  %1279 = vmatmul.f32.gmra.mxu0 %v652
  %v1280 = vpop.f32.mrf.mxu0
  %v1281 = vadd.f32 %v1072, %v1280
  %1282 = vmatmul.f32.gmra.mxu0 %v654
  %v1283 = vpop.f32.mrf.mxu0
  %v1284 = vadd.f32 %v1072, %v1283
  %1285 = vmatmul.f32.gmra.mxu0 %v656
  %v1286 = vpop.f32.mrf.mxu0
  %v1287 = vadd.f32 %v1072, %v1286
  %1288 = vmatmul.f32.gmra.mxu0 %v658
  %v1289 = vpop.f32.mrf.mxu0
  %v1290 = vadd.f32 %v1072, %v1289
  %1291 = vmatmul.f32.gmra.mxu0 %v660
  %v1292 = vpop.f32.mrf.mxu0
  %v1293 = vadd.f32 %v1072, %v1292
  %1294 = vmatmul.f32.gmra.mxu0 %v662
  %v1295 = vpop.f32.mrf.mxu0
  %v1296 = vadd.f32 %v1072, %v1295
  %1297 = vmatmul.f32.gmra.mxu0 %v664
  %v1298 = vpop.f32.mrf.mxu0
  %v1299 = vadd.f32 %v1072, %v1298
  %1300 = vmatmul.f32.gmra.mxu0 %v666
  %v1301 = vpop.f32.mrf.mxu0
  %v1302 = vadd.f32 %v1072, %v1301
  %1303 = vmatmul.f32.gmra.mxu0 %v668
  %v1304 = vpop.f32.mrf.mxu0
  %v1305 = vadd.f32 %v1072, %v1304
  %1306 = vmatmul.f32.gmra.mxu0 %v670
  %v1307 = vpop.f32.mrf.mxu0
  %v1308 = vadd.f32 %v1072, %v1307
  %1309 = vmatmul.f32.gmra.mxu0 %v672
  %v1310 = vpop.f32.mrf.mxu0
  %v1311 = vadd.f32 %v1072, %v1310
  %1312 = vmatmul.f32.gmra.mxu0 %v674
  %v1313 = vpop.f32.mrf.mxu0
  %v1314 = vadd.f32 %v1072, %v1313
  %1315 = vmatmul.f32.gmra.mxu0 %v676
  %v1316 = vpop.f32.mrf.mxu0
  %v1317 = vadd.f32 %v1072, %v1316
  %1318 = vmatmul.f32.gmra.mxu0 %v678
  %v1319 = vpop.f32.mrf.mxu0
  %v1320 = vadd.f32 %v1072, %v1319
  %1321 = vmatmul.f32.gmra.mxu0 %v680
  %v1322 = vpop.f32.mrf.mxu0
  %v1323 = vadd.f32 %v1072, %v1322
  %1324 = vmatmul.f32.gmra.mxu0 %v682
  %v1325 = vpop.f32.mrf.mxu0
  %v1326 = vadd.f32 %v1072, %v1325
  %1327 = vmatmul.f32.gmra.mxu0 %v684
  %v1328 = vpop.f32.mrf.mxu0
  %v1329 = vadd.f32 %v1072, %v1328
  %1330 = vmatmul.f32.gmra.mxu0 %v686
  %v1331 = vpop.f32.mrf.mxu0
  %v1332 = vadd.f32 %v1072, %v1331
  %1333 = vmatmul.f32.gmra.mxu0 %v688
  %v1334 = vpop.f32.mrf.mxu0
  %v1335 = vadd.f32 %v1072, %v1334
  %1336 = vmatmul.f32.gmra.mxu0 %v690
  %v1337 = vpop.f32.mrf.mxu0
  %v1338 = vadd.f32 %v1072, %v1337
  %1339 = vmatmul.f32.gmra.mxu0 %v692
  %v1340 = vpop.f32.mrf.mxu0
  %v1341 = vadd.f32 %v1072, %v1340
  %1342 = vmatmul.f32.gmra.mxu0 %v694
  %v1343 = vpop.f32.mrf.mxu0
  %v1344 = vadd.f32 %v1072, %v1343
  %1345 = vmatmul.f32.gmra.mxu0 %v696
  %v1346 = vpop.f32.mrf.mxu0
  %v1347 = vadd.f32 %v1072, %v1346
  %1348 = vmatmul.f32.gmra.mxu0 %v698
  %v1349 = vpop.f32.mrf.mxu0
  %v1350 = vadd.f32 %v1072, %v1349
  %1351 = vmatmul.f32.gmra.mxu0 %v700
  %v1352 = vpop.f32.mrf.mxu0
  %v1353 = vadd.f32 %v1072, %v1352
  %1354 = vmatmul.f32.gmra.mxu0 %v702
  %v1355 = vpop.f32.mrf.mxu0
  %v1356 = vadd.f32 %v1072, %v1355
  %1357 = vmatmul.f32.gmra.mxu0 %v704
  %v1358 = vpop.f32.mrf.mxu0
  %v1359 = vadd.f32 %v1072, %v1358
  %1360 = vmatmul.f32.gmra.mxu0 %v706
  %v1361 = vpop.f32.mrf.mxu0
  %v1362 = vadd.f32 %v1072, %v1361
  %1363 = vmatmul.f32.gmra.mxu0 %v708
  %v1364 = vpop.f32.mrf.mxu0
  %v1365 = vadd.f32 %v1072, %v1364
  %1366 = vmatmul.f32.gmra.mxu0 %v710
  %v1367 = vpop.f32.mrf.mxu0
  %v1368 = vadd.f32 %v1072, %v1367
  %1369 = vmatmul.f32.gmra.mxu0 %v712
  %v1370 = vpop.f32.mrf.mxu0
  %v1371 = vadd.f32 %v1072, %v1370
  %1372 = vmatmul.f32.gmra.mxu0 %v714
  %v1373 = vpop.f32.mrf.mxu0
  %v1374 = vadd.f32 %v1072, %v1373
  %1375 = vmatmul.f32.gmra.mxu0 %v716
  %v1376 = vpop.f32.mrf.mxu0
  %v1377 = vadd.f32 %v1072, %v1376
  %1378 = vmatmul.f32.gmra.mxu0 %v718
  %v1379 = vpop.f32.mrf.mxu0
  %v1380 = vadd.f32 %v1072, %v1379
  %1381 = vmatmul.f32.gmra.mxu0 %v720
  %v1382 = vpop.f32.mrf.mxu0
  %v1383 = vadd.f32 %v1072, %v1382
  %1384 = vmatmul.f32.gmra.mxu0 %v722
  %v1385 = vpop.f32.mrf.mxu0
  %v1386 = vadd.f32 %v1072, %v1385
  %1387 = vmatmul.f32.gmra.mxu0 %v724
  %v1388 = vpop.f32.mrf.mxu0
  %v1389 = vadd.f32 %v1072, %v1388
  %1390 = vmatmul.f32.gmra.mxu0 %v726
  %v1391 = vpop.f32.mrf.mxu0
  %v1392 = vadd.f32 %v1072, %v1391
  %1393 = vmatmul.f32.gmra.mxu0 %v728
  %v1394 = vpop.f32.mrf.mxu0
  %v1395 = vadd.f32 %v1072, %v1394
  %1396 = vmatmul.f32.gmra.mxu0 %v730
  %v1397 = vpop.f32.mrf.mxu0
  %v1398 = vadd.f32 %v1072, %v1397
  %1399 = vmatmul.f32.gmra.mxu0 %v732
  %v1400 = vpop.f32.mrf.mxu0
  %v1401 = vadd.f32 %v1072, %v1400
  %1402 = vmatmul.f32.gmra.mxu0 %v734
  %v1403 = vpop.f32.mrf.mxu0
  %v1404 = vadd.f32 %v1072, %v1403
  %1405 = vmatmul.f32.gmra.mxu0 %v736
  %v1406 = vpop.f32.mrf.mxu0
  %v1407 = vadd.f32 %v1072, %v1406
  %1408 = vmatmul.f32.gmra.mxu0 %v738
  %v1409 = vpop.f32.mrf.mxu0
  %v1410 = vadd.f32 %v1072, %v1409
  %1411 = vmatmul.f32.gmra.mxu0 %v740
  %v1412 = vpop.f32.mrf.mxu0
  %v1413 = vadd.f32 %v1072, %v1412
  %1414 = vmatmul.f32.gmra.mxu0 %v742
  %v1415 = vpop.f32.mrf.mxu0
  %v1416 = vadd.f32 %v1072, %v1415
  %1417 = vmatmul.f32.gmra.mxu0 %v744
  %v1418 = vpop.f32.mrf.mxu0
  %v1419 = vadd.f32 %v1072, %v1418
  %1420 = vmatmul.f32.gmra.mxu0 %v746
  %v1421 = vpop.f32.mrf.mxu0
  %v1422 = vadd.f32 %v1072, %v1421
  %1423 = vmatmul.f32.gmra.mxu0 %v748
  %v1424 = vpop.f32.mrf.mxu0
  %v1425 = vadd.f32 %v1072, %v1424
  %1426 = vmatmul.f32.gmra.mxu0 %v750
  %v1427 = vpop.f32.mrf.mxu0
  %v1428 = vadd.f32 %v1072, %v1427
  %1429 = vmatmul.f32.gmra.mxu0 %v752
  %v1430 = vpop.f32.mrf.mxu0
  %v1431 = vadd.f32 %v1072, %v1430
  %1432 = vmatmul.f32.gmra.mxu0 %v754
  %v1433 = vpop.f32.mrf.mxu0
  %v1434 = vadd.f32 %v1072, %v1433
  %1435 = vmatmul.f32.gmra.mxu0 %v756
  %v1436 = vpop.f32.mrf.mxu0
  %v1437 = vadd.f32 %v1072, %v1436
  %1438 = vmatmul.f32.gmra.mxu0 %v758
  %v1439 = vpop.f32.mrf.mxu0
  %v1440 = vadd.f32 %v1072, %v1439
  %1441 = vmatmul.f32.gmra.mxu0 %v760
  %v1442 = vpop.f32.mrf.mxu0
  %v1443 = vadd.f32 %v1072, %v1442
  %1444 = vmatmul.f32.gmra.mxu0 %v762
  %v1445 = vpop.f32.mrf.mxu0
  %v1446 = vadd.f32 %v1072, %v1445
  %1447 = vmatmul.f32.gmra.mxu0 %v764
  %v1448 = vpop.f32.mrf.mxu0
  %v1449 = vadd.f32 %v1072, %v1448
  %1450 = vmatmul.f32.gmra.mxu0 %v766
  %v1451 = vpop.f32.mrf.mxu0
  %v1452 = vadd.f32 %v1072, %v1451
  %1453 = vmatmul.f32.gmra.mxu0 %v768
  %v1454 = vpop.f32.mrf.mxu0
  %v1455 = vadd.f32 %v1072, %v1454
  %1456 = vmatmul.f32.gmra.mxu0 %v770
  %v1457 = vpop.f32.mrf.mxu0
  %v1458 = vadd.f32 %v1072, %v1457
  %1459 = vmatmul.f32.gmra.mxu0 %v772
  %v1460 = vpop.f32.mrf.mxu0
  %v1461 = vadd.f32 %v1072, %v1460
  %1462 = vmatmul.f32.gmra.mxu0 %v774
  %v1463 = vpop.f32.mrf.mxu0
  %v1464 = vadd.f32 %v1072, %v1463
  %1465 = vmatmul.f32.gmra.mxu0 %v776
  %v1466 = vpop.f32.mrf.mxu0
  %v1467 = vadd.f32 %v1072, %v1466
  %1468 = vmatmul.f32.gmra.mxu0 %v778
  %v1469 = vpop.f32.mrf.mxu0
  %v1470 = vadd.f32 %v1072, %v1469
  %1471 = vmatmul.f32.gmra.mxu0 %v780
  %v1472 = vpop.f32.mrf.mxu0
  %v1473 = vadd.f32 %v1072, %v1472
  %1474 = vmatmul.f32.gmra.mxu0 %v782
  %v1475 = vpop.f32.mrf.mxu0
  %v1476 = vadd.f32 %v1072, %v1475
  %1477 = vmatmul.f32.gmra.mxu0 %v784
  %v1478 = vpop.f32.mrf.mxu0
  %v1479 = vadd.f32 %v1072, %v1478
  %1480 = vmatmul.f32.gmra.mxu0 %v786
  %v1481 = vpop.f32.mrf.mxu0
  %v1482 = vadd.f32 %v1072, %v1481
  %1483 = vmatmul.f32.gmra.mxu0 %v788
  %v1484 = vpop.f32.mrf.mxu0
  %v1485 = vadd.f32 %v1072, %v1484
  %1486 = vmatmul.f32.gmra.mxu0 %v790
  %v1487 = vpop.f32.mrf.mxu0
  %v1488 = vadd.f32 %v1072, %v1487
  %1489 = vmatmul.f32.gmra.mxu0 %v792
  %v1490 = vpop.f32.mrf.mxu0
  %v1491 = vadd.f32 %v1072, %v1490
  %1492 = vmatmul.f32.gmra.mxu0 %v794
  %v1493 = vpop.f32.mrf.mxu0
  %v1494 = vadd.f32 %v1072, %v1493
  %1495 = vmatmul.f32.gmra.mxu0 %v796
  %v1496 = vpop.f32.mrf.mxu0
  %v1497 = vadd.f32 %v1072, %v1496
  %1498 = vmatmul.f32.gmra.mxu0 %v798
  %v1499 = vpop.f32.mrf.mxu0
  %v1500 = vadd.f32 %v1072, %v1499
  %1501 = vmatmul.f32.gmra.mxu0 %v800
  %v1502 = vpop.f32.mrf.mxu0
  %v1503 = vadd.f32 %v1072, %v1502
  %1504 = vmatmul.f32.gmra.mxu0 %v802
  %v1505 = vpop.f32.mrf.mxu0
  %v1506 = vadd.f32 %v1072, %v1505
  %1507 = vmatmul.f32.gmra.mxu0 %v804
  %v1508 = vpop.f32.mrf.mxu0
  %v1509 = vadd.f32 %v1072, %v1508
  %1510 = vmatmul.f32.gmra.mxu0 %v806
  %v1511 = vpop.f32.mrf.mxu0
  %v1512 = vadd.f32 %v1072, %v1511
  %1513 = vmatmul.f32.gmra.mxu0 %v808
  %v1514 = vpop.f32.mrf.mxu0
  %v1515 = vadd.f32 %v1072, %v1514
  %1516 = vmatmul.f32.gmra.mxu0 %v810
  %v1517 = vpop.f32.mrf.mxu0
  %v1518 = vadd.f32 %v1072, %v1517
  %1519 = vmatmul.f32.gmra.mxu0 %v812
  %v1520 = vpop.f32.mrf.mxu0
  %v1521 = vadd.f32 %v1072, %v1520
  %1522 = vmatmul.f32.gmra.mxu0 %v814
  %v1523 = vpop.f32.mrf.mxu0
  %v1524 = vadd.f32 %v1072, %v1523
  %1525 = vmatmul.f32.gmra.mxu0 %v816
  %v1526 = vpop.f32.mrf.mxu0
  %v1527 = vadd.f32 %v1072, %v1526
  %1528 = vmatmul.f32.gmra.mxu0 %v818
  %v1529 = vpop.f32.mrf.mxu0
  %v1530 = vadd.f32 %v1072, %v1529
  %1531 = vmatmul.f32.gmra.mxu0 %v820
  %v1532 = vpop.f32.mrf.mxu0
  %v1533 = vadd.f32 %v1072, %v1532
  %1534 = vmatmul.f32.gmra.mxu0 %v822
  %v1535 = vpop.f32.mrf.mxu0
  %v1536 = vadd.f32 %v1072, %v1535
  %1537 = vmatmul.f32.gmra.mxu0 %v824
  %v1538 = vpop.f32.mrf.mxu0
  %v1539 = vadd.f32 %v1072, %v1538
  %1540 = vmatmul.f32.gmra.mxu0 %v826
  %v1541 = vpop.f32.mrf.mxu0
  %v1542 = vadd.f32 %v1072, %v1541
  %1543 = vmatmul.f32.gmra.mxu0 %v828
  %v1544 = vpop.f32.mrf.mxu0
  %v1545 = vadd.f32 %v1072, %v1544
  %1546 = vmatmul.f32.gmra.mxu0 %v830
  %v1547 = vpop.f32.mrf.mxu0
  %v1548 = vadd.f32 %v1072, %v1547
  %1549 = vmatmul.f32.gmra.mxu0 %v832
  %v1550 = vpop.f32.mrf.mxu0
  %v1551 = vadd.f32 %v1072, %v1550
  %1552 = vmatmul.f32.gmra.mxu0 %v834
  %v1553 = vpop.f32.mrf.mxu0
  %v1554 = vadd.f32 %v1072, %v1553
  %1555 = vmatmul.f32.gmra.mxu0 %v836
  %v1556 = vpop.f32.mrf.mxu0
  %v1557 = vadd.f32 %v1072, %v1556
  %1558 = vmatmul.f32.gmra.mxu0 %v838
  %v1559 = vpop.f32.mrf.mxu0
  %v1560 = vadd.f32 %v1072, %v1559
  %1561 = vmatmul.f32.gmra.mxu0 %v840
  %v1562 = vpop.f32.mrf.mxu0
  %v1563 = vadd.f32 %v1072, %v1562
  %1564 = vmatmul.f32.gmra.mxu0 %v842
  %v1565 = vpop.f32.mrf.mxu0
  %v1566 = vadd.f32 %v1072, %v1565
  %1567 = vmatmul.f32.gmra.mxu0 %v844
  %v1568 = vpop.f32.mrf.mxu0
  %v1569 = vadd.f32 %v1072, %v1568
  %1570 = vmatmul.f32.gmra.mxu0 %v846
  %v1571 = vpop.f32.mrf.mxu0
  %v1572 = vadd.f32 %v1072, %v1571
  %1573 = vmatmul.f32.gmra.mxu0 %v848
  %v1574 = vpop.f32.mrf.mxu0
  %v1575 = vadd.f32 %v1072, %v1574
  %1576 = vmatmul.f32.gmra.mxu0 %v850
  %v1577 = vpop.f32.mrf.mxu0
  %v1578 = vadd.f32 %v1072, %v1577
  %1579 = vmatmul.f32.gmra.mxu0 %v852
  %v1580 = vpop.f32.mrf.mxu0
  %v1581 = vadd.f32 %v1072, %v1580
  %1582 = vmatmul.f32.gmra.mxu0 %v854
  %v1583 = vpop.f32.mrf.mxu0
  %v1584 = vadd.f32 %v1072, %v1583
  %1585 = vmatmul.f32.gmra.mxu0 %v856
  %v1586 = vpop.f32.mrf.mxu0
  %v1587 = vadd.f32 %v1072, %v1586
  %1588 = vmatmul.f32.gmra.mxu0 %v858
  %v1589 = vpop.f32.mrf.mxu0
  %v1590 = vadd.f32 %v1072, %v1589
  %1591 = vmatmul.f32.gmra.mxu0 %v860
  %v1592 = vpop.f32.mrf.mxu0
  %v1593 = vadd.f32 %v1072, %v1592
  %1594 = vmatmul.f32.gmra.mxu0 %v862
  %v1595 = vpop.f32.mrf.mxu0
  %v1596 = vadd.f32 %v1072, %v1595
  %1597 = vmatmul.f32.gmra.mxu0 %v864
  %v1598 = vpop.f32.mrf.mxu0
  %v1599 = vadd.f32 %v1072, %v1598
  %1600 = vmatmul.f32.gmra.mxu0 %v866
  %v1601 = vpop.f32.mrf.mxu0
  %v1602 = vadd.f32 %v1072, %v1601
  %1603 = vmatmul.f32.gmra.mxu0 %v868
  %v1604 = vpop.f32.mrf.mxu0
  %v1605 = vadd.f32 %v1072, %v1604
  %1606 = vmatmul.f32.gmra.mxu0 %v870
  %v1607 = vpop.f32.mrf.mxu0
  %v1608 = vadd.f32 %v1072, %v1607
  %1609 = vmatmul.f32.gmra.mxu0 %v872
  %v1610 = vpop.f32.mrf.mxu0
  %v1611 = vadd.f32 %v1072, %v1610
  %1612 = vmatmul.f32.gmra.mxu0 %v874
  %v1613 = vpop.f32.mrf.mxu0
  %v1614 = vadd.f32 %v1072, %v1613
  %1615 = vmatmul.f32.gmra.mxu0 %v876
  %v1616 = vpop.f32.mrf.mxu0
  %v1617 = vadd.f32 %v1072, %v1616
  %1618 = vmatmul.f32.gmra.mxu0 %v878
  %v1619 = vpop.f32.mrf.mxu0
  %v1620 = vadd.f32 %v1072, %v1619
  %1621 = vmatmul.f32.gmra.mxu0 %v880
  %v1622 = vpop.f32.mrf.mxu0
  %v1623 = vadd.f32 %v1072, %v1622
  %1624 = vmatmul.f32.gmra.mxu0 %v882
  %v1625 = vpop.f32.mrf.mxu0
  %v1626 = vadd.f32 %v1072, %v1625
  %1627 = vmatmul.f32.gmra.mxu0 %v884
  %v1628 = vpop.f32.mrf.mxu0
  %v1629 = vadd.f32 %v1072, %v1628
  %1630 = vmatmul.f32.gmra.mxu0 %v886
  %v1631 = vpop.f32.mrf.mxu0
  %v1632 = vadd.f32 %v1072, %v1631
  %1633 = vmatmul.f32.gmra.mxu0 %v888
  %v1634 = vpop.f32.mrf.mxu0
  %v1635 = vadd.f32 %v1072, %v1634
  %1636 = vmatmul.f32.gmra.mxu0 %v890
  %v1637 = vpop.f32.mrf.mxu0
  %v1638 = vadd.f32 %v1072, %v1637
  %1639 = vmatmul.f32.gmra.mxu0 %v892
  %v1640 = vpop.f32.mrf.mxu0
  %v1641 = vadd.f32 %v1072, %v1640
  %1642 = vmatmul.f32.gmra.mxu0 %v894
  %v1643 = vpop.f32.mrf.mxu0
  %v1644 = vadd.f32 %v1072, %v1643
  %1645 = vmatmul.f32.gmra.mxu0 %v896
  %v1646 = vpop.f32.mrf.mxu0
  %v1647 = vadd.f32 %v1072, %v1646
  %1648 = vmatmul.f32.gmra.mxu0 %v898
  %v1649 = vpop.f32.mrf.mxu0
  %v1650 = vadd.f32 %v1072, %v1649
  %1651 = vmatmul.f32.gmra.mxu0 %v900
  %v1652 = vpop.f32.mrf.mxu0
  %v1653 = vadd.f32 %v1072, %v1652
  %1654 = vmatmul.f32.gmra.mxu0 %v902
  %v1655 = vpop.f32.mrf.mxu0
  %v1656 = vadd.f32 %v1072, %v1655
  %1657 = vmatmul.f32.gmra.mxu0 %v904
  %v1658 = vpop.f32.mrf.mxu0
  %v1659 = vadd.f32 %v1072, %v1658
  %1660 = vmatmul.f32.gmra.mxu0 %v906
  %v1661 = vpop.f32.mrf.mxu0
  %v1662 = vadd.f32 %v1072, %v1661
  %1663 = vmatmul.f32.gmra.mxu0 %v908
  %v1664 = vpop.f32.mrf.mxu0
  %v1665 = vadd.f32 %v1072, %v1664
  %1666 = vmatmul.f32.gmra.mxu0 %v910
  %v1667 = vpop.f32.mrf.mxu0
  %v1668 = vadd.f32 %v1072, %v1667
  %1669 = vmatmul.f32.gmra.mxu0 %v912
  %v1670 = vpop.f32.mrf.mxu0
  %v1671 = vadd.f32 %v1072, %v1670
  %1672 = vmatmul.f32.gmra.mxu0 %v914
  %v1673 = vpop.f32.mrf.mxu0
  %v1674 = vadd.f32 %v1072, %v1673
  %1675 = vmatmul.f32.gmra.mxu0 %v916
  %v1676 = vpop.f32.mrf.mxu0
  %v1677 = vadd.f32 %v1072, %v1676
  %1678 = vmatmul.f32.gmra.mxu0 %v918
  %v1679 = vpop.f32.mrf.mxu0
  %v1680 = vadd.f32 %v1072, %v1679
  %1681 = vmatmul.f32.gmra.mxu0 %v920
  %v1682 = vpop.f32.mrf.mxu0
  %v1683 = vadd.f32 %v1072, %v1682
  %1684 = vmatmul.f32.gmra.mxu0 %v922
  %v1685 = vpop.f32.mrf.mxu0
  %v1686 = vadd.f32 %v1072, %v1685
  %1687 = vmatmul.f32.gmra.mxu0 %v924
  %v1688 = vpop.f32.mrf.mxu0
  %v1689 = vadd.f32 %v1072, %v1688
  %1690 = vmatmul.f32.gmra.mxu0 %v926
  %v1691 = vpop.f32.mrf.mxu0
  %v1692 = vadd.f32 %v1072, %v1691
  %1693 = vmatmul.f32.gmra.mxu0 %v928
  %v1694 = vpop.f32.mrf.mxu0
  %v1695 = vadd.f32 %v1072, %v1694
  %1696 = vmatmul.f32.gmra.mxu0 %v930
  %v1697 = vpop.f32.mrf.mxu0
  %v1698 = vadd.f32 %v1072, %v1697
  %1699 = vmatmul.f32.gmra.mxu0 %v932
  %v1700 = vpop.f32.mrf.mxu0
  %v1701 = vadd.f32 %v1072, %v1700
  %1702 = vmatmul.f32.gmra.mxu0 %v934
  %v1703 = vpop.f32.mrf.mxu0
  %v1704 = vadd.f32 %v1072, %v1703
  %1705 = vmatmul.f32.gmra.mxu0 %v936
  %v1706 = vpop.f32.mrf.mxu0
  %v1707 = vadd.f32 %v1072, %v1706
  %1708 = vmatmul.f32.gmra.mxu0 %v938
  %v1709 = vpop.f32.mrf.mxu0
  %v1710 = vadd.f32 %v1072, %v1709
  %1711 = vmatmul.f32.gmra.mxu0 %v940
  %v1712 = vpop.f32.mrf.mxu0
  %v1713 = vadd.f32 %v1072, %v1712
  %1714 = vmatmul.f32.gmra.mxu0 %v942
  %v1715 = vpop.f32.mrf.mxu0
  %v1716 = vadd.f32 %v1072, %v1715
  %1717 = vmatmul.f32.gmra.mxu0 %v944
  %v1718 = vpop.f32.mrf.mxu0
  %v1719 = vadd.f32 %v1072, %v1718
  %1720 = vmatmul.f32.gmra.mxu0 %v946
  %v1721 = vpop.f32.mrf.mxu0
  %v1722 = vadd.f32 %v1072, %v1721
  %1723 = vmatmul.f32.gmra.mxu0 %v948
  %v1724 = vpop.f32.mrf.mxu0
  %v1725 = vadd.f32 %v1072, %v1724
  %1726 = vmatmul.f32.gmra.mxu0 %v950
  %v1727 = vpop.f32.mrf.mxu0
  %v1728 = vadd.f32 %v1072, %v1727
  %1729 = vmatmul.f32.gmra.mxu0 %v952
  %v1730 = vpop.f32.mrf.mxu0
  %v1731 = vadd.f32 %v1072, %v1730
  %1732 = vmatmul.f32.gmra.mxu0 %v954
  %v1733 = vpop.f32.mrf.mxu0
  %v1734 = vadd.f32 %v1072, %v1733
  %1735 = vmatmul.f32.gmra.mxu0 %v956
  %v1736 = vpop.f32.mrf.mxu0
  %v1737 = vadd.f32 %v1072, %v1736
  %1738 = vmatmul.f32.gmra.mxu0 %v958
  %v1739 = vpop.f32.mrf.mxu0
  %v1740 = vadd.f32 %v1072, %v1739
  %1741 = vmatmul.f32.gmra.mxu0 %v960
  %v1742 = vpop.f32.mrf.mxu0
  %v1743 = vadd.f32 %v1072, %v1742
  %1744 = vmatmul.f32.gmra.mxu0 %v962
  %v1745 = vpop.f32.mrf.mxu0
  %v1746 = vadd.f32 %v1072, %v1745
  %1747 = vmatmul.f32.gmra.mxu0 %v964
  %v1748 = vpop.f32.mrf.mxu0
  %v1749 = vadd.f32 %v1072, %v1748
  %1750 = vmatmul.f32.gmra.mxu0 %v966
  %v1751 = vpop.f32.mrf.mxu0
  %v1752 = vadd.f32 %v1072, %v1751
  %1753 = vmatmul.f32.gmra.mxu0 %v968
  %v1754 = vpop.f32.mrf.mxu0
  %v1755 = vadd.f32 %v1072, %v1754
  %1756 = vmatmul.f32.gmra.mxu0 %v970
  %v1757 = vpop.f32.mrf.mxu0
  %v1758 = vadd.f32 %v1072, %v1757
  %1759 = vmatmul.f32.gmra.mxu0 %v972
  %v1760 = vpop.f32.mrf.mxu0
  %v1761 = vadd.f32 %v1072, %v1760
  %1762 = vmatmul.f32.gmra.mxu0 %v974
  %v1763 = vpop.f32.mrf.mxu0
  %v1764 = vadd.f32 %v1072, %v1763
  %1765 = vmatmul.f32.gmra.mxu0 %v976
  %v1766 = vpop.f32.mrf.mxu0
  %v1767 = vadd.f32 %v1072, %v1766
  %1768 = vmatmul.f32.gmra.mxu0 %v978
  %v1769 = vpop.f32.mrf.mxu0
  %v1770 = vadd.f32 %v1072, %v1769
  %1771 = vmatmul.f32.gmra.mxu0 %v980
  %v1772 = vpop.f32.mrf.mxu0
  %v1773 = vadd.f32 %v1072, %v1772
  %1774 = vmatmul.f32.gmra.mxu0 %v982
  %v1775 = vpop.f32.mrf.mxu0
  %v1776 = vadd.f32 %v1072, %v1775
  %1777 = vmatmul.f32.gmra.mxu0 %v984
  %v1778 = vpop.f32.mrf.mxu0
  %v1779 = vadd.f32 %v1072, %v1778
  %1780 = vmatmul.f32.gmra.mxu0 %v986
  %v1781 = vpop.f32.mrf.mxu0
  %v1782 = vadd.f32 %v1072, %v1781
  %1783 = vmatmul.f32.gmra.mxu0 %v988
  %v1784 = vpop.f32.mrf.mxu0
  %v1785 = vadd.f32 %v1072, %v1784
  %1786 = vmatmul.f32.gmra.mxu0 %v990
  %v1787 = vpop.f32.mrf.mxu0
  %v1788 = vadd.f32 %v1072, %v1787
  %1789 = vmatmul.f32.gmra.mxu0 %v992
  %v1790 = vpop.f32.mrf.mxu0
  %v1791 = vadd.f32 %v1072, %v1790
  %1792 = vmatmul.f32.gmra.mxu0 %v994
  %v1793 = vpop.f32.mrf.mxu0
  %v1794 = vadd.f32 %v1072, %v1793
  %1795 = vmatmul.f32.gmra.mxu0 %v996
  %v1796 = vpop.f32.mrf.mxu0
  %v1797 = vadd.f32 %v1072, %v1796
  %1798 = vmatmul.f32.gmra.mxu0 %v998
  %v1799 = vpop.f32.mrf.mxu0
  %v1800 = vadd.f32 %v1072, %v1799
  %1801 = vmatmul.f32.gmra.mxu0 %v1000
  %v1802 = vpop.f32.mrf.mxu0
  %v1803 = vadd.f32 %v1072, %v1802
  %1804 = vmatmul.f32.gmra.mxu0 %v1002
  %v1805 = vpop.f32.mrf.mxu0
  %v1806 = vadd.f32 %v1072, %v1805
  %1807 = vmatmul.f32.gmra.mxu0 %v1004
  %v1808 = vpop.f32.mrf.mxu0
  %v1809 = vadd.f32 %v1072, %v1808
  %1810 = vmatmul.f32.gmra.mxu0 %v1006
  %v1811 = vpop.f32.mrf.mxu0
  %v1812 = vadd.f32 %v1072, %v1811
  %1813 = vmatmul.f32.gmra.mxu0 %v1008
  %v1814 = vpop.f32.mrf.mxu0
  %v1815 = vadd.f32 %v1072, %v1814
  %1816 = vmatmul.f32.gmra.mxu0 %v1010
  %v1817 = vpop.f32.mrf.mxu0
  %v1818 = vadd.f32 %v1072, %v1817
  %1819 = vmatmul.f32.gmra.mxu0 %v1012
  %v1820 = vpop.f32.mrf.mxu0
  %v1821 = vadd.f32 %v1072, %v1820
  %1822 = vmatmul.f32.gmra.mxu0 %v1014
  %v1823 = vpop.f32.mrf.mxu0
  %v1824 = vadd.f32 %v1072, %v1823
  %1825 = vmatmul.f32.gmra.mxu0 %v1016
  %v1826 = vpop.f32.mrf.mxu0
  %v1827 = vadd.f32 %v1072, %v1826
  %1828 = vmatmul.f32.gmra.mxu0 %v1018
  %v1829 = vpop.f32.mrf.mxu0
  %v1830 = vadd.f32 %v1072, %v1829
  %1831 = vmatmul.f32.gmra.mxu0 %v1020
  %v1832 = vpop.f32.mrf.mxu0
  %v1833 = vadd.f32 %v1072, %v1832
  %1834 = vmatmul.f32.gmra.mxu0 %v1022
  %v1835 = vpop.f32.mrf.mxu0
  %v1836 = vadd.f32 %v1072, %v1835
  %1837 = vmatmul.f32.gmra.mxu0 %v1024
  %v1838 = vpop.f32.mrf.mxu0
  %v1839 = vadd.f32 %v1072, %v1838
  %1840 = vmatmul.f32.gmra.mxu0 %v1026
  %v1841 = vpop.f32.mrf.mxu0
  %v1842 = vadd.f32 %v1072, %v1841
  %1843 = vmatmul.f32.gmra.mxu0 %v1028
  %v1844 = vpop.f32.mrf.mxu0
  %v1845 = vadd.f32 %v1072, %v1844
  %1846 = vmatmul.f32.gmra.mxu0 %v1030
  %v1847 = vpop.f32.mrf.mxu0
  %v1848 = vadd.f32 %v1072, %v1847
  %1849 = vmatmul.f32.gmra.mxu0 %v1032
  %v1850 = vpop.f32.mrf.mxu0
  %v1851 = vadd.f32 %v1072, %v1850
  %1852 = vmatmul.f32.gmra.mxu0 %v1034
  %v1853 = vpop.f32.mrf.mxu0
  %v1854 = vadd.f32 %v1072, %v1853
  %1855 = vmatmul.f32.gmra.mxu0 %v1036
  %v1856 = vpop.f32.mrf.mxu0
  %v1857 = vadd.f32 %v1072, %v1856
  %1858 = vdwg.mxu0
  %1859 = vmatpush.msra.mxu0 %v1069
  %1860 = vmatpush.msra.mxu0 %v1068
  %1861 = vmatpush.msra.mxu0 %v1067
  %1862 = vmatpush.msra.mxu0 %v1066
  %1863 = vmatpush.msra.mxu0 %v1065
  %1864 = vmatpush.msra.mxu0 %v1064
  %1865 = vmatpush.msra.mxu0 %v1063
  %1866 = vmatpush.msra.mxu0 %v1062
  %1867 = vmatpush.msra.mxu0 %v1061
  %1868 = vmatpush.msra.mxu0 %v1060
  %1869 = vmatpush.msra.mxu0 %v1059
  %1870 = vmatpush.msra.mxu0 %v1058
  %1871 = vmatpush.msra.mxu0 %v1057
  %1872 = vmatpush.msra.mxu0 %v1056
  %1873 = vmatpush.msra.mxu0 %v1055
  %1874 = vmatpush.msra.mxu0 %v1054
  %1875 = vmatmul.f32.gmra.mxu0 %v527
  %v1876 = vpop.f32.mrf.mxu0
  %v1877 = vadd.f32 %v1092, %v1876
  %1878 = vmatmul.f32.gmra.mxu0 %v529
  %v1879 = vpop.f32.mrf.mxu0
  %v1880 = vadd.f32 %v1095, %v1879
  %1881 = vmatmul.f32.gmra.mxu0 %v531
  %v1882 = vpop.f32.mrf.mxu0
  %v1883 = vadd.f32 %v1098, %v1882
  %1884 = vmatmul.f32.gmra.mxu0 %v533
  %v1885 = vpop.f32.mrf.mxu0
  %v1886 = vadd.f32 %v1101, %v1885
  %1887 = vmatmul.f32.gmra.mxu0 %v535
  %v1888 = vpop.f32.mrf.mxu0
  %v1889 = vadd.f32 %v1104, %v1888
  %1890 = vmatmul.f32.gmra.mxu0 %v537
  %v1891 = vpop.f32.mrf.mxu0
  %v1892 = vadd.f32 %v1107, %v1891
  %1893 = vmatmul.f32.gmra.mxu0 %v539
  %v1894 = vpop.f32.mrf.mxu0
  %v1895 = vadd.f32 %v1110, %v1894
  %1896 = vmatmul.f32.gmra.mxu0 %v541
  %v1897 = vpop.f32.mrf.mxu0
  %v1898 = vadd.f32 %v1113, %v1897
  %1899 = vmatmul.f32.gmra.mxu0 %v543
  %v1900 = vpop.f32.mrf.mxu0
  %v1901 = vadd.f32 %v1116, %v1900
  %1902 = vmatmul.f32.gmra.mxu0 %v545
  %v1903 = vpop.f32.mrf.mxu0
  %v1904 = vadd.f32 %v1119, %v1903
  %1905 = vmatmul.f32.gmra.mxu0 %v547
  %v1906 = vpop.f32.mrf.mxu0
  %v1907 = vadd.f32 %v1122, %v1906
  %1908 = vmatmul.f32.gmra.mxu0 %v549
  %v1909 = vpop.f32.mrf.mxu0
  %v1910 = vadd.f32 %v1125, %v1909
  %1911 = vmatmul.f32.gmra.mxu0 %v551
  %v1912 = vpop.f32.mrf.mxu0
  %v1913 = vadd.f32 %v1128, %v1912
  %1914 = vmatmul.f32.gmra.mxu0 %v553
  %v1915 = vpop.f32.mrf.mxu0
  %v1916 = vadd.f32 %v1131, %v1915
  %1917 = vmatmul.f32.gmra.mxu0 %v555
  %v1918 = vpop.f32.mrf.mxu0
  %v1919 = vadd.f32 %v1134, %v1918
  %1920 = vmatmul.f32.gmra.mxu0 %v557
  %v1921 = vpop.f32.mrf.mxu0
  %v1922 = vadd.f32 %v1137, %v1921
  %1923 = vmatmul.f32.gmra.mxu0 %v559
  %v1924 = vpop.f32.mrf.mxu0
  %v1925 = vadd.f32 %v1140, %v1924
  %1926 = vmatmul.f32.gmra.mxu0 %v561
  %v1927 = vpop.f32.mrf.mxu0
  %v1928 = vadd.f32 %v1143, %v1927
  %1929 = vmatmul.f32.gmra.mxu0 %v563
  %v1930 = vpop.f32.mrf.mxu0
  %v1931 = vadd.f32 %v1146, %v1930
  %1932 = vmatmul.f32.gmra.mxu0 %v565
  %v1933 = vpop.f32.mrf.mxu0
  %v1934 = vadd.f32 %v1149, %v1933
  %1935 = vmatmul.f32.gmra.mxu0 %v567
  %v1936 = vpop.f32.mrf.mxu0
  %v1937 = vadd.f32 %v1152, %v1936
  %1938 = vmatmul.f32.gmra.mxu0 %v569
  %v1939 = vpop.f32.mrf.mxu0
  %v1940 = vadd.f32 %v1155, %v1939
  %1941 = vmatmul.f32.gmra.mxu0 %v571
  %v1942 = vpop.f32.mrf.mxu0
  %v1943 = vadd.f32 %v1158, %v1942
  %1944 = vmatmul.f32.gmra.mxu0 %v573
  %v1945 = vpop.f32.mrf.mxu0
  %v1946 = vadd.f32 %v1161, %v1945
  %1947 = vmatmul.f32.gmra.mxu0 %v575
  %v1948 = vpop.f32.mrf.mxu0
  %v1949 = vadd.f32 %v1164, %v1948
  %1950 = vmatmul.f32.gmra.mxu0 %v577
  %v1951 = vpop.f32.mrf.mxu0
  %v1952 = vadd.f32 %v1167, %v1951
  %1953 = vmatmul.f32.gmra.mxu0 %v579
  %v1954 = vpop.f32.mrf.mxu0
  %v1955 = vadd.f32 %v1170, %v1954
  %1956 = vmatmul.f32.gmra.mxu0 %v581
  %v1957 = vpop.f32.mrf.mxu0
  %v1958 = vadd.f32 %v1173, %v1957
  %1959 = vmatmul.f32.gmra.mxu0 %v583
  %v1960 = vpop.f32.mrf.mxu0
  %v1961 = vadd.f32 %v1176, %v1960
  %1962 = vmatmul.f32.gmra.mxu0 %v585
  %v1963 = vpop.f32.mrf.mxu0
  %v1964 = vadd.f32 %v1179, %v1963
  %1965 = vmatmul.f32.gmra.mxu0 %v587
  %v1966 = vpop.f32.mrf.mxu0
  %v1967 = vadd.f32 %v1182, %v1966
  %1968 = vmatmul.f32.gmra.mxu0 %v589
  %v1969 = vpop.f32.mrf.mxu0
  %v1970 = vadd.f32 %v1185, %v1969
  %1971 = vmatmul.f32.gmra.mxu0 %v591
  %v1972 = vpop.f32.mrf.mxu0
  %v1973 = vadd.f32 %v1188, %v1972
  %1974 = vmatmul.f32.gmra.mxu0 %v593
  %v1975 = vpop.f32.mrf.mxu0
  %v1976 = vadd.f32 %v1191, %v1975
  %1977 = vmatmul.f32.gmra.mxu0 %v595
  %v1978 = vpop.f32.mrf.mxu0
  %v1979 = vadd.f32 %v1194, %v1978
  %1980 = vmatmul.f32.gmra.mxu0 %v597
  %v1981 = vpop.f32.mrf.mxu0
  %v1982 = vadd.f32 %v1197, %v1981
  %1983 = vmatmul.f32.gmra.mxu0 %v599
  %v1984 = vpop.f32.mrf.mxu0
  %v1985 = vadd.f32 %v1200, %v1984
  %1986 = vmatmul.f32.gmra.mxu0 %v601
  %v1987 = vpop.f32.mrf.mxu0
  %v1988 = vadd.f32 %v1203, %v1987
  %1989 = vmatmul.f32.gmra.mxu0 %v603
  %v1990 = vpop.f32.mrf.mxu0
  %v1991 = vadd.f32 %v1206, %v1990
  %1992 = vmatmul.f32.gmra.mxu0 %v605
  %v1993 = vpop.f32.mrf.mxu0
  %v1994 = vadd.f32 %v1209, %v1993
  %1995 = vmatmul.f32.gmra.mxu0 %v607
  %v1996 = vpop.f32.mrf.mxu0
  %v1997 = vadd.f32 %v1212, %v1996
  %1998 = vmatmul.f32.gmra.mxu0 %v609
  %v1999 = vpop.f32.mrf.mxu0
  %v2000 = vadd.f32 %v1215, %v1999
  %2001 = vmatmul.f32.gmra.mxu0 %v611
  %v2002 = vpop.f32.mrf.mxu0
  %v2003 = vadd.f32 %v1218, %v2002
  %2004 = vmatmul.f32.gmra.mxu0 %v613
  %v2005 = vpop.f32.mrf.mxu0
  %v2006 = vadd.f32 %v1221, %v2005
  %2007 = vmatmul.f32.gmra.mxu0 %v615
  %v2008 = vpop.f32.mrf.mxu0
  %v2009 = vadd.f32 %v1224, %v2008
  %2010 = vmatmul.f32.gmra.mxu0 %v617
  %v2011 = vpop.f32.mrf.mxu0
  %v2012 = vadd.f32 %v1227, %v2011
  %2013 = vmatmul.f32.gmra.mxu0 %v619
  %v2014 = vpop.f32.mrf.mxu0
  %v2015 = vadd.f32 %v1230, %v2014
  %2016 = vmatmul.f32.gmra.mxu0 %v621
  %v2017 = vpop.f32.mrf.mxu0
  %v2018 = vadd.f32 %v1233, %v2017
  %2019 = vmatmul.f32.gmra.mxu0 %v623
  %v2020 = vpop.f32.mrf.mxu0
  %v2021 = vadd.f32 %v1236, %v2020
  %2022 = vmatmul.f32.gmra.mxu0 %v625
  %v2023 = vpop.f32.mrf.mxu0
  %v2024 = vadd.f32 %v1239, %v2023
  %2025 = vmatmul.f32.gmra.mxu0 %v627
  %v2026 = vpop.f32.mrf.mxu0
  %v2027 = vadd.f32 %v1242, %v2026
  %2028 = vmatmul.f32.gmra.mxu0 %v629
  %v2029 = vpop.f32.mrf.mxu0
  %v2030 = vadd.f32 %v1245, %v2029
  %2031 = vmatmul.f32.gmra.mxu0 %v631
  %v2032 = vpop.f32.mrf.mxu0
  %v2033 = vadd.f32 %v1248, %v2032
  %2034 = vmatmul.f32.gmra.mxu0 %v633
  %v2035 = vpop.f32.mrf.mxu0
  %v2036 = vadd.f32 %v1251, %v2035
  %2037 = vmatmul.f32.gmra.mxu0 %v635
  %v2038 = vpop.f32.mrf.mxu0
  %v2039 = vadd.f32 %v1254, %v2038
  %2040 = vmatmul.f32.gmra.mxu0 %v637
  %v2041 = vpop.f32.mrf.mxu0
  %v2042 = vadd.f32 %v1257, %v2041
  %2043 = vmatmul.f32.gmra.mxu0 %v639
  %v2044 = vpop.f32.mrf.mxu0
  %v2045 = vadd.f32 %v1260, %v2044
  %2046 = vmatmul.f32.gmra.mxu0 %v641
  %v2047 = vpop.f32.mrf.mxu0
  %v2048 = vadd.f32 %v1263, %v2047
  %2049 = vmatmul.f32.gmra.mxu0 %v643
  %v2050 = vpop.f32.mrf.mxu0
  %v2051 = vadd.f32 %v1266, %v2050
  %2052 = vmatmul.f32.gmra.mxu0 %v645
  %v2053 = vpop.f32.mrf.mxu0
  %v2054 = vadd.f32 %v1269, %v2053
  %2055 = vmatmul.f32.gmra.mxu0 %v647
  %v2056 = vpop.f32.mrf.mxu0
  %v2057 = vadd.f32 %v1272, %v2056
  %2058 = vmatmul.f32.gmra.mxu0 %v649
  %v2059 = vpop.f32.mrf.mxu0
  %v2060 = vadd.f32 %v1275, %v2059
  %2061 = vmatmul.f32.gmra.mxu0 %v651
  %v2062 = vpop.f32.mrf.mxu0
  %v2063 = vadd.f32 %v1278, %v2062
  %2064 = vmatmul.f32.gmra.mxu0 %v653
  %v2065 = vpop.f32.mrf.mxu0
  %v2066 = vadd.f32 %v1281, %v2065
  %2067 = vmatmul.f32.gmra.mxu0 %v655
  %v2068 = vpop.f32.mrf.mxu0
  %v2069 = vadd.f32 %v1284, %v2068
  %2070 = vmatmul.f32.gmra.mxu0 %v657
  %v2071 = vpop.f32.mrf.mxu0
  %v2072 = vadd.f32 %v1287, %v2071
  %2073 = vmatmul.f32.gmra.mxu0 %v659
  %v2074 = vpop.f32.mrf.mxu0
  %v2075 = vadd.f32 %v1290, %v2074
  %2076 = vmatmul.f32.gmra.mxu0 %v661
  %v2077 = vpop.f32.mrf.mxu0
  %v2078 = vadd.f32 %v1293, %v2077
  %2079 = vmatmul.f32.gmra.mxu0 %v663
  %v2080 = vpop.f32.mrf.mxu0
  %v2081 = vadd.f32 %v1296, %v2080
  %2082 = vmatmul.f32.gmra.mxu0 %v665
  %v2083 = vpop.f32.mrf.mxu0
  %v2084 = vadd.f32 %v1299, %v2083
  %2085 = vmatmul.f32.gmra.mxu0 %v667
  %v2086 = vpop.f32.mrf.mxu0
  %v2087 = vadd.f32 %v1302, %v2086
  %2088 = vmatmul.f32.gmra.mxu0 %v669
  %v2089 = vpop.f32.mrf.mxu0
  %v2090 = vadd.f32 %v1305, %v2089
  %2091 = vmatmul.f32.gmra.mxu0 %v671
  %v2092 = vpop.f32.mrf.mxu0
  %v2093 = vadd.f32 %v1308, %v2092
  %2094 = vmatmul.f32.gmra.mxu0 %v673
  %v2095 = vpop.f32.mrf.mxu0
  %v2096 = vadd.f32 %v1311, %v2095
  %2097 = vmatmul.f32.gmra.mxu0 %v675
  %v2098 = vpop.f32.mrf.mxu0
  %v2099 = vadd.f32 %v1314, %v2098
  %2100 = vmatmul.f32.gmra.mxu0 %v677
  %v2101 = vpop.f32.mrf.mxu0
  %v2102 = vadd.f32 %v1317, %v2101
  %2103 = vmatmul.f32.gmra.mxu0 %v679
  %v2104 = vpop.f32.mrf.mxu0
  %v2105 = vadd.f32 %v1320, %v2104
  %2106 = vmatmul.f32.gmra.mxu0 %v681
  %v2107 = vpop.f32.mrf.mxu0
  %v2108 = vadd.f32 %v1323, %v2107
  %2109 = vmatmul.f32.gmra.mxu0 %v683
  %v2110 = vpop.f32.mrf.mxu0
  %v2111 = vadd.f32 %v1326, %v2110
  %2112 = vmatmul.f32.gmra.mxu0 %v685
  %v2113 = vpop.f32.mrf.mxu0
  %v2114 = vadd.f32 %v1329, %v2113
  %2115 = vmatmul.f32.gmra.mxu0 %v687
  %v2116 = vpop.f32.mrf.mxu0
  %v2117 = vadd.f32 %v1332, %v2116
  %2118 = vmatmul.f32.gmra.mxu0 %v689
  %v2119 = vpop.f32.mrf.mxu0
  %v2120 = vadd.f32 %v1335, %v2119
  %2121 = vmatmul.f32.gmra.mxu0 %v691
  %v2122 = vpop.f32.mrf.mxu0
  %v2123 = vadd.f32 %v1338, %v2122
  %2124 = vmatmul.f32.gmra.mxu0 %v693
  %v2125 = vpop.f32.mrf.mxu0
  %v2126 = vadd.f32 %v1341, %v2125
  %2127 = vmatmul.f32.gmra.mxu0 %v695
  %v2128 = vpop.f32.mrf.mxu0
  %v2129 = vadd.f32 %v1344, %v2128
  %2130 = vmatmul.f32.gmra.mxu0 %v697
  %v2131 = vpop.f32.mrf.mxu0
  %v2132 = vadd.f32 %v1347, %v2131
  %2133 = vmatmul.f32.gmra.mxu0 %v699
  %v2134 = vpop.f32.mrf.mxu0
  %v2135 = vadd.f32 %v1350, %v2134
  %2136 = vmatmul.f32.gmra.mxu0 %v701
  %v2137 = vpop.f32.mrf.mxu0
  %v2138 = vadd.f32 %v1353, %v2137
  %2139 = vmatmul.f32.gmra.mxu0 %v703
  %v2140 = vpop.f32.mrf.mxu0
  %v2141 = vadd.f32 %v1356, %v2140
  %2142 = vmatmul.f32.gmra.mxu0 %v705
  %v2143 = vpop.f32.mrf.mxu0
  %v2144 = vadd.f32 %v1359, %v2143
  %2145 = vmatmul.f32.gmra.mxu0 %v707
  %v2146 = vpop.f32.mrf.mxu0
  %v2147 = vadd.f32 %v1362, %v2146
  %2148 = vmatmul.f32.gmra.mxu0 %v709
  %v2149 = vpop.f32.mrf.mxu0
  %v2150 = vadd.f32 %v1365, %v2149
  %2151 = vmatmul.f32.gmra.mxu0 %v711
  %v2152 = vpop.f32.mrf.mxu0
  %v2153 = vadd.f32 %v1368, %v2152
  %2154 = vmatmul.f32.gmra.mxu0 %v713
  %v2155 = vpop.f32.mrf.mxu0
  %v2156 = vadd.f32 %v1371, %v2155
  %2157 = vmatmul.f32.gmra.mxu0 %v715
  %v2158 = vpop.f32.mrf.mxu0
  %v2159 = vadd.f32 %v1374, %v2158
  %2160 = vmatmul.f32.gmra.mxu0 %v717
  %v2161 = vpop.f32.mrf.mxu0
  %v2162 = vadd.f32 %v1377, %v2161
  %2163 = vmatmul.f32.gmra.mxu0 %v719
  %v2164 = vpop.f32.mrf.mxu0
  %v2165 = vadd.f32 %v1380, %v2164
  %2166 = vmatmul.f32.gmra.mxu0 %v721
  %v2167 = vpop.f32.mrf.mxu0
  %v2168 = vadd.f32 %v1383, %v2167
  %2169 = vmatmul.f32.gmra.mxu0 %v723
  %v2170 = vpop.f32.mrf.mxu0
  %v2171 = vadd.f32 %v1386, %v2170
  %2172 = vmatmul.f32.gmra.mxu0 %v725
  %v2173 = vpop.f32.mrf.mxu0
  %v2174 = vadd.f32 %v1389, %v2173
  %2175 = vmatmul.f32.gmra.mxu0 %v727
  %v2176 = vpop.f32.mrf.mxu0
  %v2177 = vadd.f32 %v1392, %v2176
  %2178 = vmatmul.f32.gmra.mxu0 %v729
  %v2179 = vpop.f32.mrf.mxu0
  %v2180 = vadd.f32 %v1395, %v2179
  %2181 = vmatmul.f32.gmra.mxu0 %v731
  %v2182 = vpop.f32.mrf.mxu0
  %v2183 = vadd.f32 %v1398, %v2182
  %2184 = vmatmul.f32.gmra.mxu0 %v733
  %v2185 = vpop.f32.mrf.mxu0
  %v2186 = vadd.f32 %v1401, %v2185
  %2187 = vmatmul.f32.gmra.mxu0 %v735
  %v2188 = vpop.f32.mrf.mxu0
  %v2189 = vadd.f32 %v1404, %v2188
  %2190 = vmatmul.f32.gmra.mxu0 %v737
  %v2191 = vpop.f32.mrf.mxu0
  %v2192 = vadd.f32 %v1407, %v2191
  %2193 = vmatmul.f32.gmra.mxu0 %v739
  %v2194 = vpop.f32.mrf.mxu0
  %v2195 = vadd.f32 %v1410, %v2194
  %2196 = vmatmul.f32.gmra.mxu0 %v741
  %v2197 = vpop.f32.mrf.mxu0
  %v2198 = vadd.f32 %v1413, %v2197
  %2199 = vmatmul.f32.gmra.mxu0 %v743
  %v2200 = vpop.f32.mrf.mxu0
  %v2201 = vadd.f32 %v1416, %v2200
  %2202 = vmatmul.f32.gmra.mxu0 %v745
  %v2203 = vpop.f32.mrf.mxu0
  %v2204 = vadd.f32 %v1419, %v2203
  %2205 = vmatmul.f32.gmra.mxu0 %v747
  %v2206 = vpop.f32.mrf.mxu0
  %v2207 = vadd.f32 %v1422, %v2206
  %2208 = vmatmul.f32.gmra.mxu0 %v749
  %v2209 = vpop.f32.mrf.mxu0
  %v2210 = vadd.f32 %v1425, %v2209
  %2211 = vmatmul.f32.gmra.mxu0 %v751
  %v2212 = vpop.f32.mrf.mxu0
  %v2213 = vadd.f32 %v1428, %v2212
  %2214 = vmatmul.f32.gmra.mxu0 %v753
  %v2215 = vpop.f32.mrf.mxu0
  %v2216 = vadd.f32 %v1431, %v2215
  %2217 = vmatmul.f32.gmra.mxu0 %v755
  %v2218 = vpop.f32.mrf.mxu0
  %v2219 = vadd.f32 %v1434, %v2218
  %2220 = vmatmul.f32.gmra.mxu0 %v757
  %v2221 = vpop.f32.mrf.mxu0
  %v2222 = vadd.f32 %v1437, %v2221
  %2223 = vmatmul.f32.gmra.mxu0 %v759
  %v2224 = vpop.f32.mrf.mxu0
  %v2225 = vadd.f32 %v1440, %v2224
  %2226 = vmatmul.f32.gmra.mxu0 %v761
  %v2227 = vpop.f32.mrf.mxu0
  %v2228 = vadd.f32 %v1443, %v2227
  %2229 = vmatmul.f32.gmra.mxu0 %v763
  %v2230 = vpop.f32.mrf.mxu0
  %v2231 = vadd.f32 %v1446, %v2230
  %2232 = vmatmul.f32.gmra.mxu0 %v765
  %v2233 = vpop.f32.mrf.mxu0
  %v2234 = vadd.f32 %v1449, %v2233
  %2235 = vmatmul.f32.gmra.mxu0 %v767
  %v2236 = vpop.f32.mrf.mxu0
  %v2237 = vadd.f32 %v1452, %v2236
  %2238 = vmatmul.f32.gmra.mxu0 %v769
  %v2239 = vpop.f32.mrf.mxu0
  %v2240 = vadd.f32 %v1455, %v2239
  %2241 = vmatmul.f32.gmra.mxu0 %v771
  %v2242 = vpop.f32.mrf.mxu0
  %v2243 = vadd.f32 %v1458, %v2242
  %2244 = vmatmul.f32.gmra.mxu0 %v773
  %v2245 = vpop.f32.mrf.mxu0
  %v2246 = vadd.f32 %v1461, %v2245
  %2247 = vmatmul.f32.gmra.mxu0 %v775
  %v2248 = vpop.f32.mrf.mxu0
  %v2249 = vadd.f32 %v1464, %v2248
  %2250 = vmatmul.f32.gmra.mxu0 %v777
  %v2251 = vpop.f32.mrf.mxu0
  %v2252 = vadd.f32 %v1467, %v2251
  %2253 = vmatmul.f32.gmra.mxu0 %v779
  %v2254 = vpop.f32.mrf.mxu0
  %v2255 = vadd.f32 %v1470, %v2254
  %2256 = vmatmul.f32.gmra.mxu0 %v781
  %v2257 = vpop.f32.mrf.mxu0
  %v2258 = vadd.f32 %v1473, %v2257
  %2259 = vmatmul.f32.gmra.mxu0 %v783
  %v2260 = vpop.f32.mrf.mxu0
  %v2261 = vadd.f32 %v1476, %v2260
  %2262 = vmatmul.f32.gmra.mxu0 %v785
  %v2263 = vpop.f32.mrf.mxu0
  %v2264 = vadd.f32 %v1479, %v2263
  %2265 = vmatmul.f32.gmra.mxu0 %v787
  %v2266 = vpop.f32.mrf.mxu0
  %v2267 = vadd.f32 %v1482, %v2266
  %2268 = vmatmul.f32.gmra.mxu0 %v789
  %v2269 = vpop.f32.mrf.mxu0
  %v2270 = vadd.f32 %v1485, %v2269
  %2271 = vmatmul.f32.gmra.mxu0 %v791
  %v2272 = vpop.f32.mrf.mxu0
  %v2273 = vadd.f32 %v1488, %v2272
  %2274 = vmatmul.f32.gmra.mxu0 %v793
  %v2275 = vpop.f32.mrf.mxu0
  %v2276 = vadd.f32 %v1491, %v2275
  %2277 = vmatmul.f32.gmra.mxu0 %v795
  %v2278 = vpop.f32.mrf.mxu0
  %v2279 = vadd.f32 %v1494, %v2278
  %2280 = vmatmul.f32.gmra.mxu0 %v797
  %v2281 = vpop.f32.mrf.mxu0
  %v2282 = vadd.f32 %v1497, %v2281
  %2283 = vmatmul.f32.gmra.mxu0 %v799
  %v2284 = vpop.f32.mrf.mxu0
  %v2285 = vadd.f32 %v1500, %v2284
  %2286 = vmatmul.f32.gmra.mxu0 %v801
  %v2287 = vpop.f32.mrf.mxu0
  %v2288 = vadd.f32 %v1503, %v2287
  %2289 = vmatmul.f32.gmra.mxu0 %v803
  %v2290 = vpop.f32.mrf.mxu0
  %v2291 = vadd.f32 %v1506, %v2290
  %2292 = vmatmul.f32.gmra.mxu0 %v805
  %v2293 = vpop.f32.mrf.mxu0
  %v2294 = vadd.f32 %v1509, %v2293
  %2295 = vmatmul.f32.gmra.mxu0 %v807
  %v2296 = vpop.f32.mrf.mxu0
  %v2297 = vadd.f32 %v1512, %v2296
  %2298 = vmatmul.f32.gmra.mxu0 %v809
  %v2299 = vpop.f32.mrf.mxu0
  %v2300 = vadd.f32 %v1515, %v2299
  %2301 = vmatmul.f32.gmra.mxu0 %v811
  %v2302 = vpop.f32.mrf.mxu0
  %v2303 = vadd.f32 %v1518, %v2302
  %2304 = vmatmul.f32.gmra.mxu0 %v813
  %v2305 = vpop.f32.mrf.mxu0
  %v2306 = vadd.f32 %v1521, %v2305
  %2307 = vmatmul.f32.gmra.mxu0 %v815
  %v2308 = vpop.f32.mrf.mxu0
  %v2309 = vadd.f32 %v1524, %v2308
  %2310 = vmatmul.f32.gmra.mxu0 %v817
  %v2311 = vpop.f32.mrf.mxu0
  %v2312 = vadd.f32 %v1527, %v2311
  %2313 = vmatmul.f32.gmra.mxu0 %v819
  %v2314 = vpop.f32.mrf.mxu0
  %v2315 = vadd.f32 %v1530, %v2314
  %2316 = vmatmul.f32.gmra.mxu0 %v821
  %v2317 = vpop.f32.mrf.mxu0
  %v2318 = vadd.f32 %v1533, %v2317
  %2319 = vmatmul.f32.gmra.mxu0 %v823
  %v2320 = vpop.f32.mrf.mxu0
  %v2321 = vadd.f32 %v1536, %v2320
  %2322 = vmatmul.f32.gmra.mxu0 %v825
  %v2323 = vpop.f32.mrf.mxu0
  %v2324 = vadd.f32 %v1539, %v2323
  %2325 = vmatmul.f32.gmra.mxu0 %v827
  %v2326 = vpop.f32.mrf.mxu0
  %v2327 = vadd.f32 %v1542, %v2326
  %2328 = vmatmul.f32.gmra.mxu0 %v829
  %v2329 = vpop.f32.mrf.mxu0
  %v2330 = vadd.f32 %v1545, %v2329
  %2331 = vmatmul.f32.gmra.mxu0 %v831
  %v2332 = vpop.f32.mrf.mxu0
  %v2333 = vadd.f32 %v1548, %v2332
  %2334 = vmatmul.f32.gmra.mxu0 %v833
  %v2335 = vpop.f32.mrf.mxu0
  %v2336 = vadd.f32 %v1551, %v2335
  %2337 = vmatmul.f32.gmra.mxu0 %v835
  %v2338 = vpop.f32.mrf.mxu0
  %v2339 = vadd.f32 %v1554, %v2338
  %2340 = vmatmul.f32.gmra.mxu0 %v837
  %v2341 = vpop.f32.mrf.mxu0
  %v2342 = vadd.f32 %v1557, %v2341
  %2343 = vmatmul.f32.gmra.mxu0 %v839
  %v2344 = vpop.f32.mrf.mxu0
  %v2345 = vadd.f32 %v1560, %v2344
  %2346 = vmatmul.f32.gmra.mxu0 %v841
  %v2347 = vpop.f32.mrf.mxu0
  %v2348 = vadd.f32 %v1563, %v2347
  %2349 = vmatmul.f32.gmra.mxu0 %v843
  %v2350 = vpop.f32.mrf.mxu0
  %v2351 = vadd.f32 %v1566, %v2350
  %2352 = vmatmul.f32.gmra.mxu0 %v845
  %v2353 = vpop.f32.mrf.mxu0
  %v2354 = vadd.f32 %v1569, %v2353
  %2355 = vmatmul.f32.gmra.mxu0 %v847
  %v2356 = vpop.f32.mrf.mxu0
  %v2357 = vadd.f32 %v1572, %v2356
  %2358 = vmatmul.f32.gmra.mxu0 %v849
  %v2359 = vpop.f32.mrf.mxu0
  %v2360 = vadd.f32 %v1575, %v2359
  %2361 = vmatmul.f32.gmra.mxu0 %v851
  %v2362 = vpop.f32.mrf.mxu0
  %v2363 = vadd.f32 %v1578, %v2362
  %2364 = vmatmul.f32.gmra.mxu0 %v853
  %v2365 = vpop.f32.mrf.mxu0
  %v2366 = vadd.f32 %v1581, %v2365
  %2367 = vmatmul.f32.gmra.mxu0 %v855
  %v2368 = vpop.f32.mrf.mxu0
  %v2369 = vadd.f32 %v1584, %v2368
  %2370 = vmatmul.f32.gmra.mxu0 %v857
  %v2371 = vpop.f32.mrf.mxu0
  %v2372 = vadd.f32 %v1587, %v2371
  %2373 = vmatmul.f32.gmra.mxu0 %v859
  %v2374 = vpop.f32.mrf.mxu0
  %v2375 = vadd.f32 %v1590, %v2374
  %2376 = vmatmul.f32.gmra.mxu0 %v861
  %v2377 = vpop.f32.mrf.mxu0
  %v2378 = vadd.f32 %v1593, %v2377
  %2379 = vmatmul.f32.gmra.mxu0 %v863
  %v2380 = vpop.f32.mrf.mxu0
  %v2381 = vadd.f32 %v1596, %v2380
  %2382 = vmatmul.f32.gmra.mxu0 %v865
  %v2383 = vpop.f32.mrf.mxu0
  %v2384 = vadd.f32 %v1599, %v2383
  %2385 = vmatmul.f32.gmra.mxu0 %v867
  %v2386 = vpop.f32.mrf.mxu0
  %v2387 = vadd.f32 %v1602, %v2386
  %2388 = vmatmul.f32.gmra.mxu0 %v869
  %v2389 = vpop.f32.mrf.mxu0
  %v2390 = vadd.f32 %v1605, %v2389
  %2391 = vmatmul.f32.gmra.mxu0 %v871
  %v2392 = vpop.f32.mrf.mxu0
  %v2393 = vadd.f32 %v1608, %v2392
  %2394 = vmatmul.f32.gmra.mxu0 %v873
  %v2395 = vpop.f32.mrf.mxu0
  %v2396 = vadd.f32 %v1611, %v2395
  %2397 = vmatmul.f32.gmra.mxu0 %v875
  %v2398 = vpop.f32.mrf.mxu0
  %v2399 = vadd.f32 %v1614, %v2398
  %2400 = vmatmul.f32.gmra.mxu0 %v877
  %v2401 = vpop.f32.mrf.mxu0
  %v2402 = vadd.f32 %v1617, %v2401
  %2403 = vmatmul.f32.gmra.mxu0 %v879
  %v2404 = vpop.f32.mrf.mxu0
  %v2405 = vadd.f32 %v1620, %v2404
  %2406 = vmatmul.f32.gmra.mxu0 %v881
  %v2407 = vpop.f32.mrf.mxu0
  %v2408 = vadd.f32 %v1623, %v2407
  %2409 = vmatmul.f32.gmra.mxu0 %v883
  %v2410 = vpop.f32.mrf.mxu0
  %v2411 = vadd.f32 %v1626, %v2410
  %2412 = vmatmul.f32.gmra.mxu0 %v885
  %v2413 = vpop.f32.mrf.mxu0
  %v2414 = vadd.f32 %v1629, %v2413
  %2415 = vmatmul.f32.gmra.mxu0 %v887
  %v2416 = vpop.f32.mrf.mxu0
  %v2417 = vadd.f32 %v1632, %v2416
  %2418 = vmatmul.f32.gmra.mxu0 %v889
  %v2419 = vpop.f32.mrf.mxu0
  %v2420 = vadd.f32 %v1635, %v2419
  %2421 = vmatmul.f32.gmra.mxu0 %v891
  %v2422 = vpop.f32.mrf.mxu0
  %v2423 = vadd.f32 %v1638, %v2422
  %2424 = vmatmul.f32.gmra.mxu0 %v893
  %v2425 = vpop.f32.mrf.mxu0
  %v2426 = vadd.f32 %v1641, %v2425
  %2427 = vmatmul.f32.gmra.mxu0 %v895
  %v2428 = vpop.f32.mrf.mxu0
  %v2429 = vadd.f32 %v1644, %v2428
  %2430 = vmatmul.f32.gmra.mxu0 %v897
  %v2431 = vpop.f32.mrf.mxu0
  %v2432 = vadd.f32 %v1647, %v2431
  %2433 = vmatmul.f32.gmra.mxu0 %v899
  %v2434 = vpop.f32.mrf.mxu0
  %v2435 = vadd.f32 %v1650, %v2434
  %2436 = vmatmul.f32.gmra.mxu0 %v901
  %v2437 = vpop.f32.mrf.mxu0
  %v2438 = vadd.f32 %v1653, %v2437
  %2439 = vmatmul.f32.gmra.mxu0 %v903
  %v2440 = vpop.f32.mrf.mxu0
  %v2441 = vadd.f32 %v1656, %v2440
  %2442 = vmatmul.f32.gmra.mxu0 %v905
  %v2443 = vpop.f32.mrf.mxu0
  %v2444 = vadd.f32 %v1659, %v2443
  %2445 = vmatmul.f32.gmra.mxu0 %v907
  %v2446 = vpop.f32.mrf.mxu0
  %v2447 = vadd.f32 %v1662, %v2446
  %2448 = vmatmul.f32.gmra.mxu0 %v909
  %v2449 = vpop.f32.mrf.mxu0
  %v2450 = vadd.f32 %v1665, %v2449
  %2451 = vmatmul.f32.gmra.mxu0 %v911
  %v2452 = vpop.f32.mrf.mxu0
  %v2453 = vadd.f32 %v1668, %v2452
  %2454 = vmatmul.f32.gmra.mxu0 %v913
  %v2455 = vpop.f32.mrf.mxu0
  %v2456 = vadd.f32 %v1671, %v2455
  %2457 = vmatmul.f32.gmra.mxu0 %v915
  %v2458 = vpop.f32.mrf.mxu0
  %v2459 = vadd.f32 %v1674, %v2458
  %2460 = vmatmul.f32.gmra.mxu0 %v917
  %v2461 = vpop.f32.mrf.mxu0
  %v2462 = vadd.f32 %v1677, %v2461
  %2463 = vmatmul.f32.gmra.mxu0 %v919
  %v2464 = vpop.f32.mrf.mxu0
  %v2465 = vadd.f32 %v1680, %v2464
  %2466 = vmatmul.f32.gmra.mxu0 %v921
  %v2467 = vpop.f32.mrf.mxu0
  %v2468 = vadd.f32 %v1683, %v2467
  %2469 = vmatmul.f32.gmra.mxu0 %v923
  %v2470 = vpop.f32.mrf.mxu0
  %v2471 = vadd.f32 %v1686, %v2470
  %2472 = vmatmul.f32.gmra.mxu0 %v925
  %v2473 = vpop.f32.mrf.mxu0
  %v2474 = vadd.f32 %v1689, %v2473
  %2475 = vmatmul.f32.gmra.mxu0 %v927
  %v2476 = vpop.f32.mrf.mxu0
  %v2477 = vadd.f32 %v1692, %v2476
  %2478 = vmatmul.f32.gmra.mxu0 %v929
  %v2479 = vpop.f32.mrf.mxu0
  %v2480 = vadd.f32 %v1695, %v2479
  %2481 = vmatmul.f32.gmra.mxu0 %v931
  %v2482 = vpop.f32.mrf.mxu0
  %v2483 = vadd.f32 %v1698, %v2482
  %2484 = vmatmul.f32.gmra.mxu0 %v933
  %v2485 = vpop.f32.mrf.mxu0
  %v2486 = vadd.f32 %v1701, %v2485
  %2487 = vmatmul.f32.gmra.mxu0 %v935
  %v2488 = vpop.f32.mrf.mxu0
  %v2489 = vadd.f32 %v1704, %v2488
  %2490 = vmatmul.f32.gmra.mxu0 %v937
  %v2491 = vpop.f32.mrf.mxu0
  %v2492 = vadd.f32 %v1707, %v2491
  %2493 = vmatmul.f32.gmra.mxu0 %v939
  %v2494 = vpop.f32.mrf.mxu0
  %v2495 = vadd.f32 %v1710, %v2494
  %2496 = vmatmul.f32.gmra.mxu0 %v941
  %v2497 = vpop.f32.mrf.mxu0
  %v2498 = vadd.f32 %v1713, %v2497
  %2499 = vmatmul.f32.gmra.mxu0 %v943
  %v2500 = vpop.f32.mrf.mxu0
  %v2501 = vadd.f32 %v1716, %v2500
  %2502 = vmatmul.f32.gmra.mxu0 %v945
  %v2503 = vpop.f32.mrf.mxu0
  %v2504 = vadd.f32 %v1719, %v2503
  %2505 = vmatmul.f32.gmra.mxu0 %v947
  %v2506 = vpop.f32.mrf.mxu0
  %v2507 = vadd.f32 %v1722, %v2506
  %2508 = vmatmul.f32.gmra.mxu0 %v949
  %v2509 = vpop.f32.mrf.mxu0
  %v2510 = vadd.f32 %v1725, %v2509
  %2511 = vmatmul.f32.gmra.mxu0 %v951
  %v2512 = vpop.f32.mrf.mxu0
  %v2513 = vadd.f32 %v1728, %v2512
  %2514 = vmatmul.f32.gmra.mxu0 %v953
  %v2515 = vpop.f32.mrf.mxu0
  %v2516 = vadd.f32 %v1731, %v2515
  %2517 = vmatmul.f32.gmra.mxu0 %v955
  %v2518 = vpop.f32.mrf.mxu0
  %v2519 = vadd.f32 %v1734, %v2518
  %2520 = vmatmul.f32.gmra.mxu0 %v957
  %v2521 = vpop.f32.mrf.mxu0
  %v2522 = vadd.f32 %v1737, %v2521
  %2523 = vmatmul.f32.gmra.mxu0 %v959
  %v2524 = vpop.f32.mrf.mxu0
  %v2525 = vadd.f32 %v1740, %v2524
  %2526 = vmatmul.f32.gmra.mxu0 %v961
  %v2527 = vpop.f32.mrf.mxu0
  %v2528 = vadd.f32 %v1743, %v2527
  %2529 = vmatmul.f32.gmra.mxu0 %v963
  %v2530 = vpop.f32.mrf.mxu0
  %v2531 = vadd.f32 %v1746, %v2530
  %2532 = vmatmul.f32.gmra.mxu0 %v965
  %v2533 = vpop.f32.mrf.mxu0
  %v2534 = vadd.f32 %v1749, %v2533
  %2535 = vmatmul.f32.gmra.mxu0 %v967
  %v2536 = vpop.f32.mrf.mxu0
  %v2537 = vadd.f32 %v1752, %v2536
  %2538 = vmatmul.f32.gmra.mxu0 %v969
  %v2539 = vpop.f32.mrf.mxu0
  %v2540 = vadd.f32 %v1755, %v2539
  %2541 = vmatmul.f32.gmra.mxu0 %v971
  %v2542 = vpop.f32.mrf.mxu0
  %v2543 = vadd.f32 %v1758, %v2542
  %2544 = vmatmul.f32.gmra.mxu0 %v973
  %v2545 = vpop.f32.mrf.mxu0
  %v2546 = vadd.f32 %v1761, %v2545
  %2547 = vmatmul.f32.gmra.mxu0 %v975
  %v2548 = vpop.f32.mrf.mxu0
  %v2549 = vadd.f32 %v1764, %v2548
  %2550 = vmatmul.f32.gmra.mxu0 %v977
  %v2551 = vpop.f32.mrf.mxu0
  %v2552 = vadd.f32 %v1767, %v2551
  %2553 = vmatmul.f32.gmra.mxu0 %v979
  %v2554 = vpop.f32.mrf.mxu0
  %v2555 = vadd.f32 %v1770, %v2554
  %2556 = vmatmul.f32.gmra.mxu0 %v981
  %v2557 = vpop.f32.mrf.mxu0
  %v2558 = vadd.f32 %v1773, %v2557
  %2559 = vmatmul.f32.gmra.mxu0 %v983
  %v2560 = vpop.f32.mrf.mxu0
  %v2561 = vadd.f32 %v1776, %v2560
  %2562 = vmatmul.f32.gmra.mxu0 %v985
  %v2563 = vpop.f32.mrf.mxu0
  %v2564 = vadd.f32 %v1779, %v2563
  %2565 = vmatmul.f32.gmra.mxu0 %v987
  %v2566 = vpop.f32.mrf.mxu0
  %v2567 = vadd.f32 %v1782, %v2566
  %2568 = vmatmul.f32.gmra.mxu0 %v989
  %v2569 = vpop.f32.mrf.mxu0
  %v2570 = vadd.f32 %v1785, %v2569
  %2571 = vmatmul.f32.gmra.mxu0 %v991
  %v2572 = vpop.f32.mrf.mxu0
  %v2573 = vadd.f32 %v1788, %v2572
  %2574 = vmatmul.f32.gmra.mxu0 %v993
  %v2575 = vpop.f32.mrf.mxu0
  %v2576 = vadd.f32 %v1791, %v2575
  %2577 = vmatmul.f32.gmra.mxu0 %v995
  %v2578 = vpop.f32.mrf.mxu0
  %v2579 = vadd.f32 %v1794, %v2578
  %2580 = vmatmul.f32.gmra.mxu0 %v997
  %v2581 = vpop.f32.mrf.mxu0
  %v2582 = vadd.f32 %v1797, %v2581
  %2583 = vmatmul.f32.gmra.mxu0 %v999
  %v2584 = vpop.f32.mrf.mxu0
  %v2585 = vadd.f32 %v1800, %v2584
  %2586 = vmatmul.f32.gmra.mxu0 %v1001
  %v2587 = vpop.f32.mrf.mxu0
  %v2588 = vadd.f32 %v1803, %v2587
  %2589 = vmatmul.f32.gmra.mxu0 %v1003
  %v2590 = vpop.f32.mrf.mxu0
  %v2591 = vadd.f32 %v1806, %v2590
  %2592 = vmatmul.f32.gmra.mxu0 %v1005
  %v2593 = vpop.f32.mrf.mxu0
  %v2594 = vadd.f32 %v1809, %v2593
  %2595 = vmatmul.f32.gmra.mxu0 %v1007
  %v2596 = vpop.f32.mrf.mxu0
  %v2597 = vadd.f32 %v1812, %v2596
  %2598 = vmatmul.f32.gmra.mxu0 %v1009
  %v2599 = vpop.f32.mrf.mxu0
  %v2600 = vadd.f32 %v1815, %v2599
  %2601 = vmatmul.f32.gmra.mxu0 %v1011
  %v2602 = vpop.f32.mrf.mxu0
  %v2603 = vadd.f32 %v1818, %v2602
  %2604 = vmatmul.f32.gmra.mxu0 %v1013
  %v2605 = vpop.f32.mrf.mxu0
  %v2606 = vadd.f32 %v1821, %v2605
  %2607 = vmatmul.f32.gmra.mxu0 %v1015
  %v2608 = vpop.f32.mrf.mxu0
  %v2609 = vadd.f32 %v1824, %v2608
  %2610 = vmatmul.f32.gmra.mxu0 %v1017
  %v2611 = vpop.f32.mrf.mxu0
  %v2612 = vadd.f32 %v1827, %v2611
  %2613 = vmatmul.f32.gmra.mxu0 %v1019
  %v2614 = vpop.f32.mrf.mxu0
  %v2615 = vadd.f32 %v1830, %v2614
  %2616 = vmatmul.f32.gmra.mxu0 %v1021
  %v2617 = vpop.f32.mrf.mxu0
  %v2618 = vadd.f32 %v1833, %v2617
  %2619 = vmatmul.f32.gmra.mxu0 %v1023
  %v2620 = vpop.f32.mrf.mxu0
  %v2621 = vadd.f32 %v1836, %v2620
  %2622 = vmatmul.f32.gmra.mxu0 %v1025
  %v2623 = vpop.f32.mrf.mxu0
  %v2624 = vadd.f32 %v1839, %v2623
  %2625 = vmatmul.f32.gmra.mxu0 %v1027
  %v2626 = vpop.f32.mrf.mxu0
  %v2627 = vadd.f32 %v1842, %v2626
  %2628 = vmatmul.f32.gmra.mxu0 %v1029
  %v2629 = vpop.f32.mrf.mxu0
  %v2630 = vadd.f32 %v1845, %v2629
  %2631 = vmatmul.f32.gmra.mxu0 %v1031
  %v2632 = vpop.f32.mrf.mxu0
  %v2633 = vadd.f32 %v1848, %v2632
  %2634 = vmatmul.f32.gmra.mxu0 %v1033
  %v2635 = vpop.f32.mrf.mxu0
  %v2636 = vadd.f32 %v1851, %v2635
  %2637 = vmatmul.f32.gmra.mxu0 %v1035
  %v2638 = vpop.f32.mrf.mxu0
  %v2639 = vadd.f32 %v1854, %v2638
  %2640 = vmatmul.f32.gmra.mxu0 %v1037
  %v2641 = vpop.f32.mrf.mxu0
  %v2642 = vadd.f32 %v1857, %v2641
  %2643 = vdwg.mxu0
  %v2644 = vtanh.pop %v1877
  %v2645 = vtanh.pop %v1880
  %v2646 = vtanh.pop %v1883
  %v2647 = vtanh.pop %v1886
  %v2648 = vtanh.pop %v1889
  %v2649 = vtanh.pop %v1892
  %v2650 = vtanh.pop %v1895
  %v2651 = vtanh.pop %v1898
  %v2652 = vtanh.pop %v1901
  %v2653 = vtanh.pop %v1904
  %v2654 = vtanh.pop %v1907
  %v2655 = vtanh.pop %v1910
  %v2656 = vtanh.pop %v1913
  %v2657 = vtanh.pop %v1916
  %v2658 = vtanh.pop %v1919
  %v2659 = vtanh.pop %v1922
  %v2660 = vtanh.pop %v1925
  %v2661 = vtanh.pop %v1928
  %v2662 = vtanh.pop %v1931
  %v2663 = vtanh.pop %v1934
  %v2664 = vtanh.pop %v1937
  %v2665 = vtanh.pop %v1940
  %v2666 = vtanh.pop %v1943
  %v2667 = vtanh.pop %v1946
  %v2668 = vtanh.pop %v1949
  %v2669 = vtanh.pop %v1952
  %v2670 = vtanh.pop %v1955
  %v2671 = vtanh.pop %v1958
  %v2672 = vtanh.pop %v1961
  %v2673 = vtanh.pop %v1964
  %v2674 = vtanh.pop %v1967
  %v2675 = vtanh.pop %v1970
  %v2676 = vtanh.pop %v1973
  %v2677 = vtanh.pop %v1976
  %v2678 = vtanh.pop %v1979
  %v2679 = vtanh.pop %v1982
  %v2680 = vtanh.pop %v1985
  %v2681 = vtanh.pop %v1988
  %v2682 = vtanh.pop %v1991
  %v2683 = vtanh.pop %v1994
  %v2684 = vtanh.pop %v1997
  %v2685 = vtanh.pop %v2000
  %v2686 = vtanh.pop %v2003
  %v2687 = vtanh.pop %v2006
  %v2688 = vtanh.pop %v2009
  %v2689 = vtanh.pop %v2012
  %v2690 = vtanh.pop %v2015
  %v2691 = vtanh.pop %v2018
  %v2692 = vtanh.pop %v2021
  %v2693 = vtanh.pop %v2024
  %v2694 = vtanh.pop %v2027
  %v2695 = vtanh.pop %v2030
  %v2696 = vtanh.pop %v2033
  %v2697 = vtanh.pop %v2036
  %v2698 = vtanh.pop %v2039
  %v2699 = vtanh.pop %v2042
  %v2700 = vtanh.pop %v2045
  %v2701 = vtanh.pop %v2048
  %v2702 = vtanh.pop %v2051
  %v2703 = vtanh.pop %v2054
  %v2704 = vtanh.pop %v2057
  %v2705 = vtanh.pop %v2060
  %v2706 = vtanh.pop %v2063
  %v2707 = vtanh.pop %v2066
  %v2708 = vtanh.pop %v2069
  %v2709 = vtanh.pop %v2072
  %v2710 = vtanh.pop %v2075
  %v2711 = vtanh.pop %v2078
  %v2712 = vtanh.pop %v2081
  %v2713 = vtanh.pop %v2084
  %v2714 = vtanh.pop %v2087
  %v2715 = vtanh.pop %v2090
  %v2716 = vtanh.pop %v2093
  %v2717 = vtanh.pop %v2096
  %v2718 = vtanh.pop %v2099
  %v2719 = vtanh.pop %v2102
  %v2720 = vtanh.pop %v2105
  %v2721 = vtanh.pop %v2108
  %v2722 = vtanh.pop %v2111
  %v2723 = vtanh.pop %v2114
  %v2724 = vtanh.pop %v2117
  %v2725 = vtanh.pop %v2120
  %v2726 = vtanh.pop %v2123
  %v2727 = vtanh.pop %v2126
  %v2728 = vtanh.pop %v2129
  %v2729 = vtanh.pop %v2132
  %v2730 = vtanh.pop %v2135
  %v2731 = vtanh.pop %v2138
  %v2732 = vtanh.pop %v2141
  %v2733 = vtanh.pop %v2144
  %v2734 = vtanh.pop %v2147
  %v2735 = vtanh.pop %v2150
  %v2736 = vtanh.pop %v2153
  %v2737 = vtanh.pop %v2156
  %v2738 = vtanh.pop %v2159
  %v2739 = vtanh.pop %v2162
  %v2740 = vtanh.pop %v2165
  %v2741 = vtanh.pop %v2168
  %v2742 = vtanh.pop %v2171
  %v2743 = vtanh.pop %v2174
  %v2744 = vtanh.pop %v2177
  %v2745 = vtanh.pop %v2180
  %v2746 = vtanh.pop %v2183
  %v2747 = vtanh.pop %v2186
  %v2748 = vtanh.pop %v2189
  %v2749 = vtanh.pop %v2192
  %v2750 = vtanh.pop %v2195
  %v2751 = vtanh.pop %v2198
  %v2752 = vtanh.pop %v2201
  %v2753 = vtanh.pop %v2204
  %v2754 = vtanh.pop %v2207
  %v2755 = vtanh.pop %v2210
  %v2756 = vtanh.pop %v2213
  %v2757 = vtanh.pop %v2216
  %v2758 = vtanh.pop %v2219
  %v2759 = vtanh.pop %v2222
  %v2760 = vtanh.pop %v2225
  %v2761 = vtanh.pop %v2228
  %v2762 = vtanh.pop %v2231
  %v2763 = vtanh.pop %v2234
  %v2764 = vtanh.pop %v2237
  %v2765 = vtanh.pop %v2240
  %v2766 = vtanh.pop %v2243
  %v2767 = vtanh.pop %v2246
  %v2768 = vtanh.pop %v2249
  %v2769 = vtanh.pop %v2252
  %v2770 = vtanh.pop %v2255
  %v2771 = vtanh.pop %v2258
  %v2772 = vtanh.pop %v2261
  %v2773 = vtanh.pop %v2264
  %v2774 = vtanh.pop %v2267
  %v2775 = vtanh.pop %v2270
  %v2776 = vtanh.pop %v2273
  %v2777 = vtanh.pop %v2276
  %v2778 = vtanh.pop %v2279
  %v2779 = vtanh.pop %v2282
  %v2780 = vtanh.pop %v2285
  %v2781 = vtanh.pop %v2288
  %v2782 = vtanh.pop %v2291
  %v2783 = vtanh.pop %v2294
  %v2784 = vtanh.pop %v2297
  %v2785 = vtanh.pop %v2300
  %v2786 = vtanh.pop %v2303
  %v2787 = vtanh.pop %v2306
  %v2788 = vtanh.pop %v2309
  %v2789 = vtanh.pop %v2312
  %v2790 = vtanh.pop %v2315
  %v2791 = vtanh.pop %v2318
  %v2792 = vtanh.pop %v2321
  %v2793 = vtanh.pop %v2324
  %v2794 = vtanh.pop %v2327
  %v2795 = vtanh.pop %v2330
  %v2796 = vtanh.pop %v2333
  %v2797 = vtanh.pop %v2336
  %v2798 = vtanh.pop %v2339
  %v2799 = vtanh.pop %v2342
  %v2800 = vtanh.pop %v2345
  %v2801 = vtanh.pop %v2348
  %v2802 = vtanh.pop %v2351
  %v2803 = vtanh.pop %v2354
  %v2804 = vtanh.pop %v2357
  %v2805 = vtanh.pop %v2360
  %v2806 = vtanh.pop %v2363
  %v2807 = vtanh.pop %v2366
  %v2808 = vtanh.pop %v2369
  %v2809 = vtanh.pop %v2372
  %v2810 = vtanh.pop %v2375
  %v2811 = vtanh.pop %v2378
  %v2812 = vtanh.pop %v2381
  %v2813 = vtanh.pop %v2384
  %v2814 = vtanh.pop %v2387
  %v2815 = vtanh.pop %v2390
  %v2816 = vtanh.pop %v2393
  %v2817 = vtanh.pop %v2396
  %v2818 = vtanh.pop %v2399
  %v2819 = vtanh.pop %v2402
  %v2820 = vtanh.pop %v2405
  %v2821 = vtanh.pop %v2408
  %v2822 = vtanh.pop %v2411
  %v2823 = vtanh.pop %v2414
  %v2824 = vtanh.pop %v2417
  %v2825 = vtanh.pop %v2420
  %v2826 = vtanh.pop %v2423
  %v2827 = vtanh.pop %v2426
  %v2828 = vtanh.pop %v2429
  %v2829 = vtanh.pop %v2432
  %v2830 = vtanh.pop %v2435
  %v2831 = vtanh.pop %v2438
  %v2832 = vtanh.pop %v2441
  %v2833 = vtanh.pop %v2444
  %v2834 = vtanh.pop %v2447
  %v2835 = vtanh.pop %v2450
  %v2836 = vtanh.pop %v2453
  %v2837 = vtanh.pop %v2456
  %v2838 = vtanh.pop %v2459
  %v2839 = vtanh.pop %v2462
  %v2840 = vtanh.pop %v2465
  %v2841 = vtanh.pop %v2468
  %v2842 = vtanh.pop %v2471
  %v2843 = vtanh.pop %v2474
  %v2844 = vtanh.pop %v2477
  %v2845 = vtanh.pop %v2480
  %v2846 = vtanh.pop %v2483
  %v2847 = vtanh.pop %v2486
  %v2848 = vtanh.pop %v2489
  %v2849 = vtanh.pop %v2492
  %v2850 = vtanh.pop %v2495
  %v2851 = vtanh.pop %v2498
  %v2852 = vtanh.pop %v2501
  %v2853 = vtanh.pop %v2504
  %v2854 = vtanh.pop %v2507
  %v2855 = vtanh.pop %v2510
  %v2856 = vtanh.pop %v2513
  %v2857 = vtanh.pop %v2516
  %v2858 = vtanh.pop %v2519
  %v2859 = vtanh.pop %v2522
  %v2860 = vtanh.pop %v2525
  %v2861 = vtanh.pop %v2528
  %v2862 = vtanh.pop %v2531
  %v2863 = vtanh.pop %v2534
  %v2864 = vtanh.pop %v2537
  %v2865 = vtanh.pop %v2540
  %v2866 = vtanh.pop %v2543
  %v2867 = vtanh.pop %v2546
  %v2868 = vtanh.pop %v2549
  %v2869 = vtanh.pop %v2552
  %v2870 = vtanh.pop %v2555
  %v2871 = vtanh.pop %v2558
  %v2872 = vtanh.pop %v2561
  %v2873 = vtanh.pop %v2564
  %v2874 = vtanh.pop %v2567
  %v2875 = vtanh.pop %v2570
  %v2876 = vtanh.pop %v2573
  %v2877 = vtanh.pop %v2576
  %v2878 = vtanh.pop %v2579
  %v2879 = vtanh.pop %v2582
  %v2880 = vtanh.pop %v2585
  %v2881 = vtanh.pop %v2588
  %v2882 = vtanh.pop %v2591
  %v2883 = vtanh.pop %v2594
  %v2884 = vtanh.pop %v2597
  %v2885 = vtanh.pop %v2600
  %v2886 = vtanh.pop %v2603
  %v2887 = vtanh.pop %v2606
  %v2888 = vtanh.pop %v2609
  %v2889 = vtanh.pop %v2612
  %v2890 = vtanh.pop %v2615
  %v2891 = vtanh.pop %v2618
  %v2892 = vtanh.pop %v2621
  %v2893 = vtanh.pop %v2624
  %v2894 = vtanh.pop %v2627
  %v2895 = vtanh.pop %v2630
  %v2896 = vtanh.pop %v2633
  %v2897 = vtanh.pop %v2636
  %v2898 = vtanh.pop %v2639
  %v2899 = vtanh.pop %v2642
  %vm2900 = vcmask 15360
  %2901 = vst.msk [vmem:[%s3] sm:$0xff] %vm2900, %v2644
  %2902 = vst.msk [vmem:[%s3 + $0x8] sm:$0xff] %vm2900, %v2645
  %2903 = vst.msk [vmem:[%s3 + $0x10] sm:$0xff] %vm2900, %v2646
  %2904 = vst.msk [vmem:[%s3 + $0x18] sm:$0xff] %vm2900, %v2647
  %2905 = vst.msk [vmem:[%s3 + $0x20] sm:$0xff] %vm2900, %v2648
  %2906 = vst.msk [vmem:[%s3 + $0x28] sm:$0xff] %vm2900, %v2649
  %2907 = vst.msk [vmem:[%s3 + $0x30] sm:$0xff] %vm2900, %v2650
  %2908 = vst.msk [vmem:[%s3 + $0x38] sm:$0xff] %vm2900, %v2651
  %2909 = vst.msk [vmem:[%s3 + $0x40] sm:$0xff] %vm2900, %v2652
  %2910 = vst.msk [vmem:[%s3 + $0x48] sm:$0xff] %vm2900, %v2653
  %2911 = vst.msk [vmem:[%s3 + $0x50] sm:$0xff] %vm2900, %v2654
  %2912 = vst.msk [vmem:[%s3 + $0x58] sm:$0xff] %vm2900, %v2655
  %2913 = vst.msk [vmem:[%s3 + $0x60] sm:$0xff] %vm2900, %v2656
  %2914 = vst.msk [vmem:[%s3 + $0x68] sm:$0xff] %vm2900, %v2657
  %2915 = vst.msk [vmem:[%s3 + $0x70] sm:$0xff] %vm2900, %v2658
  %2916 = vst.msk [vmem:[%s3 + $0x78] sm:$0xff] %vm2900, %v2659
  %2917 = vst.msk [vmem:[%s3 + $0x80] sm:$0xff] %vm2900, %v2660
  %2918 = vst.msk [vmem:[%s3 + $0x88] sm:$0xff] %vm2900, %v2661
  %2919 = vst.msk [vmem:[%s3 + $0x90] sm:$0xff] %vm2900, %v2662
  %2920 = vst.msk [vmem:[%s3 + $0x98] sm:$0xff] %vm2900, %v2663
  %2921 = vst.msk [vmem:[%s3 + $0xa0] sm:$0xff] %vm2900, %v2664
  %2922 = vst.msk [vmem:[%s3 + $0xa8] sm:$0xff] %vm2900, %v2665
  %2923 = vst.msk [vmem:[%s3 + $0xb0] sm:$0xff] %vm2900, %v2666
  %2924 = vst.msk [vmem:[%s3 + $0xb8] sm:$0xff] %vm2900, %v2667
  %2925 = vst.msk [vmem:[%s3 + $0xc0] sm:$0xff] %vm2900, %v2668
  %2926 = vst.msk [vmem:[%s3 + $0xc8] sm:$0xff] %vm2900, %v2669
  %2927 = vst.msk [vmem:[%s3 + $0xd0] sm:$0xff] %vm2900, %v2670
  %2928 = vst.msk [vmem:[%s3 + $0xd8] sm:$0xff] %vm2900, %v2671
  %2929 = vst.msk [vmem:[%s3 + $0xe0] sm:$0xff] %vm2900, %v2672
  %2930 = vst.msk [vmem:[%s3 + $0xe8] sm:$0xff] %vm2900, %v2673
  %2931 = vst.msk [vmem:[%s3 + $0xf0] sm:$0xff] %vm2900, %v2674
  %2932 = vst.msk [vmem:[%s3 + $0xf8] sm:$0xff] %vm2900, %v2675
  %2933 = vst.msk [vmem:[%s3 + $0x100] sm:$0xff] %vm2900, %v2676
  %2934 = vst.msk [vmem:[%s3 + $0x108] sm:$0xff] %vm2900, %v2677
  %2935 = vst.msk [vmem:[%s3 + $0x110] sm:$0xff] %vm2900, %v2678
  %2936 = vst.msk [vmem:[%s3 + $0x118] sm:$0xff] %vm2900, %v2679
  %2937 = vst.msk [vmem:[%s3 + $0x120] sm:$0xff] %vm2900, %v2680
  %2938 = vst.msk [vmem:[%s3 + $0x128] sm:$0xff] %vm2900, %v2681
  %2939 = vst.msk [vmem:[%s3 + $0x130] sm:$0xff] %vm2900, %v2682
  %2940 = vst.msk [vmem:[%s3 + $0x138] sm:$0xff] %vm2900, %v2683
  %2941 = vst.msk [vmem:[%s3 + $0x140] sm:$0xff] %vm2900, %v2684
  %2942 = vst.msk [vmem:[%s3 + $0x148] sm:$0xff] %vm2900, %v2685
  %2943 = vst.msk [vmem:[%s3 + $0x150] sm:$0xff] %vm2900, %v2686
  %2944 = vst.msk [vmem:[%s3 + $0x158] sm:$0xff] %vm2900, %v2687
  %2945 = vst.msk [vmem:[%s3 + $0x160] sm:$0xff] %vm2900, %v2688
  %2946 = vst.msk [vmem:[%s3 + $0x168] sm:$0xff] %vm2900, %v2689
  %2947 = vst.msk [vmem:[%s3 + $0x170] sm:$0xff] %vm2900, %v2690
  %2948 = vst.msk [vmem:[%s3 + $0x178] sm:$0xff] %vm2900, %v2691
  %2949 = vst.msk [vmem:[%s3 + $0x180] sm:$0xff] %vm2900, %v2692
  %2950 = vst.msk [vmem:[%s3 + $0x188] sm:$0xff] %vm2900, %v2693
  %2951 = vst.msk [vmem:[%s3 + $0x190] sm:$0xff] %vm2900, %v2694
  %2952 = vst.msk [vmem:[%s3 + $0x198] sm:$0xff] %vm2900, %v2695
  %2953 = vst.msk [vmem:[%s3 + $0x1a0] sm:$0xff] %vm2900, %v2696
  %2954 = vst.msk [vmem:[%s3 + $0x1a8] sm:$0xff] %vm2900, %v2697
  %2955 = vst.msk [vmem:[%s3 + $0x1b0] sm:$0xff] %vm2900, %v2698
  %2956 = vst.msk [vmem:[%s3 + $0x1b8] sm:$0xff] %vm2900, %v2699
  %2957 = vst.msk [vmem:[%s3 + $0x1c0] sm:$0xff] %vm2900, %v2700
  %2958 = vst.msk [vmem:[%s3 + $0x1c8] sm:$0xff] %vm2900, %v2701
  %2959 = vst.msk [vmem:[%s3 + $0x1d0] sm:$0xff] %vm2900, %v2702
  %2960 = vst.msk [vmem:[%s3 + $0x1d8] sm:$0xff] %vm2900, %v2703
  %2961 = vst.msk [vmem:[%s3 + $0x1e0] sm:$0xff] %vm2900, %v2704
  %2962 = vst.msk [vmem:[%s3 + $0x1e8] sm:$0xff] %vm2900, %v2705
  %2963 = vst.msk [vmem:[%s3 + $0x1f0] sm:$0xff] %vm2900, %v2706
  %2964 = vst.msk [vmem:[%s3 + $0x1f8] sm:$0xff] %vm2900, %v2707
  %2965 = vst.msk [vmem:[%s3 + $0x200] sm:$0xff] %vm2900, %v2708
  %2966 = vst.msk [vmem:[%s3 + $0x208] sm:$0xff] %vm2900, %v2709
  %2967 = vst.msk [vmem:[%s3 + $0x210] sm:$0xff] %vm2900, %v2710
  %2968 = vst.msk [vmem:[%s3 + $0x218] sm:$0xff] %vm2900, %v2711
  %2969 = vst.msk [vmem:[%s3 + $0x220] sm:$0xff] %vm2900, %v2712
  %2970 = vst.msk [vmem:[%s3 + $0x228] sm:$0xff] %vm2900, %v2713
  %2971 = vst.msk [vmem:[%s3 + $0x230] sm:$0xff] %vm2900, %v2714
  %2972 = vst.msk [vmem:[%s3 + $0x238] sm:$0xff] %vm2900, %v2715
  %2973 = vst.msk [vmem:[%s3 + $0x240] sm:$0xff] %vm2900, %v2716
  %2974 = vst.msk [vmem:[%s3 + $0x248] sm:$0xff] %vm2900, %v2717
  %2975 = vst.msk [vmem:[%s3 + $0x250] sm:$0xff] %vm2900, %v2718
  %2976 = vst.msk [vmem:[%s3 + $0x258] sm:$0xff] %vm2900, %v2719
  %2977 = vst.msk [vmem:[%s3 + $0x260] sm:$0xff] %vm2900, %v2720
  %2978 = vst.msk [vmem:[%s3 + $0x268] sm:$0xff] %vm2900, %v2721
  %2979 = vst.msk [vmem:[%s3 + $0x270] sm:$0xff] %vm2900, %v2722
  %2980 = vst.msk [vmem:[%s3 + $0x278] sm:$0xff] %vm2900, %v2723
  %2981 = vst.msk [vmem:[%s3 + $0x280] sm:$0xff] %vm2900, %v2724
  %2982 = vst.msk [vmem:[%s3 + $0x288] sm:$0xff] %vm2900, %v2725
  %2983 = vst.msk [vmem:[%s3 + $0x290] sm:$0xff] %vm2900, %v2726
  %2984 = vst.msk [vmem:[%s3 + $0x298] sm:$0xff] %vm2900, %v2727
  %2985 = vst.msk [vmem:[%s3 + $0x2a0] sm:$0xff] %vm2900, %v2728
  %2986 = vst.msk [vmem:[%s3 + $0x2a8] sm:$0xff] %vm2900, %v2729
  %2987 = vst.msk [vmem:[%s3 + $0x2b0] sm:$0xff] %vm2900, %v2730
  %2988 = vst.msk [vmem:[%s3 + $0x2b8] sm:$0xff] %vm2900, %v2731
  %2989 = vst.msk [vmem:[%s3 + $0x2c0] sm:$0xff] %vm2900, %v2732
  %2990 = vst.msk [vmem:[%s3 + $0x2c8] sm:$0xff] %vm2900, %v2733
  %2991 = vst.msk [vmem:[%s3 + $0x2d0] sm:$0xff] %vm2900, %v2734
  %2992 = vst.msk [vmem:[%s3 + $0x2d8] sm:$0xff] %vm2900, %v2735
  %2993 = vst.msk [vmem:[%s3 + $0x2e0] sm:$0xff] %vm2900, %v2736
  %2994 = vst.msk [vmem:[%s3 + $0x2e8] sm:$0xff] %vm2900, %v2737
  %2995 = vst.msk [vmem:[%s3 + $0x2f0] sm:$0xff] %vm2900, %v2738
  %2996 = vst.msk [vmem:[%s3 + $0x2f8] sm:$0xff] %vm2900, %v2739
  %2997 = vst.msk [vmem:[%s3 + $0x300] sm:$0xff] %vm2900, %v2740
  %2998 = vst.msk [vmem:[%s3 + $0x308] sm:$0xff] %vm2900, %v2741
  %2999 = vst.msk [vmem:[%s3 + $0x310] sm:$0xff] %vm2900, %v2742
  %3000 = vst.msk [vmem:[%s3 + $0x318] sm:$0xff] %vm2900, %v2743
  %3001 = vst.msk [vmem:[%s3 + $0x320] sm:$0xff] %vm2900, %v2744
  %3002 = vst.msk [vmem:[%s3 + $0x328] sm:$0xff] %vm2900, %v2745
  %3003 = vst.msk [vmem:[%s3 + $0x330] sm:$0xff] %vm2900, %v2746
  %3004 = vst.msk [vmem:[%s3 + $0x338] sm:$0xff] %vm2900, %v2747
  %3005 = vst.msk [vmem:[%s3 + $0x340] sm:$0xff] %vm2900, %v2748
  %3006 = vst.msk [vmem:[%s3 + $0x348] sm:$0xff] %vm2900, %v2749
  %3007 = vst.msk [vmem:[%s3 + $0x350] sm:$0xff] %vm2900, %v2750
  %3008 = vst.msk [vmem:[%s3 + $0x358] sm:$0xff] %vm2900, %v2751
  %3009 = vst.msk [vmem:[%s3 + $0x360] sm:$0xff] %vm2900, %v2752
  %3010 = vst.msk [vmem:[%s3 + $0x368] sm:$0xff] %vm2900, %v2753
  %3011 = vst.msk [vmem:[%s3 + $0x370] sm:$0xff] %vm2900, %v2754
  %3012 = vst.msk [vmem:[%s3 + $0x378] sm:$0xff] %vm2900, %v2755
  %3013 = vst.msk [vmem:[%s3 + $0x380] sm:$0xff] %vm2900, %v2756
  %3014 = vst.msk [vmem:[%s3 + $0x388] sm:$0xff] %vm2900, %v2757
  %3015 = vst.msk [vmem:[%s3 + $0x390] sm:$0xff] %vm2900, %v2758
  %3016 = vst.msk [vmem:[%s3 + $0x398] sm:$0xff] %vm2900, %v2759
  %3017 = vst.msk [vmem:[%s3 + $0x3a0] sm:$0xff] %vm2900, %v2760
  %3018 = vst.msk [vmem:[%s3 + $0x3a8] sm:$0xff] %vm2900, %v2761
  %3019 = vst.msk [vmem:[%s3 + $0x3b0] sm:$0xff] %vm2900, %v2762
  %3020 = vst.msk [vmem:[%s3 + $0x3b8] sm:$0xff] %vm2900, %v2763
  %3021 = vst.msk [vmem:[%s3 + $0x3c0] sm:$0xff] %vm2900, %v2764
  %3022 = vst.msk [vmem:[%s3 + $0x3c8] sm:$0xff] %vm2900, %v2765
  %3023 = vst.msk [vmem:[%s3 + $0x3d0] sm:$0xff] %vm2900, %v2766
  %3024 = vst.msk [vmem:[%s3 + $0x3d8] sm:$0xff] %vm2900, %v2767
  %3025 = vst.msk [vmem:[%s3 + $0x3e0] sm:$0xff] %vm2900, %v2768
  %3026 = vst.msk [vmem:[%s3 + $0x3e8] sm:$0xff] %vm2900, %v2769
  %3027 = vst.msk [vmem:[%s3 + $0x3f0] sm:$0xff] %vm2900, %v2770
  %3028 = vst.msk [vmem:[%s3 + $0x3f8] sm:$0xff] %vm2900, %v2771
  %3029 = vst.msk [vmem:[%s3 + $0x400] sm:$0xff] %vm2900, %v2772
  %3030 = vst.msk [vmem:[%s3 + $0x408] sm:$0xff] %vm2900, %v2773
  %3031 = vst.msk [vmem:[%s3 + $0x410] sm:$0xff] %vm2900, %v2774
  %3032 = vst.msk [vmem:[%s3 + $0x418] sm:$0xff] %vm2900, %v2775
  %3033 = vst.msk [vmem:[%s3 + $0x420] sm:$0xff] %vm2900, %v2776
  %3034 = vst.msk [vmem:[%s3 + $0x428] sm:$0xff] %vm2900, %v2777
  %3035 = vst.msk [vmem:[%s3 + $0x430] sm:$0xff] %vm2900, %v2778
  %3036 = vst.msk [vmem:[%s3 + $0x438] sm:$0xff] %vm2900, %v2779
  %3037 = vst.msk [vmem:[%s3 + $0x440] sm:$0xff] %vm2900, %v2780
  %3038 = vst.msk [vmem:[%s3 + $0x448] sm:$0xff] %vm2900, %v2781
  %3039 = vst.msk [vmem:[%s3 + $0x450] sm:$0xff] %vm2900, %v2782
  %3040 = vst.msk [vmem:[%s3 + $0x458] sm:$0xff] %vm2900, %v2783
  %3041 = vst.msk [vmem:[%s3 + $0x460] sm:$0xff] %vm2900, %v2784
  %3042 = vst.msk [vmem:[%s3 + $0x468] sm:$0xff] %vm2900, %v2785
  %3043 = vst.msk [vmem:[%s3 + $0x470] sm:$0xff] %vm2900, %v2786
  %3044 = vst.msk [vmem:[%s3 + $0x478] sm:$0xff] %vm2900, %v2787
  %3045 = vst.msk [vmem:[%s3 + $0x480] sm:$0xff] %vm2900, %v2788
  %3046 = vst.msk [vmem:[%s3 + $0x488] sm:$0xff] %vm2900, %v2789
  %3047 = vst.msk [vmem:[%s3 + $0x490] sm:$0xff] %vm2900, %v2790
  %3048 = vst.msk [vmem:[%s3 + $0x498] sm:$0xff] %vm2900, %v2791
  %3049 = vst.msk [vmem:[%s3 + $0x4a0] sm:$0xff] %vm2900, %v2792
  %3050 = vst.msk [vmem:[%s3 + $0x4a8] sm:$0xff] %vm2900, %v2793
  %3051 = vst.msk [vmem:[%s3 + $0x4b0] sm:$0xff] %vm2900, %v2794
  %3052 = vst.msk [vmem:[%s3 + $0x4b8] sm:$0xff] %vm2900, %v2795
  %3053 = vst.msk [vmem:[%s3 + $0x4c0] sm:$0xff] %vm2900, %v2796
  %3054 = vst.msk [vmem:[%s3 + $0x4c8] sm:$0xff] %vm2900, %v2797
  %3055 = vst.msk [vmem:[%s3 + $0x4d0] sm:$0xff] %vm2900, %v2798
  %3056 = vst.msk [vmem:[%s3 + $0x4d8] sm:$0xff] %vm2900, %v2799
  %3057 = vst.msk [vmem:[%s3 + $0x4e0] sm:$0xff] %vm2900, %v2800
  %3058 = vst.msk [vmem:[%s3 + $0x4e8] sm:$0xff] %vm2900, %v2801
  %3059 = vst.msk [vmem:[%s3 + $0x4f0] sm:$0xff] %vm2900, %v2802
  %3060 = vst.msk [vmem:[%s3 + $0x4f8] sm:$0xff] %vm2900, %v2803
  %3061 = vst.msk [vmem:[%s3 + $0x500] sm:$0xff] %vm2900, %v2804
  %3062 = vst.msk [vmem:[%s3 + $0x508] sm:$0xff] %vm2900, %v2805
  %3063 = vst.msk [vmem:[%s3 + $0x510] sm:$0xff] %vm2900, %v2806
  %3064 = vst.msk [vmem:[%s3 + $0x518] sm:$0xff] %vm2900, %v2807
  %3065 = vst.msk [vmem:[%s3 + $0x520] sm:$0xff] %vm2900, %v2808
  %3066 = vst.msk [vmem:[%s3 + $0x528] sm:$0xff] %vm2900, %v2809
  %3067 = vst.msk [vmem:[%s3 + $0x530] sm:$0xff] %vm2900, %v2810
  %3068 = vst.msk [vmem:[%s3 + $0x538] sm:$0xff] %vm2900, %v2811
  %3069 = vst.msk [vmem:[%s3 + $0x540] sm:$0xff] %vm2900, %v2812
  %3070 = vst.msk [vmem:[%s3 + $0x548] sm:$0xff] %vm2900, %v2813
  %3071 = vst.msk [vmem:[%s3 + $0x550] sm:$0xff] %vm2900, %v2814
  %3072 = vst.msk [vmem:[%s3 + $0x558] sm:$0xff] %vm2900, %v2815
  %3073 = vst.msk [vmem:[%s3 + $0x560] sm:$0xff] %vm2900, %v2816
  %3074 = vst.msk [vmem:[%s3 + $0x568] sm:$0xff] %vm2900, %v2817
  %3075 = vst.msk [vmem:[%s3 + $0x570] sm:$0xff] %vm2900, %v2818
  %3076 = vst.msk [vmem:[%s3 + $0x578] sm:$0xff] %vm2900, %v2819
  %3077 = vst.msk [vmem:[%s3 + $0x580] sm:$0xff] %vm2900, %v2820
  %3078 = vst.msk [vmem:[%s3 + $0x588] sm:$0xff] %vm2900, %v2821
  %3079 = vst.msk [vmem:[%s3 + $0x590] sm:$0xff] %vm2900, %v2822
  %3080 = vst.msk [vmem:[%s3 + $0x598] sm:$0xff] %vm2900, %v2823
  %3081 = vst.msk [vmem:[%s3 + $0x5a0] sm:$0xff] %vm2900, %v2824
  %3082 = vst.msk [vmem:[%s3 + $0x5a8] sm:$0xff] %vm2900, %v2825
  %3083 = vst.msk [vmem:[%s3 + $0x5b0] sm:$0xff] %vm2900, %v2826
  %3084 = vst.msk [vmem:[%s3 + $0x5b8] sm:$0xff] %vm2900, %v2827
  %3085 = vst.msk [vmem:[%s3 + $0x5c0] sm:$0xff] %vm2900, %v2828
  %3086 = vst.msk [vmem:[%s3 + $0x5c8] sm:$0xff] %vm2900, %v2829
  %3087 = vst.msk [vmem:[%s3 + $0x5d0] sm:$0xff] %vm2900, %v2830
  %3088 = vst.msk [vmem:[%s3 + $0x5d8] sm:$0xff] %vm2900, %v2831
  %3089 = vst.msk [vmem:[%s3 + $0x5e0] sm:$0xff] %vm2900, %v2832
  %3090 = vst.msk [vmem:[%s3 + $0x5e8] sm:$0xff] %vm2900, %v2833
  %3091 = vst.msk [vmem:[%s3 + $0x5f0] sm:$0xff] %vm2900, %v2834
  %3092 = vst.msk [vmem:[%s3 + $0x5f8] sm:$0xff] %vm2900, %v2835
  %3093 = vst.msk [vmem:[%s3 + $0x600] sm:$0xff] %vm2900, %v2836
  %3094 = vst.msk [vmem:[%s3 + $0x608] sm:$0xff] %vm2900, %v2837
  %3095 = vst.msk [vmem:[%s3 + $0x610] sm:$0xff] %vm2900, %v2838
  %3096 = vst.msk [vmem:[%s3 + $0x618] sm:$0xff] %vm2900, %v2839
  %3097 = vst.msk [vmem:[%s3 + $0x620] sm:$0xff] %vm2900, %v2840
  %3098 = vst.msk [vmem:[%s3 + $0x628] sm:$0xff] %vm2900, %v2841
  %3099 = vst.msk [vmem:[%s3 + $0x630] sm:$0xff] %vm2900, %v2842
  %3100 = vst.msk [vmem:[%s3 + $0x638] sm:$0xff] %vm2900, %v2843
  %3101 = vst.msk [vmem:[%s3 + $0x640] sm:$0xff] %vm2900, %v2844
  %3102 = vst.msk [vmem:[%s3 + $0x648] sm:$0xff] %vm2900, %v2845
  %3103 = vst.msk [vmem:[%s3 + $0x650] sm:$0xff] %vm2900, %v2846
  %3104 = vst.msk [vmem:[%s3 + $0x658] sm:$0xff] %vm2900, %v2847
  %3105 = vst.msk [vmem:[%s3 + $0x660] sm:$0xff] %vm2900, %v2848
  %3106 = vst.msk [vmem:[%s3 + $0x668] sm:$0xff] %vm2900, %v2849
  %3107 = vst.msk [vmem:[%s3 + $0x670] sm:$0xff] %vm2900, %v2850
  %3108 = vst.msk [vmem:[%s3 + $0x678] sm:$0xff] %vm2900, %v2851
  %3109 = vst.msk [vmem:[%s3 + $0x680] sm:$0xff] %vm2900, %v2852
  %3110 = vst.msk [vmem:[%s3 + $0x688] sm:$0xff] %vm2900, %v2853
  %3111 = vst.msk [vmem:[%s3 + $0x690] sm:$0xff] %vm2900, %v2854
  %3112 = vst.msk [vmem:[%s3 + $0x698] sm:$0xff] %vm2900, %v2855
  %3113 = vst.msk [vmem:[%s3 + $0x6a0] sm:$0xff] %vm2900, %v2856
  %3114 = vst.msk [vmem:[%s3 + $0x6a8] sm:$0xff] %vm2900, %v2857
  %3115 = vst.msk [vmem:[%s3 + $0x6b0] sm:$0xff] %vm2900, %v2858
  %3116 = vst.msk [vmem:[%s3 + $0x6b8] sm:$0xff] %vm2900, %v2859
  %3117 = vst.msk [vmem:[%s3 + $0x6c0] sm:$0xff] %vm2900, %v2860
  %3118 = vst.msk [vmem:[%s3 + $0x6c8] sm:$0xff] %vm2900, %v2861
  %3119 = vst.msk [vmem:[%s3 + $0x6d0] sm:$0xff] %vm2900, %v2862
  %3120 = vst.msk [vmem:[%s3 + $0x6d8] sm:$0xff] %vm2900, %v2863
  %3121 = vst.msk [vmem:[%s3 + $0x6e0] sm:$0xff] %vm2900, %v2864
  %3122 = vst.msk [vmem:[%s3 + $0x6e8] sm:$0xff] %vm2900, %v2865
  %3123 = vst.msk [vmem:[%s3 + $0x6f0] sm:$0xff] %vm2900, %v2866
  %3124 = vst.msk [vmem:[%s3 + $0x6f8] sm:$0xff] %vm2900, %v2867
  %3125 = vst.msk [vmem:[%s3 + $0x700] sm:$0xff] %vm2900, %v2868
  %3126 = vst.msk [vmem:[%s3 + $0x708] sm:$0xff] %vm2900, %v2869
  %3127 = vst.msk [vmem:[%s3 + $0x710] sm:$0xff] %vm2900, %v2870
  %3128 = vst.msk [vmem:[%s3 + $0x718] sm:$0xff] %vm2900, %v2871
  %3129 = vst.msk [vmem:[%s3 + $0x720] sm:$0xff] %vm2900, %v2872
  %3130 = vst.msk [vmem:[%s3 + $0x728] sm:$0xff] %vm2900, %v2873
  %3131 = vst.msk [vmem:[%s3 + $0x730] sm:$0xff] %vm2900, %v2874
  %3132 = vst.msk [vmem:[%s3 + $0x738] sm:$0xff] %vm2900, %v2875
  %3133 = vst.msk [vmem:[%s3 + $0x740] sm:$0xff] %vm2900, %v2876
  %3134 = vst.msk [vmem:[%s3 + $0x748] sm:$0xff] %vm2900, %v2877
  %3135 = vst.msk [vmem:[%s3 + $0x750] sm:$0xff] %vm2900, %v2878
  %3136 = vst.msk [vmem:[%s3 + $0x758] sm:$0xff] %vm2900, %v2879
  %3137 = vst.msk [vmem:[%s3 + $0x760] sm:$0xff] %vm2900, %v2880
  %3138 = vst.msk [vmem:[%s3 + $0x768] sm:$0xff] %vm2900, %v2881
  %3139 = vst.msk [vmem:[%s3 + $0x770] sm:$0xff] %vm2900, %v2882
  %3140 = vst.msk [vmem:[%s3 + $0x778] sm:$0xff] %vm2900, %v2883
  %3141 = vst.msk [vmem:[%s3 + $0x780] sm:$0xff] %vm2900, %v2884
  %3142 = vst.msk [vmem:[%s3 + $0x788] sm:$0xff] %vm2900, %v2885
  %3143 = vst.msk [vmem:[%s3 + $0x790] sm:$0xff] %vm2900, %v2886
  %3144 = vst.msk [vmem:[%s3 + $0x798] sm:$0xff] %vm2900, %v2887
  %3145 = vst.msk [vmem:[%s3 + $0x7a0] sm:$0xff] %vm2900, %v2888
  %3146 = vst.msk [vmem:[%s3 + $0x7a8] sm:$0xff] %vm2900, %v2889
  %3147 = vst.msk [vmem:[%s3 + $0x7b0] sm:$0xff] %vm2900, %v2890
  %3148 = vst.msk [vmem:[%s3 + $0x7b8] sm:$0xff] %vm2900, %v2891
  %3149 = vst.msk [vmem:[%s3 + $0x7c0] sm:$0xff] %vm2900, %v2892
  %3150 = vst.msk [vmem:[%s3 + $0x7c8] sm:$0xff] %vm2900, %v2893
  %3151 = vst.msk [vmem:[%s3 + $0x7d0] sm:$0xff] %vm2900, %v2894
  %3152 = vst.msk [vmem:[%s3 + $0x7d8] sm:$0xff] %vm2900, %v2895
  %3153 = vst.msk [vmem:[%s3 + $0x7e0] sm:$0xff] %vm2900, %v2896
  %3154 = vst.msk [vmem:[%s3 + $0x7e8] sm:$0xff] %vm2900, %v2897
  %3155 = vst.msk [vmem:[%s3 + $0x7f0] sm:$0xff] %vm2900, %v2898
  %3156 = vst.msk [vmem:[%s3 + $0x7f8] sm:$0xff] %vm2900, %v2899
  // Predicated region
  $region14: #{unet_forward.19} parent=0 // pred_check
    _
  $region15: #{unet_forward.19} parent=0 // pred_check_branch
    %3158 = sbr.rel (0) target = $region17
  $region16: #{unet_forward.19} parent=0 // pred_region
    _
  $region17: #{unet_forward.19} parent=0 // pred_fallthru
    _
  // Predicated region
  $region18: #{unet_forward.19} parent=0 // pred_check
    _
  $region19: #{unet_forward.19} parent=0 // pred_check_branch
    %3160 = sbr.rel (0) target = $region21
  $region20: #{unet_forward.19} parent=0 // pred_region
    _
  $region21: #{unet_forward.19} parent=0 // pred_fallthru
    _

</llo_original>
